<compile_context>
chip_gen: v5e
topology: v5e:2x2
jax: 0.10.0
libtpu: 0.0.40
codegen_flags: <defaults>
</compile_context>

<pallas_src>
import jax
import jax.numpy as jnp
from jax import lax
from jax.experimental import pallas as pl
from jax.experimental.pallas import tpu as pltpu

EPS = 1e-5     # torch.nn.InstanceNorm2d default


def _round_up(v, m):
    return (v + m - 1) // m * m


def _residual_block_kernel(x_ref, w1_ref, b1_ref, g1_ref, be1_ref,
                           w2_ref, b2_ref, g2_ref, be2_ref,
                           o_ref, pad_ref):
    _, H, W, C = x_ref.shape
    Hp, Wp, _ = pad_ref.shape          # Hp = H + 2, Wp = round_up(W + 2, 8)
    HWp = H * Wp
    inv_hw = 1.0 / float(H * W)

    # Spare pad columns (>= W+2) never reach a valid output, but zero them so
    # no uninitialized VMEM can flow anywhere (NaN-proof; one tiny store).
    if Wp > W + 2:
        pad_ref[:, W + 2:, :] = jnp.zeros((Hp, Wp - (W + 2), C), jnp.float32)

    # Column-validity mask for the instance-norm statistics (hoisted; built once).
    col = lax.broadcasted_iota(jnp.int32, (1, Wp, C), 1)
    valid = jnp.logical_and(col >= 1, col <= W)

    def reflect_edges():
        # Top/bottom reflected rows, then left/right reflected columns.  The
        # column pass also fixes the four corners and overwrites whatever the
        # full-width interior store left in columns 0 and W+1.
        pad_ref[0:1, :, :] = pad_ref[2:3, :, :]
        pad_ref[H + 1:H + 2, :, :] = pad_ref[H - 1:H, :, :]
        pad_ref[:, 0:1, :] = pad_ref[:, 2:3, :]
        pad_ref[:, W + 1:W + 2, :] = pad_ref[:, W - 1:W, :]

    def conv3x3(w_ref, b_row):
        # pad_ref holds the reflect-padded plane.  For each kw the three kh
        # taps are summed first (the kw shift is kh-independent): 9 matmuls,
        # 2 rolls, no accumulator VMEM round trips.
        acc = None
        for kw in range(3):
            t = None
            for kh in range(3):
                # Leading-dim slice (tile-aligned) + layout-preserving reshape
                # (Wp % 8 == 0): no relayout copies.
                rows = pad_ref[kh:kh + H, :, :].reshape(HWp, C)
                contrib = jnp.dot(rows, w_ref[kh * 3 + kw],
                                  preferred_element_type=jnp.float32)
                t = contrib if t is None else t + contrib
            if kw != 1:
                # kw shift on the flattened axis (XLU).  The circular wrap and
                # row-boundary crossings only land in masked columns.
                t = pltpu.roll(t, shift=(1 - kw) % HWp, axis=0)
            if acc is None:
                acc = t + b_row                      # bias fused into init
            else:
                acc = acc + t
        return acc.reshape(H, Wp, C)                 # valid output at cols 1..W

    def instance_norm(a, g_row, be_row, relu):
        # Masked two-pass (centered) statistics over the H*W valid positions.
        mean = jnp.sum(jnp.where(valid, a, 0.0), axis=(0, 1),
                       keepdims=True) * inv_hw
        d = a - mean
        var = jnp.sum(jnp.where(valid, d * d, 0.0), axis=(0, 1),
                      keepdims=True) * inv_hw
        y = d * lax.rsqrt(var + EPS) * g_row.reshape(1, 1, C) \
            + be_row.reshape(1, 1, C)
        return jnp.maximum(y, 0.0) if relu else y

    # ---- conv1: fill pad from x (single shifted interior store), conv, IN, ReLU.
    pad_ref[1:H + 1, 1:W + 1, :] = x_ref[0]
    reflect_edges()
    y1 = instance_norm(conv3x3(w1_ref, b1_ref[...]),
                       g1_ref[...], be1_ref[...], relu=True)

    # ---- conv2: conv1 epilogue streams straight into the pad scratch with one
    # aligned full-width store (no h1 round trip), then conv, IN.
    pad_ref[1:H + 1, :, :] = y1
    reflect_edges()
    y2 = instance_norm(conv3x3(w2_ref, b2_ref[...]),
                       g2_ref[...], be2_ref[...], relu=False)

    # PyTorch forward: out = out + residual; return out + residual  => + 2*x.
    # Residual is re-read from the input block ref (not kept live across convs).
    o_ref[0] = y2[:, 1:W + 1, :] + 2.0 * x_ref[0]


def residual_block(x_nchw, params):
    """x_nchw: (N, C, H, W) float32. Returns (N, C, H, W) float32."""
    w1, b1, g1, be1, w2, b2, g2, be2 = params
    n, c, h, w = x_nchw.shape
    if h < 2 or w < 2:
        raise ValueError("ReflectionPad2d(1) requires H >= 2 and W >= 2")

    wp = _round_up(w + 2, 8)           # pad-plane width, sublane aligned

    # NCHW -> NHWC, channels kept dense (no HBM channel padding).
    x_nhwc = jnp.transpose(x_nchw, (0, 2, 3, 1)).astype(jnp.float32)

    def prep_w(wk):                    # (3, 3, Cin, Cout) -> (9, Cin, Cout)
        return wk.reshape(9, c, c).astype(jnp.float32)

    def prep_v(v):                     # (C,) -> (1, C)
        return v.reshape(1, c).astype(jnp.float32)

    args = (x_nhwc, prep_w(w1), prep_v(b1), prep_v(g1), prep_v(be1),
            prep_w(w2), prep_v(b2), prep_v(g2), prep_v(be2))

    # Per-step VMEM working set, accounting for the lane/sublane padding the
    # dense-C layout pays in VMEM and for the live value temporaries
    # (rows / per-kw partials / conv result / normalized result).
    f32 = 4
    lanes = _round_up(c, 128)
    blk = h * _round_up(w, 8) * lanes * f32            # one (1,H,W,C) block
    pad_b = (h + 2) * wp * lanes * f32                 # pad scratch
    val = h * wp * lanes * f32                         # one (H,Wp,C) live value
    wts = 9 * _round_up(c, 8) * lanes * f32            # one conv's weights
    est = 2 * (2 * blk) + pad_b + 6 * val + 2 * (2 * wts) + (1 << 20)
    vmem_limit = max(2 * est, 16 << 20)
    try:   # cap against physical VMEM (64 MiB on v7x, 128 MiB on v5e/v6e)
        phys = pltpu.get_tpu_info().vmem_capacity_bytes
        vmem_limit = min(vmem_limit, (phys * 5) // 8)
    except Exception:
        vmem_limit = min(vmem_limit, 40 << 20)         # assume v7x-sized part
    vmem_limit = int(max(vmem_limit, 16 << 20))

    x_spec = pl.BlockSpec((1, h, w, c), lambda i: (i, 0, 0, 0))
    # Weights / affine params: constant index maps -> stay VMEM resident across
    # the batch grid.  pipeline_mode=pl.Buffered(1) would halve their footprint
    # on v7x, but at these sizes it is noise, so it is omitted.
    w_spec = pl.BlockSpec((9, c, c), lambda i: (0, 0, 0))
    v_spec = pl.BlockSpec((1, c), lambda i: (0, 0))

    out_nhwc = pl.pallas_call(
        _residual_block_kernel,
        grid=(n,),
        in_specs=[x_spec, w_spec, v_spec, v_spec, v_spec,
                  w_spec, v_spec, v_spec, v_spec],
        out_specs=pl.BlockSpec((1, h, w, c), lambda i: (i, 0, 0, 0)),
        out_shape=jax.ShapeDtypeStruct((n, h, w, c), jnp.float32),
        scratch_shapes=[pltpu.VMEM((h + 2, wp, c), jnp.float32)],  # pad plane
        compiler_params=pltpu.CompilerParams(
            dimension_semantics=("parallel",),
            vmem_limit_bytes=vmem_limit),
    )(*args)

    return jnp.transpose(out_nhwc, (0, 3, 1, 2))       # NHWC -> NCHW


def _reference(x_nchw, params):
    """Pure-JAX reference (lax.conv) for verification."""
    w1, b1, g1, be1, w2, b2, g2, be2 = params

    def conv(x, wk, b):  # x NCHW, wk (kh,kw,Cin,Cout)
        xp = jnp.pad(x, ((0, 0), (0, 0), (1, 1), (1, 1)), mode="reflect")
        w_oihw = jnp.transpose(wk, (3, 2, 0, 1))
        y = lax.conv_general_dilated(xp, w_oihw, (1, 1), "VALID",
                                     dimension_numbers=("NCHW", "OIHW", "NCHW"))
        return y + b.reshape(1, -1, 1, 1)

    def inorm(y, g, be):
        mean = jnp.mean(y, axis=(2, 3), keepdims=True)
        var = jnp.mean((y - mean) ** 2, axis=(2, 3), keepdims=True)
        return (y - mean) * lax.rsqrt(var + EPS) * g.reshape(1, -1, 1, 1) \
               + be.reshape(1, -1, 1, 1)

    h = jnp.maximum(inorm(conv(x_nchw, w1, b1), g1, be1), 0.0)
    out = inorm(conv(h, w2, b2), g2, be2)
    return out + 2.0 * x_nchw


if __name__ == "__main__":
    N, C, H, W = 2, 4, 16, 16  # planes = 4
    key = jax.random.PRNGKey(0)
    kx, k1, k2, k3, k4 = jax.random.split(key, 5)

    x = jax.random.normal(kx, (N, C, H, W), jnp.float32)

    # Conv weights in (kh, kw, Cin, Cout); biases / affine params per channel.
    w1 = jax.random.normal(k1, (3, 3, C, C), jnp.float32) * 0.1
    b1 = jax.random.normal(k2, (C,), jnp.float32) * 0.1
    g1 = jnp.ones((C,), jnp.float32)          # InstanceNorm affine weight init
    be1 = jnp.zeros((C,), jnp.float32)        # InstanceNorm affine bias init
    w2 = jax.random.normal(k3, (3, 3, C, C), jnp.float32) * 0.1
    b2 = jax.random.normal(k4, (C,), jnp.float32) * 0.1
    g2 = jnp.ones((C,), jnp.float32)
    be2 = jnp.zeros((C,), jnp.float32)

    params = (w1, b1, g1, be1, w2, b2, g2, be2)

    out = residual_block(x, params)
    out = jax.block_until_ready(out)

    ref = _reference(x, params)
    assert out.shape == (N, C, H, W)
    assert jnp.allclose(out, ref, atol=1e-4, rtol=1e-4), \
        f"max err {jnp.max(jnp.abs(out - ref))}"

    print("KERNEL_OK")
</pallas_src>

<mosaic_0001>
module attributes {stable_mosaic.version = 11 : i64} {
  func.func @_residual_block_kernel(%arg0: i32, %arg1: memref<1x16x16x4xf32, #tpu.memory_space<vmem>>, %arg2: memref<9x4x4xf32, #tpu.memory_space<vmem>>, %arg3: memref<1x4xf32, #tpu.memory_space<vmem>>, %arg4: memref<1x4xf32, #tpu.memory_space<vmem>>, %arg5: memref<1x4xf32, #tpu.memory_space<vmem>>, %arg6: memref<9x4x4xf32, #tpu.memory_space<vmem>>, %arg7: memref<1x4xf32, #tpu.memory_space<vmem>>, %arg8: memref<1x4xf32, #tpu.memory_space<vmem>>, %arg9: memref<1x4xf32, #tpu.memory_space<vmem>>, %arg10: memref<1x16x16x4xf32, #tpu.memory_space<vmem>>, %arg11: memref<18x24x4xf32, #tpu.memory_space<vmem>>) attributes {dimension_semantics = [#tpu.dimension_semantics<parallel>], iteration_bounds = array<i64: 2>, scalar_prefetch = 0 : i64, scratch_operands = 1 : i64, tpu.core_type = #tpu.core_type<tc>, window_params = [{transform_indices = @transform_0, window_bounds = array<i64: 1, 16, 16, 4>}, {pipeline_mode = #tpu.pipeline_mode<synchronous>, transform_indices = @transform_1, window_bounds = array<i64: 9, 4, 4>}, {pipeline_mode = #tpu.pipeline_mode<synchronous>, transform_indices = @transform_2, window_bounds = array<i64: 1, 4>}, {pipeline_mode = #tpu.pipeline_mode<synchronous>, transform_indices = @transform_3, window_bounds = array<i64: 1, 4>}, {pipeline_mode = #tpu.pipeline_mode<synchronous>, transform_indices = @transform_4, window_bounds = array<i64: 1, 4>}, {pipeline_mode = #tpu.pipeline_mode<synchronous>, transform_indices = @transform_5, window_bounds = array<i64: 9, 4, 4>}, {pipeline_mode = #tpu.pipeline_mode<synchronous>, transform_indices = @transform_6, window_bounds = array<i64: 1, 4>}, {pipeline_mode = #tpu.pipeline_mode<synchronous>, transform_indices = @transform_7, window_bounds = array<i64: 1, 4>}, {pipeline_mode = #tpu.pipeline_mode<synchronous>, transform_indices = @transform_8, window_bounds = array<i64: 1, 4>}, {transform_indices = @transform_9, window_bounds = array<i64: 1, 16, 16, 4>}]} {
    %cst = arith.constant 0.000000e+00 : f32
    %0 = vector.broadcast %cst : f32 to vector<18x6x4xf32>
    %c0 = arith.constant 0 : index
    %c18 = arith.constant 18 : index
    %c0_0 = arith.constant 0 : index
    %1 = vector.load %arg11[%c0, %c18, %c0_0] : memref<18x24x4xf32, #tpu.memory_space<vmem>>, vector<18x6x4xf32>
    tpu.vector_store %arg11[%c0, %c18, %c0_0], %0 {strides = array<i32>} : memref<18x24x4xf32, #tpu.memory_space<vmem>>, vector<18x6x4xf32>,
    %2 = tpu.iota {dimensions = array<i32: 1>} : vector<1x24x4xi32>
    %c1_i32 = arith.constant 1 : i32
    %3 = vector.broadcast %c1_i32 : i32 to vector<1x24x4xi32>
    %4 = arith.cmpi sge, %2, %3 : vector<1x24x4xi32>
    %c16_i32 = arith.constant 16 : i32
    %5 = vector.broadcast %c16_i32 : i32 to vector<1x24x4xi32>
    %6 = arith.cmpi sle, %2, %5 : vector<1x24x4xi32>
    %7 = arith.andi %4, %6 : vector<1x24x4xi1>
    %c0_1 = arith.constant 0 : index
    %c0_2 = arith.constant 0 : index
    %c0_3 = arith.constant 0 : index
    %c0_4 = arith.constant 0 : index
    %8 = vector.load %arg1[%c0_1, %c0_2, %c0_3, %c0_4] : memref<1x16x16x4xf32, #tpu.memory_space<vmem>>, vector<1x16x16x4xf32>
    %9 = vector.shape_cast %8 : vector<1x16x16x4xf32> to vector<16x16x4xf32>
    %c1 = arith.constant 1 : index
    %c1_5 = arith.constant 1 : index
    %c0_6 = arith.constant 0 : index
    %10 = vector.load %arg11[%c1, %c1_5, %c0_6] : memref<18x24x4xf32, #tpu.memory_space<vmem>>, vector<16x16x4xf32>
    tpu.vector_store %arg11[%c1, %c1_5, %c0_6], %9 {strides = array<i32>} : memref<18x24x4xf32, #tpu.memory_space<vmem>>, vector<16x16x4xf32>,
    %c2 = arith.constant 2 : index
    %c0_7 = arith.constant 0 : index
    %c0_8 = arith.constant 0 : index
    %11 = vector.load %arg11[%c2, %c0_7, %c0_8] : memref<18x24x4xf32, #tpu.memory_space<vmem>>, vector<1x24x4xf32>
    %c0_9 = arith.constant 0 : index
    %c0_10 = arith.constant 0 : index
    %c0_11 = arith.constant 0 : index
    %12 = vector.load %arg11[%c0_9, %c0_10, %c0_11] : memref<18x24x4xf32, #tpu.memory_space<vmem>>, vector<1x24x4xf32>
    tpu.vector_store %arg11[%c0_9, %c0_10, %c0_11], %11 {strides = array<i32>} : memref<18x24x4xf32, #tpu.memory_space<vmem>>, vector<1x24x4xf32>,
    %c15 = arith.constant 15 : index
    %c0_12 = arith.constant 0 : index
    %c0_13 = arith.constant 0 : index
    %13 = vector.load %arg11[%c15, %c0_12, %c0_13] : memref<18x24x4xf32, #tpu.memory_space<vmem>>, vector<1x24x4xf32>
    %c17 = arith.constant 17 : index
    %c0_14 = arith.constant 0 : index
    %c0_15 = arith.constant 0 : index
    %14 = vector.load %arg11[%c17, %c0_14, %c0_15] : memref<18x24x4xf32, #tpu.memory_space<vmem>>, vector<1x24x4xf32>
    tpu.vector_store %arg11[%c17, %c0_14, %c0_15], %13 {strides = array<i32>} : memref<18x24x4xf32, #tpu.memory_space<vmem>>, vector<1x24x4xf32>,
    %c0_16 = arith.constant 0 : index
    %c2_17 = arith.constant 2 : index
    %c0_18 = arith.constant 0 : index
    %15 = vector.load %arg11[%c0_16, %c2_17, %c0_18] : memref<18x24x4xf32, #tpu.memory_space<vmem>>, vector<18x1x4xf32>
    %c0_19 = arith.constant 0 : index
    %c0_20 = arith.constant 0 : index
    %c0_21 = arith.constant 0 : index
    %16 = vector.load %arg11[%c0_19, %c0_20, %c0_21] : memref<18x24x4xf32, #tpu.memory_space<vmem>>, vector<18x1x4xf32>
    tpu.vector_store %arg11[%c0_19, %c0_20, %c0_21], %15 {strides = array<i32>} : memref<18x24x4xf32, #tpu.memory_space<vmem>>, vector<18x1x4xf32>,
    %c0_22 = arith.constant 0 : index
    %c15_23 = arith.constant 15 : index
    %c0_24 = arith.constant 0 : index
    %17 = vector.load %arg11[%c0_22, %c15_23, %c0_24] : memref<18x24x4xf32, #tpu.memory_space<vmem>>, vector<18x1x4xf32>
    %c0_25 = arith.constant 0 : index
    %c17_26 = arith.constant 17 : index
    %c0_27 = arith.constant 0 : index
    %18 = vector.load %arg11[%c0_25, %c17_26, %c0_27] : memref<18x24x4xf32, #tpu.memory_space<vmem>>, vector<18x1x4xf32>
    tpu.vector_store %arg11[%c0_25, %c17_26, %c0_27], %17 {strides = array<i32>} : memref<18x24x4xf32, #tpu.memory_space<vmem>>, vector<18x1x4xf32>,
    %c0_28 = arith.constant 0 : index
    %c0_29 = arith.constant 0 : index
    %19 = vector.load %arg3[%c0_28, %c0_29] : memref<1x4xf32, #tpu.memory_space<vmem>>, vector<1x4xf32>
    %c0_30 = arith.constant 0 : index
    %c0_31 = arith.constant 0 : index
    %c0_32 = arith.constant 0 : index
    %20 = vector.load %arg11[%c0_30, %c0_31, %c0_32] : memref<18x24x4xf32, #tpu.memory_space<vmem>>, vector<16x24x4xf32>
    %21 = vector.shape_cast %20 : vector<16x24x4xf32> to vector<384x4xf32>
    %c0_33 = arith.constant 0 : index
    %c0_34 = arith.constant 0 : index
    %c0_35 = arith.constant 0 : index
    %22 = vector.load %arg2[%c0_33, %c0_34, %c0_35] : memref<9x4x4xf32, #tpu.memory_space<vmem>>, vector<1x4x4xf32>
    %23 = vector.shape_cast %22 : vector<1x4x4xf32> to vector<4x4xf32>
    %cst_36 = arith.constant dense<0.000000e+00> : vector<384x4xf32>
    %24 = tpu.matmul %21, %23, %cst_36 {dimension_numbers = #tpu.dot_dimension_numbers<[1], [0], [0], [1], [0, 0, 1, 1], [], []>} : vector<384x4xf32>, vector<4x4xf32>, vector<384x4xf32> -> vector<384x4xf32>
    %c1_37 = arith.constant 1 : index
    %c0_38 = arith.constant 0 : index
    %c0_39 = arith.constant 0 : index
    %25 = vector.load %arg11[%c1_37, %c0_38, %c0_39] : memref<18x24x4xf32, #tpu.memory_space<vmem>>, vector<16x24x4xf32>
    %26 = vector.shape_cast %25 : vector<16x24x4xf32> to vector<384x4xf32>
    %c3 = arith.constant 3 : index
    %c0_40 = arith.constant 0 : index
    %c0_41 = arith.constant 0 : index
    %27 = vector.load %arg2[%c3, %c0_40, %c0_41] : memref<9x4x4xf32, #tpu.memory_space<vmem>>, vector<1x4x4xf32>
    %28 = vector.shape_cast %27 : vector<1x4x4xf32> to vector<4x4xf32>
    %cst_42 = arith.constant dense<0.000000e+00> : vector<384x4xf32>
    %29 = tpu.matmul %26, %28, %cst_42 {dimension_numbers = #tpu.dot_dimension_numbers<[1], [0], [0], [1], [0, 0, 1, 1], [], []>} : vector<384x4xf32>, vector<4x4xf32>, vector<384x4xf32> -> vector<384x4xf32>
    %30 = arith.addf %24, %29 : vector<384x4xf32>
    %c2_43 = arith.constant 2 : index
    %c0_44 = arith.constant 0 : index
    %c0_45 = arith.constant 0 : index
    %31 = vector.load %arg11[%c2_43, %c0_44, %c0_45] : memref<18x24x4xf32, #tpu.memory_space<vmem>>, vector<16x24x4xf32>
    %32 = vector.shape_cast %31 : vector<16x24x4xf32> to vector<384x4xf32>
    %c6 = arith.constant 6 : index
    %c0_46 = arith.constant 0 : index
    %c0_47 = arith.constant 0 : index
    %33 = vector.load %arg2[%c6, %c0_46, %c0_47] : memref<9x4x4xf32, #tpu.memory_space<vmem>>, vector<1x4x4xf32>
    %34 = vector.shape_cast %33 : vector<1x4x4xf32> to vector<4x4xf32>
    %cst_48 = arith.constant dense<0.000000e+00> : vector<384x4xf32>
    %35 = tpu.matmul %32, %34, %cst_48 {dimension_numbers = #tpu.dot_dimension_numbers<[1], [0], [0], [1], [0, 0, 1, 1], [], []>} : vector<384x4xf32>, vector<4x4xf32>, vector<384x4xf32> -> vector<384x4xf32>
    %36 = arith.addf %30, %35 : vector<384x4xf32>
    %c1_i32_49 = arith.constant 1 : i32
    %37 = tpu.dynamic_rotate %36 by %c1_i32_49 dim 0 : vector<384x4xf32>, i32 -> vector<384x4xf32>
    %38 = vector.broadcast %19 : vector<1x4xf32> to vector<384x4xf32>
    %39 = arith.addf %37, %38 : vector<384x4xf32>
    %c0_50 = arith.constant 0 : index
    %c0_51 = arith.constant 0 : index
    %c0_52 = arith.constant 0 : index
    %40 = vector.load %arg11[%c0_50, %c0_51, %c0_52] : memref<18x24x4xf32, #tpu.memory_space<vmem>>, vector<16x24x4xf32>
    %41 = vector.shape_cast %40 : vector<16x24x4xf32> to vector<384x4xf32>
    %c1_53 = arith.constant 1 : index
    %c0_54 = arith.constant 0 : index
    %c0_55 = arith.constant 0 : index
    %42 = vector.load %arg2[%c1_53, %c0_54, %c0_55] : memref<9x4x4xf32, #tpu.memory_space<vmem>>, vector<1x4x4xf32>
    %43 = vector.shape_cast %42 : vector<1x4x4xf32> to vector<4x4xf32>
    %cst_56 = arith.constant dense<0.000000e+00> : vector<384x4xf32>
    %44 = tpu.matmul %41, %43, %cst_56 {dimension_numbers = #tpu.dot_dimension_numbers<[1], [0], [0], [1], [0, 0, 1, 1], [], []>} : vector<384x4xf32>, vector<4x4xf32>, vector<384x4xf32> -> vector<384x4xf32>
    %c1_57 = arith.constant 1 : index
    %c0_58 = arith.constant 0 : index
    %c0_59 = arith.constant 0 : index
    %45 = vector.load %arg11[%c1_57, %c0_58, %c0_59] : memref<18x24x4xf32, #tpu.memory_space<vmem>>, vector<16x24x4xf32>
    %46 = vector.shape_cast %45 : vector<16x24x4xf32> to vector<384x4xf32>
    %c4 = arith.constant 4 : index
    %c0_60 = arith.constant 0 : index
    %c0_61 = arith.constant 0 : index
    %47 = vector.load %arg2[%c4, %c0_60, %c0_61] : memref<9x4x4xf32, #tpu.memory_space<vmem>>, vector<1x4x4xf32>
    %48 = vector.shape_cast %47 : vector<1x4x4xf32> to vector<4x4xf32>
    %cst_62 = arith.constant dense<0.000000e+00> : vector<384x4xf32>
    %49 = tpu.matmul %46, %48, %cst_62 {dimension_numbers = #tpu.dot_dimension_numbers<[1], [0], [0], [1], [0, 0, 1, 1], [], []>} : vector<384x4xf32>, vector<4x4xf32>, vector<384x4xf32> -> vector<384x4xf32>
    %50 = arith.addf %44, %49 : vector<384x4xf32>
    %c2_63 = arith.constant 2 : index
    %c0_64 = arith.constant 0 : index
    %c0_65 = arith.constant 0 : index
    %51 = vector.load %arg11[%c2_63, %c0_64, %c0_65] : memref<18x24x4xf32, #tpu.memory_space<vmem>>, vector<16x24x4xf32>
    %52 = vector.shape_cast %51 : vector<16x24x4xf32> to vector<384x4xf32>
    %c7 = arith.constant 7 : index
    %c0_66 = arith.constant 0 : index
    %c0_67 = arith.constant 0 : index
    %53 = vector.load %arg2[%c7, %c0_66, %c0_67] : memref<9x4x4xf32, #tpu.memory_space<vmem>>, vector<1x4x4xf32>
    %54 = vector.shape_cast %53 : vector<1x4x4xf32> to vector<4x4xf32>
    %cst_68 = arith.constant dense<0.000000e+00> : vector<384x4xf32>
    %55 = tpu.matmul %52, %54, %cst_68 {dimension_numbers = #tpu.dot_dimension_numbers<[1], [0], [0], [1], [0, 0, 1, 1], [], []>} : vector<384x4xf32>, vector<4x4xf32>, vector<384x4xf32> -> vector<384x4xf32>
    %56 = arith.addf %50, %55 : vector<384x4xf32>
    %57 = arith.addf %39, %56 : vector<384x4xf32>
    %c0_69 = arith.constant 0 : index
    %c0_70 = arith.constant 0 : index
    %c0_71 = arith.constant 0 : index
    %58 = vector.load %arg11[%c0_69, %c0_70, %c0_71] : memref<18x24x4xf32, #tpu.memory_space<vmem>>, vector<16x24x4xf32>
    %59 = vector.shape_cast %58 : vector<16x24x4xf32> to vector<384x4xf32>
    %c2_72 = arith.constant 2 : index
    %c0_73 = arith.constant 0 : index
    %c0_74 = arith.constant 0 : index
    %60 = vector.load %arg2[%c2_72, %c0_73, %c0_74] : memref<9x4x4xf32, #tpu.memory_space<vmem>>, vector<1x4x4xf32>
    %61 = vector.shape_cast %60 : vector<1x4x4xf32> to vector<4x4xf32>
    %cst_75 = arith.constant dense<0.000000e+00> : vector<384x4xf32>
    %62 = tpu.matmul %59, %61, %cst_75 {dimension_numbers = #tpu.dot_dimension_numbers<[1], [0], [0], [1], [0, 0, 1, 1], [], []>} : vector<384x4xf32>, vector<4x4xf32>, vector<384x4xf32> -> vector<384x4xf32>
    %c1_76 = arith.constant 1 : index
    %c0_77 = arith.constant 0 : index
    %c0_78 = arith.constant 0 : index
    %63 = vector.load %arg11[%c1_76, %c0_77, %c0_78] : memref<18x24x4xf32, #tpu.memory_space<vmem>>, vector<16x24x4xf32>
    %64 = vector.shape_cast %63 : vector<16x24x4xf32> to vector<384x4xf32>
    %c5 = arith.constant 5 : index
    %c0_79 = arith.constant 0 : index
    %c0_80 = arith.constant 0 : index
    %65 = vector.load %arg2[%c5, %c0_79, %c0_80] : memref<9x4x4xf32, #tpu.memory_space<vmem>>, vector<1x4x4xf32>
    %66 = vector.shape_cast %65 : vector<1x4x4xf32> to vector<4x4xf32>
    %cst_81 = arith.constant dense<0.000000e+00> : vector<384x4xf32>
    %67 = tpu.matmul %64, %66, %cst_81 {dimension_numbers = #tpu.dot_dimension_numbers<[1], [0], [0], [1], [0, 0, 1, 1], [], []>} : vector<384x4xf32>, vector<4x4xf32>, vector<384x4xf32> -> vector<384x4xf32>
    %68 = arith.addf %62, %67 : vector<384x4xf32>
    %c2_82 = arith.constant 2 : index
    %c0_83 = arith.constant 0 : index
    %c0_84 = arith.constant 0 : index
    %69 = vector.load %arg11[%c2_82, %c0_83, %c0_84] : memref<18x24x4xf32, #tpu.memory_space<vmem>>, vector<16x24x4xf32>
    %70 = vector.shape_cast %69 : vector<16x24x4xf32> to vector<384x4xf32>
    %c8 = arith.constant 8 : index
    %c0_85 = arith.constant 0 : index
    %c0_86 = arith.constant 0 : index
    %71 = vector.load %arg2[%c8, %c0_85, %c0_86] : memref<9x4x4xf32, #tpu.memory_space<vmem>>, vector<1x4x4xf32>
    %72 = vector.shape_cast %71 : vector<1x4x4xf32> to vector<4x4xf32>
    %cst_87 = arith.constant dense<0.000000e+00> : vector<384x4xf32>
    %73 = tpu.matmul %70, %72, %cst_87 {dimension_numbers = #tpu.dot_dimension_numbers<[1], [0], [0], [1], [0, 0, 1, 1], [], []>} : vector<384x4xf32>, vector<4x4xf32>, vector<384x4xf32> -> vector<384x4xf32>
    %74 = arith.addf %68, %73 : vector<384x4xf32>
    %c383_i32 = arith.constant 383 : i32
    %75 = tpu.dynamic_rotate %74 by %c383_i32 dim 0 : vector<384x4xf32>, i32 -> vector<384x4xf32>
    %76 = arith.addf %57, %75 : vector<384x4xf32>
    %77 = vector.shape_cast %76 : vector<384x4xf32> to vector<16x24x4xf32>
    %c0_88 = arith.constant 0 : index
    %c0_89 = arith.constant 0 : index
    %78 = vector.load %arg4[%c0_88, %c0_89] : memref<1x4xf32, #tpu.memory_space<vmem>>, vector<1x4xf32>
    %c0_90 = arith.constant 0 : index
    %c0_91 = arith.constant 0 : index
    %79 = vector.load %arg5[%c0_90, %c0_91] : memref<1x4xf32, #tpu.memory_space<vmem>>, vector<1x4xf32>
    %cst_92 = arith.constant 0.000000e+00 : f32
    %80 = vector.shape_cast %7 : vector<1x24x4xi1> to vector<1x24x4xi1>
    %81 = vector.broadcast %80 : vector<1x24x4xi1> to vector<16x24x4xi1>
    %82 = vector.broadcast %cst_92 : f32 to vector<16x24x4xf32>
    %83 = arith.select %81, %77, %82 : vector<16x24x4xi1>, vector<16x24x4xf32>
    %cst_93 = arith.constant dense<0.000000e+00> : vector<4xf32>
    %84 = vector.multi_reduction <add>, %83, %cst_93 [0, 1] : vector<16x24x4xf32> to vector<4xf32>
    %85 = vector.shape_cast %84 : vector<4xf32> to vector<1x1x4xf32>
    %cst_94 = arith.constant 3.906250e-03 : f32
    %86 = vector.broadcast %cst_94 : f32 to vector<1x1x4xf32>
    %87 = arith.mulf %85, %86 : vector<1x1x4xf32>
    %88 = vector.broadcast %87 : vector<1x1x4xf32> to vector<16x24x4xf32>
    %89 = arith.subf %77, %88 : vector<16x24x4xf32>
    %90 = arith.mulf %89, %89 : vector<16x24x4xf32>
    %cst_95 = arith.constant 0.000000e+00 : f32
    %91 = vector.shape_cast %7 : vector<1x24x4xi1> to vector<1x24x4xi1>
    %92 = vector.broadcast %91 : vector<1x24x4xi1> to vector<16x24x4xi1>
    %93 = vector.broadcast %cst_95 : f32 to vector<16x24x4xf32>
    %94 = arith.select %92, %90, %93 : vector<16x24x4xi1>, vector<16x24x4xf32>
    %cst_96 = arith.constant dense<0.000000e+00> : vector<4xf32>
    %95 = vector.multi_reduction <add>, %94, %cst_96 [0, 1] : vector<16x24x4xf32> to vector<4xf32>
    %96 = vector.shape_cast %95 : vector<4xf32> to vector<1x1x4xf32>
    %cst_97 = arith.constant 3.906250e-03 : f32
    %97 = vector.broadcast %cst_97 : f32 to vector<1x1x4xf32>
    %98 = arith.mulf %96, %97 : vector<1x1x4xf32>
    %cst_98 = arith.constant 9.99999974E-6 : f32
    %99 = vector.broadcast %cst_98 : f32 to vector<1x1x4xf32>
    %100 = arith.addf %98, %99 : vector<1x1x4xf32>
    %101 = math.rsqrt %100 : vector<1x1x4xf32>
    %102 = vector.broadcast %101 : vector<1x1x4xf32> to vector<16x24x4xf32>
    %103 = arith.mulf %89, %102 : vector<16x24x4xf32>
    %104 = vector.shape_cast %78 : vector<1x4xf32> to vector<1x1x4xf32>
    %105 = vector.broadcast %104 : vector<1x1x4xf32> to vector<16x24x4xf32>
    %106 = arith.mulf %103, %105 : vector<16x24x4xf32>
    %107 = vector.shape_cast %79 : vector<1x4xf32> to vector<1x1x4xf32>
    %108 = vector.broadcast %107 : vector<1x1x4xf32> to vector<16x24x4xf32>
    %109 = arith.addf %106, %108 : vector<16x24x4xf32>
    %cst_99 = arith.constant 0.000000e+00 : f32
    %110 = vector.broadcast %cst_99 : f32 to vector<16x24x4xf32>
    %111 = arith.maximumf %109, %110 : vector<16x24x4xf32>
    %c1_100 = arith.constant 1 : index
    %c0_101 = arith.constant 0 : index
    %c0_102 = arith.constant 0 : index
    %112 = vector.load %arg11[%c1_100, %c0_101, %c0_102] : memref<18x24x4xf32, #tpu.memory_space<vmem>>, vector<16x24x4xf32>
    tpu.vector_store %arg11[%c1_100, %c0_101, %c0_102], %111 {strides = array<i32>} : memref<18x24x4xf32, #tpu.memory_space<vmem>>, vector<16x24x4xf32>,
    %c2_103 = arith.constant 2 : index
    %c0_104 = arith.constant 0 : index
    %c0_105 = arith.constant 0 : index
    %113 = vector.load %arg11[%c2_103, %c0_104, %c0_105] : memref<18x24x4xf32, #tpu.memory_space<vmem>>, vector<1x24x4xf32>
    %c0_106 = arith.constant 0 : index
    %c0_107 = arith.constant 0 : index
    %c0_108 = arith.constant 0 : index
    %114 = vector.load %arg11[%c0_106, %c0_107, %c0_108] : memref<18x24x4xf32, #tpu.memory_space<vmem>>, vector<1x24x4xf32>
    tpu.vector_store %arg11[%c0_106, %c0_107, %c0_108], %113 {strides = array<i32>} : memref<18x24x4xf32, #tpu.memory_space<vmem>>, vector<1x24x4xf32>,
    %c15_109 = arith.constant 15 : index
    %c0_110 = arith.constant 0 : index
    %c0_111 = arith.constant 0 : index
    %115 = vector.load %arg11[%c15_109, %c0_110, %c0_111] : memref<18x24x4xf32, #tpu.memory_space<vmem>>, vector<1x24x4xf32>
    %c17_112 = arith.constant 17 : index
    %c0_113 = arith.constant 0 : index
    %c0_114 = arith.constant 0 : index
    %116 = vector.load %arg11[%c17_112, %c0_113, %c0_114] : memref<18x24x4xf32, #tpu.memory_space<vmem>>, vector<1x24x4xf32>
    tpu.vector_store %arg11[%c17_112, %c0_113, %c0_114], %115 {strides = array<i32>} : memref<18x24x4xf32, #tpu.memory_space<vmem>>, vector<1x24x4xf32>,
    %c0_115 = arith.constant 0 : index
    %c2_116 = arith.constant 2 : index
    %c0_117 = arith.constant 0 : index
    %117 = vector.load %arg11[%c0_115, %c2_116, %c0_117] : memref<18x24x4xf32, #tpu.memory_space<vmem>>, vector<18x1x4xf32>
    %c0_118 = arith.constant 0 : index
    %c0_119 = arith.constant 0 : index
    %c0_120 = arith.constant 0 : index
    %118 = vector.load %arg11[%c0_118, %c0_119, %c0_120] : memref<18x24x4xf32, #tpu.memory_space<vmem>>, vector<18x1x4xf32>
    tpu.vector_store %arg11[%c0_118, %c0_119, %c0_120], %117 {strides = array<i32>} : memref<18x24x4xf32, #tpu.memory_space<vmem>>, vector<18x1x4xf32>,
    %c0_121 = arith.constant 0 : index
    %c15_122 = arith.constant 15 : index
    %c0_123 = arith.constant 0 : index
    %119 = vector.load %arg11[%c0_121, %c15_122, %c0_123] : memref<18x24x4xf32, #tpu.memory_space<vmem>>, vector<18x1x4xf32>
    %c0_124 = arith.constant 0 : index
    %c17_125 = arith.constant 17 : index
    %c0_126 = arith.constant 0 : index
    %120 = vector.load %arg11[%c0_124, %c17_125, %c0_126] : memref<18x24x4xf32, #tpu.memory_space<vmem>>, vector<18x1x4xf32>
    tpu.vector_store %arg11[%c0_124, %c17_125, %c0_126], %119 {strides = array<i32>} : memref<18x24x4xf32, #tpu.memory_space<vmem>>, vector<18x1x4xf32>,
    %c0_127 = arith.constant 0 : index
    %c0_128 = arith.constant 0 : index
    %121 = vector.load %arg7[%c0_127, %c0_128] : memref<1x4xf32, #tpu.memory_space<vmem>>, vector<1x4xf32>
    %c0_129 = arith.constant 0 : index
    %c0_130 = arith.constant 0 : index
    %c0_131 = arith.constant 0 : index
    %122 = vector.load %arg11[%c0_129, %c0_130, %c0_131] : memref<18x24x4xf32, #tpu.memory_space<vmem>>, vector<16x24x4xf32>
    %123 = vector.shape_cast %122 : vector<16x24x4xf32> to vector<384x4xf32>
    %c0_132 = arith.constant 0 : index
    %c0_133 = arith.constant 0 : index
    %c0_134 = arith.constant 0 : index
    %124 = vector.load %arg6[%c0_132, %c0_133, %c0_134] : memref<9x4x4xf32, #tpu.memory_space<vmem>>, vector<1x4x4xf32>
    %125 = vector.shape_cast %124 : vector<1x4x4xf32> to vector<4x4xf32>
    %cst_135 = arith.constant dense<0.000000e+00> : vector<384x4xf32>
    %126 = tpu.matmul %123, %125, %cst_135 {dimension_numbers = #tpu.dot_dimension_numbers<[1], [0], [0], [1], [0, 0, 1, 1], [], []>} : vector<384x4xf32>, vector<4x4xf32>, vector<384x4xf32> -> vector<384x4xf32>
    %c1_136 = arith.constant 1 : index
    %c0_137 = arith.constant 0 : index
    %c0_138 = arith.constant 0 : index
    %127 = vector.load %arg11[%c1_136, %c0_137, %c0_138] : memref<18x24x4xf32, #tpu.memory_space<vmem>>, vector<16x24x4xf32>
    %128 = vector.shape_cast %127 : vector<16x24x4xf32> to vector<384x4xf32>
    %c3_139 = arith.constant 3 : index
    %c0_140 = arith.constant 0 : index
    %c0_141 = arith.constant 0 : index
    %129 = vector.load %arg6[%c3_139, %c0_140, %c0_141] : memref<9x4x4xf32, #tpu.memory_space<vmem>>, vector<1x4x4xf32>
    %130 = vector.shape_cast %129 : vector<1x4x4xf32> to vector<4x4xf32>
    %cst_142 = arith.constant dense<0.000000e+00> : vector<384x4xf32>
    %131 = tpu.matmul %128, %130, %cst_142 {dimension_numbers = #tpu.dot_dimension_numbers<[1], [0], [0], [1], [0, 0, 1, 1], [], []>} : vector<384x4xf32>, vector<4x4xf32>, vector<384x4xf32> -> vector<384x4xf32>
    %132 = arith.addf %126, %131 : vector<384x4xf32>
    %c2_143 = arith.constant 2 : index
    %c0_144 = arith.constant 0 : index
    %c0_145 = arith.constant 0 : index
    %133 = vector.load %arg11[%c2_143, %c0_144, %c0_145] : memref<18x24x4xf32, #tpu.memory_space<vmem>>, vector<16x24x4xf32>
    %134 = vector.shape_cast %133 : vector<16x24x4xf32> to vector<384x4xf32>
    %c6_146 = arith.constant 6 : index
    %c0_147 = arith.constant 0 : index
    %c0_148 = arith.constant 0 : index
    %135 = vector.load %arg6[%c6_146, %c0_147, %c0_148] : memref<9x4x4xf32, #tpu.memory_space<vmem>>, vector<1x4x4xf32>
    %136 = vector.shape_cast %135 : vector<1x4x4xf32> to vector<4x4xf32>
    %cst_149 = arith.constant dense<0.000000e+00> : vector<384x4xf32>
    %137 = tpu.matmul %134, %136, %cst_149 {dimension_numbers = #tpu.dot_dimension_numbers<[1], [0], [0], [1], [0, 0, 1, 1], [], []>} : vector<384x4xf32>, vector<4x4xf32>, vector<384x4xf32> -> vector<384x4xf32>
    %138 = arith.addf %132, %137 : vector<384x4xf32>
    %c1_i32_150 = arith.constant 1 : i32
    %139 = tpu.dynamic_rotate %138 by %c1_i32_150 dim 0 : vector<384x4xf32>, i32 -> vector<384x4xf32>
    %140 = vector.broadcast %121 : vector<1x4xf32> to vector<384x4xf32>
    %141 = arith.addf %139, %140 : vector<384x4xf32>
    %c0_151 = arith.constant 0 : index
    %c0_152 = arith.constant 0 : index
    %c0_153 = arith.constant 0 : index
    %142 = vector.load %arg11[%c0_151, %c0_152, %c0_153] : memref<18x24x4xf32, #tpu.memory_space<vmem>>, vector<16x24x4xf32>
    %143 = vector.shape_cast %142 : vector<16x24x4xf32> to vector<384x4xf32>
    %c1_154 = arith.constant 1 : index
    %c0_155 = arith.constant 0 : index
    %c0_156 = arith.constant 0 : index
    %144 = vector.load %arg6[%c1_154, %c0_155, %c0_156] : memref<9x4x4xf32, #tpu.memory_space<vmem>>, vector<1x4x4xf32>
    %145 = vector.shape_cast %144 : vector<1x4x4xf32> to vector<4x4xf32>
    %cst_157 = arith.constant dense<0.000000e+00> : vector<384x4xf32>
    %146 = tpu.matmul %143, %145, %cst_157 {dimension_numbers = #tpu.dot_dimension_numbers<[1], [0], [0], [1], [0, 0, 1, 1], [], []>} : vector<384x4xf32>, vector<4x4xf32>, vector<384x4xf32> -> vector<384x4xf32>
    %c1_158 = arith.constant 1 : index
    %c0_159 = arith.constant 0 : index
    %c0_160 = arith.constant 0 : index
    %147 = vector.load %arg11[%c1_158, %c0_159, %c0_160] : memref<18x24x4xf32, #tpu.memory_space<vmem>>, vector<16x24x4xf32>
    %148 = vector.shape_cast %147 : vector<16x24x4xf32> to vector<384x4xf32>
    %c4_161 = arith.constant 4 : index
    %c0_162 = arith.constant 0 : index
    %c0_163 = arith.constant 0 : index
    %149 = vector.load %arg6[%c4_161, %c0_162, %c0_163] : memref<9x4x4xf32, #tpu.memory_space<vmem>>, vector<1x4x4xf32>
    %150 = vector.shape_cast %149 : vector<1x4x4xf32> to vector<4x4xf32>
    %cst_164 = arith.constant dense<0.000000e+00> : vector<384x4xf32>
    %151 = tpu.matmul %148, %150, %cst_164 {dimension_numbers = #tpu.dot_dimension_numbers<[1], [0], [0], [1], [0, 0, 1, 1], [], []>} : vector<384x4xf32>, vector<4x4xf32>, vector<384x4xf32> -> vector<384x4xf32>
    %152 = arith.addf %146, %151 : vector<384x4xf32>
    %c2_165 = arith.constant 2 : index
    %c0_166 = arith.constant 0 : index
    %c0_167 = arith.constant 0 : index
    %153 = vector.load %arg11[%c2_165, %c0_166, %c0_167] : memref<18x24x4xf32, #tpu.memory_space<vmem>>, vector<16x24x4xf32>
    %154 = vector.shape_cast %153 : vector<16x24x4xf32> to vector<384x4xf32>
    %c7_168 = arith.constant 7 : index
    %c0_169 = arith.constant 0 : index
    %c0_170 = arith.constant 0 : index
    %155 = vector.load %arg6[%c7_168, %c0_169, %c0_170] : memref<9x4x4xf32, #tpu.memory_space<vmem>>, vector<1x4x4xf32>
    %156 = vector.shape_cast %155 : vector<1x4x4xf32> to vector<4x4xf32>
    %cst_171 = arith.constant dense<0.000000e+00> : vector<384x4xf32>
    %157 = tpu.matmul %154, %156, %cst_171 {dimension_numbers = #tpu.dot_dimension_numbers<[1], [0], [0], [1], [0, 0, 1, 1], [], []>} : vector<384x4xf32>, vector<4x4xf32>, vector<384x4xf32> -> vector<384x4xf32>
    %158 = arith.addf %152, %157 : vector<384x4xf32>
    %159 = arith.addf %141, %158 : vector<384x4xf32>
    %c0_172 = arith.constant 0 : index
    %c0_173 = arith.constant 0 : index
    %c0_174 = arith.constant 0 : index
    %160 = vector.load %arg11[%c0_172, %c0_173, %c0_174] : memref<18x24x4xf32, #tpu.memory_space<vmem>>, vector<16x24x4xf32>
    %161 = vector.shape_cast %160 : vector<16x24x4xf32> to vector<384x4xf32>
    %c2_175 = arith.constant 2 : index
    %c0_176 = arith.constant 0 : index
    %c0_177 = arith.constant 0 : index
    %162 = vector.load %arg6[%c2_175, %c0_176, %c0_177] : memref<9x4x4xf32, #tpu.memory_space<vmem>>, vector<1x4x4xf32>
    %163 = vector.shape_cast %162 : vector<1x4x4xf32> to vector<4x4xf32>
    %cst_178 = arith.constant dense<0.000000e+00> : vector<384x4xf32>
    %164 = tpu.matmul %161, %163, %cst_178 {dimension_numbers = #tpu.dot_dimension_numbers<[1], [0], [0], [1], [0, 0, 1, 1], [], []>} : vector<384x4xf32>, vector<4x4xf32>, vector<384x4xf32> -> vector<384x4xf32>
    %c1_179 = arith.constant 1 : index
    %c0_180 = arith.constant 0 : index
    %c0_181 = arith.constant 0 : index
    %165 = vector.load %arg11[%c1_179, %c0_180, %c0_181] : memref<18x24x4xf32, #tpu.memory_space<vmem>>, vector<16x24x4xf32>
    %166 = vector.shape_cast %165 : vector<16x24x4xf32> to vector<384x4xf32>
    %c5_182 = arith.constant 5 : index
    %c0_183 = arith.constant 0 : index
    %c0_184 = arith.constant 0 : index
    %167 = vector.load %arg6[%c5_182, %c0_183, %c0_184] : memref<9x4x4xf32, #tpu.memory_space<vmem>>, vector<1x4x4xf32>
    %168 = vector.shape_cast %167 : vector<1x4x4xf32> to vector<4x4xf32>
    %cst_185 = arith.constant dense<0.000000e+00> : vector<384x4xf32>
    %169 = tpu.matmul %166, %168, %cst_185 {dimension_numbers = #tpu.dot_dimension_numbers<[1], [0], [0], [1], [0, 0, 1, 1], [], []>} : vector<384x4xf32>, vector<4x4xf32>, vector<384x4xf32> -> vector<384x4xf32>
    %170 = arith.addf %164, %169 : vector<384x4xf32>
    %c2_186 = arith.constant 2 : index
    %c0_187 = arith.constant 0 : index
    %c0_188 = arith.constant 0 : index
    %171 = vector.load %arg11[%c2_186, %c0_187, %c0_188] : memref<18x24x4xf32, #tpu.memory_space<vmem>>, vector<16x24x4xf32>
    %172 = vector.shape_cast %171 : vector<16x24x4xf32> to vector<384x4xf32>
    %c8_189 = arith.constant 8 : index
    %c0_190 = arith.constant 0 : index
    %c0_191 = arith.constant 0 : index
    %173 = vector.load %arg6[%c8_189, %c0_190, %c0_191] : memref<9x4x4xf32, #tpu.memory_space<vmem>>, vector<1x4x4xf32>
    %174 = vector.shape_cast %173 : vector<1x4x4xf32> to vector<4x4xf32>
    %cst_192 = arith.constant dense<0.000000e+00> : vector<384x4xf32>
    %175 = tpu.matmul %172, %174, %cst_192 {dimension_numbers = #tpu.dot_dimension_numbers<[1], [0], [0], [1], [0, 0, 1, 1], [], []>} : vector<384x4xf32>, vector<4x4xf32>, vector<384x4xf32> -> vector<384x4xf32>
    %176 = arith.addf %170, %175 : vector<384x4xf32>
    %c383_i32_193 = arith.constant 383 : i32
    %177 = tpu.dynamic_rotate %176 by %c383_i32_193 dim 0 : vector<384x4xf32>, i32 -> vector<384x4xf32>
    %178 = arith.addf %159, %177 : vector<384x4xf32>
    %179 = vector.shape_cast %178 : vector<384x4xf32> to vector<16x24x4xf32>
    %c0_194 = arith.constant 0 : index
    %c0_195 = arith.constant 0 : index
    %180 = vector.load %arg8[%c0_194, %c0_195] : memref<1x4xf32, #tpu.memory_space<vmem>>, vector<1x4xf32>
    %c0_196 = arith.constant 0 : index
    %c0_197 = arith.constant 0 : index
    %181 = vector.load %arg9[%c0_196, %c0_197] : memref<1x4xf32, #tpu.memory_space<vmem>>, vector<1x4xf32>
    %cst_198 = arith.constant 0.000000e+00 : f32
    %182 = vector.shape_cast %7 : vector<1x24x4xi1> to vector<1x24x4xi1>
    %183 = vector.broadcast %182 : vector<1x24x4xi1> to vector<16x24x4xi1>
    %184 = vector.broadcast %cst_198 : f32 to vector<16x24x4xf32>
    %185 = arith.select %183, %179, %184 : vector<16x24x4xi1>, vector<16x24x4xf32>
    %cst_199 = arith.constant dense<0.000000e+00> : vector<4xf32>
    %186 = vector.multi_reduction <add>, %185, %cst_199 [0, 1] : vector<16x24x4xf32> to vector<4xf32>
    %187 = vector.shape_cast %186 : vector<4xf32> to vector<1x1x4xf32>
    %cst_200 = arith.constant 3.906250e-03 : f32
    %188 = vector.broadcast %cst_200 : f32 to vector<1x1x4xf32>
    %189 = arith.mulf %187, %188 : vector<1x1x4xf32>
    %190 = vector.broadcast %189 : vector<1x1x4xf32> to vector<16x24x4xf32>
    %191 = arith.subf %179, %190 : vector<16x24x4xf32>
    %192 = arith.mulf %191, %191 : vector<16x24x4xf32>
    %cst_201 = arith.constant 0.000000e+00 : f32
    %193 = vector.shape_cast %7 : vector<1x24x4xi1> to vector<1x24x4xi1>
    %194 = vector.broadcast %193 : vector<1x24x4xi1> to vector<16x24x4xi1>
    %195 = vector.broadcast %cst_201 : f32 to vector<16x24x4xf32>
    %196 = arith.select %194, %192, %195 : vector<16x24x4xi1>, vector<16x24x4xf32>
    %cst_202 = arith.constant dense<0.000000e+00> : vector<4xf32>
    %197 = vector.multi_reduction <add>, %196, %cst_202 [0, 1] : vector<16x24x4xf32> to vector<4xf32>
    %198 = vector.shape_cast %197 : vector<4xf32> to vector<1x1x4xf32>
    %cst_203 = arith.constant 3.906250e-03 : f32
    %199 = vector.broadcast %cst_203 : f32 to vector<1x1x4xf32>
    %200 = arith.mulf %198, %199 : vector<1x1x4xf32>
    %cst_204 = arith.constant 9.99999974E-6 : f32
    %201 = vector.broadcast %cst_204 : f32 to vector<1x1x4xf32>
    %202 = arith.addf %200, %201 : vector<1x1x4xf32>
    %203 = math.rsqrt %202 : vector<1x1x4xf32>
    %204 = vector.broadcast %203 : vector<1x1x4xf32> to vector<16x24x4xf32>
    %205 = arith.mulf %191, %204 : vector<16x24x4xf32>
    %206 = vector.shape_cast %180 : vector<1x4xf32> to vector<1x1x4xf32>
    %207 = vector.broadcast %206 : vector<1x1x4xf32> to vector<16x24x4xf32>
    %208 = arith.mulf %205, %207 : vector<16x24x4xf32>
    %209 = vector.shape_cast %181 : vector<1x4xf32> to vector<1x1x4xf32>
    %210 = vector.broadcast %209 : vector<1x1x4xf32> to vector<16x24x4xf32>
    %211 = arith.addf %208, %210 : vector<16x24x4xf32>
    %212 = vector.extract_strided_slice %211 {offsets = [0, 1, 0], sizes = [16, 16, 4], strides = [1, 1, 1]} : vector<16x24x4xf32> to vector<16x16x4xf32>
    %c0_205 = arith.constant 0 : index
    %c0_206 = arith.constant 0 : index
    %c0_207 = arith.constant 0 : index
    %c0_208 = arith.constant 0 : index
    %213 = vector.load %arg1[%c0_205, %c0_206, %c0_207, %c0_208] : memref<1x16x16x4xf32, #tpu.memory_space<vmem>>, vector<1x16x16x4xf32>
    %214 = vector.shape_cast %213 : vector<1x16x16x4xf32> to vector<16x16x4xf32>
    %cst_209 = arith.constant 2.000000e+00 : f32
    %215 = vector.broadcast %cst_209 : f32 to vector<16x16x4xf32>
    %216 = arith.mulf %215, %214 : vector<16x16x4xf32>
    %217 = arith.addf %212, %216 : vector<16x16x4xf32>
    %c0_210 = arith.constant 0 : index
    %c0_211 = arith.constant 0 : index
    %c0_212 = arith.constant 0 : index
    %c0_213 = arith.constant 0 : index
    %218 = vector.load %arg10[%c0_210, %c0_211, %c0_212, %c0_213] : memref<1x16x16x4xf32, #tpu.memory_space<vmem>>, vector<1x16x16x4xf32>
    %219 = vector.shape_cast %218 : vector<1x16x16x4xf32> to vector<16x16x4xf32>
    %220 = vector.shape_cast %217 : vector<16x16x4xf32> to vector<1x16x16x4xf32>
    tpu.vector_store %arg10[%c0_210, %c0_211, %c0_212, %c0_213], %220 {strides = array<i32>} : memref<1x16x16x4xf32, #tpu.memory_space<vmem>>, vector<1x16x16x4xf32>,
    return
  }
  func.func @transform_0(%arg0: i32) -> (i32, i32, i32, i32) {
    %c0_i32 = arith.constant 0 : i32
    %c0_i32_0 = arith.constant 0 : i32
    %c0_i32_1 = arith.constant 0 : i32
    %c0_i32_2 = arith.constant 0 : i32
    return %arg0, %c0_i32, %c0_i32_0, %c0_i32_1 : i32, i32, i32, i32
  }
  func.func @transform_1(%arg0: i32) -> (i32, i32, i32) {
    %c0_i32 = arith.constant 0 : i32
    %c0_i32_0 = arith.constant 0 : i32
    %c0_i32_1 = arith.constant 0 : i32
    %c0_i32_2 = arith.constant 0 : i32
    return %c0_i32, %c0_i32_0, %c0_i32_1 : i32, i32, i32
  }
  func.func @transform_2(%arg0: i32) -> (i32, i32) {
    %c0_i32 = arith.constant 0 : i32
    %c0_i32_0 = arith.constant 0 : i32
    %c0_i32_1 = arith.constant 0 : i32
    return %c0_i32, %c0_i32_0 : i32, i32
  }
  func.func @transform_3(%arg0: i32) -> (i32, i32) {
    %c0_i32 = arith.constant 0 : i32
    %c0_i32_0 = arith.constant 0 : i32
    %c0_i32_1 = arith.constant 0 : i32
    return %c0_i32, %c0_i32_0 : i32, i32
  }
  func.func @transform_4(%arg0: i32) -> (i32, i32) {
    %c0_i32 = arith.constant 0 : i32
    %c0_i32_0 = arith.constant 0 : i32
    %c0_i32_1 = arith.constant 0 : i32
    return %c0_i32, %c0_i32_0 : i32, i32
  }
  func.func @transform_5(%arg0: i32) -> (i32, i32, i32) {
    %c0_i32 = arith.constant 0 : i32
    %c0_i32_0 = arith.constant 0 : i32
    %c0_i32_1 = arith.constant 0 : i32
    %c0_i32_2 = arith.constant 0 : i32
    return %c0_i32, %c0_i32_0, %c0_i32_1 : i32, i32, i32
  }
  func.func @transform_6(%arg0: i32) -> (i32, i32) {
    %c0_i32 = arith.constant 0 : i32
    %c0_i32_0 = arith.constant 0 : i32
    %c0_i32_1 = arith.constant 0 : i32
    return %c0_i32, %c0_i32_0 : i32, i32
  }
  func.func @transform_7(%arg0: i32) -> (i32, i32) {
    %c0_i32 = arith.constant 0 : i32
    %c0_i32_0 = arith.constant 0 : i32
    %c0_i32_1 = arith.constant 0 : i32
    return %c0_i32, %c0_i32_0 : i32, i32
  }
  func.func @transform_8(%arg0: i32) -> (i32, i32) {
    %c0_i32 = arith.constant 0 : i32
    %c0_i32_0 = arith.constant 0 : i32
    %c0_i32_1 = arith.constant 0 : i32
    return %c0_i32, %c0_i32_0 : i32, i32
  }
  func.func @transform_9(%arg0: i32) -> (i32, i32, i32, i32) {
    %c0_i32 = arith.constant 0 : i32
    %c0_i32_0 = arith.constant 0 : i32
    %c0_i32_1 = arith.constant 0 : i32
    %c0_i32_2 = arith.constant 0 : i32
    return %arg0, %c0_i32, %c0_i32_0, %c0_i32_1 : i32, i32, i32, i32
  }
}

</mosaic_0001>

<llo_original>
// kernel: tpu_custom_call.1
$region0: #{tpu_custom_call.1}
  #allocation0 [shape = 'u32[]', space=smem, size = 0x4, offset = 0x4, fixed_abs, tag = 'smem constant byte address 0x4 - core index']
  #allocation1 [shape = 'u32[72,128]{1,0:T(1,128)}', space=vmem, size = 0x9000, scoped, tag = 'internal scratch']
  #allocation2 [shape = 'f32[18,24,4]{2,1,0:T(8,128)}', space=vmem, size = 0x36000, scoped, tag = 'scratch operand']
  %s0 = inlined_call_operand.vmem [shape: f32[2,16,16,4], index: 0, kind: input, shape index: {}]
  %s1 = inlined_call_operand.vmem [shape: f32[9,4,4], index: 1, kind: input, shape index: {}]
  %s2 = inlined_call_operand.vmem [shape: f32[1,4], index: 2, kind: input, shape index: {}]
  %s3 = inlined_call_operand.vmem [shape: f32[1,4], index: 3, kind: input, shape index: {}]
  %s4 = inlined_call_operand.vmem [shape: f32[1,4], index: 4, kind: input, shape index: {}]
  %s5 = inlined_call_operand.vmem [shape: f32[9,4,4], index: 5, kind: input, shape index: {}]
  %s6 = inlined_call_operand.vmem [shape: f32[1,4], index: 6, kind: input, shape index: {}]
  %s7 = inlined_call_operand.vmem [shape: f32[1,4], index: 7, kind: input, shape index: {}]
  %s8 = inlined_call_operand.vmem [shape: f32[1,4], index: 8, kind: input, shape index: {}]
  %s9 = inlined_call_operand.vmem [shape: f32[2,16,16,4], index: 9, kind: output, shape index: {}]
  %s10 = sld [smem:[#allocation0]]
  $region69: #{tpu_custom_call.1} parent=0
    _
  %s12 = ssub.s32 1, %s10
  %s13 = scalar_select 0, %s12, %s10
  loop: start=0, step=1, limit=4
  $region2: #{tpu_custom_call.1} parent=0 // loop_pre_header
    _
  $region3: #{tpu_custom_call.1} parent=0 // loop_header
    %s15 = sphi 0, %s19
    %p16 = scmp.ge.s32.totalorder %s15, 4
    %s25 = sphi 0, %s27
    %s28 = sphi 0, %s25
    %s29 = sphi 0, %s28
    %s45 = sphi 0, %s29
    %s49 = sphi 0, %s49
    %s51 = sphi 0, %s49
    %s52 = sphi 0, %s51
    %s66 = sphi 0, %s52
    %s70 = sphi 0, %s70
    %s72 = sphi 0, %s70
    %s73 = sphi 0, %s72
    %s87 = sphi 0, %s73
    %s91 = sphi 0, %s91
    %s93 = sphi 0, %s91
    %s94 = sphi 0, %s93
    %s108 = sphi 0, %s94
    %s112 = sphi 0, %s112
    %s114 = sphi 0, %s112
    %s115 = sphi 0, %s114
    %s129 = sphi 0, %s115
    %s133 = sphi 0, %s133
    %s135 = sphi 0, %s133
    %s136 = sphi 0, %s135
    %s150 = sphi 0, %s136
    %s154 = sphi 0, %s154
    %s156 = sphi 0, %s154
    %s157 = sphi 0, %s156
    %s171 = sphi 0, %s157
    %s175 = sphi 0, %s175
    %s177 = sphi 0, %s175
    %s178 = sphi 0, %s177
    %s192 = sphi 0, %s178
    %s196 = sphi 0, %s196
    %s198 = sphi 0, %s196
    %s199 = sphi 0, %s198
    %s213 = sphi 0, %s199
    %s219 = sphi 0, %s221
    %s222 = sphi 0, %s219
    %s223 = sphi 0, %s222
    %s239 = sphi 0, %s223
  $region4: #{tpu_custom_call.1} parent=0 // loop_header_branch
    %18 = sbr.rel (%p16) target = $region8
  $region5: #{tpu_custom_call.1} parent=0 // loop_body
    %s20 = ssub.s32 %s15, 1
    %s21 = ssub.s32 %s15, 2
    %s22 = sadd.s32 %s15, 1
    %s23 = ssub.s32 %s15, %s22
    %p24 = scmp.eq.s32.totalorder %s23, 0
    %s26 = sadd.s32 %s25, 1
    %s27 = scalar_select %p24, %s25, %s26
    %p30 = pneg %p24
    %p31 = scmp.eq.s32.totalorder %s15, 1
    %p32 = por %p30, %p31
    %p33 = scmp.ne.s32.totalorder %s25, %s28
    %p34 = scmp.eq.s32.totalorder %s15, 0
    %p35 = por %p33, %p34
    %p36 = scmp.ne.s32.totalorder %s25, %s28
    %p37 = scmp.eq.s32.totalorder %s20, 1
    %p38 = por %p36, %p37
    %p39 = scmp.ne.s32.totalorder %s28, %s29
    %p40 = scmp.eq.s32.totalorder %s20, 0
    %p41 = por %p39, %p40
    %p42 = scmp.ne.s32.totalorder %s28, %s29
    %p43 = scmp.eq.s32.totalorder %s21, 1
    %p44 = por %p42, %p43
    %p46 = scmp.ne.s32.totalorder %s29, %s45
    %p47 = scmp.eq.s32.totalorder %s21, 0
    %p48 = por %p46, %p47
    %s50 = sadd.s32 %s49, 1
    %p53 = scmp.eq.s32.totalorder %s15, 1
    %p54 = scmp.ne.s32.totalorder %s49, %s51
    %p55 = scmp.eq.s32.totalorder %s15, 0
    %p56 = por %p54, %p55
    %p57 = scmp.ne.s32.totalorder %s49, %s51
    %p58 = scmp.eq.s32.totalorder %s20, 1
    %p59 = por %p57, %p58
    %p60 = scmp.ne.s32.totalorder %s51, %s52
    %p61 = scmp.eq.s32.totalorder %s20, 0
    %p62 = por %p60, %p61
    %p63 = scmp.ne.s32.totalorder %s51, %s52
    %p64 = scmp.eq.s32.totalorder %s21, 1
    %p65 = por %p63, %p64
    %p67 = scmp.ne.s32.totalorder %s52, %s66
    %p68 = scmp.eq.s32.totalorder %s21, 0
    %p69 = por %p67, %p68
    %s71 = sadd.s32 %s70, 1
    %p74 = scmp.eq.s32.totalorder %s15, 1
    %p75 = scmp.ne.s32.totalorder %s70, %s72
    %p76 = scmp.eq.s32.totalorder %s15, 0
    %p77 = por %p75, %p76
    %p78 = scmp.ne.s32.totalorder %s70, %s72
    %p79 = scmp.eq.s32.totalorder %s20, 1
    %p80 = por %p78, %p79
    %p81 = scmp.ne.s32.totalorder %s72, %s73
    %p82 = scmp.eq.s32.totalorder %s20, 0
    %p83 = por %p81, %p82
    %p84 = scmp.ne.s32.totalorder %s72, %s73
    %p85 = scmp.eq.s32.totalorder %s21, 1
    %p86 = por %p84, %p85
    %p88 = scmp.ne.s32.totalorder %s73, %s87
    %p89 = scmp.eq.s32.totalorder %s21, 0
    %p90 = por %p88, %p89
    %s92 = sadd.s32 %s91, 1
    %p95 = scmp.eq.s32.totalorder %s15, 1
    %p96 = scmp.ne.s32.totalorder %s91, %s93
    %p97 = scmp.eq.s32.totalorder %s15, 0
    %p98 = por %p96, %p97
    %p99 = scmp.ne.s32.totalorder %s91, %s93
    %p100 = scmp.eq.s32.totalorder %s20, 1
    %p101 = por %p99, %p100
    %p102 = scmp.ne.s32.totalorder %s93, %s94
    %p103 = scmp.eq.s32.totalorder %s20, 0
    %p104 = por %p102, %p103
    %p105 = scmp.ne.s32.totalorder %s93, %s94
    %p106 = scmp.eq.s32.totalorder %s21, 1
    %p107 = por %p105, %p106
    %p109 = scmp.ne.s32.totalorder %s94, %s108
    %p110 = scmp.eq.s32.totalorder %s21, 0
    %p111 = por %p109, %p110
    %s113 = sadd.s32 %s112, 1
    %p116 = scmp.eq.s32.totalorder %s15, 1
    %p117 = scmp.ne.s32.totalorder %s112, %s114
    %p118 = scmp.eq.s32.totalorder %s15, 0
    %p119 = por %p117, %p118
    %p120 = scmp.ne.s32.totalorder %s112, %s114
    %p121 = scmp.eq.s32.totalorder %s20, 1
    %p122 = por %p120, %p121
    %p123 = scmp.ne.s32.totalorder %s114, %s115
    %p124 = scmp.eq.s32.totalorder %s20, 0
    %p125 = por %p123, %p124
    %p126 = scmp.ne.s32.totalorder %s114, %s115
    %p127 = scmp.eq.s32.totalorder %s21, 1
    %p128 = por %p126, %p127
    %p130 = scmp.ne.s32.totalorder %s115, %s129
    %p131 = scmp.eq.s32.totalorder %s21, 0
    %p132 = por %p130, %p131
    %s134 = sadd.s32 %s133, 1
    %p137 = scmp.eq.s32.totalorder %s15, 1
    %p138 = scmp.ne.s32.totalorder %s133, %s135
    %p139 = scmp.eq.s32.totalorder %s15, 0
    %p140 = por %p138, %p139
    %p141 = scmp.ne.s32.totalorder %s133, %s135
    %p142 = scmp.eq.s32.totalorder %s20, 1
    %p143 = por %p141, %p142
    %p144 = scmp.ne.s32.totalorder %s135, %s136
    %p145 = scmp.eq.s32.totalorder %s20, 0
    %p146 = por %p144, %p145
    %p147 = scmp.ne.s32.totalorder %s135, %s136
    %p148 = scmp.eq.s32.totalorder %s21, 1
    %p149 = por %p147, %p148
    %p151 = scmp.ne.s32.totalorder %s136, %s150
    %p152 = scmp.eq.s32.totalorder %s21, 0
    %p153 = por %p151, %p152
    %s155 = sadd.s32 %s154, 1
    %p158 = scmp.eq.s32.totalorder %s15, 1
    %p159 = scmp.ne.s32.totalorder %s154, %s156
    %p160 = scmp.eq.s32.totalorder %s15, 0
    %p161 = por %p159, %p160
    %p162 = scmp.ne.s32.totalorder %s154, %s156
    %p163 = scmp.eq.s32.totalorder %s20, 1
    %p164 = por %p162, %p163
    %p165 = scmp.ne.s32.totalorder %s156, %s157
    %p166 = scmp.eq.s32.totalorder %s20, 0
    %p167 = por %p165, %p166
    %p168 = scmp.ne.s32.totalorder %s156, %s157
    %p169 = scmp.eq.s32.totalorder %s21, 1
    %p170 = por %p168, %p169
    %p172 = scmp.ne.s32.totalorder %s157, %s171
    %p173 = scmp.eq.s32.totalorder %s21, 0
    %p174 = por %p172, %p173
    %s176 = sadd.s32 %s175, 1
    %p179 = scmp.eq.s32.totalorder %s15, 1
    %p180 = scmp.ne.s32.totalorder %s175, %s177
    %p181 = scmp.eq.s32.totalorder %s15, 0
    %p182 = por %p180, %p181
    %p183 = scmp.ne.s32.totalorder %s175, %s177
    %p184 = scmp.eq.s32.totalorder %s20, 1
    %p185 = por %p183, %p184
    %p186 = scmp.ne.s32.totalorder %s177, %s178
    %p187 = scmp.eq.s32.totalorder %s20, 0
    %p188 = por %p186, %p187
    %p189 = scmp.ne.s32.totalorder %s177, %s178
    %p190 = scmp.eq.s32.totalorder %s21, 1
    %p191 = por %p189, %p190
    %p193 = scmp.ne.s32.totalorder %s178, %s192
    %p194 = scmp.eq.s32.totalorder %s21, 0
    %p195 = por %p193, %p194
    %s197 = sadd.s32 %s196, 1
    %p200 = scmp.eq.s32.totalorder %s15, 1
    %p201 = scmp.ne.s32.totalorder %s196, %s198
    %p202 = scmp.eq.s32.totalorder %s15, 0
    %p203 = por %p201, %p202
    %p204 = scmp.ne.s32.totalorder %s196, %s198
    %p205 = scmp.eq.s32.totalorder %s20, 1
    %p206 = por %p204, %p205
    %p207 = scmp.ne.s32.totalorder %s198, %s199
    %p208 = scmp.eq.s32.totalorder %s20, 0
    %p209 = por %p207, %p208
    %p210 = scmp.ne.s32.totalorder %s198, %s199
    %p211 = scmp.eq.s32.totalorder %s21, 1
    %p212 = por %p210, %p211
    %p214 = scmp.ne.s32.totalorder %s199, %s213
    %p215 = scmp.eq.s32.totalorder %s21, 0
    %p216 = por %p214, %p215
    %s217 = ssub.s32 %s15, %s22
    %p218 = scmp.eq.s32.totalorder %s217, 0
    %s220 = sadd.s32 %s219, 1
    %s221 = scalar_select %p218, %s219, %s220
    %p224 = pneg %p218
    %p225 = scmp.eq.s32.totalorder %s15, 1
    %p226 = por %p224, %p225
    %p227 = scmp.ne.s32.totalorder %s219, %s222
    %p228 = scmp.eq.s32.totalorder %s15, 0
    %p229 = por %p227, %p228
    %p230 = scmp.ne.s32.totalorder %s219, %s222
    %p231 = scmp.eq.s32.totalorder %s20, 1
    %p232 = por %p230, %p231
    %p233 = scmp.ne.s32.totalorder %s222, %s223
    %p234 = scmp.eq.s32.totalorder %s20, 0
    %p235 = por %p233, %p234
    %p236 = scmp.ne.s32.totalorder %s222, %s223
    %p237 = scmp.eq.s32.totalorder %s21, 1
    %p238 = por %p236, %p237
    %p240 = scmp.ne.s32.totalorder %s223, %s239
    %p241 = scmp.eq.s32.totalorder %s21, 0
    %p242 = por %p240, %p241
    %p243 = scmp.le.s32.totalorder 1, %s15
    %p244 = scmp.lt.s32.totalorder %s15, 3
    %p245 = pnand %p243, %p244
    %p246 = pneg %p245
    // Predicated region
    $region9: #{tpu_custom_call.1} parent=5 // pred_check
      _
    $region10: #{tpu_custom_call.1} parent=5 // pred_check_branch
      %248 = sbr.rel (%p245) target = $region12
    $region11: #{tpu_custom_call.1} parent=5 // pred_region
      %s249 = ssub.s32 %s15, 1
      // Predicated region
      $region13: #{tpu_custom_call.1} parent=11 // pred_check
        %p250 = pneg %p62
      $region14: #{tpu_custom_call.1} parent=11 // pred_check_branch
        %252 = sbr.rel (%p250) target = $region16
      $region15: #{tpu_custom_call.1} parent=11 // pred_region
        _
      $region16: #{tpu_custom_call.1} parent=11 // pred_fallthru
        _
      // Predicated region
      $region17: #{tpu_custom_call.1} parent=11 // pred_check
        %p253 = pneg %p83
      $region18: #{tpu_custom_call.1} parent=11 // pred_check_branch
        %255 = sbr.rel (%p253) target = $region20
      $region19: #{tpu_custom_call.1} parent=11 // pred_region
        _
      $region20: #{tpu_custom_call.1} parent=11 // pred_fallthru
        _
      // Predicated region
      $region21: #{tpu_custom_call.1} parent=11 // pred_check
        %p256 = pneg %p104
      $region22: #{tpu_custom_call.1} parent=11 // pred_check_branch
        %258 = sbr.rel (%p256) target = $region24
      $region23: #{tpu_custom_call.1} parent=11 // pred_region
        _
      $region24: #{tpu_custom_call.1} parent=11 // pred_fallthru
        _
      // Predicated region
      $region25: #{tpu_custom_call.1} parent=11 // pred_check
        %p259 = pneg %p125
      $region26: #{tpu_custom_call.1} parent=11 // pred_check_branch
        %261 = sbr.rel (%p259) target = $region28
      $region27: #{tpu_custom_call.1} parent=11 // pred_region
        _
      $region28: #{tpu_custom_call.1} parent=11 // pred_fallthru
        _
      // Predicated region
      $region29: #{tpu_custom_call.1} parent=11 // pred_check
        %p262 = pneg %p146
      $region30: #{tpu_custom_call.1} parent=11 // pred_check_branch
        %264 = sbr.rel (%p262) target = $region32
      $region31: #{tpu_custom_call.1} parent=11 // pred_region
        _
      $region32: #{tpu_custom_call.1} parent=11 // pred_fallthru
        _
      // Predicated region
      $region33: #{tpu_custom_call.1} parent=11 // pred_check
        %p265 = pneg %p167
      $region34: #{tpu_custom_call.1} parent=11 // pred_check_branch
        %267 = sbr.rel (%p265) target = $region36
      $region35: #{tpu_custom_call.1} parent=11 // pred_region
        _
      $region36: #{tpu_custom_call.1} parent=11 // pred_fallthru
        _
      // Predicated region
      $region37: #{tpu_custom_call.1} parent=11 // pred_check
        %p268 = pneg %p188
      $region38: #{tpu_custom_call.1} parent=11 // pred_check_branch
        %270 = sbr.rel (%p268) target = $region40
      $region39: #{tpu_custom_call.1} parent=11 // pred_region
        _
      $region40: #{tpu_custom_call.1} parent=11 // pred_fallthru
        _
      // Predicated region
      $region41: #{tpu_custom_call.1} parent=11 // pred_check
        %p271 = pneg %p209
      $region42: #{tpu_custom_call.1} parent=11 // pred_check_branch
        %273 = sbr.rel (%p271) target = $region44
      $region43: #{tpu_custom_call.1} parent=11 // pred_region
        _
      $region44: #{tpu_custom_call.1} parent=11 // pred_fallthru
        _
    $region12: #{tpu_custom_call.1} parent=5 // pred_fallthru
      _
    %p274 = scmp.lt.s32.totalorder %s15, 2
    // Predicated region
    $region45: #{tpu_custom_call.1} parent=5 // pred_check
      %p275 = pneg %p274
    $region46: #{tpu_custom_call.1} parent=5 // pred_check_branch
      %277 = sbr.rel (%p275) target = $region48
    $region47: #{tpu_custom_call.1} parent=5 // pred_region
      // Predicated region
      $region49: #{tpu_custom_call.1} parent=47 // pred_check
        %p278 = pneg %p35
      $region50: #{tpu_custom_call.1} parent=47 // pred_check_branch
        %280 = sbr.rel (%p278) target = $region52
      $region51: #{tpu_custom_call.1} parent=47 // pred_region
        %p281 = scmp.lt.s32.totalorder %s15, 1
        %s282 = scalar_select %p281, %s15, 1
        %s283 = smul.addr %s282, 32
        %s284 = smul.addr %s283, 8
        %s285 = scalar_lea.vmem %s0, %s284
      $region52: #{tpu_custom_call.1} parent=47 // pred_fallthru
        _
    $region48: #{tpu_custom_call.1} parent=5 // pred_fallthru
      _
    %p286 = scmp.le.s32.totalorder 1, %s15
    %p287 = scmp.lt.s32.totalorder %s15, 3
    %p288 = pnand %p286, %p287
    %p289 = pneg %p288
    // Predicated region
    $region53: #{tpu_custom_call.1} parent=5 // pred_check
      _
    $region54: #{tpu_custom_call.1} parent=5 // pred_check_branch
      %291 = sbr.rel (%p288) target = $region56
    $region55: #{tpu_custom_call.1} parent=5 // pred_region
      %s292 = ssub.s32 %s15, 1
      %p293 = scmp.lt.s32.totalorder %s20, 1
      %s294 = scalar_select %p293, %s20, 1
      %s295 = smul.addr %s294, 32
      %s296 = smul.addr %s295, 8
      %s297 = scalar_lea.vmem %s0, %s296
      %p298 = pneg %p41
      %p299 = pneg %p38
      %p300 = pneg %p62
      %p301 = pneg %p59
      %p302 = pneg %p83
      %p303 = pneg %p80
      %p304 = pneg %p104
      %p305 = pneg %p101
      %p306 = pneg %p125
      %p307 = pneg %p122
      %p308 = pneg %p146
      %p309 = pneg %p143
      %p310 = pneg %p167
      %p311 = pneg %p164
      %p312 = pneg %p188
      %p313 = pneg %p185
      %p314 = pneg %p209
      %p315 = pneg %p206
      %p316 = pneg %p235
      %p317 = pneg %p232
      %p318 = scmp.lt.s32.totalorder %s20, 1
      %s319 = scalar_select %p318, %s20, 1
      %s320 = smul.addr %s319, 32
      %s321 = smul.addr %s320, 8
      %s322 = scalar_lea.vmem %s9, %s321
      %p323 = scmp.lt.s32.totalorder %s20, 1
      %s324 = scalar_select %p323, %s20, 1
      %s325 = smul.addr %s324, 32
      %s326 = smul.addr %s325, 8
      %s327 = scalar_lea.vmem %s0, %s326
      %p328 = scmp.lt.s32.totalorder %s20, 1
      %s329 = scalar_select %p328, %s20, 1
      %s330 = smul.addr %s329, 32
      %s331 = smul.addr %s330, 8
      %s332 = scalar_lea.vmem %s9, %s331
      %vm333 = vcmask 29696
      %334 = vst.msk [vmem:[#allocation2 + $0x12] sm:$0x3f] %vm333, 0.0
      %335 = vst.msk [vmem:[#allocation2 + $0x2a] sm:$0x3f] %vm333, 0.0
      %336 = vst.msk [vmem:[#allocation2 + $0x42] sm:$0x3f] %vm333, 0.0
      %337 = vst.msk [vmem:[#allocation2 + $0x5a] sm:$0x3f] %vm333, 0.0
      %338 = vst.msk [vmem:[#allocation2 + $0x72] sm:$0x3f] %vm333, 0.0
      %339 = vst.msk [vmem:[#allocation2 + $0x8a] sm:$0x3f] %vm333, 0.0
      %340 = vst.msk [vmem:[#allocation2 + $0xa2] sm:$0x3f] %vm333, 0.0
      %341 = vst.msk [vmem:[#allocation2 + $0xba] sm:$0x3f] %vm333, 0.0
      %342 = vst.msk [vmem:[#allocation2 + $0xd2] sm:$0x3f] %vm333, 0.0
      %343 = vst.msk [vmem:[#allocation2 + $0xea] sm:$0x3f] %vm333, 0.0
      %344 = vst.msk [vmem:[#allocation2 + $0x102] sm:$0x3f] %vm333, 0.0
      %345 = vst.msk [vmem:[#allocation2 + $0x11a] sm:$0x3f] %vm333, 0.0
      %346 = vst.msk [vmem:[#allocation2 + $0x132] sm:$0x3f] %vm333, 0.0
      %347 = vst.msk [vmem:[#allocation2 + $0x14a] sm:$0x3f] %vm333, 0.0
      %348 = vst.msk [vmem:[#allocation2 + $0x162] sm:$0x3f] %vm333, 0.0
      %349 = vst.msk [vmem:[#allocation2 + $0x17a] sm:$0x3f] %vm333, 0.0
      %350 = vst.msk [vmem:[#allocation2 + $0x192] sm:$0x3f] %vm333, 0.0
      %351 = vst.msk [vmem:[#allocation2 + $0x1aa] sm:$0x3f] %vm333, 0.0
      %v352 = vlaneseq
      %v353 = vshrl.u32 %v352, 7
      %v354 = vadd.s32 %v353, 8
      %v355 = vadd.s32 %v353, 16
      %vm356 = vcmp.ge.s32.totalorder %v353, 1
      %vm357 = vcmp.ge.s32.totalorder %v354, 1
      %vm358 = vcmp.ge.s32.totalorder %v355, 1
      %vm359 = vcmp.le.s32.totalorder %v353, 16
      %vm360 = vcmp.le.s32.totalorder %v354, 16
      %vm361 = vcmp.le.s32.totalorder %v355, 16
      %vm362 = vmand %vm356, %vm359
      %vm363 = vmand %vm357, %vm360
      %vm364 = vmand %vm358, %vm361
      %v365 = vld [vmem:[%s327] sm:$0xff]
      %v366 = vld [vmem:[%s327 + $0x8] sm:$0xff]
      %v367 = vld [vmem:[%s327 + $0x10] sm:$0xff]
      %v368 = vld [vmem:[%s327 + $0x18] sm:$0xff]
      %v369 = vld [vmem:[%s327 + $0x20] sm:$0xff]
      %v370 = vld [vmem:[%s327 + $0x28] sm:$0xff]
      %v371 = vld [vmem:[%s327 + $0x30] sm:$0xff]
      %v372 = vld [vmem:[%s327 + $0x38] sm:$0xff]
      %v373 = vld [vmem:[%s327 + $0x40] sm:$0xff]
      %v374 = vld [vmem:[%s327 + $0x48] sm:$0xff]
      %v375 = vld [vmem:[%s327 + $0x50] sm:$0xff]
      %v376 = vld [vmem:[%s327 + $0x58] sm:$0xff]
      %v377 = vld [vmem:[%s327 + $0x60] sm:$0xff]
      %v378 = vld [vmem:[%s327 + $0x68] sm:$0xff]
      %v379 = vld [vmem:[%s327 + $0x70] sm:$0xff]
      %v380 = vld [vmem:[%s327 + $0x78] sm:$0xff]
      %v381 = vld [vmem:[%s327 + $0x80] sm:$0xff]
      %v382 = vld [vmem:[%s327 + $0x88] sm:$0xff]
      %v383 = vld [vmem:[%s327 + $0x90] sm:$0xff]
      %v384 = vld [vmem:[%s327 + $0x98] sm:$0xff]
      %v385 = vld [vmem:[%s327 + $0xa0] sm:$0xff]
      %v386 = vld [vmem:[%s327 + $0xa8] sm:$0xff]
      %v387 = vld [vmem:[%s327 + $0xb0] sm:$0xff]
      %v388 = vld [vmem:[%s327 + $0xb8] sm:$0xff]
      %v389 = vld [vmem:[%s327 + $0xc0] sm:$0xff]
      %v390 = vld [vmem:[%s327 + $0xc8] sm:$0xff]
      %v391 = vld [vmem:[%s327 + $0xd0] sm:$0xff]
      %v392 = vld [vmem:[%s327 + $0xd8] sm:$0xff]
      %v393 = vld [vmem:[%s327 + $0xe0] sm:$0xff]
      %v394 = vld [vmem:[%s327 + $0xe8] sm:$0xff]
      %v395 = vld [vmem:[%s327 + $0xf0] sm:$0xff]
      %v396 = vld [vmem:[%s327 + $0xf8] sm:$0xff]
      %s397 = scalar_lea.vmem [#allocation2], 24
      %vm398 = vcmask 31744
      %399 = vst.msk [vmem:[%s397 + $0x1] sm:$0xff] %vm398, %v365
      %400 = vst.msk [vmem:[%s397 + $0x9] sm:$0xff] %vm398, %v366
      %401 = vst.msk [vmem:[%s397 + $0x19] sm:$0xff] %vm398, %v367
      %402 = vst.msk [vmem:[%s397 + $0x21] sm:$0xff] %vm398, %v368
      %403 = vst.msk [vmem:[%s397 + $0x31] sm:$0xff] %vm398, %v369
      %404 = vst.msk [vmem:[%s397 + $0x39] sm:$0xff] %vm398, %v370
      %405 = vst.msk [vmem:[%s397 + $0x49] sm:$0xff] %vm398, %v371
      %406 = vst.msk [vmem:[%s397 + $0x51] sm:$0xff] %vm398, %v372
      %407 = vst.msk [vmem:[%s397 + $0x61] sm:$0xff] %vm398, %v373
      %408 = vst.msk [vmem:[%s397 + $0x69] sm:$0xff] %vm398, %v374
      %409 = vst.msk [vmem:[%s397 + $0x79] sm:$0xff] %vm398, %v375
      %410 = vst.msk [vmem:[%s397 + $0x81] sm:$0xff] %vm398, %v376
      %411 = vst.msk [vmem:[%s397 + $0x91] sm:$0xff] %vm398, %v377
      %412 = vst.msk [vmem:[%s397 + $0x99] sm:$0xff] %vm398, %v378
      %413 = vst.msk [vmem:[%s397 + $0xa9] sm:$0xff] %vm398, %v379
      %414 = vst.msk [vmem:[%s397 + $0xb1] sm:$0xff] %vm398, %v380
      %415 = vst.msk [vmem:[%s397 + $0xc1] sm:$0xff] %vm398, %v381
      %416 = vst.msk [vmem:[%s397 + $0xc9] sm:$0xff] %vm398, %v382
      %417 = vst.msk [vmem:[%s397 + $0xd9] sm:$0xff] %vm398, %v383
      %418 = vst.msk [vmem:[%s397 + $0xe1] sm:$0xff] %vm398, %v384
      %419 = vst.msk [vmem:[%s397 + $0xf1] sm:$0xff] %vm398, %v385
      %420 = vst.msk [vmem:[%s397 + $0xf9] sm:$0xff] %vm398, %v386
      %421 = vst.msk [vmem:[%s397 + $0x109] sm:$0xff] %vm398, %v387
      %422 = vst.msk [vmem:[%s397 + $0x111] sm:$0xff] %vm398, %v388
      %423 = vst.msk [vmem:[%s397 + $0x121] sm:$0xff] %vm398, %v389
      %424 = vst.msk [vmem:[%s397 + $0x129] sm:$0xff] %vm398, %v390
      %425 = vst.msk [vmem:[%s397 + $0x139] sm:$0xff] %vm398, %v391
      %426 = vst.msk [vmem:[%s397 + $0x141] sm:$0xff] %vm398, %v392
      %427 = vst.msk [vmem:[%s397 + $0x151] sm:$0xff] %vm398, %v393
      %428 = vst.msk [vmem:[%s397 + $0x159] sm:$0xff] %vm398, %v394
      %429 = vst.msk [vmem:[%s397 + $0x169] sm:$0xff] %vm398, %v395
      %430 = vst.msk [vmem:[%s397 + $0x171] sm:$0xff] %vm398, %v396
      %s431 = scalar_lea.vmem [#allocation2], 48
      %v432 = vld [vmem:[%s431] sm:$0xff]
      %v433 = vld [vmem:[%s431 + $0x8] sm:$0xff]
      %v434 = vld [vmem:[%s431 + $0x10] sm:$0xff]
      %435 = vst.msk [vmem:[#allocation2] sm:$0xff] %vm398, %v432
      %436 = vst.msk [vmem:[#allocation2 + $0x8] sm:$0xff] %vm398, %v433
      %437 = vst.msk [vmem:[#allocation2 + $0x10] sm:$0xff] %vm398, %v434
      %s438 = scalar_lea.vmem [#allocation2], 360
      %v439 = vld [vmem:[%s438] sm:$0xff]
      %v440 = vld [vmem:[%s438 + $0x8] sm:$0xff]
      %v441 = vld [vmem:[%s438 + $0x10] sm:$0xff]
      %s442 = scalar_lea.vmem [#allocation2], 408
      %443 = vst.msk [vmem:[%s442] sm:$0xff] %vm398, %v439
      %444 = vst.msk [vmem:[%s442 + $0x8] sm:$0xff] %vm398, %v440
      %445 = vst.msk [vmem:[%s442 + $0x10] sm:$0xff] %vm398, %v441
      %v446 = vld [vmem:[#allocation2 + $0x2] sm:$0x1]
      %v447 = vld [vmem:[#allocation2 + $0x1a] sm:$0x1]
      %v448 = vld [vmem:[#allocation2 + $0x32] sm:$0x1]
      %v449 = vld [vmem:[#allocation2 + $0x4a] sm:$0x1]
      %v450 = vld [vmem:[#allocation2 + $0x62] sm:$0x1]
      %v451 = vld [vmem:[#allocation2 + $0x7a] sm:$0x1]
      %v452 = vld [vmem:[#allocation2 + $0x92] sm:$0x1]
      %v453 = vld [vmem:[#allocation2 + $0xaa] sm:$0x1]
      %v454 = vld [vmem:[#allocation2 + $0xc2] sm:$0x1]
      %v455 = vld [vmem:[#allocation2 + $0xda] sm:$0x1]
      %v456 = vld [vmem:[#allocation2 + $0xf2] sm:$0x1]
      %v457 = vld [vmem:[#allocation2 + $0x10a] sm:$0x1]
      %v458 = vld [vmem:[#allocation2 + $0x122] sm:$0x1]
      %v459 = vld [vmem:[#allocation2 + $0x13a] sm:$0x1]
      %v460 = vld [vmem:[#allocation2 + $0x152] sm:$0x1]
      %v461 = vld [vmem:[#allocation2 + $0x16a] sm:$0x1]
      %v462 = vld [vmem:[#allocation2 + $0x182] sm:$0x1]
      %v463 = vld [vmem:[#allocation2 + $0x19a] sm:$0x1]
      %vm464 = vcmask 24576
      %465 = vst.msk [vmem:[#allocation2] sm:$0x1] %vm464, %v446
      %466 = vst.msk [vmem:[#allocation2 + $0x18] sm:$0x1] %vm464, %v447
      %467 = vst.msk [vmem:[#allocation2 + $0x30] sm:$0x1] %vm464, %v448
      %468 = vst.msk [vmem:[#allocation2 + $0x48] sm:$0x1] %vm464, %v449
      %469 = vst.msk [vmem:[#allocation2 + $0x60] sm:$0x1] %vm464, %v450
      %470 = vst.msk [vmem:[#allocation2 + $0x78] sm:$0x1] %vm464, %v451
      %471 = vst.msk [vmem:[#allocation2 + $0x90] sm:$0x1] %vm464, %v452
      %472 = vst.msk [vmem:[#allocation2 + $0xa8] sm:$0x1] %vm464, %v453
      %473 = vst.msk [vmem:[#allocation2 + $0xc0] sm:$0x1] %vm464, %v454
      %474 = vst.msk [vmem:[#allocation2 + $0xd8] sm:$0x1] %vm464, %v455
      %475 = vst.msk [vmem:[#allocation2 + $0xf0] sm:$0x1] %vm464, %v456
      %476 = vst.msk [vmem:[#allocation2 + $0x108] sm:$0x1] %vm464, %v457
      %477 = vst.msk [vmem:[#allocation2 + $0x120] sm:$0x1] %vm464, %v458
      %478 = vst.msk [vmem:[#allocation2 + $0x138] sm:$0x1] %vm464, %v459
      %479 = vst.msk [vmem:[#allocation2 + $0x150] sm:$0x1] %vm464, %v460
      %480 = vst.msk [vmem:[#allocation2 + $0x168] sm:$0x1] %vm464, %v461
      %481 = vst.msk [vmem:[#allocation2 + $0x180] sm:$0x1] %vm464, %v462
      %482 = vst.msk [vmem:[#allocation2 + $0x198] sm:$0x1] %vm464, %v463
      %v483 = vld [vmem:[#allocation2 + $0xf] sm:$0x1]
      %v484 = vld [vmem:[#allocation2 + $0x27] sm:$0x1]
      %v485 = vld [vmem:[#allocation2 + $0x3f] sm:$0x1]
      %v486 = vld [vmem:[#allocation2 + $0x57] sm:$0x1]
      %v487 = vld [vmem:[#allocation2 + $0x6f] sm:$0x1]
      %v488 = vld [vmem:[#allocation2 + $0x87] sm:$0x1]
      %v489 = vld [vmem:[#allocation2 + $0x9f] sm:$0x1]
      %v490 = vld [vmem:[#allocation2 + $0xb7] sm:$0x1]
      %v491 = vld [vmem:[#allocation2 + $0xcf] sm:$0x1]
      %v492 = vld [vmem:[#allocation2 + $0xe7] sm:$0x1]
      %v493 = vld [vmem:[#allocation2 + $0xff] sm:$0x1]
      %v494 = vld [vmem:[#allocation2 + $0x117] sm:$0x1]
      %v495 = vld [vmem:[#allocation2 + $0x12f] sm:$0x1]
      %v496 = vld [vmem:[#allocation2 + $0x147] sm:$0x1]
      %v497 = vld [vmem:[#allocation2 + $0x15f] sm:$0x1]
      %v498 = vld [vmem:[#allocation2 + $0x177] sm:$0x1]
      %v499 = vld [vmem:[#allocation2 + $0x18f] sm:$0x1]
      %v500 = vld [vmem:[#allocation2 + $0x1a7] sm:$0x1]
      %501 = vst.msk [vmem:[#allocation2 + $0x11] sm:$0x1] %vm464, %v483
      %502 = vst.msk [vmem:[#allocation2 + $0x29] sm:$0x1] %vm464, %v484
      %503 = vst.msk [vmem:[#allocation2 + $0x41] sm:$0x1] %vm464, %v485
      %504 = vst.msk [vmem:[#allocation2 + $0x59] sm:$0x1] %vm464, %v486
      %505 = vst.msk [vmem:[#allocation2 + $0x71] sm:$0x1] %vm464, %v487
      %506 = vst.msk [vmem:[#allocation2 + $0x89] sm:$0x1] %vm464, %v488
      %507 = vst.msk [vmem:[#allocation2 + $0xa1] sm:$0x1] %vm464, %v489
      %508 = vst.msk [vmem:[#allocation2 + $0xb9] sm:$0x1] %vm464, %v490
      %509 = vst.msk [vmem:[#allocation2 + $0xd1] sm:$0x1] %vm464, %v491
      %510 = vst.msk [vmem:[#allocation2 + $0xe9] sm:$0x1] %vm464, %v492
      %511 = vst.msk [vmem:[#allocation2 + $0x101] sm:$0x1] %vm464, %v493
      %512 = vst.msk [vmem:[#allocation2 + $0x119] sm:$0x1] %vm464, %v494
      %513 = vst.msk [vmem:[#allocation2 + $0x131] sm:$0x1] %vm464, %v495
      %514 = vst.msk [vmem:[#allocation2 + $0x149] sm:$0x1] %vm464, %v496
      %515 = vst.msk [vmem:[#allocation2 + $0x161] sm:$0x1] %vm464, %v497
      %516 = vst.msk [vmem:[#allocation2 + $0x179] sm:$0x1] %vm464, %v498
      %517 = vst.msk [vmem:[#allocation2 + $0x191] sm:$0x1] %vm464, %v499
      %518 = vst.msk [vmem:[#allocation2 + $0x1a9] sm:$0x1] %vm464, %v500
      %v519 = vld [vmem:[%s2] sm:$0x1]
      %v520 = vld [vmem:[#allocation2] sm:$0xff]
      %v521 = vld [vmem:[#allocation2 + $0x8] sm:$0xff]
      %v522 = vld [vmem:[#allocation2 + $0x10] sm:$0xff]
      %v523 = vld [vmem:[#allocation2 + $0x18] sm:$0xff]
      %v524 = vld [vmem:[#allocation2 + $0x20] sm:$0xff]
      %v525 = vld [vmem:[#allocation2 + $0x28] sm:$0xff]
      %v526 = vld [vmem:[#allocation2 + $0x30] sm:$0xff]
      %v527 = vld [vmem:[#allocation2 + $0x38] sm:$0xff]
      %v528 = vld [vmem:[#allocation2 + $0x40] sm:$0xff]
      %v529 = vld [vmem:[#allocation2 + $0x48] sm:$0xff]
      %v530 = vld [vmem:[#allocation2 + $0x50] sm:$0xff]
      %v531 = vld [vmem:[#allocation2 + $0x58] sm:$0xff]
      %v532 = vld [vmem:[#allocation2 + $0x60] sm:$0xff]
      %v533 = vld [vmem:[#allocation2 + $0x68] sm:$0xff]
      %v534 = vld [vmem:[#allocation2 + $0x70] sm:$0xff]
      %v535 = vld [vmem:[#allocation2 + $0x78] sm:$0xff]
      %v536 = vld [vmem:[#allocation2 + $0x80] sm:$0xff]
      %v537 = vld [vmem:[#allocation2 + $0x88] sm:$0xff]
      %v538 = vld [vmem:[#allocation2 + $0x90] sm:$0xff]
      %v539 = vld [vmem:[#allocation2 + $0x98] sm:$0xff]
      %v540 = vld [vmem:[#allocation2 + $0xa0] sm:$0xff]
      %v541 = vld [vmem:[#allocation2 + $0xa8] sm:$0xff]
      %v542 = vld [vmem:[#allocation2 + $0xb0] sm:$0xff]
      %v543 = vld [vmem:[#allocation2 + $0xb8] sm:$0xff]
      %v544 = vld [vmem:[#allocation2 + $0xc0] sm:$0xff]
      %v545 = vld [vmem:[#allocation2 + $0xc8] sm:$0xff]
      %v546 = vld [vmem:[#allocation2 + $0xd0] sm:$0xff]
      %v547 = vld [vmem:[#allocation2 + $0xd8] sm:$0xff]
      %v548 = vld [vmem:[#allocation2 + $0xe0] sm:$0xff]
      %v549 = vld [vmem:[#allocation2 + $0xe8] sm:$0xff]
      %v550 = vld [vmem:[#allocation2 + $0xf0] sm:$0xff]
      %v551 = vld [vmem:[#allocation2 + $0xf8] sm:$0xff]
      %v552 = vld [vmem:[#allocation2 + $0x100] sm:$0xff]
      %v553 = vld [vmem:[#allocation2 + $0x108] sm:$0xff]
      %v554 = vld [vmem:[#allocation2 + $0x110] sm:$0xff]
      %v555 = vld [vmem:[#allocation2 + $0x118] sm:$0xff]
      %v556 = vld [vmem:[#allocation2 + $0x120] sm:$0xff]
      %v557 = vld [vmem:[#allocation2 + $0x128] sm:$0xff]
      %v558 = vld [vmem:[#allocation2 + $0x130] sm:$0xff]
      %v559 = vld [vmem:[#allocation2 + $0x138] sm:$0xff]
      %v560 = vld [vmem:[#allocation2 + $0x140] sm:$0xff]
      %v561 = vld [vmem:[#allocation2 + $0x148] sm:$0xff]
      %v562 = vld [vmem:[#allocation2 + $0x150] sm:$0xff]
      %v563 = vld [vmem:[#allocation2 + $0x158] sm:$0xff]
      %v564 = vld [vmem:[#allocation2 + $0x160] sm:$0xff]
      %v565 = vld [vmem:[#allocation2 + $0x168] sm:$0xff]
      %v566 = vld [vmem:[#allocation2 + $0x170] sm:$0xff]
      %v567 = vld [vmem:[#allocation2 + $0x178] sm:$0xff]
      %v568 = vld [vmem:[%s1] sm:$0xf]
      %v569 = vld [vmem:[%s397] sm:$0xff]
      %v570 = vld [vmem:[%s397 + $0x8] sm:$0xff]
      %v571 = vld [vmem:[%s397 + $0x10] sm:$0xff]
      %v572 = vld [vmem:[%s397 + $0x18] sm:$0xff]
      %v573 = vld [vmem:[%s397 + $0x20] sm:$0xff]
      %v574 = vld [vmem:[%s397 + $0x28] sm:$0xff]
      %v575 = vld [vmem:[%s397 + $0x30] sm:$0xff]
      %v576 = vld [vmem:[%s397 + $0x38] sm:$0xff]
      %v577 = vld [vmem:[%s397 + $0x40] sm:$0xff]
      %v578 = vld [vmem:[%s397 + $0x48] sm:$0xff]
      %v579 = vld [vmem:[%s397 + $0x50] sm:$0xff]
      %v580 = vld [vmem:[%s397 + $0x58] sm:$0xff]
      %v581 = vld [vmem:[%s397 + $0x60] sm:$0xff]
      %v582 = vld [vmem:[%s397 + $0x68] sm:$0xff]
      %v583 = vld [vmem:[%s397 + $0x70] sm:$0xff]
      %v584 = vld [vmem:[%s397 + $0x78] sm:$0xff]
      %v585 = vld [vmem:[%s397 + $0x80] sm:$0xff]
      %v586 = vld [vmem:[%s397 + $0x88] sm:$0xff]
      %v587 = vld [vmem:[%s397 + $0x90] sm:$0xff]
      %v588 = vld [vmem:[%s397 + $0x98] sm:$0xff]
      %v589 = vld [vmem:[%s397 + $0xa0] sm:$0xff]
      %v590 = vld [vmem:[%s397 + $0xa8] sm:$0xff]
      %v591 = vld [vmem:[%s397 + $0xb0] sm:$0xff]
      %v592 = vld [vmem:[%s397 + $0xb8] sm:$0xff]
      %v593 = vld [vmem:[%s397 + $0xc0] sm:$0xff]
      %v594 = vld [vmem:[%s397 + $0xc8] sm:$0xff]
      %v595 = vld [vmem:[%s397 + $0xd0] sm:$0xff]
      %v596 = vld [vmem:[%s397 + $0xd8] sm:$0xff]
      %v597 = vld [vmem:[%s397 + $0xe0] sm:$0xff]
      %v598 = vld [vmem:[%s397 + $0xe8] sm:$0xff]
      %v599 = vld [vmem:[%s397 + $0xf0] sm:$0xff]
      %v600 = vld [vmem:[%s397 + $0xf8] sm:$0xff]
      %v601 = vld [vmem:[%s397 + $0x100] sm:$0xff]
      %v602 = vld [vmem:[%s397 + $0x108] sm:$0xff]
      %v603 = vld [vmem:[%s397 + $0x110] sm:$0xff]
      %v604 = vld [vmem:[%s397 + $0x118] sm:$0xff]
      %v605 = vld [vmem:[%s397 + $0x120] sm:$0xff]
      %v606 = vld [vmem:[%s397 + $0x128] sm:$0xff]
      %v607 = vld [vmem:[%s397 + $0x130] sm:$0xff]
      %v608 = vld [vmem:[%s397 + $0x138] sm:$0xff]
      %v609 = vld [vmem:[%s397 + $0x140] sm:$0xff]
      %v610 = vld [vmem:[%s397 + $0x148] sm:$0xff]
      %v611 = vld [vmem:[%s397 + $0x150] sm:$0xff]
      %v612 = vld [vmem:[%s397 + $0x158] sm:$0xff]
      %v613 = vld [vmem:[%s397 + $0x160] sm:$0xff]
      %v614 = vld [vmem:[%s397 + $0x168] sm:$0xff]
      %v615 = vld [vmem:[%s397 + $0x170] sm:$0xff]
      %v616 = vld [vmem:[%s397 + $0x178] sm:$0xff]
      %s617 = scalar_lea.vmem %s1, 12
      %v618 = vld [vmem:[%s617] sm:$0xf]
      %v620 = vsel %vm398, %v569, 0
      %v623 = vsel %vm398, %v570, 0
      %v626 = vsel %vm398, %v571, 0
      %v629 = vsel %vm398, %v572, 0
      %v632 = vsel %vm398, %v573, 0
      %v635 = vsel %vm398, %v574, 0
      %v638 = vsel %vm398, %v575, 0
      %v641 = vsel %vm398, %v576, 0
      %v644 = vsel %vm398, %v577, 0
      %v647 = vsel %vm398, %v578, 0
      %v650 = vsel %vm398, %v579, 0
      %v653 = vsel %vm398, %v580, 0
      %v656 = vsel %vm398, %v581, 0
      %v659 = vsel %vm398, %v582, 0
      %v662 = vsel %vm398, %v583, 0
      %v665 = vsel %vm398, %v584, 0
      %v668 = vsel %vm398, %v585, 0
      %v671 = vsel %vm398, %v586, 0
      %v674 = vsel %vm398, %v587, 0
      %v677 = vsel %vm398, %v588, 0
      %v680 = vsel %vm398, %v589, 0
      %v683 = vsel %vm398, %v590, 0
      %v686 = vsel %vm398, %v591, 0
      %v689 = vsel %vm398, %v592, 0
      %v692 = vsel %vm398, %v593, 0
      %v695 = vsel %vm398, %v594, 0
      %v698 = vsel %vm398, %v595, 0
      %v701 = vsel %vm398, %v596, 0
      %v704 = vsel %vm398, %v597, 0
      %v707 = vsel %vm398, %v598, 0
      %v710 = vsel %vm398, %v599, 0
      %v713 = vsel %vm398, %v600, 0
      %v716 = vsel %vm398, %v601, 0
      %v719 = vsel %vm398, %v602, 0
      %v722 = vsel %vm398, %v603, 0
      %v725 = vsel %vm398, %v604, 0
      %v728 = vsel %vm398, %v605, 0
      %v731 = vsel %vm398, %v606, 0
      %v734 = vsel %vm398, %v607, 0
      %v737 = vsel %vm398, %v608, 0
      %v740 = vsel %vm398, %v609, 0
      %v743 = vsel %vm398, %v610, 0
      %v746 = vsel %vm398, %v611, 0
      %v749 = vsel %vm398, %v612, 0
      %v752 = vsel %vm398, %v613, 0
      %v755 = vsel %vm398, %v614, 0
      %v758 = vsel %vm398, %v615, 0
      %v761 = vsel %vm398, %v616, 0
      %vm763 = vcmask 1043456
      %v765 = vsel %vm763, %v618, 0
      %767 = vmatpush.msra.mxu0 0.0
      %768 = vmatpush.msra.mxu0 0.0
      %769 = vmatpush.msra.mxu0 0.0
      %770 = vmatpush.msra.mxu0 0.0
      %771 = vmatpush.msra.mxu0 0.0
      %772 = vmatpush.msra.mxu0 0.0
      %773 = vmatpush.msra.mxu0 0.0
      %774 = vmatpush.msra.mxu0 0.0
      %775 = vmatpush.msra.mxu0 0.0
      %776 = vmatpush.msra.mxu0 0.0
      %777 = vmatpush.msra.mxu0 0.0
      %778 = vmatpush.msra.mxu0 0.0
      %779 = vmatpush.msra.mxu0 0.0
      %780 = vmatpush.msra.mxu0 0.0
      %781 = vmatpush.msra.mxu0 0.0
      %782 = vmatpush.msra.mxu0 %v765
      %783 = vmatmul.f32.gmra.mxu0 %v620
      %v784 = vpop.f32.mrf.mxu0
      %v785 = vadd.f32 0.0, %v784
      %786 = vmatmul.f32.gmra.mxu0 %v623
      %v787 = vpop.f32.mrf.mxu0
      %v788 = vadd.f32 0.0, %v787
      %789 = vmatmul.f32.gmra.mxu0 %v626
      %v790 = vpop.f32.mrf.mxu0
      %v791 = vadd.f32 0.0, %v790
      %792 = vmatmul.f32.gmra.mxu0 %v629
      %v793 = vpop.f32.mrf.mxu0
      %v794 = vadd.f32 0.0, %v793
      %795 = vmatmul.f32.gmra.mxu0 %v632
      %v796 = vpop.f32.mrf.mxu0
      %v797 = vadd.f32 0.0, %v796
      %798 = vmatmul.f32.gmra.mxu0 %v635
      %v799 = vpop.f32.mrf.mxu0
      %v800 = vadd.f32 0.0, %v799
      %801 = vmatmul.f32.gmra.mxu0 %v638
      %v802 = vpop.f32.mrf.mxu0
      %v803 = vadd.f32 0.0, %v802
      %804 = vmatmul.f32.gmra.mxu0 %v641
      %v805 = vpop.f32.mrf.mxu0
      %v806 = vadd.f32 0.0, %v805
      %807 = vmatmul.f32.gmra.mxu0 %v644
      %v808 = vpop.f32.mrf.mxu0
      %v809 = vadd.f32 0.0, %v808
      %810 = vmatmul.f32.gmra.mxu0 %v647
      %v811 = vpop.f32.mrf.mxu0
      %v812 = vadd.f32 0.0, %v811
      %813 = vmatmul.f32.gmra.mxu0 %v650
      %v814 = vpop.f32.mrf.mxu0
      %v815 = vadd.f32 0.0, %v814
      %816 = vmatmul.f32.gmra.mxu0 %v653
      %v817 = vpop.f32.mrf.mxu0
      %v818 = vadd.f32 0.0, %v817
      %819 = vmatmul.f32.gmra.mxu0 %v656
      %v820 = vpop.f32.mrf.mxu0
      %v821 = vadd.f32 0.0, %v820
      %822 = vmatmul.f32.gmra.mxu0 %v659
      %v823 = vpop.f32.mrf.mxu0
      %v824 = vadd.f32 0.0, %v823
      %825 = vmatmul.f32.gmra.mxu0 %v662
      %v826 = vpop.f32.mrf.mxu0
      %v827 = vadd.f32 0.0, %v826
      %828 = vmatmul.f32.gmra.mxu0 %v665
      %v829 = vpop.f32.mrf.mxu0
      %v830 = vadd.f32 0.0, %v829
      %831 = vmatmul.f32.gmra.mxu0 %v668
      %v832 = vpop.f32.mrf.mxu0
      %v833 = vadd.f32 0.0, %v832
      %834 = vmatmul.f32.gmra.mxu0 %v671
      %v835 = vpop.f32.mrf.mxu0
      %v836 = vadd.f32 0.0, %v835
      %837 = vmatmul.f32.gmra.mxu0 %v674
      %v838 = vpop.f32.mrf.mxu0
      %v839 = vadd.f32 0.0, %v838
      %840 = vmatmul.f32.gmra.mxu0 %v677
      %v841 = vpop.f32.mrf.mxu0
      %v842 = vadd.f32 0.0, %v841
      %843 = vmatmul.f32.gmra.mxu0 %v680
      %v844 = vpop.f32.mrf.mxu0
      %v845 = vadd.f32 0.0, %v844
      %846 = vmatmul.f32.gmra.mxu0 %v683
      %v847 = vpop.f32.mrf.mxu0
      %v848 = vadd.f32 0.0, %v847
      %849 = vmatmul.f32.gmra.mxu0 %v686
      %v850 = vpop.f32.mrf.mxu0
      %v851 = vadd.f32 0.0, %v850
      %852 = vmatmul.f32.gmra.mxu0 %v689
      %v853 = vpop.f32.mrf.mxu0
      %v854 = vadd.f32 0.0, %v853
      %855 = vmatmul.f32.gmra.mxu0 %v692
      %v856 = vpop.f32.mrf.mxu0
      %v857 = vadd.f32 0.0, %v856
      %858 = vmatmul.f32.gmra.mxu0 %v695
      %v859 = vpop.f32.mrf.mxu0
      %v860 = vadd.f32 0.0, %v859
      %861 = vmatmul.f32.gmra.mxu0 %v698
      %v862 = vpop.f32.mrf.mxu0
      %v863 = vadd.f32 0.0, %v862
      %864 = vmatmul.f32.gmra.mxu0 %v701
      %v865 = vpop.f32.mrf.mxu0
      %v866 = vadd.f32 0.0, %v865
      %867 = vmatmul.f32.gmra.mxu0 %v704
      %v868 = vpop.f32.mrf.mxu0
      %v869 = vadd.f32 0.0, %v868
      %870 = vmatmul.f32.gmra.mxu0 %v707
      %v871 = vpop.f32.mrf.mxu0
      %v872 = vadd.f32 0.0, %v871
      %873 = vmatmul.f32.gmra.mxu0 %v710
      %v874 = vpop.f32.mrf.mxu0
      %v875 = vadd.f32 0.0, %v874
      %876 = vmatmul.f32.gmra.mxu0 %v713
      %v877 = vpop.f32.mrf.mxu0
      %v878 = vadd.f32 0.0, %v877
      %879 = vmatmul.f32.gmra.mxu0 %v716
      %v880 = vpop.f32.mrf.mxu0
      %v881 = vadd.f32 0.0, %v880
      %882 = vmatmul.f32.gmra.mxu0 %v719
      %v883 = vpop.f32.mrf.mxu0
      %v884 = vadd.f32 0.0, %v883
      %885 = vmatmul.f32.gmra.mxu0 %v722
      %v886 = vpop.f32.mrf.mxu0
      %v887 = vadd.f32 0.0, %v886
      %888 = vmatmul.f32.gmra.mxu0 %v725
      %v889 = vpop.f32.mrf.mxu0
      %v890 = vadd.f32 0.0, %v889
      %891 = vmatmul.f32.gmra.mxu0 %v728
      %v892 = vpop.f32.mrf.mxu0
      %v893 = vadd.f32 0.0, %v892
      %894 = vmatmul.f32.gmra.mxu0 %v731
      %v895 = vpop.f32.mrf.mxu0
      %v896 = vadd.f32 0.0, %v895
      %897 = vmatmul.f32.gmra.mxu0 %v734
      %v898 = vpop.f32.mrf.mxu0
      %v899 = vadd.f32 0.0, %v898
      %900 = vmatmul.f32.gmra.mxu0 %v737
      %v901 = vpop.f32.mrf.mxu0
      %v902 = vadd.f32 0.0, %v901
      %903 = vmatmul.f32.gmra.mxu0 %v740
      %v904 = vpop.f32.mrf.mxu0
      %v905 = vadd.f32 0.0, %v904
      %906 = vmatmul.f32.gmra.mxu0 %v743
      %v907 = vpop.f32.mrf.mxu0
      %v908 = vadd.f32 0.0, %v907
      %909 = vmatmul.f32.gmra.mxu0 %v746
      %v910 = vpop.f32.mrf.mxu0
      %v911 = vadd.f32 0.0, %v910
      %912 = vmatmul.f32.gmra.mxu0 %v749
      %v913 = vpop.f32.mrf.mxu0
      %v914 = vadd.f32 0.0, %v913
      %915 = vmatmul.f32.gmra.mxu0 %v752
      %v916 = vpop.f32.mrf.mxu0
      %v917 = vadd.f32 0.0, %v916
      %918 = vmatmul.f32.gmra.mxu0 %v755
      %v919 = vpop.f32.mrf.mxu0
      %v920 = vadd.f32 0.0, %v919
      %921 = vmatmul.f32.gmra.mxu0 %v758
      %v922 = vpop.f32.mrf.mxu0
      %v923 = vadd.f32 0.0, %v922
      %924 = vmatmul.f32.gmra.mxu0 %v761
      %v925 = vpop.f32.mrf.mxu0
      %v926 = vadd.f32 0.0, %v925
      %927 = vdwg.mxu0
      %v929 = vsel %vm398, %v520, 0
      %v932 = vsel %vm398, %v521, 0
      %v935 = vsel %vm398, %v522, 0
      %v938 = vsel %vm398, %v523, 0
      %v941 = vsel %vm398, %v524, 0
      %v944 = vsel %vm398, %v525, 0
      %v947 = vsel %vm398, %v526, 0
      %v950 = vsel %vm398, %v527, 0
      %v953 = vsel %vm398, %v528, 0
      %v956 = vsel %vm398, %v529, 0
      %v959 = vsel %vm398, %v530, 0
      %v962 = vsel %vm398, %v531, 0
      %v965 = vsel %vm398, %v532, 0
      %v968 = vsel %vm398, %v533, 0
      %v971 = vsel %vm398, %v534, 0
      %v974 = vsel %vm398, %v535, 0
      %v977 = vsel %vm398, %v536, 0
      %v980 = vsel %vm398, %v537, 0
      %v983 = vsel %vm398, %v538, 0
      %v986 = vsel %vm398, %v539, 0
      %v989 = vsel %vm398, %v540, 0
      %v992 = vsel %vm398, %v541, 0
      %v995 = vsel %vm398, %v542, 0
      %v998 = vsel %vm398, %v543, 0
      %v1001 = vsel %vm398, %v544, 0
      %v1004 = vsel %vm398, %v545, 0
      %v1007 = vsel %vm398, %v546, 0
      %v1010 = vsel %vm398, %v547, 0
      %v1013 = vsel %vm398, %v548, 0
      %v1016 = vsel %vm398, %v549, 0
      %v1019 = vsel %vm398, %v550, 0
      %v1022 = vsel %vm398, %v551, 0
      %v1025 = vsel %vm398, %v552, 0
      %v1028 = vsel %vm398, %v553, 0
      %v1031 = vsel %vm398, %v554, 0
      %v1034 = vsel %vm398, %v555, 0
      %v1037 = vsel %vm398, %v556, 0
      %v1040 = vsel %vm398, %v557, 0
      %v1043 = vsel %vm398, %v558, 0
      %v1046 = vsel %vm398, %v559, 0
      %v1049 = vsel %vm398, %v560, 0
      %v1052 = vsel %vm398, %v561, 0
      %v1055 = vsel %vm398, %v562, 0
      %v1058 = vsel %vm398, %v563, 0
      %v1061 = vsel %vm398, %v564, 0
      %v1064 = vsel %vm398, %v565, 0
      %v1067 = vsel %vm398, %v566, 0
      %v1070 = vsel %vm398, %v567, 0
      %v1073 = vsel %vm763, %v568, 0
      %1075 = vmatpush.msra.mxu0 0.0
      %1076 = vmatpush.msra.mxu0 0.0
      %1077 = vmatpush.msra.mxu0 0.0
      %1078 = vmatpush.msra.mxu0 0.0
      %1079 = vmatpush.msra.mxu0 0.0
      %1080 = vmatpush.msra.mxu0 0.0
      %1081 = vmatpush.msra.mxu0 0.0
      %1082 = vmatpush.msra.mxu0 0.0
      %1083 = vmatpush.msra.mxu0 0.0
      %1084 = vmatpush.msra.mxu0 0.0
      %1085 = vmatpush.msra.mxu0 0.0
      %1086 = vmatpush.msra.mxu0 0.0
      %1087 = vmatpush.msra.mxu0 0.0
      %1088 = vmatpush.msra.mxu0 0.0
      %1089 = vmatpush.msra.mxu0 0.0
      %1090 = vmatpush.msra.mxu0 %v1073
      %1091 = vmatmul.f32.gmra.mxu0 %v929
      %v1092 = vpop.f32.mrf.mxu0
      %v1093 = vadd.f32 %v785, %v1092
      %1094 = vmatmul.f32.gmra.mxu0 %v932
      %v1095 = vpop.f32.mrf.mxu0
      %v1096 = vadd.f32 %v788, %v1095
      %1097 = vmatmul.f32.gmra.mxu0 %v935
      %v1098 = vpop.f32.mrf.mxu0
      %v1099 = vadd.f32 %v791, %v1098
      %1100 = vmatmul.f32.gmra.mxu0 %v938
      %v1101 = vpop.f32.mrf.mxu0
      %v1102 = vadd.f32 %v794, %v1101
      %1103 = vmatmul.f32.gmra.mxu0 %v941
      %v1104 = vpop.f32.mrf.mxu0
      %v1105 = vadd.f32 %v797, %v1104
      %1106 = vmatmul.f32.gmra.mxu0 %v944
      %v1107 = vpop.f32.mrf.mxu0
      %v1108 = vadd.f32 %v800, %v1107
      %1109 = vmatmul.f32.gmra.mxu0 %v947
      %v1110 = vpop.f32.mrf.mxu0
      %v1111 = vadd.f32 %v803, %v1110
      %1112 = vmatmul.f32.gmra.mxu0 %v950
      %v1113 = vpop.f32.mrf.mxu0
      %v1114 = vadd.f32 %v806, %v1113
      %1115 = vmatmul.f32.gmra.mxu0 %v953
      %v1116 = vpop.f32.mrf.mxu0
      %v1117 = vadd.f32 %v809, %v1116
      %1118 = vmatmul.f32.gmra.mxu0 %v956
      %v1119 = vpop.f32.mrf.mxu0
      %v1120 = vadd.f32 %v812, %v1119
      %1121 = vmatmul.f32.gmra.mxu0 %v959
      %v1122 = vpop.f32.mrf.mxu0
      %v1123 = vadd.f32 %v815, %v1122
      %1124 = vmatmul.f32.gmra.mxu0 %v962
      %v1125 = vpop.f32.mrf.mxu0
      %v1126 = vadd.f32 %v818, %v1125
      %1127 = vmatmul.f32.gmra.mxu0 %v965
      %v1128 = vpop.f32.mrf.mxu0
      %v1129 = vadd.f32 %v821, %v1128
      %1130 = vmatmul.f32.gmra.mxu0 %v968
      %v1131 = vpop.f32.mrf.mxu0
      %v1132 = vadd.f32 %v824, %v1131
      %1133 = vmatmul.f32.gmra.mxu0 %v971
      %v1134 = vpop.f32.mrf.mxu0
      %v1135 = vadd.f32 %v827, %v1134
      %1136 = vmatmul.f32.gmra.mxu0 %v974
      %v1137 = vpop.f32.mrf.mxu0
      %v1138 = vadd.f32 %v830, %v1137
      %1139 = vmatmul.f32.gmra.mxu0 %v977
      %v1140 = vpop.f32.mrf.mxu0
      %v1141 = vadd.f32 %v833, %v1140
      %1142 = vmatmul.f32.gmra.mxu0 %v980
      %v1143 = vpop.f32.mrf.mxu0
      %v1144 = vadd.f32 %v836, %v1143
      %1145 = vmatmul.f32.gmra.mxu0 %v983
      %v1146 = vpop.f32.mrf.mxu0
      %v1147 = vadd.f32 %v839, %v1146
      %1148 = vmatmul.f32.gmra.mxu0 %v986
      %v1149 = vpop.f32.mrf.mxu0
      %v1150 = vadd.f32 %v842, %v1149
      %1151 = vmatmul.f32.gmra.mxu0 %v989
      %v1152 = vpop.f32.mrf.mxu0
      %v1153 = vadd.f32 %v845, %v1152
      %1154 = vmatmul.f32.gmra.mxu0 %v992
      %v1155 = vpop.f32.mrf.mxu0
      %v1156 = vadd.f32 %v848, %v1155
      %1157 = vmatmul.f32.gmra.mxu0 %v995
      %v1158 = vpop.f32.mrf.mxu0
      %v1159 = vadd.f32 %v851, %v1158
      %1160 = vmatmul.f32.gmra.mxu0 %v998
      %v1161 = vpop.f32.mrf.mxu0
      %v1162 = vadd.f32 %v854, %v1161
      %1163 = vmatmul.f32.gmra.mxu0 %v1001
      %v1164 = vpop.f32.mrf.mxu0
      %v1165 = vadd.f32 %v857, %v1164
      %1166 = vmatmul.f32.gmra.mxu0 %v1004
      %v1167 = vpop.f32.mrf.mxu0
      %v1168 = vadd.f32 %v860, %v1167
      %1169 = vmatmul.f32.gmra.mxu0 %v1007
      %v1170 = vpop.f32.mrf.mxu0
      %v1171 = vadd.f32 %v863, %v1170
      %1172 = vmatmul.f32.gmra.mxu0 %v1010
      %v1173 = vpop.f32.mrf.mxu0
      %v1174 = vadd.f32 %v866, %v1173
      %1175 = vmatmul.f32.gmra.mxu0 %v1013
      %v1176 = vpop.f32.mrf.mxu0
      %v1177 = vadd.f32 %v869, %v1176
      %1178 = vmatmul.f32.gmra.mxu0 %v1016
      %v1179 = vpop.f32.mrf.mxu0
      %v1180 = vadd.f32 %v872, %v1179
      %1181 = vmatmul.f32.gmra.mxu0 %v1019
      %v1182 = vpop.f32.mrf.mxu0
      %v1183 = vadd.f32 %v875, %v1182
      %1184 = vmatmul.f32.gmra.mxu0 %v1022
      %v1185 = vpop.f32.mrf.mxu0
      %v1186 = vadd.f32 %v878, %v1185
      %1187 = vmatmul.f32.gmra.mxu0 %v1025
      %v1188 = vpop.f32.mrf.mxu0
      %v1189 = vadd.f32 %v881, %v1188
      %1190 = vmatmul.f32.gmra.mxu0 %v1028
      %v1191 = vpop.f32.mrf.mxu0
      %v1192 = vadd.f32 %v884, %v1191
      %1193 = vmatmul.f32.gmra.mxu0 %v1031
      %v1194 = vpop.f32.mrf.mxu0
      %v1195 = vadd.f32 %v887, %v1194
      %1196 = vmatmul.f32.gmra.mxu0 %v1034
      %v1197 = vpop.f32.mrf.mxu0
      %v1198 = vadd.f32 %v890, %v1197
      %1199 = vmatmul.f32.gmra.mxu0 %v1037
      %v1200 = vpop.f32.mrf.mxu0
      %v1201 = vadd.f32 %v893, %v1200
      %1202 = vmatmul.f32.gmra.mxu0 %v1040
      %v1203 = vpop.f32.mrf.mxu0
      %v1204 = vadd.f32 %v896, %v1203
      %1205 = vmatmul.f32.gmra.mxu0 %v1043
      %v1206 = vpop.f32.mrf.mxu0
      %v1207 = vadd.f32 %v899, %v1206
      %1208 = vmatmul.f32.gmra.mxu0 %v1046
      %v1209 = vpop.f32.mrf.mxu0
      %v1210 = vadd.f32 %v902, %v1209
      %1211 = vmatmul.f32.gmra.mxu0 %v1049
      %v1212 = vpop.f32.mrf.mxu0
      %v1213 = vadd.f32 %v905, %v1212
      %1214 = vmatmul.f32.gmra.mxu0 %v1052
      %v1215 = vpop.f32.mrf.mxu0
      %v1216 = vadd.f32 %v908, %v1215
      %1217 = vmatmul.f32.gmra.mxu0 %v1055
      %v1218 = vpop.f32.mrf.mxu0
      %v1219 = vadd.f32 %v911, %v1218
      %1220 = vmatmul.f32.gmra.mxu0 %v1058
      %v1221 = vpop.f32.mrf.mxu0
      %v1222 = vadd.f32 %v914, %v1221
      %1223 = vmatmul.f32.gmra.mxu0 %v1061
      %v1224 = vpop.f32.mrf.mxu0
      %v1225 = vadd.f32 %v917, %v1224
      %1226 = vmatmul.f32.gmra.mxu0 %v1064
      %v1227 = vpop.f32.mrf.mxu0
      %v1228 = vadd.f32 %v920, %v1227
      %1229 = vmatmul.f32.gmra.mxu0 %v1067
      %v1230 = vpop.f32.mrf.mxu0
      %v1231 = vadd.f32 %v923, %v1230
      %1232 = vmatmul.f32.gmra.mxu0 %v1070
      %v1233 = vpop.f32.mrf.mxu0
      %v1234 = vadd.f32 %v926, %v1233
      %1235 = vdwg.mxu0
      %v1236 = vld [vmem:[%s431] sm:$0xff]
      %v1237 = vld [vmem:[%s431 + $0x8] sm:$0xff]
      %v1238 = vld [vmem:[%s431 + $0x10] sm:$0xff]
      %v1239 = vld [vmem:[%s431 + $0x18] sm:$0xff]
      %v1240 = vld [vmem:[%s431 + $0x20] sm:$0xff]
      %v1241 = vld [vmem:[%s431 + $0x28] sm:$0xff]
      %v1242 = vld [vmem:[%s431 + $0x30] sm:$0xff]
      %v1243 = vld [vmem:[%s431 + $0x38] sm:$0xff]
      %v1244 = vld [vmem:[%s431 + $0x40] sm:$0xff]
      %v1245 = vld [vmem:[%s431 + $0x48] sm:$0xff]
      %v1246 = vld [vmem:[%s431 + $0x50] sm:$0xff]
      %v1247 = vld [vmem:[%s431 + $0x58] sm:$0xff]
      %v1248 = vld [vmem:[%s431 + $0x60] sm:$0xff]
      %v1249 = vld [vmem:[%s431 + $0x68] sm:$0xff]
      %v1250 = vld [vmem:[%s431 + $0x70] sm:$0xff]
      %v1251 = vld [vmem:[%s431 + $0x78] sm:$0xff]
      %v1252 = vld [vmem:[%s431 + $0x80] sm:$0xff]
      %v1253 = vld [vmem:[%s431 + $0x88] sm:$0xff]
      %v1254 = vld [vmem:[%s431 + $0x90] sm:$0xff]
      %v1255 = vld [vmem:[%s431 + $0x98] sm:$0xff]
      %v1256 = vld [vmem:[%s431 + $0xa0] sm:$0xff]
      %v1257 = vld [vmem:[%s431 + $0xa8] sm:$0xff]
      %v1258 = vld [vmem:[%s431 + $0xb0] sm:$0xff]
      %v1259 = vld [vmem:[%s431 + $0xb8] sm:$0xff]
      %v1260 = vld [vmem:[%s431 + $0xc0] sm:$0xff]
      %v1261 = vld [vmem:[%s431 + $0xc8] sm:$0xff]
      %v1262 = vld [vmem:[%s431 + $0xd0] sm:$0xff]
      %v1263 = vld [vmem:[%s431 + $0xd8] sm:$0xff]
      %v1264 = vld [vmem:[%s431 + $0xe0] sm:$0xff]
      %v1265 = vld [vmem:[%s431 + $0xe8] sm:$0xff]
      %v1266 = vld [vmem:[%s431 + $0xf0] sm:$0xff]
      %v1267 = vld [vmem:[%s431 + $0xf8] sm:$0xff]
      %v1268 = vld [vmem:[%s431 + $0x100] sm:$0xff]
      %v1269 = vld [vmem:[%s431 + $0x108] sm:$0xff]
      %v1270 = vld [vmem:[%s431 + $0x110] sm:$0xff]
      %v1271 = vld [vmem:[%s431 + $0x118] sm:$0xff]
      %v1272 = vld [vmem:[%s431 + $0x120] sm:$0xff]
      %v1273 = vld [vmem:[%s431 + $0x128] sm:$0xff]
      %v1274 = vld [vmem:[%s431 + $0x130] sm:$0xff]
      %v1275 = vld [vmem:[%s431 + $0x138] sm:$0xff]
      %v1276 = vld [vmem:[%s431 + $0x140] sm:$0xff]
      %v1277 = vld [vmem:[%s431 + $0x148] sm:$0xff]
      %v1278 = vld [vmem:[%s431 + $0x150] sm:$0xff]
      %v1279 = vld [vmem:[%s431 + $0x158] sm:$0xff]
      %v1280 = vld [vmem:[%s431 + $0x160] sm:$0xff]
      %v1281 = vld [vmem:[%s431 + $0x168] sm:$0xff]
      %v1282 = vld [vmem:[%s431 + $0x170] sm:$0xff]
      %v1283 = vld [vmem:[%s431 + $0x178] sm:$0xff]
      %s1284 = scalar_lea.vmem %s1, 24
      %v1285 = vld [vmem:[%s1284] sm:$0xf]
      %v1287 = vsel %vm398, %v1236, 0
      %v1290 = vsel %vm398, %v1237, 0
      %v1293 = vsel %vm398, %v1238, 0
      %v1296 = vsel %vm398, %v1239, 0
      %v1299 = vsel %vm398, %v1240, 0
      %v1302 = vsel %vm398, %v1241, 0
      %v1305 = vsel %vm398, %v1242, 0
      %v1308 = vsel %vm398, %v1243, 0
      %v1311 = vsel %vm398, %v1244, 0
      %v1314 = vsel %vm398, %v1245, 0
      %v1317 = vsel %vm398, %v1246, 0
      %v1320 = vsel %vm398, %v1247, 0
      %v1323 = vsel %vm398, %v1248, 0
      %v1326 = vsel %vm398, %v1249, 0
      %v1329 = vsel %vm398, %v1250, 0
      %v1332 = vsel %vm398, %v1251, 0
      %v1335 = vsel %vm398, %v1252, 0
      %v1338 = vsel %vm398, %v1253, 0
      %v1341 = vsel %vm398, %v1254, 0
      %v1344 = vsel %vm398, %v1255, 0
      %v1347 = vsel %vm398, %v1256, 0
      %v1350 = vsel %vm398, %v1257, 0
      %v1353 = vsel %vm398, %v1258, 0
      %v1356 = vsel %vm398, %v1259, 0
      %v1359 = vsel %vm398, %v1260, 0
      %v1362 = vsel %vm398, %v1261, 0
      %v1365 = vsel %vm398, %v1262, 0
      %v1368 = vsel %vm398, %v1263, 0
      %v1371 = vsel %vm398, %v1264, 0
      %v1374 = vsel %vm398, %v1265, 0
      %v1377 = vsel %vm398, %v1266, 0
      %v1380 = vsel %vm398, %v1267, 0
      %v1383 = vsel %vm398, %v1268, 0
      %v1386 = vsel %vm398, %v1269, 0
      %v1389 = vsel %vm398, %v1270, 0
      %v1392 = vsel %vm398, %v1271, 0
      %v1395 = vsel %vm398, %v1272, 0
      %v1398 = vsel %vm398, %v1273, 0
      %v1401 = vsel %vm398, %v1274, 0
      %v1404 = vsel %vm398, %v1275, 0
      %v1407 = vsel %vm398, %v1276, 0
      %v1410 = vsel %vm398, %v1277, 0
      %v1413 = vsel %vm398, %v1278, 0
      %v1416 = vsel %vm398, %v1279, 0
      %v1419 = vsel %vm398, %v1280, 0
      %v1422 = vsel %vm398, %v1281, 0
      %v1425 = vsel %vm398, %v1282, 0
      %v1428 = vsel %vm398, %v1283, 0
      %v1431 = vsel %vm763, %v1285, 0
      %1433 = vmatpush.msra.mxu0 0.0
      %1434 = vmatpush.msra.mxu0 0.0
      %1435 = vmatpush.msra.mxu0 0.0
      %1436 = vmatpush.msra.mxu0 0.0
      %1437 = vmatpush.msra.mxu0 0.0
      %1438 = vmatpush.msra.mxu0 0.0
      %1439 = vmatpush.msra.mxu0 0.0
      %1440 = vmatpush.msra.mxu0 0.0
      %1441 = vmatpush.msra.mxu0 0.0
      %1442 = vmatpush.msra.mxu0 0.0
      %1443 = vmatpush.msra.mxu0 0.0
      %1444 = vmatpush.msra.mxu0 0.0
      %1445 = vmatpush.msra.mxu0 0.0
      %1446 = vmatpush.msra.mxu0 0.0
      %1447 = vmatpush.msra.mxu0 0.0
      %1448 = vmatpush.msra.mxu0 %v1431
      %1449 = vmatmul.f32.gmra.mxu0 %v1287
      %v1450 = vpop.f32.mrf.mxu0
      %v1451 = vadd.f32 0.0, %v1450
      %1452 = vmatmul.f32.gmra.mxu0 %v1290
      %v1453 = vpop.f32.mrf.mxu0
      %v1454 = vadd.f32 0.0, %v1453
      %1455 = vmatmul.f32.gmra.mxu0 %v1293
      %v1456 = vpop.f32.mrf.mxu0
      %v1457 = vadd.f32 0.0, %v1456
      %1458 = vmatmul.f32.gmra.mxu0 %v1296
      %v1459 = vpop.f32.mrf.mxu0
      %v1460 = vadd.f32 0.0, %v1459
      %1461 = vmatmul.f32.gmra.mxu0 %v1299
      %v1462 = vpop.f32.mrf.mxu0
      %v1463 = vadd.f32 0.0, %v1462
      %1464 = vmatmul.f32.gmra.mxu0 %v1302
      %v1465 = vpop.f32.mrf.mxu0
      %v1466 = vadd.f32 0.0, %v1465
      %1467 = vmatmul.f32.gmra.mxu0 %v1305
      %v1468 = vpop.f32.mrf.mxu0
      %v1469 = vadd.f32 0.0, %v1468
      %1470 = vmatmul.f32.gmra.mxu0 %v1308
      %v1471 = vpop.f32.mrf.mxu0
      %v1472 = vadd.f32 0.0, %v1471
      %1473 = vmatmul.f32.gmra.mxu0 %v1311
      %v1474 = vpop.f32.mrf.mxu0
      %v1475 = vadd.f32 0.0, %v1474
      %1476 = vmatmul.f32.gmra.mxu0 %v1314
      %v1477 = vpop.f32.mrf.mxu0
      %v1478 = vadd.f32 0.0, %v1477
      %1479 = vmatmul.f32.gmra.mxu0 %v1317
      %v1480 = vpop.f32.mrf.mxu0
      %v1481 = vadd.f32 0.0, %v1480
      %1482 = vmatmul.f32.gmra.mxu0 %v1320
      %v1483 = vpop.f32.mrf.mxu0
      %v1484 = vadd.f32 0.0, %v1483
      %1485 = vmatmul.f32.gmra.mxu0 %v1323
      %v1486 = vpop.f32.mrf.mxu0
      %v1487 = vadd.f32 0.0, %v1486
      %1488 = vmatmul.f32.gmra.mxu0 %v1326
      %v1489 = vpop.f32.mrf.mxu0
      %v1490 = vadd.f32 0.0, %v1489
      %1491 = vmatmul.f32.gmra.mxu0 %v1329
      %v1492 = vpop.f32.mrf.mxu0
      %v1493 = vadd.f32 0.0, %v1492
      %1494 = vmatmul.f32.gmra.mxu0 %v1332
      %v1495 = vpop.f32.mrf.mxu0
      %v1496 = vadd.f32 0.0, %v1495
      %1497 = vmatmul.f32.gmra.mxu0 %v1335
      %v1498 = vpop.f32.mrf.mxu0
      %v1499 = vadd.f32 0.0, %v1498
      %1500 = vmatmul.f32.gmra.mxu0 %v1338
      %v1501 = vpop.f32.mrf.mxu0
      %v1502 = vadd.f32 0.0, %v1501
      %1503 = vmatmul.f32.gmra.mxu0 %v1341
      %v1504 = vpop.f32.mrf.mxu0
      %v1505 = vadd.f32 0.0, %v1504
      %1506 = vmatmul.f32.gmra.mxu0 %v1344
      %v1507 = vpop.f32.mrf.mxu0
      %v1508 = vadd.f32 0.0, %v1507
      %1509 = vmatmul.f32.gmra.mxu0 %v1347
      %v1510 = vpop.f32.mrf.mxu0
      %v1511 = vadd.f32 0.0, %v1510
      %1512 = vmatmul.f32.gmra.mxu0 %v1350
      %v1513 = vpop.f32.mrf.mxu0
      %v1514 = vadd.f32 0.0, %v1513
      %1515 = vmatmul.f32.gmra.mxu0 %v1353
      %v1516 = vpop.f32.mrf.mxu0
      %v1517 = vadd.f32 0.0, %v1516
      %1518 = vmatmul.f32.gmra.mxu0 %v1356
      %v1519 = vpop.f32.mrf.mxu0
      %v1520 = vadd.f32 0.0, %v1519
      %1521 = vmatmul.f32.gmra.mxu0 %v1359
      %v1522 = vpop.f32.mrf.mxu0
      %v1523 = vadd.f32 0.0, %v1522
      %1524 = vmatmul.f32.gmra.mxu0 %v1362
      %v1525 = vpop.f32.mrf.mxu0
      %v1526 = vadd.f32 0.0, %v1525
      %1527 = vmatmul.f32.gmra.mxu0 %v1365
      %v1528 = vpop.f32.mrf.mxu0
      %v1529 = vadd.f32 0.0, %v1528
      %1530 = vmatmul.f32.gmra.mxu0 %v1368
      %v1531 = vpop.f32.mrf.mxu0
      %v1532 = vadd.f32 0.0, %v1531
      %1533 = vmatmul.f32.gmra.mxu0 %v1371
      %v1534 = vpop.f32.mrf.mxu0
      %v1535 = vadd.f32 0.0, %v1534
      %1536 = vmatmul.f32.gmra.mxu0 %v1374
      %v1537 = vpop.f32.mrf.mxu0
      %v1538 = vadd.f32 0.0, %v1537
      %1539 = vmatmul.f32.gmra.mxu0 %v1377
      %v1540 = vpop.f32.mrf.mxu0
      %v1541 = vadd.f32 0.0, %v1540
      %1542 = vmatmul.f32.gmra.mxu0 %v1380
      %v1543 = vpop.f32.mrf.mxu0
      %v1544 = vadd.f32 0.0, %v1543
      %1545 = vmatmul.f32.gmra.mxu0 %v1383
      %v1546 = vpop.f32.mrf.mxu0
      %v1547 = vadd.f32 0.0, %v1546
      %1548 = vmatmul.f32.gmra.mxu0 %v1386
      %v1549 = vpop.f32.mrf.mxu0
      %v1550 = vadd.f32 0.0, %v1549
      %1551 = vmatmul.f32.gmra.mxu0 %v1389
      %v1552 = vpop.f32.mrf.mxu0
      %v1553 = vadd.f32 0.0, %v1552
      %1554 = vmatmul.f32.gmra.mxu0 %v1392
      %v1555 = vpop.f32.mrf.mxu0
      %v1556 = vadd.f32 0.0, %v1555
      %1557 = vmatmul.f32.gmra.mxu0 %v1395
      %v1558 = vpop.f32.mrf.mxu0
      %v1559 = vadd.f32 0.0, %v1558
      %1560 = vmatmul.f32.gmra.mxu0 %v1398
      %v1561 = vpop.f32.mrf.mxu0
      %v1562 = vadd.f32 0.0, %v1561
      %1563 = vmatmul.f32.gmra.mxu0 %v1401
      %v1564 = vpop.f32.mrf.mxu0
      %v1565 = vadd.f32 0.0, %v1564
      %1566 = vmatmul.f32.gmra.mxu0 %v1404
      %v1567 = vpop.f32.mrf.mxu0
      %v1568 = vadd.f32 0.0, %v1567
      %1569 = vmatmul.f32.gmra.mxu0 %v1407
      %v1570 = vpop.f32.mrf.mxu0
      %v1571 = vadd.f32 0.0, %v1570
      %1572 = vmatmul.f32.gmra.mxu0 %v1410
      %v1573 = vpop.f32.mrf.mxu0
      %v1574 = vadd.f32 0.0, %v1573
      %1575 = vmatmul.f32.gmra.mxu0 %v1413
      %v1576 = vpop.f32.mrf.mxu0
      %v1577 = vadd.f32 0.0, %v1576
      %1578 = vmatmul.f32.gmra.mxu0 %v1416
      %v1579 = vpop.f32.mrf.mxu0
      %v1580 = vadd.f32 0.0, %v1579
      %1581 = vmatmul.f32.gmra.mxu0 %v1419
      %v1582 = vpop.f32.mrf.mxu0
      %v1583 = vadd.f32 0.0, %v1582
      %1584 = vmatmul.f32.gmra.mxu0 %v1422
      %v1585 = vpop.f32.mrf.mxu0
      %v1586 = vadd.f32 0.0, %v1585
      %1587 = vmatmul.f32.gmra.mxu0 %v1425
      %v1588 = vpop.f32.mrf.mxu0
      %v1589 = vadd.f32 0.0, %v1588
      %1590 = vmatmul.f32.gmra.mxu0 %v1428
      %v1591 = vpop.f32.mrf.mxu0
      %v1592 = vadd.f32 0.0, %v1591
      %1593 = vdwg.mxu0
      %v1594 = vadd.f32 %v1093, %v1451
      %v1595 = vadd.f32 %v1096, %v1454
      %v1596 = vadd.f32 %v1099, %v1457
      %v1597 = vadd.f32 %v1102, %v1460
      %v1598 = vadd.f32 %v1105, %v1463
      %v1599 = vadd.f32 %v1108, %v1466
      %v1600 = vadd.f32 %v1111, %v1469
      %v1601 = vadd.f32 %v1114, %v1472
      %v1602 = vadd.f32 %v1117, %v1475
      %v1603 = vadd.f32 %v1120, %v1478
      %v1604 = vadd.f32 %v1123, %v1481
      %v1605 = vadd.f32 %v1126, %v1484
      %v1606 = vadd.f32 %v1129, %v1487
      %v1607 = vadd.f32 %v1132, %v1490
      %v1608 = vadd.f32 %v1135, %v1493
      %v1609 = vadd.f32 %v1138, %v1496
      %v1610 = vadd.f32 %v1141, %v1499
      %v1611 = vadd.f32 %v1144, %v1502
      %v1612 = vadd.f32 %v1147, %v1505
      %v1613 = vadd.f32 %v1150, %v1508
      %v1614 = vadd.f32 %v1153, %v1511
      %v1615 = vadd.f32 %v1156, %v1514
      %v1616 = vadd.f32 %v1159, %v1517
      %v1617 = vadd.f32 %v1162, %v1520
      %v1618 = vadd.f32 %v1165, %v1523
      %v1619 = vadd.f32 %v1168, %v1526
      %v1620 = vadd.f32 %v1171, %v1529
      %v1621 = vadd.f32 %v1174, %v1532
      %v1622 = vadd.f32 %v1177, %v1535
      %v1623 = vadd.f32 %v1180, %v1538
      %v1624 = vadd.f32 %v1183, %v1541
      %v1625 = vadd.f32 %v1186, %v1544
      %v1626 = vadd.f32 %v1189, %v1547
      %v1627 = vadd.f32 %v1192, %v1550
      %v1628 = vadd.f32 %v1195, %v1553
      %v1629 = vadd.f32 %v1198, %v1556
      %v1630 = vadd.f32 %v1201, %v1559
      %v1631 = vadd.f32 %v1204, %v1562
      %v1632 = vadd.f32 %v1207, %v1565
      %v1633 = vadd.f32 %v1210, %v1568
      %v1634 = vadd.f32 %v1213, %v1571
      %v1635 = vadd.f32 %v1216, %v1574
      %v1636 = vadd.f32 %v1219, %v1577
      %v1637 = vadd.f32 %v1222, %v1580
      %v1638 = vadd.f32 %v1225, %v1583
      %v1639 = vadd.f32 %v1228, %v1586
      %v1640 = vadd.f32 %v1231, %v1589
      %v1641 = vadd.f32 %v1234, %v1592
      %v1642 = vrot.slane %v1594, 7
      %v1643 = vrot.slane %v1595, 7
      %v1644 = vrot.slane %v1596, 7
      %v1645 = vrot.slane %v1597, 7
      %v1646 = vrot.slane %v1598, 7
      %v1647 = vrot.slane %v1599, 7
      %v1648 = vrot.slane %v1600, 7
      %v1649 = vrot.slane %v1601, 7
      %v1650 = vrot.slane %v1602, 7
      %v1651 = vrot.slane %v1603, 7
      %v1652 = vrot.slane %v1604, 7
      %v1653 = vrot.slane %v1605, 7
      %v1654 = vrot.slane %v1606, 7
      %v1655 = vrot.slane %v1607, 7
      %v1656 = vrot.slane %v1608, 7
      %v1657 = vrot.slane %v1609, 7
      %v1658 = vrot.slane %v1610, 7
      %v1659 = vrot.slane %v1611, 7
      %v1660 = vrot.slane %v1612, 7
      %v1661 = vrot.slane %v1613, 7
      %v1662 = vrot.slane %v1614, 7
      %v1663 = vrot.slane %v1615, 7
      %v1664 = vrot.slane %v1616, 7
      %v1665 = vrot.slane %v1617, 7
      %v1666 = vrot.slane %v1618, 7
      %v1667 = vrot.slane %v1619, 7
      %v1668 = vrot.slane %v1620, 7
      %v1669 = vrot.slane %v1621, 7
      %v1670 = vrot.slane %v1622, 7
      %v1671 = vrot.slane %v1623, 7
      %v1672 = vrot.slane %v1624, 7
      %v1673 = vrot.slane %v1625, 7
      %v1674 = vrot.slane %v1626, 7
      %v1675 = vrot.slane %v1627, 7
      %v1676 = vrot.slane %v1628, 7
      %v1677 = vrot.slane %v1629, 7
      %v1678 = vrot.slane %v1630, 7
      %v1679 = vrot.slane %v1631, 7
      %v1680 = vrot.slane %v1632, 7
      %v1681 = vrot.slane %v1633, 7
      %v1682 = vrot.slane %v1634, 7
      %v1683 = vrot.slane %v1635, 7
      %v1684 = vrot.slane %v1636, 7
      %v1685 = vrot.slane %v1637, 7
      %v1686 = vrot.slane %v1638, 7
      %v1687 = vrot.slane %v1639, 7
      %v1688 = vrot.slane %v1640, 7
      %v1689 = vrot.slane %v1641, 7
      %vm1690 = vcmp.lt.s32.totalorder %v353, 1
      %v1691 = vsel %vm1690, %v1688, %v1689
      %v1692 = vsel %vm1690, %v1687, %v1688
      %v1693 = vsel %vm1690, %v1686, %v1687
      %v1694 = vsel %vm1690, %v1685, %v1686
      %v1695 = vsel %vm1690, %v1684, %v1685
      %v1696 = vsel %vm1690, %v1683, %v1684
      %v1697 = vsel %vm1690, %v1682, %v1683
      %v1698 = vsel %vm1690, %v1681, %v1682
      %v1699 = vsel %vm1690, %v1680, %v1681
      %v1700 = vsel %vm1690, %v1679, %v1680
      %v1701 = vsel %vm1690, %v1678, %v1679
      %v1702 = vsel %vm1690, %v1677, %v1678
      %v1703 = vsel %vm1690, %v1676, %v1677
      %v1704 = vsel %vm1690, %v1675, %v1676
      %v1705 = vsel %vm1690, %v1674, %v1675
      %v1706 = vsel %vm1690, %v1673, %v1674
      %v1707 = vsel %vm1690, %v1672, %v1673
      %v1708 = vsel %vm1690, %v1671, %v1672
      %v1709 = vsel %vm1690, %v1670, %v1671
      %v1710 = vsel %vm1690, %v1669, %v1670
      %v1711 = vsel %vm1690, %v1668, %v1669
      %v1712 = vsel %vm1690, %v1667, %v1668
      %v1713 = vsel %vm1690, %v1666, %v1667
      %v1714 = vsel %vm1690, %v1665, %v1666
      %v1715 = vsel %vm1690, %v1664, %v1665
      %v1716 = vsel %vm1690, %v1663, %v1664
      %v1717 = vsel %vm1690, %v1662, %v1663
      %v1718 = vsel %vm1690, %v1661, %v1662
      %v1719 = vsel %vm1690, %v1660, %v1661
      %v1720 = vsel %vm1690, %v1659, %v1660
      %v1721 = vsel %vm1690, %v1658, %v1659
      %v1722 = vsel %vm1690, %v1657, %v1658
      %v1723 = vsel %vm1690, %v1656, %v1657
      %v1724 = vsel %vm1690, %v1655, %v1656
      %v1725 = vsel %vm1690, %v1654, %v1655
      %v1726 = vsel %vm1690, %v1653, %v1654
      %v1727 = vsel %vm1690, %v1652, %v1653
      %v1728 = vsel %vm1690, %v1651, %v1652
      %v1729 = vsel %vm1690, %v1650, %v1651
      %v1730 = vsel %vm1690, %v1649, %v1650
      %v1731 = vsel %vm1690, %v1648, %v1649
      %v1732 = vsel %vm1690, %v1647, %v1648
      %v1733 = vsel %vm1690, %v1646, %v1647
      %v1734 = vsel %vm1690, %v1645, %v1646
      %v1735 = vsel %vm1690, %v1644, %v1645
      %v1736 = vsel %vm1690, %v1643, %v1644
      %v1737 = vsel %vm1690, %v1642, %v1643
      %v1738 = vsel %vm1690, %v1689, %v1642
      %v1740 = vperm.slane %v519, 0
      %v1742 = vadd.f32 %v1738, %v1740
      %v1743 = vadd.f32 %v1737, %v1740
      %v1744 = vadd.f32 %v1736, %v1740
      %v1745 = vadd.f32 %v1735, %v1740
      %v1746 = vadd.f32 %v1734, %v1740
      %v1747 = vadd.f32 %v1733, %v1740
      %v1748 = vadd.f32 %v1732, %v1740
      %v1749 = vadd.f32 %v1731, %v1740
      %v1750 = vadd.f32 %v1730, %v1740
      %v1751 = vadd.f32 %v1729, %v1740
      %v1752 = vadd.f32 %v1728, %v1740
      %v1753 = vadd.f32 %v1727, %v1740
      %v1754 = vadd.f32 %v1726, %v1740
      %v1755 = vadd.f32 %v1725, %v1740
      %v1756 = vadd.f32 %v1724, %v1740
      %v1757 = vadd.f32 %v1723, %v1740
      %v1758 = vadd.f32 %v1722, %v1740
      %v1759 = vadd.f32 %v1721, %v1740
      %v1760 = vadd.f32 %v1720, %v1740
      %v1761 = vadd.f32 %v1719, %v1740
      %v1762 = vadd.f32 %v1718, %v1740
      %v1763 = vadd.f32 %v1717, %v1740
      %v1764 = vadd.f32 %v1716, %v1740
      %v1765 = vadd.f32 %v1715, %v1740
      %v1766 = vadd.f32 %v1714, %v1740
      %v1767 = vadd.f32 %v1713, %v1740
      %v1768 = vadd.f32 %v1712, %v1740
      %v1769 = vadd.f32 %v1711, %v1740
      %v1770 = vadd.f32 %v1710, %v1740
      %v1771 = vadd.f32 %v1709, %v1740
      %v1772 = vadd.f32 %v1708, %v1740
      %v1773 = vadd.f32 %v1707, %v1740
      %v1774 = vadd.f32 %v1706, %v1740
      %v1775 = vadd.f32 %v1705, %v1740
      %v1776 = vadd.f32 %v1704, %v1740
      %v1777 = vadd.f32 %v1703, %v1740
      %v1778 = vadd.f32 %v1702, %v1740
      %v1779 = vadd.f32 %v1701, %v1740
      %v1780 = vadd.f32 %v1700, %v1740
      %v1781 = vadd.f32 %v1699, %v1740
      %v1782 = vadd.f32 %v1698, %v1740
      %v1783 = vadd.f32 %v1697, %v1740
      %v1784 = vadd.f32 %v1696, %v1740
      %v1785 = vadd.f32 %v1695, %v1740
      %v1786 = vadd.f32 %v1694, %v1740
      %v1787 = vadd.f32 %v1693, %v1740
      %v1788 = vadd.f32 %v1692, %v1740
      %v1789 = vadd.f32 %v1691, %v1740
      %s1790 = scalar_lea.vmem %s1, 4
      %v1791 = vld [vmem:[%s1790] sm:$0xf]
      %s1792 = scalar_lea.vmem %s1, 16
      %v1793 = vld [vmem:[%s1792] sm:$0xf]
      %v1795 = vsel %vm763, %v1793, 0
      %1797 = vmatpush.msra.mxu0 0.0
      %1798 = vmatpush.msra.mxu0 0.0
      %1799 = vmatpush.msra.mxu0 0.0
      %1800 = vmatpush.msra.mxu0 0.0
      %1801 = vmatpush.msra.mxu0 0.0
      %1802 = vmatpush.msra.mxu0 0.0
      %1803 = vmatpush.msra.mxu0 0.0
      %1804 = vmatpush.msra.mxu0 0.0
      %1805 = vmatpush.msra.mxu0 0.0
      %1806 = vmatpush.msra.mxu0 0.0
      %1807 = vmatpush.msra.mxu0 0.0
      %1808 = vmatpush.msra.mxu0 0.0
      %1809 = vmatpush.msra.mxu0 0.0
      %1810 = vmatpush.msra.mxu0 0.0
      %1811 = vmatpush.msra.mxu0 0.0
      %1812 = vmatpush.msra.mxu0 %v1795
      %1813 = vmatmul.f32.gmra.mxu0 %v620
      %v1814 = vpop.f32.mrf.mxu0
      %v1815 = vadd.f32 0.0, %v1814
      %1816 = vmatmul.f32.gmra.mxu0 %v623
      %v1817 = vpop.f32.mrf.mxu0
      %v1818 = vadd.f32 0.0, %v1817
      %1819 = vmatmul.f32.gmra.mxu0 %v626
      %v1820 = vpop.f32.mrf.mxu0
      %v1821 = vadd.f32 0.0, %v1820
      %1822 = vmatmul.f32.gmra.mxu0 %v629
      %v1823 = vpop.f32.mrf.mxu0
      %v1824 = vadd.f32 0.0, %v1823
      %1825 = vmatmul.f32.gmra.mxu0 %v632
      %v1826 = vpop.f32.mrf.mxu0
      %v1827 = vadd.f32 0.0, %v1826
      %1828 = vmatmul.f32.gmra.mxu0 %v635
      %v1829 = vpop.f32.mrf.mxu0
      %v1830 = vadd.f32 0.0, %v1829
      %1831 = vmatmul.f32.gmra.mxu0 %v638
      %v1832 = vpop.f32.mrf.mxu0
      %v1833 = vadd.f32 0.0, %v1832
      %1834 = vmatmul.f32.gmra.mxu0 %v641
      %v1835 = vpop.f32.mrf.mxu0
      %v1836 = vadd.f32 0.0, %v1835
      %1837 = vmatmul.f32.gmra.mxu0 %v644
      %v1838 = vpop.f32.mrf.mxu0
      %v1839 = vadd.f32 0.0, %v1838
      %1840 = vmatmul.f32.gmra.mxu0 %v647
      %v1841 = vpop.f32.mrf.mxu0
      %v1842 = vadd.f32 0.0, %v1841
      %1843 = vmatmul.f32.gmra.mxu0 %v650
      %v1844 = vpop.f32.mrf.mxu0
      %v1845 = vadd.f32 0.0, %v1844
      %1846 = vmatmul.f32.gmra.mxu0 %v653
      %v1847 = vpop.f32.mrf.mxu0
      %v1848 = vadd.f32 0.0, %v1847
      %1849 = vmatmul.f32.gmra.mxu0 %v656
      %v1850 = vpop.f32.mrf.mxu0
      %v1851 = vadd.f32 0.0, %v1850
      %1852 = vmatmul.f32.gmra.mxu0 %v659
      %v1853 = vpop.f32.mrf.mxu0
      %v1854 = vadd.f32 0.0, %v1853
      %1855 = vmatmul.f32.gmra.mxu0 %v662
      %v1856 = vpop.f32.mrf.mxu0
      %v1857 = vadd.f32 0.0, %v1856
      %1858 = vmatmul.f32.gmra.mxu0 %v665
      %v1859 = vpop.f32.mrf.mxu0
      %v1860 = vadd.f32 0.0, %v1859
      %1861 = vmatmul.f32.gmra.mxu0 %v668
      %v1862 = vpop.f32.mrf.mxu0
      %v1863 = vadd.f32 0.0, %v1862
      %1864 = vmatmul.f32.gmra.mxu0 %v671
      %v1865 = vpop.f32.mrf.mxu0
      %v1866 = vadd.f32 0.0, %v1865
      %1867 = vmatmul.f32.gmra.mxu0 %v674
      %v1868 = vpop.f32.mrf.mxu0
      %v1869 = vadd.f32 0.0, %v1868
      %1870 = vmatmul.f32.gmra.mxu0 %v677
      %v1871 = vpop.f32.mrf.mxu0
      %v1872 = vadd.f32 0.0, %v1871
      %1873 = vmatmul.f32.gmra.mxu0 %v680
      %v1874 = vpop.f32.mrf.mxu0
      %v1875 = vadd.f32 0.0, %v1874
      %1876 = vmatmul.f32.gmra.mxu0 %v683
      %v1877 = vpop.f32.mrf.mxu0
      %v1878 = vadd.f32 0.0, %v1877
      %1879 = vmatmul.f32.gmra.mxu0 %v686
      %v1880 = vpop.f32.mrf.mxu0
      %v1881 = vadd.f32 0.0, %v1880
      %1882 = vmatmul.f32.gmra.mxu0 %v689
      %v1883 = vpop.f32.mrf.mxu0
      %v1884 = vadd.f32 0.0, %v1883
      %1885 = vmatmul.f32.gmra.mxu0 %v692
      %v1886 = vpop.f32.mrf.mxu0
      %v1887 = vadd.f32 0.0, %v1886
      %1888 = vmatmul.f32.gmra.mxu0 %v695
      %v1889 = vpop.f32.mrf.mxu0
      %v1890 = vadd.f32 0.0, %v1889
      %1891 = vmatmul.f32.gmra.mxu0 %v698
      %v1892 = vpop.f32.mrf.mxu0
      %v1893 = vadd.f32 0.0, %v1892
      %1894 = vmatmul.f32.gmra.mxu0 %v701
      %v1895 = vpop.f32.mrf.mxu0
      %v1896 = vadd.f32 0.0, %v1895
      %1897 = vmatmul.f32.gmra.mxu0 %v704
      %v1898 = vpop.f32.mrf.mxu0
      %v1899 = vadd.f32 0.0, %v1898
      %1900 = vmatmul.f32.gmra.mxu0 %v707
      %v1901 = vpop.f32.mrf.mxu0
      %v1902 = vadd.f32 0.0, %v1901
      %1903 = vmatmul.f32.gmra.mxu0 %v710
      %v1904 = vpop.f32.mrf.mxu0
      %v1905 = vadd.f32 0.0, %v1904
      %1906 = vmatmul.f32.gmra.mxu0 %v713
      %v1907 = vpop.f32.mrf.mxu0
      %v1908 = vadd.f32 0.0, %v1907
      %1909 = vmatmul.f32.gmra.mxu0 %v716
      %v1910 = vpop.f32.mrf.mxu0
      %v1911 = vadd.f32 0.0, %v1910
      %1912 = vmatmul.f32.gmra.mxu0 %v719
      %v1913 = vpop.f32.mrf.mxu0
      %v1914 = vadd.f32 0.0, %v1913
      %1915 = vmatmul.f32.gmra.mxu0 %v722
      %v1916 = vpop.f32.mrf.mxu0
      %v1917 = vadd.f32 0.0, %v1916
      %1918 = vmatmul.f32.gmra.mxu0 %v725
      %v1919 = vpop.f32.mrf.mxu0
      %v1920 = vadd.f32 0.0, %v1919
      %1921 = vmatmul.f32.gmra.mxu0 %v728
      %v1922 = vpop.f32.mrf.mxu0
      %v1923 = vadd.f32 0.0, %v1922
      %1924 = vmatmul.f32.gmra.mxu0 %v731
      %v1925 = vpop.f32.mrf.mxu0
      %v1926 = vadd.f32 0.0, %v1925
      %1927 = vmatmul.f32.gmra.mxu0 %v734
      %v1928 = vpop.f32.mrf.mxu0
      %v1929 = vadd.f32 0.0, %v1928
      %1930 = vmatmul.f32.gmra.mxu0 %v737
      %v1931 = vpop.f32.mrf.mxu0
      %v1932 = vadd.f32 0.0, %v1931
      %1933 = vmatmul.f32.gmra.mxu0 %v740
      %v1934 = vpop.f32.mrf.mxu0
      %v1935 = vadd.f32 0.0, %v1934
      %1936 = vmatmul.f32.gmra.mxu0 %v743
      %v1937 = vpop.f32.mrf.mxu0
      %v1938 = vadd.f32 0.0, %v1937
      %1939 = vmatmul.f32.gmra.mxu0 %v746
      %v1940 = vpop.f32.mrf.mxu0
      %v1941 = vadd.f32 0.0, %v1940
      %1942 = vmatmul.f32.gmra.mxu0 %v749
      %v1943 = vpop.f32.mrf.mxu0
      %v1944 = vadd.f32 0.0, %v1943
      %1945 = vmatmul.f32.gmra.mxu0 %v752
      %v1946 = vpop.f32.mrf.mxu0
      %v1947 = vadd.f32 0.0, %v1946
      %1948 = vmatmul.f32.gmra.mxu0 %v755
      %v1949 = vpop.f32.mrf.mxu0
      %v1950 = vadd.f32 0.0, %v1949
      %1951 = vmatmul.f32.gmra.mxu0 %v758
      %v1952 = vpop.f32.mrf.mxu0
      %v1953 = vadd.f32 0.0, %v1952
      %1954 = vmatmul.f32.gmra.mxu0 %v761
      %v1955 = vpop.f32.mrf.mxu0
      %v1956 = vadd.f32 0.0, %v1955
      %1957 = vdwg.mxu0
      %v1959 = vsel %vm763, %v1791, 0
      %1961 = vmatpush.msra.mxu0 0.0
      %1962 = vmatpush.msra.mxu0 0.0
      %1963 = vmatpush.msra.mxu0 0.0
      %1964 = vmatpush.msra.mxu0 0.0
      %1965 = vmatpush.msra.mxu0 0.0
      %1966 = vmatpush.msra.mxu0 0.0
      %1967 = vmatpush.msra.mxu0 0.0
      %1968 = vmatpush.msra.mxu0 0.0
      %1969 = vmatpush.msra.mxu0 0.0
      %1970 = vmatpush.msra.mxu0 0.0
      %1971 = vmatpush.msra.mxu0 0.0
      %1972 = vmatpush.msra.mxu0 0.0
      %1973 = vmatpush.msra.mxu0 0.0
      %1974 = vmatpush.msra.mxu0 0.0
      %1975 = vmatpush.msra.mxu0 0.0
      %1976 = vmatpush.msra.mxu0 %v1959
      %1977 = vmatmul.f32.gmra.mxu0 %v929
      %v1978 = vpop.f32.mrf.mxu0
      %v1979 = vadd.f32 %v1815, %v1978
      %1980 = vmatmul.f32.gmra.mxu0 %v932
      %v1981 = vpop.f32.mrf.mxu0
      %v1982 = vadd.f32 %v1818, %v1981
      %1983 = vmatmul.f32.gmra.mxu0 %v935
      %v1984 = vpop.f32.mrf.mxu0
      %v1985 = vadd.f32 %v1821, %v1984
      %1986 = vmatmul.f32.gmra.mxu0 %v938
      %v1987 = vpop.f32.mrf.mxu0
      %v1988 = vadd.f32 %v1824, %v1987
      %1989 = vmatmul.f32.gmra.mxu0 %v941
      %v1990 = vpop.f32.mrf.mxu0
      %v1991 = vadd.f32 %v1827, %v1990
      %1992 = vmatmul.f32.gmra.mxu0 %v944
      %v1993 = vpop.f32.mrf.mxu0
      %v1994 = vadd.f32 %v1830, %v1993
      %1995 = vmatmul.f32.gmra.mxu0 %v947
      %v1996 = vpop.f32.mrf.mxu0
      %v1997 = vadd.f32 %v1833, %v1996
      %1998 = vmatmul.f32.gmra.mxu0 %v950
      %v1999 = vpop.f32.mrf.mxu0
      %v2000 = vadd.f32 %v1836, %v1999
      %2001 = vmatmul.f32.gmra.mxu0 %v953
      %v2002 = vpop.f32.mrf.mxu0
      %v2003 = vadd.f32 %v1839, %v2002
      %2004 = vmatmul.f32.gmra.mxu0 %v956
      %v2005 = vpop.f32.mrf.mxu0
      %v2006 = vadd.f32 %v1842, %v2005
      %2007 = vmatmul.f32.gmra.mxu0 %v959
      %v2008 = vpop.f32.mrf.mxu0
      %v2009 = vadd.f32 %v1845, %v2008
      %2010 = vmatmul.f32.gmra.mxu0 %v962
      %v2011 = vpop.f32.mrf.mxu0
      %v2012 = vadd.f32 %v1848, %v2011
      %2013 = vmatmul.f32.gmra.mxu0 %v965
      %v2014 = vpop.f32.mrf.mxu0
      %v2015 = vadd.f32 %v1851, %v2014
      %2016 = vmatmul.f32.gmra.mxu0 %v968
      %v2017 = vpop.f32.mrf.mxu0
      %v2018 = vadd.f32 %v1854, %v2017
      %2019 = vmatmul.f32.gmra.mxu0 %v971
      %v2020 = vpop.f32.mrf.mxu0
      %v2021 = vadd.f32 %v1857, %v2020
      %2022 = vmatmul.f32.gmra.mxu0 %v974
      %v2023 = vpop.f32.mrf.mxu0
      %v2024 = vadd.f32 %v1860, %v2023
      %2025 = vmatmul.f32.gmra.mxu0 %v977
      %v2026 = vpop.f32.mrf.mxu0
      %v2027 = vadd.f32 %v1863, %v2026
      %2028 = vmatmul.f32.gmra.mxu0 %v980
      %v2029 = vpop.f32.mrf.mxu0
      %v2030 = vadd.f32 %v1866, %v2029
      %2031 = vmatmul.f32.gmra.mxu0 %v983
      %v2032 = vpop.f32.mrf.mxu0
      %v2033 = vadd.f32 %v1869, %v2032
      %2034 = vmatmul.f32.gmra.mxu0 %v986
      %v2035 = vpop.f32.mrf.mxu0
      %v2036 = vadd.f32 %v1872, %v2035
      %2037 = vmatmul.f32.gmra.mxu0 %v989
      %v2038 = vpop.f32.mrf.mxu0
      %v2039 = vadd.f32 %v1875, %v2038
      %2040 = vmatmul.f32.gmra.mxu0 %v992
      %v2041 = vpop.f32.mrf.mxu0
      %v2042 = vadd.f32 %v1878, %v2041
      %2043 = vmatmul.f32.gmra.mxu0 %v995
      %v2044 = vpop.f32.mrf.mxu0
      %v2045 = vadd.f32 %v1881, %v2044
      %2046 = vmatmul.f32.gmra.mxu0 %v998
      %v2047 = vpop.f32.mrf.mxu0
      %v2048 = vadd.f32 %v1884, %v2047
      %2049 = vmatmul.f32.gmra.mxu0 %v1001
      %v2050 = vpop.f32.mrf.mxu0
      %v2051 = vadd.f32 %v1887, %v2050
      %2052 = vmatmul.f32.gmra.mxu0 %v1004
      %v2053 = vpop.f32.mrf.mxu0
      %v2054 = vadd.f32 %v1890, %v2053
      %2055 = vmatmul.f32.gmra.mxu0 %v1007
      %v2056 = vpop.f32.mrf.mxu0
      %v2057 = vadd.f32 %v1893, %v2056
      %2058 = vmatmul.f32.gmra.mxu0 %v1010
      %v2059 = vpop.f32.mrf.mxu0
      %v2060 = vadd.f32 %v1896, %v2059
      %2061 = vmatmul.f32.gmra.mxu0 %v1013
      %v2062 = vpop.f32.mrf.mxu0
      %v2063 = vadd.f32 %v1899, %v2062
      %2064 = vmatmul.f32.gmra.mxu0 %v1016
      %v2065 = vpop.f32.mrf.mxu0
      %v2066 = vadd.f32 %v1902, %v2065
      %2067 = vmatmul.f32.gmra.mxu0 %v1019
      %v2068 = vpop.f32.mrf.mxu0
      %v2069 = vadd.f32 %v1905, %v2068
      %2070 = vmatmul.f32.gmra.mxu0 %v1022
      %v2071 = vpop.f32.mrf.mxu0
      %v2072 = vadd.f32 %v1908, %v2071
      %2073 = vmatmul.f32.gmra.mxu0 %v1025
      %v2074 = vpop.f32.mrf.mxu0
      %v2075 = vadd.f32 %v1911, %v2074
      %2076 = vmatmul.f32.gmra.mxu0 %v1028
      %v2077 = vpop.f32.mrf.mxu0
      %v2078 = vadd.f32 %v1914, %v2077
      %2079 = vmatmul.f32.gmra.mxu0 %v1031
      %v2080 = vpop.f32.mrf.mxu0
      %v2081 = vadd.f32 %v1917, %v2080
      %2082 = vmatmul.f32.gmra.mxu0 %v1034
      %v2083 = vpop.f32.mrf.mxu0
      %v2084 = vadd.f32 %v1920, %v2083
      %2085 = vmatmul.f32.gmra.mxu0 %v1037
      %v2086 = vpop.f32.mrf.mxu0
      %v2087 = vadd.f32 %v1923, %v2086
      %2088 = vmatmul.f32.gmra.mxu0 %v1040
      %v2089 = vpop.f32.mrf.mxu0
      %v2090 = vadd.f32 %v1926, %v2089
      %2091 = vmatmul.f32.gmra.mxu0 %v1043
      %v2092 = vpop.f32.mrf.mxu0
      %v2093 = vadd.f32 %v1929, %v2092
      %2094 = vmatmul.f32.gmra.mxu0 %v1046
      %v2095 = vpop.f32.mrf.mxu0
      %v2096 = vadd.f32 %v1932, %v2095
      %2097 = vmatmul.f32.gmra.mxu0 %v1049
      %v2098 = vpop.f32.mrf.mxu0
      %v2099 = vadd.f32 %v1935, %v2098
      %2100 = vmatmul.f32.gmra.mxu0 %v1052
      %v2101 = vpop.f32.mrf.mxu0
      %v2102 = vadd.f32 %v1938, %v2101
      %2103 = vmatmul.f32.gmra.mxu0 %v1055
      %v2104 = vpop.f32.mrf.mxu0
      %v2105 = vadd.f32 %v1941, %v2104
      %2106 = vmatmul.f32.gmra.mxu0 %v1058
      %v2107 = vpop.f32.mrf.mxu0
      %v2108 = vadd.f32 %v1944, %v2107
      %2109 = vmatmul.f32.gmra.mxu0 %v1061
      %v2110 = vpop.f32.mrf.mxu0
      %v2111 = vadd.f32 %v1947, %v2110
      %2112 = vmatmul.f32.gmra.mxu0 %v1064
      %v2113 = vpop.f32.mrf.mxu0
      %v2114 = vadd.f32 %v1950, %v2113
      %2115 = vmatmul.f32.gmra.mxu0 %v1067
      %v2116 = vpop.f32.mrf.mxu0
      %v2117 = vadd.f32 %v1953, %v2116
      %2118 = vmatmul.f32.gmra.mxu0 %v1070
      %v2119 = vpop.f32.mrf.mxu0
      %v2120 = vadd.f32 %v1956, %v2119
      %2121 = vdwg.mxu0
      %s2122 = scalar_lea.vmem %s1, 28
      %v2123 = vld [vmem:[%s2122] sm:$0xf]
      %v2125 = vsel %vm763, %v2123, 0
      %2127 = vmatpush.msra.mxu0 0.0
      %2128 = vmatpush.msra.mxu0 0.0
      %2129 = vmatpush.msra.mxu0 0.0
      %2130 = vmatpush.msra.mxu0 0.0
      %2131 = vmatpush.msra.mxu0 0.0
      %2132 = vmatpush.msra.mxu0 0.0
      %2133 = vmatpush.msra.mxu0 0.0
      %2134 = vmatpush.msra.mxu0 0.0
      %2135 = vmatpush.msra.mxu0 0.0
      %2136 = vmatpush.msra.mxu0 0.0
      %2137 = vmatpush.msra.mxu0 0.0
      %2138 = vmatpush.msra.mxu0 0.0
      %2139 = vmatpush.msra.mxu0 0.0
      %2140 = vmatpush.msra.mxu0 0.0
      %2141 = vmatpush.msra.mxu0 0.0
      %2142 = vmatpush.msra.mxu0 %v2125
      %2143 = vmatmul.f32.gmra.mxu0 %v1287
      %v2144 = vpop.f32.mrf.mxu0
      %v2145 = vadd.f32 0.0, %v2144
      %2146 = vmatmul.f32.gmra.mxu0 %v1290
      %v2147 = vpop.f32.mrf.mxu0
      %v2148 = vadd.f32 0.0, %v2147
      %2149 = vmatmul.f32.gmra.mxu0 %v1293
      %v2150 = vpop.f32.mrf.mxu0
      %v2151 = vadd.f32 0.0, %v2150
      %2152 = vmatmul.f32.gmra.mxu0 %v1296
      %v2153 = vpop.f32.mrf.mxu0
      %v2154 = vadd.f32 0.0, %v2153
      %2155 = vmatmul.f32.gmra.mxu0 %v1299
      %v2156 = vpop.f32.mrf.mxu0
      %v2157 = vadd.f32 0.0, %v2156
      %2158 = vmatmul.f32.gmra.mxu0 %v1302
      %v2159 = vpop.f32.mrf.mxu0
      %v2160 = vadd.f32 0.0, %v2159
      %2161 = vmatmul.f32.gmra.mxu0 %v1305
      %v2162 = vpop.f32.mrf.mxu0
      %v2163 = vadd.f32 0.0, %v2162
      %2164 = vmatmul.f32.gmra.mxu0 %v1308
      %v2165 = vpop.f32.mrf.mxu0
      %v2166 = vadd.f32 0.0, %v2165
      %2167 = vmatmul.f32.gmra.mxu0 %v1311
      %v2168 = vpop.f32.mrf.mxu0
      %v2169 = vadd.f32 0.0, %v2168
      %2170 = vmatmul.f32.gmra.mxu0 %v1314
      %v2171 = vpop.f32.mrf.mxu0
      %v2172 = vadd.f32 0.0, %v2171
      %2173 = vmatmul.f32.gmra.mxu0 %v1317
      %v2174 = vpop.f32.mrf.mxu0
      %v2175 = vadd.f32 0.0, %v2174
      %2176 = vmatmul.f32.gmra.mxu0 %v1320
      %v2177 = vpop.f32.mrf.mxu0
      %v2178 = vadd.f32 0.0, %v2177
      %2179 = vmatmul.f32.gmra.mxu0 %v1323
      %v2180 = vpop.f32.mrf.mxu0
      %v2181 = vadd.f32 0.0, %v2180
      %2182 = vmatmul.f32.gmra.mxu0 %v1326
      %v2183 = vpop.f32.mrf.mxu0
      %v2184 = vadd.f32 0.0, %v2183
      %2185 = vmatmul.f32.gmra.mxu0 %v1329
      %v2186 = vpop.f32.mrf.mxu0
      %v2187 = vadd.f32 0.0, %v2186
      %2188 = vmatmul.f32.gmra.mxu0 %v1332
      %v2189 = vpop.f32.mrf.mxu0
      %v2190 = vadd.f32 0.0, %v2189
      %2191 = vmatmul.f32.gmra.mxu0 %v1335
      %v2192 = vpop.f32.mrf.mxu0
      %v2193 = vadd.f32 0.0, %v2192
      %2194 = vmatmul.f32.gmra.mxu0 %v1338
      %v2195 = vpop.f32.mrf.mxu0
      %v2196 = vadd.f32 0.0, %v2195
      %2197 = vmatmul.f32.gmra.mxu0 %v1341
      %v2198 = vpop.f32.mrf.mxu0
      %v2199 = vadd.f32 0.0, %v2198
      %2200 = vmatmul.f32.gmra.mxu0 %v1344
      %v2201 = vpop.f32.mrf.mxu0
      %v2202 = vadd.f32 0.0, %v2201
      %2203 = vmatmul.f32.gmra.mxu0 %v1347
      %v2204 = vpop.f32.mrf.mxu0
      %v2205 = vadd.f32 0.0, %v2204
      %2206 = vmatmul.f32.gmra.mxu0 %v1350
      %v2207 = vpop.f32.mrf.mxu0
      %v2208 = vadd.f32 0.0, %v2207
      %2209 = vmatmul.f32.gmra.mxu0 %v1353
      %v2210 = vpop.f32.mrf.mxu0
      %v2211 = vadd.f32 0.0, %v2210
      %2212 = vmatmul.f32.gmra.mxu0 %v1356
      %v2213 = vpop.f32.mrf.mxu0
      %v2214 = vadd.f32 0.0, %v2213
      %2215 = vmatmul.f32.gmra.mxu0 %v1359
      %v2216 = vpop.f32.mrf.mxu0
      %v2217 = vadd.f32 0.0, %v2216
      %2218 = vmatmul.f32.gmra.mxu0 %v1362
      %v2219 = vpop.f32.mrf.mxu0
      %v2220 = vadd.f32 0.0, %v2219
      %2221 = vmatmul.f32.gmra.mxu0 %v1365
      %v2222 = vpop.f32.mrf.mxu0
      %v2223 = vadd.f32 0.0, %v2222
      %2224 = vmatmul.f32.gmra.mxu0 %v1368
      %v2225 = vpop.f32.mrf.mxu0
      %v2226 = vadd.f32 0.0, %v2225
      %2227 = vmatmul.f32.gmra.mxu0 %v1371
      %v2228 = vpop.f32.mrf.mxu0
      %v2229 = vadd.f32 0.0, %v2228
      %2230 = vmatmul.f32.gmra.mxu0 %v1374
      %v2231 = vpop.f32.mrf.mxu0
      %v2232 = vadd.f32 0.0, %v2231
      %2233 = vmatmul.f32.gmra.mxu0 %v1377
      %v2234 = vpop.f32.mrf.mxu0
      %v2235 = vadd.f32 0.0, %v2234
      %2236 = vmatmul.f32.gmra.mxu0 %v1380
      %v2237 = vpop.f32.mrf.mxu0
      %v2238 = vadd.f32 0.0, %v2237
      %2239 = vmatmul.f32.gmra.mxu0 %v1383
      %v2240 = vpop.f32.mrf.mxu0
      %v2241 = vadd.f32 0.0, %v2240
      %2242 = vmatmul.f32.gmra.mxu0 %v1386
      %v2243 = vpop.f32.mrf.mxu0
      %v2244 = vadd.f32 0.0, %v2243
      %2245 = vmatmul.f32.gmra.mxu0 %v1389
      %v2246 = vpop.f32.mrf.mxu0
      %v2247 = vadd.f32 0.0, %v2246
      %2248 = vmatmul.f32.gmra.mxu0 %v1392
      %v2249 = vpop.f32.mrf.mxu0
      %v2250 = vadd.f32 0.0, %v2249
      %2251 = vmatmul.f32.gmra.mxu0 %v1395
      %v2252 = vpop.f32.mrf.mxu0
      %v2253 = vadd.f32 0.0, %v2252
      %2254 = vmatmul.f32.gmra.mxu0 %v1398
      %v2255 = vpop.f32.mrf.mxu0
      %v2256 = vadd.f32 0.0, %v2255
      %2257 = vmatmul.f32.gmra.mxu0 %v1401
      %v2258 = vpop.f32.mrf.mxu0
      %v2259 = vadd.f32 0.0, %v2258
      %2260 = vmatmul.f32.gmra.mxu0 %v1404
      %v2261 = vpop.f32.mrf.mxu0
      %v2262 = vadd.f32 0.0, %v2261
      %2263 = vmatmul.f32.gmra.mxu0 %v1407
      %v2264 = vpop.f32.mrf.mxu0
      %v2265 = vadd.f32 0.0, %v2264
      %2266 = vmatmul.f32.gmra.mxu0 %v1410
      %v2267 = vpop.f32.mrf.mxu0
      %v2268 = vadd.f32 0.0, %v2267
      %2269 = vmatmul.f32.gmra.mxu0 %v1413
      %v2270 = vpop.f32.mrf.mxu0
      %v2271 = vadd.f32 0.0, %v2270
      %2272 = vmatmul.f32.gmra.mxu0 %v1416
      %v2273 = vpop.f32.mrf.mxu0
      %v2274 = vadd.f32 0.0, %v2273
      %2275 = vmatmul.f32.gmra.mxu0 %v1419
      %v2276 = vpop.f32.mrf.mxu0
      %v2277 = vadd.f32 0.0, %v2276
      %2278 = vmatmul.f32.gmra.mxu0 %v1422
      %v2279 = vpop.f32.mrf.mxu0
      %v2280 = vadd.f32 0.0, %v2279
      %2281 = vmatmul.f32.gmra.mxu0 %v1425
      %v2282 = vpop.f32.mrf.mxu0
      %v2283 = vadd.f32 0.0, %v2282
      %2284 = vmatmul.f32.gmra.mxu0 %v1428
      %v2285 = vpop.f32.mrf.mxu0
      %v2286 = vadd.f32 0.0, %v2285
      %2287 = vdwg.mxu0
      %v2288 = vadd.f32 %v1979, %v2145
      %v2289 = vadd.f32 %v1982, %v2148
      %v2290 = vadd.f32 %v1985, %v2151
      %v2291 = vadd.f32 %v1988, %v2154
      %v2292 = vadd.f32 %v1991, %v2157
      %v2293 = vadd.f32 %v1994, %v2160
      %v2294 = vadd.f32 %v1997, %v2163
      %v2295 = vadd.f32 %v2000, %v2166
      %v2296 = vadd.f32 %v2003, %v2169
      %v2297 = vadd.f32 %v2006, %v2172
      %v2298 = vadd.f32 %v2009, %v2175
      %v2299 = vadd.f32 %v2012, %v2178
      %v2300 = vadd.f32 %v2015, %v2181
      %v2301 = vadd.f32 %v2018, %v2184
      %v2302 = vadd.f32 %v2021, %v2187
      %v2303 = vadd.f32 %v2024, %v2190
      %v2304 = vadd.f32 %v2027, %v2193
      %v2305 = vadd.f32 %v2030, %v2196
      %v2306 = vadd.f32 %v2033, %v2199
      %v2307 = vadd.f32 %v2036, %v2202
      %v2308 = vadd.f32 %v2039, %v2205
      %v2309 = vadd.f32 %v2042, %v2208
      %v2310 = vadd.f32 %v2045, %v2211
      %v2311 = vadd.f32 %v2048, %v2214
      %v2312 = vadd.f32 %v2051, %v2217
      %v2313 = vadd.f32 %v2054, %v2220
      %v2314 = vadd.f32 %v2057, %v2223
      %v2315 = vadd.f32 %v2060, %v2226
      %v2316 = vadd.f32 %v2063, %v2229
      %v2317 = vadd.f32 %v2066, %v2232
      %v2318 = vadd.f32 %v2069, %v2235
      %v2319 = vadd.f32 %v2072, %v2238
      %v2320 = vadd.f32 %v2075, %v2241
      %v2321 = vadd.f32 %v2078, %v2244
      %v2322 = vadd.f32 %v2081, %v2247
      %v2323 = vadd.f32 %v2084, %v2250
      %v2324 = vadd.f32 %v2087, %v2253
      %v2325 = vadd.f32 %v2090, %v2256
      %v2326 = vadd.f32 %v2093, %v2259
      %v2327 = vadd.f32 %v2096, %v2262
      %v2328 = vadd.f32 %v2099, %v2265
      %v2329 = vadd.f32 %v2102, %v2268
      %v2330 = vadd.f32 %v2105, %v2271
      %v2331 = vadd.f32 %v2108, %v2274
      %v2332 = vadd.f32 %v2111, %v2277
      %v2333 = vadd.f32 %v2114, %v2280
      %v2334 = vadd.f32 %v2117, %v2283
      %v2335 = vadd.f32 %v2120, %v2286
      %v2336 = vadd.f32 %v1742, %v2288
      %v2337 = vadd.f32 %v1743, %v2289
      %v2338 = vadd.f32 %v1744, %v2290
      %v2339 = vadd.f32 %v1745, %v2291
      %v2340 = vadd.f32 %v1746, %v2292
      %v2341 = vadd.f32 %v1747, %v2293
      %v2342 = vadd.f32 %v1748, %v2294
      %v2343 = vadd.f32 %v1749, %v2295
      %v2344 = vadd.f32 %v1750, %v2296
      %v2345 = vadd.f32 %v1751, %v2297
      %v2346 = vadd.f32 %v1752, %v2298
      %v2347 = vadd.f32 %v1753, %v2299
      %v2348 = vadd.f32 %v1754, %v2300
      %v2349 = vadd.f32 %v1755, %v2301
      %v2350 = vadd.f32 %v1756, %v2302
      %v2351 = vadd.f32 %v1757, %v2303
      %v2352 = vadd.f32 %v1758, %v2304
      %v2353 = vadd.f32 %v1759, %v2305
      %v2354 = vadd.f32 %v1760, %v2306
      %v2355 = vadd.f32 %v1761, %v2307
      %v2356 = vadd.f32 %v1762, %v2308
      %v2357 = vadd.f32 %v1763, %v2309
      %v2358 = vadd.f32 %v1764, %v2310
      %v2359 = vadd.f32 %v1765, %v2311
      %v2360 = vadd.f32 %v1766, %v2312
      %v2361 = vadd.f32 %v1767, %v2313
      %v2362 = vadd.f32 %v1768, %v2314
      %v2363 = vadd.f32 %v1769, %v2315
      %v2364 = vadd.f32 %v1770, %v2316
      %v2365 = vadd.f32 %v1771, %v2317
      %v2366 = vadd.f32 %v1772, %v2318
      %v2367 = vadd.f32 %v1773, %v2319
      %v2368 = vadd.f32 %v1774, %v2320
      %v2369 = vadd.f32 %v1775, %v2321
      %v2370 = vadd.f32 %v1776, %v2322
      %v2371 = vadd.f32 %v1777, %v2323
      %v2372 = vadd.f32 %v1778, %v2324
      %v2373 = vadd.f32 %v1779, %v2325
      %v2374 = vadd.f32 %v1780, %v2326
      %v2375 = vadd.f32 %v1781, %v2327
      %v2376 = vadd.f32 %v1782, %v2328
      %v2377 = vadd.f32 %v1783, %v2329
      %v2378 = vadd.f32 %v1784, %v2330
      %v2379 = vadd.f32 %v1785, %v2331
      %v2380 = vadd.f32 %v1786, %v2332
      %v2381 = vadd.f32 %v1787, %v2333
      %v2382 = vadd.f32 %v1788, %v2334
      %v2383 = vadd.f32 %v1789, %v2335
      %s2384 = scalar_lea.vmem %s1, 8
      %v2385 = vld [vmem:[%s2384] sm:$0xf]
      %s2386 = scalar_lea.vmem %s1, 20
      %v2387 = vld [vmem:[%s2386] sm:$0xf]
      %v2389 = vsel %vm763, %v2387, 0
      %2391 = vmatpush.msra.mxu0 0.0
      %2392 = vmatpush.msra.mxu0 0.0
      %2393 = vmatpush.msra.mxu0 0.0
      %2394 = vmatpush.msra.mxu0 0.0
      %2395 = vmatpush.msra.mxu0 0.0
      %2396 = vmatpush.msra.mxu0 0.0
      %2397 = vmatpush.msra.mxu0 0.0
      %2398 = vmatpush.msra.mxu0 0.0
      %2399 = vmatpush.msra.mxu0 0.0
      %2400 = vmatpush.msra.mxu0 0.0
      %2401 = vmatpush.msra.mxu0 0.0
      %2402 = vmatpush.msra.mxu0 0.0
      %2403 = vmatpush.msra.mxu0 0.0
      %2404 = vmatpush.msra.mxu0 0.0
      %2405 = vmatpush.msra.mxu0 0.0
      %2406 = vmatpush.msra.mxu0 %v2389
      %2407 = vmatmul.f32.gmra.mxu0 %v620
      %v2408 = vpop.f32.mrf.mxu0
      %v2409 = vadd.f32 0.0, %v2408
      %2410 = vmatmul.f32.gmra.mxu0 %v623
      %v2411 = vpop.f32.mrf.mxu0
      %v2412 = vadd.f32 0.0, %v2411
      %2413 = vmatmul.f32.gmra.mxu0 %v626
      %v2414 = vpop.f32.mrf.mxu0
      %v2415 = vadd.f32 0.0, %v2414
      %2416 = vmatmul.f32.gmra.mxu0 %v629
      %v2417 = vpop.f32.mrf.mxu0
      %v2418 = vadd.f32 0.0, %v2417
      %2419 = vmatmul.f32.gmra.mxu0 %v632
      %v2420 = vpop.f32.mrf.mxu0
      %v2421 = vadd.f32 0.0, %v2420
      %2422 = vmatmul.f32.gmra.mxu0 %v635
      %v2423 = vpop.f32.mrf.mxu0
      %v2424 = vadd.f32 0.0, %v2423
      %2425 = vmatmul.f32.gmra.mxu0 %v638
      %v2426 = vpop.f32.mrf.mxu0
      %v2427 = vadd.f32 0.0, %v2426
      %2428 = vmatmul.f32.gmra.mxu0 %v641
      %v2429 = vpop.f32.mrf.mxu0
      %v2430 = vadd.f32 0.0, %v2429
      %2431 = vmatmul.f32.gmra.mxu0 %v644
      %v2432 = vpop.f32.mrf.mxu0
      %v2433 = vadd.f32 0.0, %v2432
      %2434 = vmatmul.f32.gmra.mxu0 %v647
      %v2435 = vpop.f32.mrf.mxu0
      %v2436 = vadd.f32 0.0, %v2435
      %2437 = vmatmul.f32.gmra.mxu0 %v650
      %v2438 = vpop.f32.mrf.mxu0
      %v2439 = vadd.f32 0.0, %v2438
      %2440 = vmatmul.f32.gmra.mxu0 %v653
      %v2441 = vpop.f32.mrf.mxu0
      %v2442 = vadd.f32 0.0, %v2441
      %2443 = vmatmul.f32.gmra.mxu0 %v656
      %v2444 = vpop.f32.mrf.mxu0
      %v2445 = vadd.f32 0.0, %v2444
      %2446 = vmatmul.f32.gmra.mxu0 %v659
      %v2447 = vpop.f32.mrf.mxu0
      %v2448 = vadd.f32 0.0, %v2447
      %2449 = vmatmul.f32.gmra.mxu0 %v662
      %v2450 = vpop.f32.mrf.mxu0
      %v2451 = vadd.f32 0.0, %v2450
      %2452 = vmatmul.f32.gmra.mxu0 %v665
      %v2453 = vpop.f32.mrf.mxu0
      %v2454 = vadd.f32 0.0, %v2453
      %2455 = vmatmul.f32.gmra.mxu0 %v668
      %v2456 = vpop.f32.mrf.mxu0
      %v2457 = vadd.f32 0.0, %v2456
      %2458 = vmatmul.f32.gmra.mxu0 %v671
      %v2459 = vpop.f32.mrf.mxu0
      %v2460 = vadd.f32 0.0, %v2459
      %2461 = vmatmul.f32.gmra.mxu0 %v674
      %v2462 = vpop.f32.mrf.mxu0
      %v2463 = vadd.f32 0.0, %v2462
      %2464 = vmatmul.f32.gmra.mxu0 %v677
      %v2465 = vpop.f32.mrf.mxu0
      %v2466 = vadd.f32 0.0, %v2465
      %2467 = vmatmul.f32.gmra.mxu0 %v680
      %v2468 = vpop.f32.mrf.mxu0
      %v2469 = vadd.f32 0.0, %v2468
      %2470 = vmatmul.f32.gmra.mxu0 %v683
      %v2471 = vpop.f32.mrf.mxu0
      %v2472 = vadd.f32 0.0, %v2471
      %2473 = vmatmul.f32.gmra.mxu0 %v686
      %v2474 = vpop.f32.mrf.mxu0
      %v2475 = vadd.f32 0.0, %v2474
      %2476 = vmatmul.f32.gmra.mxu0 %v689
      %v2477 = vpop.f32.mrf.mxu0
      %v2478 = vadd.f32 0.0, %v2477
      %2479 = vmatmul.f32.gmra.mxu0 %v692
      %v2480 = vpop.f32.mrf.mxu0
      %v2481 = vadd.f32 0.0, %v2480
      %2482 = vmatmul.f32.gmra.mxu0 %v695
      %v2483 = vpop.f32.mrf.mxu0
      %v2484 = vadd.f32 0.0, %v2483
      %2485 = vmatmul.f32.gmra.mxu0 %v698
      %v2486 = vpop.f32.mrf.mxu0
      %v2487 = vadd.f32 0.0, %v2486
      %2488 = vmatmul.f32.gmra.mxu0 %v701
      %v2489 = vpop.f32.mrf.mxu0
      %v2490 = vadd.f32 0.0, %v2489
      %2491 = vmatmul.f32.gmra.mxu0 %v704
      %v2492 = vpop.f32.mrf.mxu0
      %v2493 = vadd.f32 0.0, %v2492
      %2494 = vmatmul.f32.gmra.mxu0 %v707
      %v2495 = vpop.f32.mrf.mxu0
      %v2496 = vadd.f32 0.0, %v2495
      %2497 = vmatmul.f32.gmra.mxu0 %v710
      %v2498 = vpop.f32.mrf.mxu0
      %v2499 = vadd.f32 0.0, %v2498
      %2500 = vmatmul.f32.gmra.mxu0 %v713
      %v2501 = vpop.f32.mrf.mxu0
      %v2502 = vadd.f32 0.0, %v2501
      %2503 = vmatmul.f32.gmra.mxu0 %v716
      %v2504 = vpop.f32.mrf.mxu0
      %v2505 = vadd.f32 0.0, %v2504
      %2506 = vmatmul.f32.gmra.mxu0 %v719
      %v2507 = vpop.f32.mrf.mxu0
      %v2508 = vadd.f32 0.0, %v2507
      %2509 = vmatmul.f32.gmra.mxu0 %v722
      %v2510 = vpop.f32.mrf.mxu0
      %v2511 = vadd.f32 0.0, %v2510
      %2512 = vmatmul.f32.gmra.mxu0 %v725
      %v2513 = vpop.f32.mrf.mxu0
      %v2514 = vadd.f32 0.0, %v2513
      %2515 = vmatmul.f32.gmra.mxu0 %v728
      %v2516 = vpop.f32.mrf.mxu0
      %v2517 = vadd.f32 0.0, %v2516
      %2518 = vmatmul.f32.gmra.mxu0 %v731
      %v2519 = vpop.f32.mrf.mxu0
      %v2520 = vadd.f32 0.0, %v2519
      %2521 = vmatmul.f32.gmra.mxu0 %v734
      %v2522 = vpop.f32.mrf.mxu0
      %v2523 = vadd.f32 0.0, %v2522
      %2524 = vmatmul.f32.gmra.mxu0 %v737
      %v2525 = vpop.f32.mrf.mxu0
      %v2526 = vadd.f32 0.0, %v2525
      %2527 = vmatmul.f32.gmra.mxu0 %v740
      %v2528 = vpop.f32.mrf.mxu0
      %v2529 = vadd.f32 0.0, %v2528
      %2530 = vmatmul.f32.gmra.mxu0 %v743
      %v2531 = vpop.f32.mrf.mxu0
      %v2532 = vadd.f32 0.0, %v2531
      %2533 = vmatmul.f32.gmra.mxu0 %v746
      %v2534 = vpop.f32.mrf.mxu0
      %v2535 = vadd.f32 0.0, %v2534
      %2536 = vmatmul.f32.gmra.mxu0 %v749
      %v2537 = vpop.f32.mrf.mxu0
      %v2538 = vadd.f32 0.0, %v2537
      %2539 = vmatmul.f32.gmra.mxu0 %v752
      %v2540 = vpop.f32.mrf.mxu0
      %v2541 = vadd.f32 0.0, %v2540
      %2542 = vmatmul.f32.gmra.mxu0 %v755
      %v2543 = vpop.f32.mrf.mxu0
      %v2544 = vadd.f32 0.0, %v2543
      %2545 = vmatmul.f32.gmra.mxu0 %v758
      %v2546 = vpop.f32.mrf.mxu0
      %v2547 = vadd.f32 0.0, %v2546
      %2548 = vmatmul.f32.gmra.mxu0 %v761
      %v2549 = vpop.f32.mrf.mxu0
      %v2550 = vadd.f32 0.0, %v2549
      %2551 = vdwg.mxu0
      %v2553 = vsel %vm763, %v2385, 0
      %2555 = vmatpush.msra.mxu0 0.0
      %2556 = vmatpush.msra.mxu0 0.0
      %2557 = vmatpush.msra.mxu0 0.0
      %2558 = vmatpush.msra.mxu0 0.0
      %2559 = vmatpush.msra.mxu0 0.0
      %2560 = vmatpush.msra.mxu0 0.0
      %2561 = vmatpush.msra.mxu0 0.0
      %2562 = vmatpush.msra.mxu0 0.0
      %2563 = vmatpush.msra.mxu0 0.0
      %2564 = vmatpush.msra.mxu0 0.0
      %2565 = vmatpush.msra.mxu0 0.0
      %2566 = vmatpush.msra.mxu0 0.0
      %2567 = vmatpush.msra.mxu0 0.0
      %2568 = vmatpush.msra.mxu0 0.0
      %2569 = vmatpush.msra.mxu0 0.0
      %2570 = vmatpush.msra.mxu0 %v2553
      %2571 = vmatmul.f32.gmra.mxu0 %v929
      %v2572 = vpop.f32.mrf.mxu0
      %v2573 = vadd.f32 %v2409, %v2572
      %2574 = vmatmul.f32.gmra.mxu0 %v932
      %v2575 = vpop.f32.mrf.mxu0
      %v2576 = vadd.f32 %v2412, %v2575
      %2577 = vmatmul.f32.gmra.mxu0 %v935
      %v2578 = vpop.f32.mrf.mxu0
      %v2579 = vadd.f32 %v2415, %v2578
      %2580 = vmatmul.f32.gmra.mxu0 %v938
      %v2581 = vpop.f32.mrf.mxu0
      %v2582 = vadd.f32 %v2418, %v2581
      %2583 = vmatmul.f32.gmra.mxu0 %v941
      %v2584 = vpop.f32.mrf.mxu0
      %v2585 = vadd.f32 %v2421, %v2584
      %2586 = vmatmul.f32.gmra.mxu0 %v944
      %v2587 = vpop.f32.mrf.mxu0
      %v2588 = vadd.f32 %v2424, %v2587
      %2589 = vmatmul.f32.gmra.mxu0 %v947
      %v2590 = vpop.f32.mrf.mxu0
      %v2591 = vadd.f32 %v2427, %v2590
      %2592 = vmatmul.f32.gmra.mxu0 %v950
      %v2593 = vpop.f32.mrf.mxu0
      %v2594 = vadd.f32 %v2430, %v2593
      %2595 = vmatmul.f32.gmra.mxu0 %v953
      %v2596 = vpop.f32.mrf.mxu0
      %v2597 = vadd.f32 %v2433, %v2596
      %2598 = vmatmul.f32.gmra.mxu0 %v956
      %v2599 = vpop.f32.mrf.mxu0
      %v2600 = vadd.f32 %v2436, %v2599
      %2601 = vmatmul.f32.gmra.mxu0 %v959
      %v2602 = vpop.f32.mrf.mxu0
      %v2603 = vadd.f32 %v2439, %v2602
      %2604 = vmatmul.f32.gmra.mxu0 %v962
      %v2605 = vpop.f32.mrf.mxu0
      %v2606 = vadd.f32 %v2442, %v2605
      %2607 = vmatmul.f32.gmra.mxu0 %v965
      %v2608 = vpop.f32.mrf.mxu0
      %v2609 = vadd.f32 %v2445, %v2608
      %2610 = vmatmul.f32.gmra.mxu0 %v968
      %v2611 = vpop.f32.mrf.mxu0
      %v2612 = vadd.f32 %v2448, %v2611
      %2613 = vmatmul.f32.gmra.mxu0 %v971
      %v2614 = vpop.f32.mrf.mxu0
      %v2615 = vadd.f32 %v2451, %v2614
      %2616 = vmatmul.f32.gmra.mxu0 %v974
      %v2617 = vpop.f32.mrf.mxu0
      %v2618 = vadd.f32 %v2454, %v2617
      %2619 = vmatmul.f32.gmra.mxu0 %v977
      %v2620 = vpop.f32.mrf.mxu0
      %v2621 = vadd.f32 %v2457, %v2620
      %2622 = vmatmul.f32.gmra.mxu0 %v980
      %v2623 = vpop.f32.mrf.mxu0
      %v2624 = vadd.f32 %v2460, %v2623
      %2625 = vmatmul.f32.gmra.mxu0 %v983
      %v2626 = vpop.f32.mrf.mxu0
      %v2627 = vadd.f32 %v2463, %v2626
      %2628 = vmatmul.f32.gmra.mxu0 %v986
      %v2629 = vpop.f32.mrf.mxu0
      %v2630 = vadd.f32 %v2466, %v2629
      %2631 = vmatmul.f32.gmra.mxu0 %v989
      %v2632 = vpop.f32.mrf.mxu0
      %v2633 = vadd.f32 %v2469, %v2632
      %2634 = vmatmul.f32.gmra.mxu0 %v992
      %v2635 = vpop.f32.mrf.mxu0
      %v2636 = vadd.f32 %v2472, %v2635
      %2637 = vmatmul.f32.gmra.mxu0 %v995
      %v2638 = vpop.f32.mrf.mxu0
      %v2639 = vadd.f32 %v2475, %v2638
      %2640 = vmatmul.f32.gmra.mxu0 %v998
      %v2641 = vpop.f32.mrf.mxu0
      %v2642 = vadd.f32 %v2478, %v2641
      %2643 = vmatmul.f32.gmra.mxu0 %v1001
      %v2644 = vpop.f32.mrf.mxu0
      %v2645 = vadd.f32 %v2481, %v2644
      %2646 = vmatmul.f32.gmra.mxu0 %v1004
      %v2647 = vpop.f32.mrf.mxu0
      %v2648 = vadd.f32 %v2484, %v2647
      %2649 = vmatmul.f32.gmra.mxu0 %v1007
      %v2650 = vpop.f32.mrf.mxu0
      %v2651 = vadd.f32 %v2487, %v2650
      %2652 = vmatmul.f32.gmra.mxu0 %v1010
      %v2653 = vpop.f32.mrf.mxu0
      %v2654 = vadd.f32 %v2490, %v2653
      %2655 = vmatmul.f32.gmra.mxu0 %v1013
      %v2656 = vpop.f32.mrf.mxu0
      %v2657 = vadd.f32 %v2493, %v2656
      %2658 = vmatmul.f32.gmra.mxu0 %v1016
      %v2659 = vpop.f32.mrf.mxu0
      %v2660 = vadd.f32 %v2496, %v2659
      %2661 = vmatmul.f32.gmra.mxu0 %v1019
      %v2662 = vpop.f32.mrf.mxu0
      %v2663 = vadd.f32 %v2499, %v2662
      %2664 = vmatmul.f32.gmra.mxu0 %v1022
      %v2665 = vpop.f32.mrf.mxu0
      %v2666 = vadd.f32 %v2502, %v2665
      %2667 = vmatmul.f32.gmra.mxu0 %v1025
      %v2668 = vpop.f32.mrf.mxu0
      %v2669 = vadd.f32 %v2505, %v2668
      %2670 = vmatmul.f32.gmra.mxu0 %v1028
      %v2671 = vpop.f32.mrf.mxu0
      %v2672 = vadd.f32 %v2508, %v2671
      %2673 = vmatmul.f32.gmra.mxu0 %v1031
      %v2674 = vpop.f32.mrf.mxu0
      %v2675 = vadd.f32 %v2511, %v2674
      %2676 = vmatmul.f32.gmra.mxu0 %v1034
      %v2677 = vpop.f32.mrf.mxu0
      %v2678 = vadd.f32 %v2514, %v2677
      %2679 = vmatmul.f32.gmra.mxu0 %v1037
      %v2680 = vpop.f32.mrf.mxu0
      %v2681 = vadd.f32 %v2517, %v2680
      %2682 = vmatmul.f32.gmra.mxu0 %v1040
      %v2683 = vpop.f32.mrf.mxu0
      %v2684 = vadd.f32 %v2520, %v2683
      %2685 = vmatmul.f32.gmra.mxu0 %v1043
      %v2686 = vpop.f32.mrf.mxu0
      %v2687 = vadd.f32 %v2523, %v2686
      %2688 = vmatmul.f32.gmra.mxu0 %v1046
      %v2689 = vpop.f32.mrf.mxu0
      %v2690 = vadd.f32 %v2526, %v2689
      %2691 = vmatmul.f32.gmra.mxu0 %v1049
      %v2692 = vpop.f32.mrf.mxu0
      %v2693 = vadd.f32 %v2529, %v2692
      %2694 = vmatmul.f32.gmra.mxu0 %v1052
      %v2695 = vpop.f32.mrf.mxu0
      %v2696 = vadd.f32 %v2532, %v2695
      %2697 = vmatmul.f32.gmra.mxu0 %v1055
      %v2698 = vpop.f32.mrf.mxu0
      %v2699 = vadd.f32 %v2535, %v2698
      %2700 = vmatmul.f32.gmra.mxu0 %v1058
      %v2701 = vpop.f32.mrf.mxu0
      %v2702 = vadd.f32 %v2538, %v2701
      %2703 = vmatmul.f32.gmra.mxu0 %v1061
      %v2704 = vpop.f32.mrf.mxu0
      %v2705 = vadd.f32 %v2541, %v2704
      %2706 = vmatmul.f32.gmra.mxu0 %v1064
      %v2707 = vpop.f32.mrf.mxu0
      %v2708 = vadd.f32 %v2544, %v2707
      %2709 = vmatmul.f32.gmra.mxu0 %v1067
      %v2710 = vpop.f32.mrf.mxu0
      %v2711 = vadd.f32 %v2547, %v2710
      %2712 = vmatmul.f32.gmra.mxu0 %v1070
      %v2713 = vpop.f32.mrf.mxu0
      %v2714 = vadd.f32 %v2550, %v2713
      %2715 = vdwg.mxu0
      %s2716 = scalar_lea.vmem %s1, 32
      %v2717 = vld [vmem:[%s2716] sm:$0xf]
      %v2719 = vsel %vm763, %v2717, 0
      %2721 = vmatpush.msra.mxu0 0.0
      %2722 = vmatpush.msra.mxu0 0.0
      %2723 = vmatpush.msra.mxu0 0.0
      %2724 = vmatpush.msra.mxu0 0.0
      %2725 = vmatpush.msra.mxu0 0.0
      %2726 = vmatpush.msra.mxu0 0.0
      %2727 = vmatpush.msra.mxu0 0.0
      %2728 = vmatpush.msra.mxu0 0.0
      %2729 = vmatpush.msra.mxu0 0.0
      %2730 = vmatpush.msra.mxu0 0.0
      %2731 = vmatpush.msra.mxu0 0.0
      %2732 = vmatpush.msra.mxu0 0.0
      %2733 = vmatpush.msra.mxu0 0.0
      %2734 = vmatpush.msra.mxu0 0.0
      %2735 = vmatpush.msra.mxu0 0.0
      %2736 = vmatpush.msra.mxu0 %v2719
      %2737 = vmatmul.f32.gmra.mxu0 %v1287
      %v2738 = vpop.f32.mrf.mxu0
      %v2739 = vadd.f32 0.0, %v2738
      %2740 = vmatmul.f32.gmra.mxu0 %v1290
      %v2741 = vpop.f32.mrf.mxu0
      %v2742 = vadd.f32 0.0, %v2741
      %2743 = vmatmul.f32.gmra.mxu0 %v1293
      %v2744 = vpop.f32.mrf.mxu0
      %v2745 = vadd.f32 0.0, %v2744
      %2746 = vmatmul.f32.gmra.mxu0 %v1296
      %v2747 = vpop.f32.mrf.mxu0
      %v2748 = vadd.f32 0.0, %v2747
      %2749 = vmatmul.f32.gmra.mxu0 %v1299
      %v2750 = vpop.f32.mrf.mxu0
      %v2751 = vadd.f32 0.0, %v2750
      %2752 = vmatmul.f32.gmra.mxu0 %v1302
      %v2753 = vpop.f32.mrf.mxu0
      %v2754 = vadd.f32 0.0, %v2753
      %2755 = vmatmul.f32.gmra.mxu0 %v1305
      %v2756 = vpop.f32.mrf.mxu0
      %v2757 = vadd.f32 0.0, %v2756
      %2758 = vmatmul.f32.gmra.mxu0 %v1308
      %v2759 = vpop.f32.mrf.mxu0
      %v2760 = vadd.f32 0.0, %v2759
      %2761 = vmatmul.f32.gmra.mxu0 %v1311
      %v2762 = vpop.f32.mrf.mxu0
      %v2763 = vadd.f32 0.0, %v2762
      %2764 = vmatmul.f32.gmra.mxu0 %v1314
      %v2765 = vpop.f32.mrf.mxu0
      %v2766 = vadd.f32 0.0, %v2765
      %2767 = vmatmul.f32.gmra.mxu0 %v1317
      %v2768 = vpop.f32.mrf.mxu0
      %v2769 = vadd.f32 0.0, %v2768
      %2770 = vmatmul.f32.gmra.mxu0 %v1320
      %v2771 = vpop.f32.mrf.mxu0
      %v2772 = vadd.f32 0.0, %v2771
      %2773 = vmatmul.f32.gmra.mxu0 %v1323
      %v2774 = vpop.f32.mrf.mxu0
      %v2775 = vadd.f32 0.0, %v2774
      %2776 = vmatmul.f32.gmra.mxu0 %v1326
      %v2777 = vpop.f32.mrf.mxu0
      %v2778 = vadd.f32 0.0, %v2777
      %2779 = vmatmul.f32.gmra.mxu0 %v1329
      %v2780 = vpop.f32.mrf.mxu0
      %v2781 = vadd.f32 0.0, %v2780
      %2782 = vmatmul.f32.gmra.mxu0 %v1332
      %v2783 = vpop.f32.mrf.mxu0
      %v2784 = vadd.f32 0.0, %v2783
      %2785 = vmatmul.f32.gmra.mxu0 %v1335
      %v2786 = vpop.f32.mrf.mxu0
      %v2787 = vadd.f32 0.0, %v2786
      %2788 = vmatmul.f32.gmra.mxu0 %v1338
      %v2789 = vpop.f32.mrf.mxu0
      %v2790 = vadd.f32 0.0, %v2789
      %2791 = vmatmul.f32.gmra.mxu0 %v1341
      %v2792 = vpop.f32.mrf.mxu0
      %v2793 = vadd.f32 0.0, %v2792
      %2794 = vmatmul.f32.gmra.mxu0 %v1344
      %v2795 = vpop.f32.mrf.mxu0
      %v2796 = vadd.f32 0.0, %v2795
      %2797 = vmatmul.f32.gmra.mxu0 %v1347
      %v2798 = vpop.f32.mrf.mxu0
      %v2799 = vadd.f32 0.0, %v2798
      %2800 = vmatmul.f32.gmra.mxu0 %v1350
      %v2801 = vpop.f32.mrf.mxu0
      %v2802 = vadd.f32 0.0, %v2801
      %2803 = vmatmul.f32.gmra.mxu0 %v1353
      %v2804 = vpop.f32.mrf.mxu0
      %v2805 = vadd.f32 0.0, %v2804
      %2806 = vmatmul.f32.gmra.mxu0 %v1356
      %v2807 = vpop.f32.mrf.mxu0
      %v2808 = vadd.f32 0.0, %v2807
      %2809 = vmatmul.f32.gmra.mxu0 %v1359
      %v2810 = vpop.f32.mrf.mxu0
      %v2811 = vadd.f32 0.0, %v2810
      %2812 = vmatmul.f32.gmra.mxu0 %v1362
      %v2813 = vpop.f32.mrf.mxu0
      %v2814 = vadd.f32 0.0, %v2813
      %2815 = vmatmul.f32.gmra.mxu0 %v1365
      %v2816 = vpop.f32.mrf.mxu0
      %v2817 = vadd.f32 0.0, %v2816
      %2818 = vmatmul.f32.gmra.mxu0 %v1368
      %v2819 = vpop.f32.mrf.mxu0
      %v2820 = vadd.f32 0.0, %v2819
      %2821 = vmatmul.f32.gmra.mxu0 %v1371
      %v2822 = vpop.f32.mrf.mxu0
      %v2823 = vadd.f32 0.0, %v2822
      %2824 = vmatmul.f32.gmra.mxu0 %v1374
      %v2825 = vpop.f32.mrf.mxu0
      %v2826 = vadd.f32 0.0, %v2825
      %2827 = vmatmul.f32.gmra.mxu0 %v1377
      %v2828 = vpop.f32.mrf.mxu0
      %v2829 = vadd.f32 0.0, %v2828
      %2830 = vmatmul.f32.gmra.mxu0 %v1380
      %v2831 = vpop.f32.mrf.mxu0
      %v2832 = vadd.f32 0.0, %v2831
      %2833 = vmatmul.f32.gmra.mxu0 %v1383
      %v2834 = vpop.f32.mrf.mxu0
      %v2835 = vadd.f32 0.0, %v2834
      %2836 = vmatmul.f32.gmra.mxu0 %v1386
      %v2837 = vpop.f32.mrf.mxu0
      %v2838 = vadd.f32 0.0, %v2837
      %2839 = vmatmul.f32.gmra.mxu0 %v1389
      %v2840 = vpop.f32.mrf.mxu0
      %v2841 = vadd.f32 0.0, %v2840
      %2842 = vmatmul.f32.gmra.mxu0 %v1392
      %v2843 = vpop.f32.mrf.mxu0
      %v2844 = vadd.f32 0.0, %v2843
      %2845 = vmatmul.f32.gmra.mxu0 %v1395
      %v2846 = vpop.f32.mrf.mxu0
      %v2847 = vadd.f32 0.0, %v2846
      %2848 = vmatmul.f32.gmra.mxu0 %v1398
      %v2849 = vpop.f32.mrf.mxu0
      %v2850 = vadd.f32 0.0, %v2849
      %2851 = vmatmul.f32.gmra.mxu0 %v1401
      %v2852 = vpop.f32.mrf.mxu0
      %v2853 = vadd.f32 0.0, %v2852
      %2854 = vmatmul.f32.gmra.mxu0 %v1404
      %v2855 = vpop.f32.mrf.mxu0
      %v2856 = vadd.f32 0.0, %v2855
      %2857 = vmatmul.f32.gmra.mxu0 %v1407
      %v2858 = vpop.f32.mrf.mxu0
      %v2859 = vadd.f32 0.0, %v2858
      %2860 = vmatmul.f32.gmra.mxu0 %v1410
      %v2861 = vpop.f32.mrf.mxu0
      %v2862 = vadd.f32 0.0, %v2861
      %2863 = vmatmul.f32.gmra.mxu0 %v1413
      %v2864 = vpop.f32.mrf.mxu0
      %v2865 = vadd.f32 0.0, %v2864
      %2866 = vmatmul.f32.gmra.mxu0 %v1416
      %v2867 = vpop.f32.mrf.mxu0
      %v2868 = vadd.f32 0.0, %v2867
      %2869 = vmatmul.f32.gmra.mxu0 %v1419
      %v2870 = vpop.f32.mrf.mxu0
      %v2871 = vadd.f32 0.0, %v2870
      %2872 = vmatmul.f32.gmra.mxu0 %v1422
      %v2873 = vpop.f32.mrf.mxu0
      %v2874 = vadd.f32 0.0, %v2873
      %2875 = vmatmul.f32.gmra.mxu0 %v1425
      %v2876 = vpop.f32.mrf.mxu0
      %v2877 = vadd.f32 0.0, %v2876
      %2878 = vmatmul.f32.gmra.mxu0 %v1428
      %v2879 = vpop.f32.mrf.mxu0
      %v2880 = vadd.f32 0.0, %v2879
      %2881 = vdwg.mxu0
      %v2882 = vadd.f32 %v2573, %v2739
      %v2883 = vadd.f32 %v2576, %v2742
      %v2884 = vadd.f32 %v2579, %v2745
      %v2885 = vadd.f32 %v2582, %v2748
      %v2886 = vadd.f32 %v2585, %v2751
      %v2887 = vadd.f32 %v2588, %v2754
      %v2888 = vadd.f32 %v2591, %v2757
      %v2889 = vadd.f32 %v2594, %v2760
      %v2890 = vadd.f32 %v2597, %v2763
      %v2891 = vadd.f32 %v2600, %v2766
      %v2892 = vadd.f32 %v2603, %v2769
      %v2893 = vadd.f32 %v2606, %v2772
      %v2894 = vadd.f32 %v2609, %v2775
      %v2895 = vadd.f32 %v2612, %v2778
      %v2896 = vadd.f32 %v2615, %v2781
      %v2897 = vadd.f32 %v2618, %v2784
      %v2898 = vadd.f32 %v2621, %v2787
      %v2899 = vadd.f32 %v2624, %v2790
      %v2900 = vadd.f32 %v2627, %v2793
      %v2901 = vadd.f32 %v2630, %v2796
      %v2902 = vadd.f32 %v2633, %v2799
      %v2903 = vadd.f32 %v2636, %v2802
      %v2904 = vadd.f32 %v2639, %v2805
      %v2905 = vadd.f32 %v2642, %v2808
      %v2906 = vadd.f32 %v2645, %v2811
      %v2907 = vadd.f32 %v2648, %v2814
      %v2908 = vadd.f32 %v2651, %v2817
      %v2909 = vadd.f32 %v2654, %v2820
      %v2910 = vadd.f32 %v2657, %v2823
      %v2911 = vadd.f32 %v2660, %v2826
      %v2912 = vadd.f32 %v2663, %v2829
      %v2913 = vadd.f32 %v2666, %v2832
      %v2914 = vadd.f32 %v2669, %v2835
      %v2915 = vadd.f32 %v2672, %v2838
      %v2916 = vadd.f32 %v2675, %v2841
      %v2917 = vadd.f32 %v2678, %v2844
      %v2918 = vadd.f32 %v2681, %v2847
      %v2919 = vadd.f32 %v2684, %v2850
      %v2920 = vadd.f32 %v2687, %v2853
      %v2921 = vadd.f32 %v2690, %v2856
      %v2922 = vadd.f32 %v2693, %v2859
      %v2923 = vadd.f32 %v2696, %v2862
      %v2924 = vadd.f32 %v2699, %v2865
      %v2925 = vadd.f32 %v2702, %v2868
      %v2926 = vadd.f32 %v2705, %v2871
      %v2927 = vadd.f32 %v2708, %v2874
      %v2928 = vadd.f32 %v2711, %v2877
      %v2929 = vadd.f32 %v2714, %v2880
      %v2930 = vrot.slane %v2882, 1
      %v2931 = vrot.slane %v2883, 1
      %v2932 = vrot.slane %v2884, 1
      %v2933 = vrot.slane %v2885, 1
      %v2934 = vrot.slane %v2886, 1
      %v2935 = vrot.slane %v2887, 1
      %v2936 = vrot.slane %v2888, 1
      %v2937 = vrot.slane %v2889, 1
      %v2938 = vrot.slane %v2890, 1
      %v2939 = vrot.slane %v2891, 1
      %v2940 = vrot.slane %v2892, 1
      %v2941 = vrot.slane %v2893, 1
      %v2942 = vrot.slane %v2894, 1
      %v2943 = vrot.slane %v2895, 1
      %v2944 = vrot.slane %v2896, 1
      %v2945 = vrot.slane %v2897, 1
      %v2946 = vrot.slane %v2898, 1
      %v2947 = vrot.slane %v2899, 1
      %v2948 = vrot.slane %v2900, 1
      %v2949 = vrot.slane %v2901, 1
      %v2950 = vrot.slane %v2902, 1
      %v2951 = vrot.slane %v2903, 1
      %v2952 = vrot.slane %v2904, 1
      %v2953 = vrot.slane %v2905, 1
      %v2954 = vrot.slane %v2906, 1
      %v2955 = vrot.slane %v2907, 1
      %v2956 = vrot.slane %v2908, 1
      %v2957 = vrot.slane %v2909, 1
      %v2958 = vrot.slane %v2910, 1
      %v2959 = vrot.slane %v2911, 1
      %v2960 = vrot.slane %v2912, 1
      %v2961 = vrot.slane %v2913, 1
      %v2962 = vrot.slane %v2914, 1
      %v2963 = vrot.slane %v2915, 1
      %v2964 = vrot.slane %v2916, 1
      %v2965 = vrot.slane %v2917, 1
      %v2966 = vrot.slane %v2918, 1
      %v2967 = vrot.slane %v2919, 1
      %v2968 = vrot.slane %v2920, 1
      %v2969 = vrot.slane %v2921, 1
      %v2970 = vrot.slane %v2922, 1
      %v2971 = vrot.slane %v2923, 1
      %v2972 = vrot.slane %v2924, 1
      %v2973 = vrot.slane %v2925, 1
      %v2974 = vrot.slane %v2926, 1
      %v2975 = vrot.slane %v2927, 1
      %v2976 = vrot.slane %v2928, 1
      %v2977 = vrot.slane %v2929, 1
      %vm2978 = vcmp.lt.s32.totalorder %v353, 7
      %v2979 = vsel %vm2978, %v2976, %v2977
      %v2980 = vsel %vm2978, %v2975, %v2976
      %v2981 = vsel %vm2978, %v2974, %v2975
      %v2982 = vsel %vm2978, %v2973, %v2974
      %v2983 = vsel %vm2978, %v2972, %v2973
      %v2984 = vsel %vm2978, %v2971, %v2972
      %v2985 = vsel %vm2978, %v2970, %v2971
      %v2986 = vsel %vm2978, %v2969, %v2970
      %v2987 = vsel %vm2978, %v2968, %v2969
      %v2988 = vsel %vm2978, %v2967, %v2968
      %v2989 = vsel %vm2978, %v2966, %v2967
      %v2990 = vsel %vm2978, %v2965, %v2966
      %v2991 = vsel %vm2978, %v2964, %v2965
      %v2992 = vsel %vm2978, %v2963, %v2964
      %v2993 = vsel %vm2978, %v2962, %v2963
      %v2994 = vsel %vm2978, %v2961, %v2962
      %v2995 = vsel %vm2978, %v2960, %v2961
      %v2996 = vsel %vm2978, %v2959, %v2960
      %v2997 = vsel %vm2978, %v2958, %v2959
      %v2998 = vsel %vm2978, %v2957, %v2958
      %v2999 = vsel %vm2978, %v2956, %v2957
      %v3000 = vsel %vm2978, %v2955, %v2956
      %v3001 = vsel %vm2978, %v2954, %v2955
      %v3002 = vsel %vm2978, %v2953, %v2954
      %v3003 = vsel %vm2978, %v2952, %v2953
      %v3004 = vsel %vm2978, %v2951, %v2952
      %v3005 = vsel %vm2978, %v2950, %v2951
      %v3006 = vsel %vm2978, %v2949, %v2950
      %v3007 = vsel %vm2978, %v2948, %v2949
      %v3008 = vsel %vm2978, %v2947, %v2948
      %v3009 = vsel %vm2978, %v2946, %v2947
      %v3010 = vsel %vm2978, %v2945, %v2946
      %v3011 = vsel %vm2978, %v2944, %v2945
      %v3012 = vsel %vm2978, %v2943, %v2944
      %v3013 = vsel %vm2978, %v2942, %v2943
      %v3014 = vsel %vm2978, %v2941, %v2942
      %v3015 = vsel %vm2978, %v2940, %v2941
      %v3016 = vsel %vm2978, %v2939, %v2940
      %v3017 = vsel %vm2978, %v2938, %v2939
      %v3018 = vsel %vm2978, %v2937, %v2938
      %v3019 = vsel %vm2978, %v2936, %v2937
      %v3020 = vsel %vm2978, %v2935, %v2936
      %v3021 = vsel %vm2978, %v2934, %v2935
      %v3022 = vsel %vm2978, %v2933, %v2934
      %v3023 = vsel %vm2978, %v2932, %v2933
      %v3024 = vsel %vm2978, %v2931, %v2932
      %v3025 = vsel %vm2978, %v2930, %v2931
      %v3026 = vsel %vm2978, %v2977, %v2930
      %v3027 = vadd.f32 %v2336, %v3025
      %v3028 = vadd.f32 %v2337, %v3024
      %v3029 = vadd.f32 %v2338, %v3023
      %v3030 = vadd.f32 %v2339, %v3022
      %v3031 = vadd.f32 %v2340, %v3021
      %v3032 = vadd.f32 %v2341, %v3020
      %v3033 = vadd.f32 %v2342, %v3019
      %v3034 = vadd.f32 %v2343, %v3018
      %v3035 = vadd.f32 %v2344, %v3017
      %v3036 = vadd.f32 %v2345, %v3016
      %v3037 = vadd.f32 %v2346, %v3015
      %v3038 = vadd.f32 %v2347, %v3014
      %v3039 = vadd.f32 %v2348, %v3013
      %v3040 = vadd.f32 %v2349, %v3012
      %v3041 = vadd.f32 %v2350, %v3011
      %v3042 = vadd.f32 %v2351, %v3010
      %v3043 = vadd.f32 %v2352, %v3009
      %v3044 = vadd.f32 %v2353, %v3008
      %v3045 = vadd.f32 %v2354, %v3007
      %v3046 = vadd.f32 %v2355, %v3006
      %v3047 = vadd.f32 %v2356, %v3005
      %v3048 = vadd.f32 %v2357, %v3004
      %v3049 = vadd.f32 %v2358, %v3003
      %v3050 = vadd.f32 %v2359, %v3002
      %v3051 = vadd.f32 %v2360, %v3001
      %v3052 = vadd.f32 %v2361, %v3000
      %v3053 = vadd.f32 %v2362, %v2999
      %v3054 = vadd.f32 %v2363, %v2998
      %v3055 = vadd.f32 %v2364, %v2997
      %v3056 = vadd.f32 %v2365, %v2996
      %v3057 = vadd.f32 %v2366, %v2995
      %v3058 = vadd.f32 %v2367, %v2994
      %v3059 = vadd.f32 %v2368, %v2993
      %v3060 = vadd.f32 %v2369, %v2992
      %v3061 = vadd.f32 %v2370, %v2991
      %v3062 = vadd.f32 %v2371, %v2990
      %v3063 = vadd.f32 %v2372, %v2989
      %v3064 = vadd.f32 %v2373, %v2988
      %v3065 = vadd.f32 %v2374, %v2987
      %v3066 = vadd.f32 %v2375, %v2986
      %v3067 = vadd.f32 %v2376, %v2985
      %v3068 = vadd.f32 %v2377, %v2984
      %v3069 = vadd.f32 %v2378, %v2983
      %v3070 = vadd.f32 %v2379, %v2982
      %v3071 = vadd.f32 %v2380, %v2981
      %v3072 = vadd.f32 %v2381, %v2980
      %v3073 = vadd.f32 %v2382, %v2979
      %v3074 = vadd.f32 %v2383, %v3026
      %v3075 = vld [vmem:[%s3] sm:$0x1]
      %v3076 = vld [vmem:[%s4] sm:$0x1]
      %v3077 = vsel %vm362, 1, 0
      %v3078 = vsel %vm363, 1, 0
      %v3079 = vsel %vm364, 1, 0
      %vm3080 = vcmp.eq.s32.totalorder %v3077, 1
      %vm3081 = vcmp.eq.s32.totalorder %v3078, 1
      %vm3082 = vcmp.eq.s32.totalorder %v3079, 1
      %v3083 = vsel %vm3080, %v3027, 0.0
      %v3084 = vsel %vm3081, %v3028, 0.0
      %v3085 = vsel %vm3082, %v3029, 0.0
      %v3086 = vsel %vm3080, %v3030, 0.0
      %v3087 = vsel %vm3081, %v3031, 0.0
      %v3088 = vsel %vm3082, %v3032, 0.0
      %v3089 = vsel %vm3080, %v3033, 0.0
      %v3090 = vsel %vm3081, %v3034, 0.0
      %v3091 = vsel %vm3082, %v3035, 0.0
      %v3092 = vsel %vm3080, %v3036, 0.0
      %v3093 = vsel %vm3081, %v3037, 0.0
      %v3094 = vsel %vm3082, %v3038, 0.0
      %v3095 = vsel %vm3080, %v3039, 0.0
      %v3096 = vsel %vm3081, %v3040, 0.0
      %v3097 = vsel %vm3082, %v3041, 0.0
      %v3098 = vsel %vm3080, %v3042, 0.0
      %v3099 = vsel %vm3081, %v3043, 0.0
      %v3100 = vsel %vm3082, %v3044, 0.0
      %v3101 = vsel %vm3080, %v3045, 0.0
      %v3102 = vsel %vm3081, %v3046, 0.0
      %v3103 = vsel %vm3082, %v3047, 0.0
      %v3104 = vsel %vm3080, %v3048, 0.0
      %v3105 = vsel %vm3081, %v3049, 0.0
      %v3106 = vsel %vm3082, %v3050, 0.0
      %v3107 = vsel %vm3080, %v3051, 0.0
      %v3108 = vsel %vm3081, %v3052, 0.0
      %v3109 = vsel %vm3082, %v3053, 0.0
      %v3110 = vsel %vm3080, %v3054, 0.0
      %v3111 = vsel %vm3081, %v3055, 0.0
      %v3112 = vsel %vm3082, %v3056, 0.0
      %v3113 = vsel %vm3080, %v3057, 0.0
      %v3114 = vsel %vm3081, %v3058, 0.0
      %v3115 = vsel %vm3082, %v3059, 0.0
      %v3116 = vsel %vm3080, %v3060, 0.0
      %v3117 = vsel %vm3081, %v3061, 0.0
      %v3118 = vsel %vm3082, %v3062, 0.0
      %v3119 = vsel %vm3080, %v3063, 0.0
      %v3120 = vsel %vm3081, %v3064, 0.0
      %v3121 = vsel %vm3082, %v3065, 0.0
      %v3122 = vsel %vm3080, %v3066, 0.0
      %v3123 = vsel %vm3081, %v3067, 0.0
      %v3124 = vsel %vm3082, %v3068, 0.0
      %v3125 = vsel %vm3080, %v3069, 0.0
      %v3126 = vsel %vm3081, %v3070, 0.0
      %v3127 = vsel %vm3082, %v3071, 0.0
      %v3128 = vsel %vm3080, %v3072, 0.0
      %v3129 = vsel %vm3081, %v3073, 0.0
      %v3130 = vsel %vm3082, %v3074, 0.0
      %v3131 = vsel %vm398, %v3083, 0.0
      %v3132 = vsel %vm398, %v3084, 0.0
      %v3133 = vadd.f32 %v3131, %v3132
      %v3134 = vsel %vm398, %v3085, 0.0
      %v3135 = vadd.f32 %v3133, %v3134
      %v3136 = vsel %vm398, %v3086, 0.0
      %v3137 = vadd.f32 %v3135, %v3136
      %v3138 = vsel %vm398, %v3087, 0.0
      %v3139 = vadd.f32 %v3137, %v3138
      %v3140 = vsel %vm398, %v3088, 0.0
      %v3141 = vadd.f32 %v3139, %v3140
      %v3142 = vsel %vm398, %v3089, 0.0
      %v3143 = vadd.f32 %v3141, %v3142
      %v3144 = vsel %vm398, %v3090, 0.0
      %v3145 = vadd.f32 %v3143, %v3144
      %v3146 = vsel %vm398, %v3091, 0.0
      %v3147 = vadd.f32 %v3145, %v3146
      %v3148 = vsel %vm398, %v3092, 0.0
      %v3149 = vadd.f32 %v3147, %v3148
      %v3150 = vsel %vm398, %v3093, 0.0
      %v3151 = vadd.f32 %v3149, %v3150
      %v3152 = vsel %vm398, %v3094, 0.0
      %v3153 = vadd.f32 %v3151, %v3152
      %v3154 = vsel %vm398, %v3095, 0.0
      %v3155 = vadd.f32 %v3153, %v3154
      %v3156 = vsel %vm398, %v3096, 0.0
      %v3157 = vadd.f32 %v3155, %v3156
      %v3158 = vsel %vm398, %v3097, 0.0
      %v3159 = vadd.f32 %v3157, %v3158
      %v3160 = vsel %vm398, %v3098, 0.0
      %v3161 = vadd.f32 %v3159, %v3160
      %v3162 = vsel %vm398, %v3099, 0.0
      %v3163 = vadd.f32 %v3161, %v3162
      %v3164 = vsel %vm398, %v3100, 0.0
      %v3165 = vadd.f32 %v3163, %v3164
      %v3166 = vsel %vm398, %v3101, 0.0
      %v3167 = vadd.f32 %v3165, %v3166
      %v3168 = vsel %vm398, %v3102, 0.0
      %v3169 = vadd.f32 %v3167, %v3168
      %v3170 = vsel %vm398, %v3103, 0.0
      %v3171 = vadd.f32 %v3169, %v3170
      %v3172 = vsel %vm398, %v3104, 0.0
      %v3173 = vadd.f32 %v3171, %v3172
      %v3174 = vsel %vm398, %v3105, 0.0
      %v3175 = vadd.f32 %v3173, %v3174
      %v3176 = vsel %vm398, %v3106, 0.0
      %v3177 = vadd.f32 %v3175, %v3176
      %v3178 = vsel %vm398, %v3107, 0.0
      %v3179 = vadd.f32 %v3177, %v3178
      %v3180 = vsel %vm398, %v3108, 0.0
      %v3181 = vadd.f32 %v3179, %v3180
      %v3182 = vsel %vm398, %v3109, 0.0
      %v3183 = vadd.f32 %v3181, %v3182
      %v3184 = vsel %vm398, %v3110, 0.0
      %v3185 = vadd.f32 %v3183, %v3184
      %v3186 = vsel %vm398, %v3111, 0.0
      %v3187 = vadd.f32 %v3185, %v3186
      %v3188 = vsel %vm398, %v3112, 0.0
      %v3189 = vadd.f32 %v3187, %v3188
      %v3190 = vsel %vm398, %v3113, 0.0
      %v3191 = vadd.f32 %v3189, %v3190
      %v3192 = vsel %vm398, %v3114, 0.0
      %v3193 = vadd.f32 %v3191, %v3192
      %v3194 = vsel %vm398, %v3115, 0.0
      %v3195 = vadd.f32 %v3193, %v3194
      %v3196 = vsel %vm398, %v3116, 0.0
      %v3197 = vadd.f32 %v3195, %v3196
      %v3198 = vsel %vm398, %v3117, 0.0
      %v3199 = vadd.f32 %v3197, %v3198
      %v3200 = vsel %vm398, %v3118, 0.0
      %v3201 = vadd.f32 %v3199, %v3200
      %v3202 = vsel %vm398, %v3119, 0.0
      %v3203 = vadd.f32 %v3201, %v3202
      %v3204 = vsel %vm398, %v3120, 0.0
      %v3205 = vadd.f32 %v3203, %v3204
      %v3206 = vsel %vm398, %v3121, 0.0
      %v3207 = vadd.f32 %v3205, %v3206
      %v3208 = vsel %vm398, %v3122, 0.0
      %v3209 = vadd.f32 %v3207, %v3208
      %v3210 = vsel %vm398, %v3123, 0.0
      %v3211 = vadd.f32 %v3209, %v3210
      %v3212 = vsel %vm398, %v3124, 0.0
      %v3213 = vadd.f32 %v3211, %v3212
      %v3214 = vsel %vm398, %v3125, 0.0
      %v3215 = vadd.f32 %v3213, %v3214
      %v3216 = vsel %vm398, %v3126, 0.0
      %v3217 = vadd.f32 %v3215, %v3216
      %v3218 = vsel %vm398, %v3127, 0.0
      %v3219 = vadd.f32 %v3217, %v3218
      %v3220 = vsel %vm398, %v3128, 0.0
      %v3221 = vadd.f32 %v3219, %v3220
      %v3222 = vsel %vm398, %v3129, 0.0
      %v3223 = vadd.f32 %v3221, %v3222
      %v3224 = vsel %vm398, %v3130, 0.0
      %v3225 = vadd.f32 %v3223, %v3224
      %v3226 = vrot.slane %v3225, 4
      %v3227 = vadd.f32 %v3225, %v3226
      %v3228 = vrot.slane %v3227, 2
      %v3229 = vadd.f32 %v3227, %v3228
      %v3230 = vrot.slane %v3229, 1
      %v3231 = vadd.f32 %v3229, %v3230
      %v3232 = vmul.f32 %v3231, 0.00390625
      %v3233 = vsub.f32 %v3027, %v3232
      %v3234 = vsub.f32 %v3028, %v3232
      %v3235 = vsub.f32 %v3029, %v3232
      %v3236 = vsub.f32 %v3030, %v3232
      %v3237 = vsub.f32 %v3031, %v3232
      %v3238 = vsub.f32 %v3032, %v3232
      %v3239 = vsub.f32 %v3033, %v3232
      %v3240 = vsub.f32 %v3034, %v3232
      %v3241 = vsub.f32 %v3035, %v3232
      %v3242 = vsub.f32 %v3036, %v3232
      %v3243 = vsub.f32 %v3037, %v3232
      %v3244 = vsub.f32 %v3038, %v3232
      %v3245 = vsub.f32 %v3039, %v3232
      %v3246 = vsub.f32 %v3040, %v3232
      %v3247 = vsub.f32 %v3041, %v3232
      %v3248 = vsub.f32 %v3042, %v3232
      %v3249 = vsub.f32 %v3043, %v3232
      %v3250 = vsub.f32 %v3044, %v3232
      %v3251 = vsub.f32 %v3045, %v3232
      %v3252 = vsub.f32 %v3046, %v3232
      %v3253 = vsub.f32 %v3047, %v3232
      %v3254 = vsub.f32 %v3048, %v3232
      %v3255 = vsub.f32 %v3049, %v3232
      %v3256 = vsub.f32 %v3050, %v3232
      %v3257 = vsub.f32 %v3051, %v3232
      %v3258 = vsub.f32 %v3052, %v3232
      %v3259 = vsub.f32 %v3053, %v3232
      %v3260 = vsub.f32 %v3054, %v3232
      %v3261 = vsub.f32 %v3055, %v3232
      %v3262 = vsub.f32 %v3056, %v3232
      %v3263 = vsub.f32 %v3057, %v3232
      %v3264 = vsub.f32 %v3058, %v3232
      %v3265 = vsub.f32 %v3059, %v3232
      %v3266 = vsub.f32 %v3060, %v3232
      %v3267 = vsub.f32 %v3061, %v3232
      %v3268 = vsub.f32 %v3062, %v3232
      %v3269 = vsub.f32 %v3063, %v3232
      %v3270 = vsub.f32 %v3064, %v3232
      %v3271 = vsub.f32 %v3065, %v3232
      %v3272 = vsub.f32 %v3066, %v3232
      %v3273 = vsub.f32 %v3067, %v3232
      %v3274 = vsub.f32 %v3068, %v3232
      %v3275 = vsub.f32 %v3069, %v3232
      %v3276 = vsub.f32 %v3070, %v3232
      %v3277 = vsub.f32 %v3071, %v3232
      %v3278 = vsub.f32 %v3072, %v3232
      %v3279 = vsub.f32 %v3073, %v3232
      %v3280 = vsub.f32 %v3074, %v3232
      %v3281 = vmul.f32 %v3233, %v3233
      %v3282 = vmul.f32 %v3234, %v3234
      %v3283 = vmul.f32 %v3235, %v3235
      %v3284 = vmul.f32 %v3236, %v3236
      %v3285 = vmul.f32 %v3237, %v3237
      %v3286 = vmul.f32 %v3238, %v3238
      %v3287 = vmul.f32 %v3239, %v3239
      %v3288 = vmul.f32 %v3240, %v3240
      %v3289 = vmul.f32 %v3241, %v3241
      %v3290 = vmul.f32 %v3242, %v3242
      %v3291 = vmul.f32 %v3243, %v3243
      %v3292 = vmul.f32 %v3244, %v3244
      %v3293 = vmul.f32 %v3245, %v3245
      %v3294 = vmul.f32 %v3246, %v3246
      %v3295 = vmul.f32 %v3247, %v3247
      %v3296 = vmul.f32 %v3248, %v3248
      %v3297 = vmul.f32 %v3249, %v3249
      %v3298 = vmul.f32 %v3250, %v3250
      %v3299 = vmul.f32 %v3251, %v3251
      %v3300 = vmul.f32 %v3252, %v3252
      %v3301 = vmul.f32 %v3253, %v3253
      %v3302 = vmul.f32 %v3254, %v3254
      %v3303 = vmul.f32 %v3255, %v3255
      %v3304 = vmul.f32 %v3256, %v3256
      %v3305 = vmul.f32 %v3257, %v3257
      %v3306 = vmul.f32 %v3258, %v3258
      %v3307 = vmul.f32 %v3259, %v3259
      %v3308 = vmul.f32 %v3260, %v3260
      %v3309 = vmul.f32 %v3261, %v3261
      %v3310 = vmul.f32 %v3262, %v3262
      %v3311 = vmul.f32 %v3263, %v3263
      %v3312 = vmul.f32 %v3264, %v3264
      %v3313 = vmul.f32 %v3265, %v3265
      %v3314 = vmul.f32 %v3266, %v3266
      %v3315 = vmul.f32 %v3267, %v3267
      %v3316 = vmul.f32 %v3268, %v3268
      %v3317 = vmul.f32 %v3269, %v3269
      %v3318 = vmul.f32 %v3270, %v3270
      %v3319 = vmul.f32 %v3271, %v3271
      %v3320 = vmul.f32 %v3272, %v3272
      %v3321 = vmul.f32 %v3273, %v3273
      %v3322 = vmul.f32 %v3274, %v3274
      %v3323 = vmul.f32 %v3275, %v3275
      %v3324 = vmul.f32 %v3276, %v3276
      %v3325 = vmul.f32 %v3277, %v3277
      %v3326 = vmul.f32 %v3278, %v3278
      %v3327 = vmul.f32 %v3279, %v3279
      %v3328 = vmul.f32 %v3280, %v3280
      %v3329 = vsel %vm3080, %v3281, 0.0
      %v3330 = vsel %vm3081, %v3282, 0.0
      %v3331 = vsel %vm3082, %v3283, 0.0
      %v3332 = vsel %vm3080, %v3284, 0.0
      %v3333 = vsel %vm3081, %v3285, 0.0
      %v3334 = vsel %vm3082, %v3286, 0.0
      %v3335 = vsel %vm3080, %v3287, 0.0
      %v3336 = vsel %vm3081, %v3288, 0.0
      %v3337 = vsel %vm3082, %v3289, 0.0
      %v3338 = vsel %vm3080, %v3290, 0.0
      %v3339 = vsel %vm3081, %v3291, 0.0
      %v3340 = vsel %vm3082, %v3292, 0.0
      %v3341 = vsel %vm3080, %v3293, 0.0
      %v3342 = vsel %vm3081, %v3294, 0.0
      %v3343 = vsel %vm3082, %v3295, 0.0
      %v3344 = vsel %vm3080, %v3296, 0.0
      %v3345 = vsel %vm3081, %v3297, 0.0
      %v3346 = vsel %vm3082, %v3298, 0.0
      %v3347 = vsel %vm3080, %v3299, 0.0
      %v3348 = vsel %vm3081, %v3300, 0.0
      %v3349 = vsel %vm3082, %v3301, 0.0
      %v3350 = vsel %vm3080, %v3302, 0.0
      %v3351 = vsel %vm3081, %v3303, 0.0
      %v3352 = vsel %vm3082, %v3304, 0.0
      %v3353 = vsel %vm3080, %v3305, 0.0
      %v3354 = vsel %vm3081, %v3306, 0.0
      %v3355 = vsel %vm3082, %v3307, 0.0
      %v3356 = vsel %vm3080, %v3308, 0.0
      %v3357 = vsel %vm3081, %v3309, 0.0
      %v3358 = vsel %vm3082, %v3310, 0.0
      %v3359 = vsel %vm3080, %v3311, 0.0
      %v3360 = vsel %vm3081, %v3312, 0.0
      %v3361 = vsel %vm3082, %v3313, 0.0
      %v3362 = vsel %vm3080, %v3314, 0.0
      %v3363 = vsel %vm3081, %v3315, 0.0
      %v3364 = vsel %vm3082, %v3316, 0.0
      %v3365 = vsel %vm3080, %v3317, 0.0
      %v3366 = vsel %vm3081, %v3318, 0.0
      %v3367 = vsel %vm3082, %v3319, 0.0
      %v3368 = vsel %vm3080, %v3320, 0.0
      %v3369 = vsel %vm3081, %v3321, 0.0
      %v3370 = vsel %vm3082, %v3322, 0.0
      %v3371 = vsel %vm3080, %v3323, 0.0
      %v3372 = vsel %vm3081, %v3324, 0.0
      %v3373 = vsel %vm3082, %v3325, 0.0
      %v3374 = vsel %vm3080, %v3326, 0.0
      %v3375 = vsel %vm3081, %v3327, 0.0
      %v3376 = vsel %vm3082, %v3328, 0.0
      %v3377 = vsel %vm398, %v3329, 0.0
      %v3378 = vsel %vm398, %v3330, 0.0
      %v3379 = vadd.f32 %v3377, %v3378
      %v3380 = vsel %vm398, %v3331, 0.0
      %v3381 = vadd.f32 %v3379, %v3380
      %v3382 = vsel %vm398, %v3332, 0.0
      %v3383 = vadd.f32 %v3381, %v3382
      %v3384 = vsel %vm398, %v3333, 0.0
      %v3385 = vadd.f32 %v3383, %v3384
      %v3386 = vsel %vm398, %v3334, 0.0
      %v3387 = vadd.f32 %v3385, %v3386
      %v3388 = vsel %vm398, %v3335, 0.0
      %v3389 = vadd.f32 %v3387, %v3388
      %v3390 = vsel %vm398, %v3336, 0.0
      %v3391 = vadd.f32 %v3389, %v3390
      %v3392 = vsel %vm398, %v3337, 0.0
      %v3393 = vadd.f32 %v3391, %v3392
      %v3394 = vsel %vm398, %v3338, 0.0
      %v3395 = vadd.f32 %v3393, %v3394
      %v3396 = vsel %vm398, %v3339, 0.0
      %v3397 = vadd.f32 %v3395, %v3396
      %v3398 = vsel %vm398, %v3340, 0.0
      %v3399 = vadd.f32 %v3397, %v3398
      %v3400 = vsel %vm398, %v3341, 0.0
      %v3401 = vadd.f32 %v3399, %v3400
      %v3402 = vsel %vm398, %v3342, 0.0
      %v3403 = vadd.f32 %v3401, %v3402
      %v3404 = vsel %vm398, %v3343, 0.0
      %v3405 = vadd.f32 %v3403, %v3404
      %v3406 = vsel %vm398, %v3344, 0.0
      %v3407 = vadd.f32 %v3405, %v3406
      %v3408 = vsel %vm398, %v3345, 0.0
      %v3409 = vadd.f32 %v3407, %v3408
      %v3410 = vsel %vm398, %v3346, 0.0
      %v3411 = vadd.f32 %v3409, %v3410
      %v3412 = vsel %vm398, %v3347, 0.0
      %v3413 = vadd.f32 %v3411, %v3412
      %v3414 = vsel %vm398, %v3348, 0.0
      %v3415 = vadd.f32 %v3413, %v3414
      %v3416 = vsel %vm398, %v3349, 0.0
      %v3417 = vadd.f32 %v3415, %v3416
      %v3418 = vsel %vm398, %v3350, 0.0
      %v3419 = vadd.f32 %v3417, %v3418
      %v3420 = vsel %vm398, %v3351, 0.0
      %v3421 = vadd.f32 %v3419, %v3420
      %v3422 = vsel %vm398, %v3352, 0.0
      %v3423 = vadd.f32 %v3421, %v3422
      %v3424 = vsel %vm398, %v3353, 0.0
      %v3425 = vadd.f32 %v3423, %v3424
      %v3426 = vsel %vm398, %v3354, 0.0
      %v3427 = vadd.f32 %v3425, %v3426
      %v3428 = vsel %vm398, %v3355, 0.0
      %v3429 = vadd.f32 %v3427, %v3428
      %v3430 = vsel %vm398, %v3356, 0.0
      %v3431 = vadd.f32 %v3429, %v3430
      %v3432 = vsel %vm398, %v3357, 0.0
      %v3433 = vadd.f32 %v3431, %v3432
      %v3434 = vsel %vm398, %v3358, 0.0
      %v3435 = vadd.f32 %v3433, %v3434
      %v3436 = vsel %vm398, %v3359, 0.0
      %v3437 = vadd.f32 %v3435, %v3436
      %v3438 = vsel %vm398, %v3360, 0.0
      %v3439 = vadd.f32 %v3437, %v3438
      %v3440 = vsel %vm398, %v3361, 0.0
      %v3441 = vadd.f32 %v3439, %v3440
      %v3442 = vsel %vm398, %v3362, 0.0
      %v3443 = vadd.f32 %v3441, %v3442
      %v3444 = vsel %vm398, %v3363, 0.0
      %v3445 = vadd.f32 %v3443, %v3444
      %v3446 = vsel %vm398, %v3364, 0.0
      %v3447 = vadd.f32 %v3445, %v3446
      %v3448 = vsel %vm398, %v3365, 0.0
      %v3449 = vadd.f32 %v3447, %v3448
      %v3450 = vsel %vm398, %v3366, 0.0
      %v3451 = vadd.f32 %v3449, %v3450
      %v3452 = vsel %vm398, %v3367, 0.0
      %v3453 = vadd.f32 %v3451, %v3452
      %v3454 = vsel %vm398, %v3368, 0.0
      %v3455 = vadd.f32 %v3453, %v3454
      %v3456 = vsel %vm398, %v3369, 0.0
      %v3457 = vadd.f32 %v3455, %v3456
      %v3458 = vsel %vm398, %v3370, 0.0
      %v3459 = vadd.f32 %v3457, %v3458
      %v3460 = vsel %vm398, %v3371, 0.0
      %v3461 = vadd.f32 %v3459, %v3460
      %v3462 = vsel %vm398, %v3372, 0.0
      %v3463 = vadd.f32 %v3461, %v3462
      %v3464 = vsel %vm398, %v3373, 0.0
      %v3465 = vadd.f32 %v3463, %v3464
      %v3466 = vsel %vm398, %v3374, 0.0
      %v3467 = vadd.f32 %v3465, %v3466
      %v3468 = vsel %vm398, %v3375, 0.0
      %v3469 = vadd.f32 %v3467, %v3468
      %v3470 = vsel %vm398, %v3376, 0.0
      %v3471 = vadd.f32 %v3469, %v3470
      %v3472 = vrot.slane %v3471, 4
      %v3473 = vadd.f32 %v3471, %v3472
      %v3474 = vrot.slane %v3473, 2
      %v3475 = vadd.f32 %v3473, %v3474
      %v3476 = vrot.slane %v3475, 1
      %v3477 = vadd.f32 %v3475, %v3476
      %v3478 = vmul.f32 %v3477, 0.00390625
      %v3479 = vadd.f32 %v3478, 1e-05
      %v3480 = vrsqrt.pop %v3479
      %v3481 = vmul.f32 %v3480, %v3479
      %v3482 = vmul.f32 %v3481, %v3480
      %v3483 = vmul.f32 0.5, %v3482
      %v3484 = vsub.f32 1.5, %v3483
      %v3485 = vmul.f32 %v3480, %v3484
      %vm3486 = vweird.f32 %v3479
      %vm3487 = vweird.f32 %v3480
      %vm3488 = vmor %vm3486, %vm3487
      %v3489 = vsel %vm3488, %v3480, %v3485
      %v3490 = vmul.f32 %v3233, %v3489
      %v3491 = vmul.f32 %v3234, %v3489
      %v3492 = vmul.f32 %v3235, %v3489
      %v3493 = vmul.f32 %v3236, %v3489
      %v3494 = vmul.f32 %v3237, %v3489
      %v3495 = vmul.f32 %v3238, %v3489
      %v3496 = vmul.f32 %v3239, %v3489
      %v3497 = vmul.f32 %v3240, %v3489
      %v3498 = vmul.f32 %v3241, %v3489
      %v3499 = vmul.f32 %v3242, %v3489
      %v3500 = vmul.f32 %v3243, %v3489
      %v3501 = vmul.f32 %v3244, %v3489
      %v3502 = vmul.f32 %v3245, %v3489
      %v3503 = vmul.f32 %v3246, %v3489
      %v3504 = vmul.f32 %v3247, %v3489
      %v3505 = vmul.f32 %v3248, %v3489
      %v3506 = vmul.f32 %v3249, %v3489
      %v3507 = vmul.f32 %v3250, %v3489
      %v3508 = vmul.f32 %v3251, %v3489
      %v3509 = vmul.f32 %v3252, %v3489
      %v3510 = vmul.f32 %v3253, %v3489
      %v3511 = vmul.f32 %v3254, %v3489
      %v3512 = vmul.f32 %v3255, %v3489
      %v3513 = vmul.f32 %v3256, %v3489
      %v3514 = vmul.f32 %v3257, %v3489
      %v3515 = vmul.f32 %v3258, %v3489
      %v3516 = vmul.f32 %v3259, %v3489
      %v3517 = vmul.f32 %v3260, %v3489
      %v3518 = vmul.f32 %v3261, %v3489
      %v3519 = vmul.f32 %v3262, %v3489
      %v3520 = vmul.f32 %v3263, %v3489
      %v3521 = vmul.f32 %v3264, %v3489
      %v3522 = vmul.f32 %v3265, %v3489
      %v3523 = vmul.f32 %v3266, %v3489
      %v3524 = vmul.f32 %v3267, %v3489
      %v3525 = vmul.f32 %v3268, %v3489
      %v3526 = vmul.f32 %v3269, %v3489
      %v3527 = vmul.f32 %v3270, %v3489
      %v3528 = vmul.f32 %v3271, %v3489
      %v3529 = vmul.f32 %v3272, %v3489
      %v3530 = vmul.f32 %v3273, %v3489
      %v3531 = vmul.f32 %v3274, %v3489
      %v3532 = vmul.f32 %v3275, %v3489
      %v3533 = vmul.f32 %v3276, %v3489
      %v3534 = vmul.f32 %v3277, %v3489
      %v3535 = vmul.f32 %v3278, %v3489
      %v3536 = vmul.f32 %v3279, %v3489
      %v3537 = vmul.f32 %v3280, %v3489
      %v3539 = vperm.slane %v3075, 0
      %v3541 = vmul.f32 %v3490, %v3539
      %v3542 = vmul.f32 %v3491, %v3539
      %v3543 = vmul.f32 %v3492, %v3539
      %v3544 = vmul.f32 %v3493, %v3539
      %v3545 = vmul.f32 %v3494, %v3539
      %v3546 = vmul.f32 %v3495, %v3539
      %v3547 = vmul.f32 %v3496, %v3539
      %v3548 = vmul.f32 %v3497, %v3539
      %v3549 = vmul.f32 %v3498, %v3539
      %v3550 = vmul.f32 %v3499, %v3539
      %v3551 = vmul.f32 %v3500, %v3539
      %v3552 = vmul.f32 %v3501, %v3539
      %v3553 = vmul.f32 %v3502, %v3539
      %v3554 = vmul.f32 %v3503, %v3539
      %v3555 = vmul.f32 %v3504, %v3539
      %v3556 = vmul.f32 %v3505, %v3539
      %v3557 = vmul.f32 %v3506, %v3539
      %v3558 = vmul.f32 %v3507, %v3539
      %v3559 = vmul.f32 %v3508, %v3539
      %v3560 = vmul.f32 %v3509, %v3539
      %v3561 = vmul.f32 %v3510, %v3539
      %v3562 = vmul.f32 %v3511, %v3539
      %v3563 = vmul.f32 %v3512, %v3539
      %v3564 = vmul.f32 %v3513, %v3539
      %v3565 = vmul.f32 %v3514, %v3539
      %v3566 = vmul.f32 %v3515, %v3539
      %v3567 = vmul.f32 %v3516, %v3539
      %v3568 = vmul.f32 %v3517, %v3539
      %v3569 = vmul.f32 %v3518, %v3539
      %v3570 = vmul.f32 %v3519, %v3539
      %v3571 = vmul.f32 %v3520, %v3539
      %v3572 = vmul.f32 %v3521, %v3539
      %v3573 = vmul.f32 %v3522, %v3539
      %v3574 = vmul.f32 %v3523, %v3539
      %v3575 = vmul.f32 %v3524, %v3539
      %v3576 = vmul.f32 %v3525, %v3539
      %v3577 = vmul.f32 %v3526, %v3539
      %v3578 = vmul.f32 %v3527, %v3539
      %v3579 = vmul.f32 %v3528, %v3539
      %v3580 = vmul.f32 %v3529, %v3539
      %v3581 = vmul.f32 %v3530, %v3539
      %v3582 = vmul.f32 %v3531, %v3539
      %v3583 = vmul.f32 %v3532, %v3539
      %v3584 = vmul.f32 %v3533, %v3539
      %v3585 = vmul.f32 %v3534, %v3539
      %v3586 = vmul.f32 %v3535, %v3539
      %v3587 = vmul.f32 %v3536, %v3539
      %v3588 = vmul.f32 %v3537, %v3539
      %v3590 = vperm.slane %v3076, 0
      %v3592 = vadd.f32 %v3541, %v3590
      %v3593 = vadd.f32 %v3542, %v3590
      %v3594 = vadd.f32 %v3543, %v3590
      %v3595 = vadd.f32 %v3544, %v3590
      %v3596 = vadd.f32 %v3545, %v3590
      %v3597 = vadd.f32 %v3546, %v3590
      %v3598 = vadd.f32 %v3547, %v3590
      %v3599 = vadd.f32 %v3548, %v3590
      %v3600 = vadd.f32 %v3549, %v3590
      %v3601 = vadd.f32 %v3550, %v3590
      %v3602 = vadd.f32 %v3551, %v3590
      %v3603 = vadd.f32 %v3552, %v3590
      %v3604 = vadd.f32 %v3553, %v3590
      %v3605 = vadd.f32 %v3554, %v3590
      %v3606 = vadd.f32 %v3555, %v3590
      %v3607 = vadd.f32 %v3556, %v3590
      %v3608 = vadd.f32 %v3557, %v3590
      %v3609 = vadd.f32 %v3558, %v3590
      %v3610 = vadd.f32 %v3559, %v3590
      %v3611 = vadd.f32 %v3560, %v3590
      %v3612 = vadd.f32 %v3561, %v3590
      %v3613 = vadd.f32 %v3562, %v3590
      %v3614 = vadd.f32 %v3563, %v3590
      %v3615 = vadd.f32 %v3564, %v3590
      %v3616 = vadd.f32 %v3565, %v3590
      %v3617 = vadd.f32 %v3566, %v3590
      %v3618 = vadd.f32 %v3567, %v3590
      %v3619 = vadd.f32 %v3568, %v3590
      %v3620 = vadd.f32 %v3569, %v3590
      %v3621 = vadd.f32 %v3570, %v3590
      %v3622 = vadd.f32 %v3571, %v3590
      %v3623 = vadd.f32 %v3572, %v3590
      %v3624 = vadd.f32 %v3573, %v3590
      %v3625 = vadd.f32 %v3574, %v3590
      %v3626 = vadd.f32 %v3575, %v3590
      %v3627 = vadd.f32 %v3576, %v3590
      %v3628 = vadd.f32 %v3577, %v3590
      %v3629 = vadd.f32 %v3578, %v3590
      %v3630 = vadd.f32 %v3579, %v3590
      %v3631 = vadd.f32 %v3580, %v3590
      %v3632 = vadd.f32 %v3581, %v3590
      %v3633 = vadd.f32 %v3582, %v3590
      %v3634 = vadd.f32 %v3583, %v3590
      %v3635 = vadd.f32 %v3584, %v3590
      %v3636 = vadd.f32 %v3585, %v3590
      %v3637 = vadd.f32 %v3586, %v3590
      %v3638 = vadd.f32 %v3587, %v3590
      %v3639 = vadd.f32 %v3588, %v3590
      %v3640 = vmax.f32 %v3592, 0.0
      %v3641 = vmax.f32 %v3593, 0.0
      %v3642 = vmax.f32 %v3594, 0.0
      %v3643 = vmax.f32 %v3595, 0.0
      %v3644 = vmax.f32 %v3596, 0.0
      %v3645 = vmax.f32 %v3597, 0.0
      %v3646 = vmax.f32 %v3598, 0.0
      %v3647 = vmax.f32 %v3599, 0.0
      %v3648 = vmax.f32 %v3600, 0.0
      %v3649 = vmax.f32 %v3601, 0.0
      %v3650 = vmax.f32 %v3602, 0.0
      %v3651 = vmax.f32 %v3603, 0.0
      %v3652 = vmax.f32 %v3604, 0.0
      %v3653 = vmax.f32 %v3605, 0.0
      %v3654 = vmax.f32 %v3606, 0.0
      %v3655 = vmax.f32 %v3607, 0.0
      %v3656 = vmax.f32 %v3608, 0.0
      %v3657 = vmax.f32 %v3609, 0.0
      %v3658 = vmax.f32 %v3610, 0.0
      %v3659 = vmax.f32 %v3611, 0.0
      %v3660 = vmax.f32 %v3612, 0.0
      %v3661 = vmax.f32 %v3613, 0.0
      %v3662 = vmax.f32 %v3614, 0.0
      %v3663 = vmax.f32 %v3615, 0.0
      %v3664 = vmax.f32 %v3616, 0.0
      %v3665 = vmax.f32 %v3617, 0.0
      %v3666 = vmax.f32 %v3618, 0.0
      %v3667 = vmax.f32 %v3619, 0.0
      %v3668 = vmax.f32 %v3620, 0.0
      %v3669 = vmax.f32 %v3621, 0.0
      %v3670 = vmax.f32 %v3622, 0.0
      %v3671 = vmax.f32 %v3623, 0.0
      %v3672 = vmax.f32 %v3624, 0.0
      %v3673 = vmax.f32 %v3625, 0.0
      %v3674 = vmax.f32 %v3626, 0.0
      %v3675 = vmax.f32 %v3627, 0.0
      %v3676 = vmax.f32 %v3628, 0.0
      %v3677 = vmax.f32 %v3629, 0.0
      %v3678 = vmax.f32 %v3630, 0.0
      %v3679 = vmax.f32 %v3631, 0.0
      %v3680 = vmax.f32 %v3632, 0.0
      %v3681 = vmax.f32 %v3633, 0.0
      %v3682 = vmax.f32 %v3634, 0.0
      %v3683 = vmax.f32 %v3635, 0.0
      %v3684 = vmax.f32 %v3636, 0.0
      %v3685 = vmax.f32 %v3637, 0.0
      %v3686 = vmax.f32 %v3638, 0.0
      %v3687 = vmax.f32 %v3639, 0.0
      %3688 = vst.msk [vmem:[%s397] sm:$0xff] %vm398, %v3640
      %3689 = vst.msk [vmem:[%s397 + $0x8] sm:$0xff] %vm398, %v3641
      %3690 = vst.msk [vmem:[%s397 + $0x10] sm:$0xff] %vm398, %v3642
      %3691 = vst.msk [vmem:[%s397 + $0x18] sm:$0xff] %vm398, %v3643
      %3692 = vst.msk [vmem:[%s397 + $0x20] sm:$0xff] %vm398, %v3644
      %3693 = vst.msk [vmem:[%s397 + $0x28] sm:$0xff] %vm398, %v3645
      %3694 = vst.msk [vmem:[%s397 + $0x30] sm:$0xff] %vm398, %v3646
      %3695 = vst.msk [vmem:[%s397 + $0x38] sm:$0xff] %vm398, %v3647
      %3696 = vst.msk [vmem:[%s397 + $0x40] sm:$0xff] %vm398, %v3648
      %3697 = vst.msk [vmem:[%s397 + $0x48] sm:$0xff] %vm398, %v3649
      %3698 = vst.msk [vmem:[%s397 + $0x50] sm:$0xff] %vm398, %v3650
      %3699 = vst.msk [vmem:[%s397 + $0x58] sm:$0xff] %vm398, %v3651
      %3700 = vst.msk [vmem:[%s397 + $0x60] sm:$0xff] %vm398, %v3652
      %3701 = vst.msk [vmem:[%s397 + $0x68] sm:$0xff] %vm398, %v3653
      %3702 = vst.msk [vmem:[%s397 + $0x70] sm:$0xff] %vm398, %v3654
      %3703 = vst.msk [vmem:[%s397 + $0x78] sm:$0xff] %vm398, %v3655
      %3704 = vst.msk [vmem:[%s397 + $0x80] sm:$0xff] %vm398, %v3656
      %3705 = vst.msk [vmem:[%s397 + $0x88] sm:$0xff] %vm398, %v3657
      %3706 = vst.msk [vmem:[%s397 + $0x90] sm:$0xff] %vm398, %v3658
      %3707 = vst.msk [vmem:[%s397 + $0x98] sm:$0xff] %vm398, %v3659
      %3708 = vst.msk [vmem:[%s397 + $0xa0] sm:$0xff] %vm398, %v3660
      %3709 = vst.msk [vmem:[%s397 + $0xa8] sm:$0xff] %vm398, %v3661
      %3710 = vst.msk [vmem:[%s397 + $0xb0] sm:$0xff] %vm398, %v3662
      %3711 = vst.msk [vmem:[%s397 + $0xb8] sm:$0xff] %vm398, %v3663
      %3712 = vst.msk [vmem:[%s397 + $0xc0] sm:$0xff] %vm398, %v3664
      %3713 = vst.msk [vmem:[%s397 + $0xc8] sm:$0xff] %vm398, %v3665
      %3714 = vst.msk [vmem:[%s397 + $0xd0] sm:$0xff] %vm398, %v3666
      %3715 = vst.msk [vmem:[%s397 + $0xd8] sm:$0xff] %vm398, %v3667
      %3716 = vst.msk [vmem:[%s397 + $0xe0] sm:$0xff] %vm398, %v3668
      %3717 = vst.msk [vmem:[%s397 + $0xe8] sm:$0xff] %vm398, %v3669
      %3718 = vst.msk [vmem:[%s397 + $0xf0] sm:$0xff] %vm398, %v3670
      %3719 = vst.msk [vmem:[%s397 + $0xf8] sm:$0xff] %vm398, %v3671
      %3720 = vst.msk [vmem:[%s397 + $0x100] sm:$0xff] %vm398, %v3672
      %3721 = vst.msk [vmem:[%s397 + $0x108] sm:$0xff] %vm398, %v3673
      %3722 = vst.msk [vmem:[%s397 + $0x110] sm:$0xff] %vm398, %v3674
      %3723 = vst.msk [vmem:[%s397 + $0x118] sm:$0xff] %vm398, %v3675
      %3724 = vst.msk [vmem:[%s397 + $0x120] sm:$0xff] %vm398, %v3676
      %3725 = vst.msk [vmem:[%s397 + $0x128] sm:$0xff] %vm398, %v3677
      %3726 = vst.msk [vmem:[%s397 + $0x130] sm:$0xff] %vm398, %v3678
      %3727 = vst.msk [vmem:[%s397 + $0x138] sm:$0xff] %vm398, %v3679
      %3728 = vst.msk [vmem:[%s397 + $0x140] sm:$0xff] %vm398, %v3680
      %3729 = vst.msk [vmem:[%s397 + $0x148] sm:$0xff] %vm398, %v3681
      %3730 = vst.msk [vmem:[%s397 + $0x150] sm:$0xff] %vm398, %v3682
      %3731 = vst.msk [vmem:[%s397 + $0x158] sm:$0xff] %vm398, %v3683
      %3732 = vst.msk [vmem:[%s397 + $0x160] sm:$0xff] %vm398, %v3684
      %3733 = vst.msk [vmem:[%s397 + $0x168] sm:$0xff] %vm398, %v3685
      %3734 = vst.msk [vmem:[%s397 + $0x170] sm:$0xff] %vm398, %v3686
      %3735 = vst.msk [vmem:[%s397 + $0x178] sm:$0xff] %vm398, %v3687
      %v3736 = vld [vmem:[%s431] sm:$0xff]
      %v3737 = vld [vmem:[%s431 + $0x8] sm:$0xff]
      %v3738 = vld [vmem:[%s431 + $0x10] sm:$0xff]
      %3739 = vst.msk [vmem:[#allocation2] sm:$0xff] %vm398, %v3736
      %3740 = vst.msk [vmem:[#allocation2 + $0x8] sm:$0xff] %vm398, %v3737
      %3741 = vst.msk [vmem:[#allocation2 + $0x10] sm:$0xff] %vm398, %v3738
      %v3742 = vld [vmem:[%s438] sm:$0xff]
      %v3743 = vld [vmem:[%s438 + $0x8] sm:$0xff]
      %v3744 = vld [vmem:[%s438 + $0x10] sm:$0xff]
      %3745 = vst.msk [vmem:[%s442] sm:$0xff] %vm398, %v3742
      %3746 = vst.msk [vmem:[%s442 + $0x8] sm:$0xff] %vm398, %v3743
      %3747 = vst.msk [vmem:[%s442 + $0x10] sm:$0xff] %vm398, %v3744
      %v3748 = vld [vmem:[#allocation2 + $0x2] sm:$0x1]
      %v3749 = vld [vmem:[#allocation2 + $0x1a] sm:$0x1]
      %v3750 = vld [vmem:[#allocation2 + $0x32] sm:$0x1]
      %v3751 = vld [vmem:[#allocation2 + $0x4a] sm:$0x1]
      %v3752 = vld [vmem:[#allocation2 + $0x62] sm:$0x1]
      %v3753 = vld [vmem:[#allocation2 + $0x7a] sm:$0x1]
      %v3754 = vld [vmem:[#allocation2 + $0x92] sm:$0x1]
      %v3755 = vld [vmem:[#allocation2 + $0xaa] sm:$0x1]
      %v3756 = vld [vmem:[#allocation2 + $0xc2] sm:$0x1]
      %v3757 = vld [vmem:[#allocation2 + $0xda] sm:$0x1]
      %v3758 = vld [vmem:[#allocation2 + $0xf2] sm:$0x1]
      %v3759 = vld [vmem:[#allocation2 + $0x10a] sm:$0x1]
      %v3760 = vld [vmem:[#allocation2 + $0x122] sm:$0x1]
      %v3761 = vld [vmem:[#allocation2 + $0x13a] sm:$0x1]
      %v3762 = vld [vmem:[#allocation2 + $0x152] sm:$0x1]
      %v3763 = vld [vmem:[#allocation2 + $0x16a] sm:$0x1]
      %v3764 = vld [vmem:[#allocation2 + $0x182] sm:$0x1]
      %v3765 = vld [vmem:[#allocation2 + $0x19a] sm:$0x1]
      %3766 = vst.msk [vmem:[#allocation2] sm:$0x1] %vm464, %v3748
      %3767 = vst.msk [vmem:[#allocation2 + $0x18] sm:$0x1] %vm464, %v3749
      %3768 = vst.msk [vmem:[#allocation2 + $0x30] sm:$0x1] %vm464, %v3750
      %3769 = vst.msk [vmem:[#allocation2 + $0x48] sm:$0x1] %vm464, %v3751
      %3770 = vst.msk [vmem:[#allocation2 + $0x60] sm:$0x1] %vm464, %v3752
      %3771 = vst.msk [vmem:[#allocation2 + $0x78] sm:$0x1] %vm464, %v3753
      %3772 = vst.msk [vmem:[#allocation2 + $0x90] sm:$0x1] %vm464, %v3754
      %3773 = vst.msk [vmem:[#allocation2 + $0xa8] sm:$0x1] %vm464, %v3755
      %3774 = vst.msk [vmem:[#allocation2 + $0xc0] sm:$0x1] %vm464, %v3756
      %3775 = vst.msk [vmem:[#allocation2 + $0xd8] sm:$0x1] %vm464, %v3757
      %3776 = vst.msk [vmem:[#allocation2 + $0xf0] sm:$0x1] %vm464, %v3758
      %3777 = vst.msk [vmem:[#allocation2 + $0x108] sm:$0x1] %vm464, %v3759
      %3778 = vst.msk [vmem:[#allocation2 + $0x120] sm:$0x1] %vm464, %v3760
      %3779 = vst.msk [vmem:[#allocation2 + $0x138] sm:$0x1] %vm464, %v3761
      %3780 = vst.msk [vmem:[#allocation2 + $0x150] sm:$0x1] %vm464, %v3762
      %3781 = vst.msk [vmem:[#allocation2 + $0x168] sm:$0x1] %vm464, %v3763
      %3782 = vst.msk [vmem:[#allocation2 + $0x180] sm:$0x1] %vm464, %v3764
      %3783 = vst.msk [vmem:[#allocation2 + $0x198] sm:$0x1] %vm464, %v3765
      %v3784 = vld [vmem:[#allocation2 + $0xf] sm:$0x1]
      %v3785 = vld [vmem:[#allocation2 + $0x27] sm:$0x1]
      %v3786 = vld [vmem:[#allocation2 + $0x3f] sm:$0x1]
      %v3787 = vld [vmem:[#allocation2 + $0x57] sm:$0x1]
      %v3788 = vld [vmem:[#allocation2 + $0x6f] sm:$0x1]
      %v3789 = vld [vmem:[#allocation2 + $0x87] sm:$0x1]
      %v3790 = vld [vmem:[#allocation2 + $0x9f] sm:$0x1]
      %v3791 = vld [vmem:[#allocation2 + $0xb7] sm:$0x1]
      %v3792 = vld [vmem:[#allocation2 + $0xcf] sm:$0x1]
      %v3793 = vld [vmem:[#allocation2 + $0xe7] sm:$0x1]
      %v3794 = vld [vmem:[#allocation2 + $0xff] sm:$0x1]
      %v3795 = vld [vmem:[#allocation2 + $0x117] sm:$0x1]
      %v3796 = vld [vmem:[#allocation2 + $0x12f] sm:$0x1]
      %v3797 = vld [vmem:[#allocation2 + $0x147] sm:$0x1]
      %v3798 = vld [vmem:[#allocation2 + $0x15f] sm:$0x1]
      %v3799 = vld [vmem:[#allocation2 + $0x177] sm:$0x1]
      %v3800 = vld [vmem:[#allocation2 + $0x18f] sm:$0x1]
      %v3801 = vld [vmem:[#allocation2 + $0x1a7] sm:$0x1]
      %3802 = vst.msk [vmem:[#allocation2 + $0x11] sm:$0x1] %vm464, %v3784
      %3803 = vst.msk [vmem:[#allocation2 + $0x29] sm:$0x1] %vm464, %v3785
      %3804 = vst.msk [vmem:[#allocation2 + $0x41] sm:$0x1] %vm464, %v3786
      %3805 = vst.msk [vmem:[#allocation2 + $0x59] sm:$0x1] %vm464, %v3787
      %3806 = vst.msk [vmem:[#allocation2 + $0x71] sm:$0x1] %vm464, %v3788
      %3807 = vst.msk [vmem:[#allocation2 + $0x89] sm:$0x1] %vm464, %v3789
      %3808 = vst.msk [vmem:[#allocation2 + $0xa1] sm:$0x1] %vm464, %v3790
      %3809 = vst.msk [vmem:[#allocation2 + $0xb9] sm:$0x1] %vm464, %v3791
      %3810 = vst.msk [vmem:[#allocation2 + $0xd1] sm:$0x1] %vm464, %v3792
      %3811 = vst.msk [vmem:[#allocation2 + $0xe9] sm:$0x1] %vm464, %v3793
      %3812 = vst.msk [vmem:[#allocation2 + $0x101] sm:$0x1] %vm464, %v3794
      %3813 = vst.msk [vmem:[#allocation2 + $0x119] sm:$0x1] %vm464, %v3795
      %3814 = vst.msk [vmem:[#allocation2 + $0x131] sm:$0x1] %vm464, %v3796
      %3815 = vst.msk [vmem:[#allocation2 + $0x149] sm:$0x1] %vm464, %v3797
      %3816 = vst.msk [vmem:[#allocation2 + $0x161] sm:$0x1] %vm464, %v3798
      %3817 = vst.msk [vmem:[#allocation2 + $0x179] sm:$0x1] %vm464, %v3799
      %3818 = vst.msk [vmem:[#allocation2 + $0x191] sm:$0x1] %vm464, %v3800
      %3819 = vst.msk [vmem:[#allocation2 + $0x1a9] sm:$0x1] %vm464, %v3801
      %v3820 = vld [vmem:[%s6] sm:$0x1]
      %v3821 = vld [vmem:[#allocation2] sm:$0xff]
      %v3822 = vld [vmem:[#allocation2 + $0x8] sm:$0xff]
      %v3823 = vld [vmem:[#allocation2 + $0x10] sm:$0xff]
      %v3824 = vld [vmem:[#allocation2 + $0x18] sm:$0xff]
      %v3825 = vld [vmem:[#allocation2 + $0x20] sm:$0xff]
      %v3826 = vld [vmem:[#allocation2 + $0x28] sm:$0xff]
      %v3827 = vld [vmem:[#allocation2 + $0x30] sm:$0xff]
      %v3828 = vld [vmem:[#allocation2 + $0x38] sm:$0xff]
      %v3829 = vld [vmem:[#allocation2 + $0x40] sm:$0xff]
      %v3830 = vld [vmem:[#allocation2 + $0x48] sm:$0xff]
      %v3831 = vld [vmem:[#allocation2 + $0x50] sm:$0xff]
      %v3832 = vld [vmem:[#allocation2 + $0x58] sm:$0xff]
      %v3833 = vld [vmem:[#allocation2 + $0x60] sm:$0xff]
      %v3834 = vld [vmem:[#allocation2 + $0x68] sm:$0xff]
      %v3835 = vld [vmem:[#allocation2 + $0x70] sm:$0xff]
      %v3836 = vld [vmem:[#allocation2 + $0x78] sm:$0xff]
      %v3837 = vld [vmem:[#allocation2 + $0x80] sm:$0xff]
      %v3838 = vld [vmem:[#allocation2 + $0x88] sm:$0xff]
      %v3839 = vld [vmem:[#allocation2 + $0x90] sm:$0xff]
      %v3840 = vld [vmem:[#allocation2 + $0x98] sm:$0xff]
      %v3841 = vld [vmem:[#allocation2 + $0xa0] sm:$0xff]
      %v3842 = vld [vmem:[#allocation2 + $0xa8] sm:$0xff]
      %v3843 = vld [vmem:[#allocation2 + $0xb0] sm:$0xff]
      %v3844 = vld [vmem:[#allocation2 + $0xb8] sm:$0xff]
      %v3845 = vld [vmem:[#allocation2 + $0xc0] sm:$0xff]
      %v3846 = vld [vmem:[#allocation2 + $0xc8] sm:$0xff]
      %v3847 = vld [vmem:[#allocation2 + $0xd0] sm:$0xff]
      %v3848 = vld [vmem:[#allocation2 + $0xd8] sm:$0xff]
      %v3849 = vld [vmem:[#allocation2 + $0xe0] sm:$0xff]
      %v3850 = vld [vmem:[#allocation2 + $0xe8] sm:$0xff]
      %v3851 = vld [vmem:[#allocation2 + $0xf0] sm:$0xff]
      %v3852 = vld [vmem:[#allocation2 + $0xf8] sm:$0xff]
      %v3853 = vld [vmem:[#allocation2 + $0x100] sm:$0xff]
      %v3854 = vld [vmem:[#allocation2 + $0x108] sm:$0xff]
      %v3855 = vld [vmem:[#allocation2 + $0x110] sm:$0xff]
      %v3856 = vld [vmem:[#allocation2 + $0x118] sm:$0xff]
      %v3857 = vld [vmem:[#allocation2 + $0x120] sm:$0xff]
      %v3858 = vld [vmem:[#allocation2 + $0x128] sm:$0xff]
      %v3859 = vld [vmem:[#allocation2 + $0x130] sm:$0xff]
      %v3860 = vld [vmem:[#allocation2 + $0x138] sm:$0xff]
      %v3861 = vld [vmem:[#allocation2 + $0x140] sm:$0xff]
      %v3862 = vld [vmem:[#allocation2 + $0x148] sm:$0xff]
      %v3863 = vld [vmem:[#allocation2 + $0x150] sm:$0xff]
      %v3864 = vld [vmem:[#allocation2 + $0x158] sm:$0xff]
      %v3865 = vld [vmem:[#allocation2 + $0x160] sm:$0xff]
      %v3866 = vld [vmem:[#allocation2 + $0x168] sm:$0xff]
      %v3867 = vld [vmem:[#allocation2 + $0x170] sm:$0xff]
      %v3868 = vld [vmem:[#allocation2 + $0x178] sm:$0xff]
      %v3869 = vld [vmem:[%s5] sm:$0xf]
      %v3870 = vld [vmem:[%s397] sm:$0xff]
      %v3871 = vld [vmem:[%s397 + $0x8] sm:$0xff]
      %v3872 = vld [vmem:[%s397 + $0x10] sm:$0xff]
      %v3873 = vld [vmem:[%s397 + $0x18] sm:$0xff]
      %v3874 = vld [vmem:[%s397 + $0x20] sm:$0xff]
      %v3875 = vld [vmem:[%s397 + $0x28] sm:$0xff]
      %v3876 = vld [vmem:[%s397 + $0x30] sm:$0xff]
      %v3877 = vld [vmem:[%s397 + $0x38] sm:$0xff]
      %v3878 = vld [vmem:[%s397 + $0x40] sm:$0xff]
      %v3879 = vld [vmem:[%s397 + $0x48] sm:$0xff]
      %v3880 = vld [vmem:[%s397 + $0x50] sm:$0xff]
      %v3881 = vld [vmem:[%s397 + $0x58] sm:$0xff]
      %v3882 = vld [vmem:[%s397 + $0x60] sm:$0xff]
      %v3883 = vld [vmem:[%s397 + $0x68] sm:$0xff]
      %v3884 = vld [vmem:[%s397 + $0x70] sm:$0xff]
      %v3885 = vld [vmem:[%s397 + $0x78] sm:$0xff]
      %v3886 = vld [vmem:[%s397 + $0x80] sm:$0xff]
      %v3887 = vld [vmem:[%s397 + $0x88] sm:$0xff]
      %v3888 = vld [vmem:[%s397 + $0x90] sm:$0xff]
      %v3889 = vld [vmem:[%s397 + $0x98] sm:$0xff]
      %v3890 = vld [vmem:[%s397 + $0xa0] sm:$0xff]
      %v3891 = vld [vmem:[%s397 + $0xa8] sm:$0xff]
      %v3892 = vld [vmem:[%s397 + $0xb0] sm:$0xff]
      %v3893 = vld [vmem:[%s397 + $0xb8] sm:$0xff]
      %v3894 = vld [vmem:[%s397 + $0xc0] sm:$0xff]
      %v3895 = vld [vmem:[%s397 + $0xc8] sm:$0xff]
      %v3896 = vld [vmem:[%s397 + $0xd0] sm:$0xff]
      %v3897 = vld [vmem:[%s397 + $0xd8] sm:$0xff]
      %v3898 = vld [vmem:[%s397 + $0xe0] sm:$0xff]
      %v3899 = vld [vmem:[%s397 + $0xe8] sm:$0xff]
      %v3900 = vld [vmem:[%s397 + $0xf0] sm:$0xff]
      %v3901 = vld [vmem:[%s397 + $0xf8] sm:$0xff]
      %v3902 = vld [vmem:[%s397 + $0x100] sm:$0xff]
      %v3903 = vld [vmem:[%s397 + $0x108] sm:$0xff]
      %v3904 = vld [vmem:[%s397 + $0x110] sm:$0xff]
      %v3905 = vld [vmem:[%s397 + $0x118] sm:$0xff]
      %v3906 = vld [vmem:[%s397 + $0x120] sm:$0xff]
      %v3907 = vld [vmem:[%s397 + $0x128] sm:$0xff]
      %v3908 = vld [vmem:[%s397 + $0x130] sm:$0xff]
      %v3909 = vld [vmem:[%s397 + $0x138] sm:$0xff]
      %v3910 = vld [vmem:[%s397 + $0x140] sm:$0xff]
      %v3911 = vld [vmem:[%s397 + $0x148] sm:$0xff]
      %v3912 = vld [vmem:[%s397 + $0x150] sm:$0xff]
      %v3913 = vld [vmem:[%s397 + $0x158] sm:$0xff]
      %v3914 = vld [vmem:[%s397 + $0x160] sm:$0xff]
      %v3915 = vld [vmem:[%s397 + $0x168] sm:$0xff]
      %v3916 = vld [vmem:[%s397 + $0x170] sm:$0xff]
      %v3917 = vld [vmem:[%s397 + $0x178] sm:$0xff]
      %s3918 = scalar_lea.vmem %s5, 12
      %v3919 = vld [vmem:[%s3918] sm:$0xf]
      %v3921 = vsel %vm398, %v3870, 0
      %v3924 = vsel %vm398, %v3871, 0
      %v3927 = vsel %vm398, %v3872, 0
      %v3930 = vsel %vm398, %v3873, 0
      %v3933 = vsel %vm398, %v3874, 0
      %v3936 = vsel %vm398, %v3875, 0
      %v3939 = vsel %vm398, %v3876, 0
      %v3942 = vsel %vm398, %v3877, 0
      %v3945 = vsel %vm398, %v3878, 0
      %v3948 = vsel %vm398, %v3879, 0
      %v3951 = vsel %vm398, %v3880, 0
      %v3954 = vsel %vm398, %v3881, 0
      %v3957 = vsel %vm398, %v3882, 0
      %v3960 = vsel %vm398, %v3883, 0
      %v3963 = vsel %vm398, %v3884, 0
      %v3966 = vsel %vm398, %v3885, 0
      %v3969 = vsel %vm398, %v3886, 0
      %v3972 = vsel %vm398, %v3887, 0
      %v3975 = vsel %vm398, %v3888, 0
      %v3978 = vsel %vm398, %v3889, 0
      %v3981 = vsel %vm398, %v3890, 0
      %v3984 = vsel %vm398, %v3891, 0
      %v3987 = vsel %vm398, %v3892, 0
      %v3990 = vsel %vm398, %v3893, 0
      %v3993 = vsel %vm398, %v3894, 0
      %v3996 = vsel %vm398, %v3895, 0
      %v3999 = vsel %vm398, %v3896, 0
      %v4002 = vsel %vm398, %v3897, 0
      %v4005 = vsel %vm398, %v3898, 0
      %v4008 = vsel %vm398, %v3899, 0
      %v4011 = vsel %vm398, %v3900, 0
      %v4014 = vsel %vm398, %v3901, 0
      %v4017 = vsel %vm398, %v3902, 0
      %v4020 = vsel %vm398, %v3903, 0
      %v4023 = vsel %vm398, %v3904, 0
      %v4026 = vsel %vm398, %v3905, 0
      %v4029 = vsel %vm398, %v3906, 0
      %v4032 = vsel %vm398, %v3907, 0
      %v4035 = vsel %vm398, %v3908, 0
      %v4038 = vsel %vm398, %v3909, 0
      %v4041 = vsel %vm398, %v3910, 0
      %v4044 = vsel %vm398, %v3911, 0
      %v4047 = vsel %vm398, %v3912, 0
      %v4050 = vsel %vm398, %v3913, 0
      %v4053 = vsel %vm398, %v3914, 0
      %v4056 = vsel %vm398, %v3915, 0
      %v4059 = vsel %vm398, %v3916, 0
      %v4062 = vsel %vm398, %v3917, 0
      %v4065 = vsel %vm763, %v3919, 0
      %4067 = vmatpush.msra.mxu0 0.0
      %4068 = vmatpush.msra.mxu0 0.0
      %4069 = vmatpush.msra.mxu0 0.0
      %4070 = vmatpush.msra.mxu0 0.0
      %4071 = vmatpush.msra.mxu0 0.0
      %4072 = vmatpush.msra.mxu0 0.0
      %4073 = vmatpush.msra.mxu0 0.0
      %4074 = vmatpush.msra.mxu0 0.0
      %4075 = vmatpush.msra.mxu0 0.0
      %4076 = vmatpush.msra.mxu0 0.0
      %4077 = vmatpush.msra.mxu0 0.0
      %4078 = vmatpush.msra.mxu0 0.0
      %4079 = vmatpush.msra.mxu0 0.0
      %4080 = vmatpush.msra.mxu0 0.0
      %4081 = vmatpush.msra.mxu0 0.0
      %4082 = vmatpush.msra.mxu0 %v4065
      %4083 = vmatmul.f32.gmra.mxu0 %v3921
      %v4084 = vpop.f32.mrf.mxu0
      %v4085 = vadd.f32 0.0, %v4084
      %4086 = vmatmul.f32.gmra.mxu0 %v3924
      %v4087 = vpop.f32.mrf.mxu0
      %v4088 = vadd.f32 0.0, %v4087
      %4089 = vmatmul.f32.gmra.mxu0 %v3927
      %v4090 = vpop.f32.mrf.mxu0
      %v4091 = vadd.f32 0.0, %v4090
      %4092 = vmatmul.f32.gmra.mxu0 %v3930
      %v4093 = vpop.f32.mrf.mxu0
      %v4094 = vadd.f32 0.0, %v4093
      %4095 = vmatmul.f32.gmra.mxu0 %v3933
      %v4096 = vpop.f32.mrf.mxu0
      %v4097 = vadd.f32 0.0, %v4096
      %4098 = vmatmul.f32.gmra.mxu0 %v3936
      %v4099 = vpop.f32.mrf.mxu0
      %v4100 = vadd.f32 0.0, %v4099
      %4101 = vmatmul.f32.gmra.mxu0 %v3939
      %v4102 = vpop.f32.mrf.mxu0
      %v4103 = vadd.f32 0.0, %v4102
      %4104 = vmatmul.f32.gmra.mxu0 %v3942
      %v4105 = vpop.f32.mrf.mxu0
      %v4106 = vadd.f32 0.0, %v4105
      %4107 = vmatmul.f32.gmra.mxu0 %v3945
      %v4108 = vpop.f32.mrf.mxu0
      %v4109 = vadd.f32 0.0, %v4108
      %4110 = vmatmul.f32.gmra.mxu0 %v3948
      %v4111 = vpop.f32.mrf.mxu0
      %v4112 = vadd.f32 0.0, %v4111
      %4113 = vmatmul.f32.gmra.mxu0 %v3951
      %v4114 = vpop.f32.mrf.mxu0
      %v4115 = vadd.f32 0.0, %v4114
      %4116 = vmatmul.f32.gmra.mxu0 %v3954
      %v4117 = vpop.f32.mrf.mxu0
      %v4118 = vadd.f32 0.0, %v4117
      %4119 = vmatmul.f32.gmra.mxu0 %v3957
      %v4120 = vpop.f32.mrf.mxu0
      %v4121 = vadd.f32 0.0, %v4120
      %4122 = vmatmul.f32.gmra.mxu0 %v3960
      %v4123 = vpop.f32.mrf.mxu0
      %v4124 = vadd.f32 0.0, %v4123
      %4125 = vmatmul.f32.gmra.mxu0 %v3963
      %v4126 = vpop.f32.mrf.mxu0
      %v4127 = vadd.f32 0.0, %v4126
      %4128 = vmatmul.f32.gmra.mxu0 %v3966
      %v4129 = vpop.f32.mrf.mxu0
      %v4130 = vadd.f32 0.0, %v4129
      %4131 = vmatmul.f32.gmra.mxu0 %v3969
      %v4132 = vpop.f32.mrf.mxu0
      %v4133 = vadd.f32 0.0, %v4132
      %4134 = vmatmul.f32.gmra.mxu0 %v3972
      %v4135 = vpop.f32.mrf.mxu0
      %v4136 = vadd.f32 0.0, %v4135
      %4137 = vmatmul.f32.gmra.mxu0 %v3975
      %v4138 = vpop.f32.mrf.mxu0
      %v4139 = vadd.f32 0.0, %v4138
      %4140 = vmatmul.f32.gmra.mxu0 %v3978
      %v4141 = vpop.f32.mrf.mxu0
      %v4142 = vadd.f32 0.0, %v4141
      %4143 = vmatmul.f32.gmra.mxu0 %v3981
      %v4144 = vpop.f32.mrf.mxu0
      %v4145 = vadd.f32 0.0, %v4144
      %4146 = vmatmul.f32.gmra.mxu0 %v3984
      %v4147 = vpop.f32.mrf.mxu0
      %v4148 = vadd.f32 0.0, %v4147
      %4149 = vmatmul.f32.gmra.mxu0 %v3987
      %v4150 = vpop.f32.mrf.mxu0
      %v4151 = vadd.f32 0.0, %v4150
      %4152 = vmatmul.f32.gmra.mxu0 %v3990
      %v4153 = vpop.f32.mrf.mxu0
      %v4154 = vadd.f32 0.0, %v4153
      %4155 = vmatmul.f32.gmra.mxu0 %v3993
      %v4156 = vpop.f32.mrf.mxu0
      %v4157 = vadd.f32 0.0, %v4156
      %4158 = vmatmul.f32.gmra.mxu0 %v3996
      %v4159 = vpop.f32.mrf.mxu0
      %v4160 = vadd.f32 0.0, %v4159
      %4161 = vmatmul.f32.gmra.mxu0 %v3999
      %v4162 = vpop.f32.mrf.mxu0
      %v4163 = vadd.f32 0.0, %v4162
      %4164 = vmatmul.f32.gmra.mxu0 %v4002
      %v4165 = vpop.f32.mrf.mxu0
      %v4166 = vadd.f32 0.0, %v4165
      %4167 = vmatmul.f32.gmra.mxu0 %v4005
      %v4168 = vpop.f32.mrf.mxu0
      %v4169 = vadd.f32 0.0, %v4168
      %4170 = vmatmul.f32.gmra.mxu0 %v4008
      %v4171 = vpop.f32.mrf.mxu0
      %v4172 = vadd.f32 0.0, %v4171
      %4173 = vmatmul.f32.gmra.mxu0 %v4011
      %v4174 = vpop.f32.mrf.mxu0
      %v4175 = vadd.f32 0.0, %v4174
      %4176 = vmatmul.f32.gmra.mxu0 %v4014
      %v4177 = vpop.f32.mrf.mxu0
      %v4178 = vadd.f32 0.0, %v4177
      %4179 = vmatmul.f32.gmra.mxu0 %v4017
      %v4180 = vpop.f32.mrf.mxu0
      %v4181 = vadd.f32 0.0, %v4180
      %4182 = vmatmul.f32.gmra.mxu0 %v4020
      %v4183 = vpop.f32.mrf.mxu0
      %v4184 = vadd.f32 0.0, %v4183
      %4185 = vmatmul.f32.gmra.mxu0 %v4023
      %v4186 = vpop.f32.mrf.mxu0
      %v4187 = vadd.f32 0.0, %v4186
      %4188 = vmatmul.f32.gmra.mxu0 %v4026
      %v4189 = vpop.f32.mrf.mxu0
      %v4190 = vadd.f32 0.0, %v4189
      %4191 = vmatmul.f32.gmra.mxu0 %v4029
      %v4192 = vpop.f32.mrf.mxu0
      %v4193 = vadd.f32 0.0, %v4192
      %4194 = vmatmul.f32.gmra.mxu0 %v4032
      %v4195 = vpop.f32.mrf.mxu0
      %v4196 = vadd.f32 0.0, %v4195
      %4197 = vmatmul.f32.gmra.mxu0 %v4035
      %v4198 = vpop.f32.mrf.mxu0
      %v4199 = vadd.f32 0.0, %v4198
      %4200 = vmatmul.f32.gmra.mxu0 %v4038
      %v4201 = vpop.f32.mrf.mxu0
      %v4202 = vadd.f32 0.0, %v4201
      %4203 = vmatmul.f32.gmra.mxu0 %v4041
      %v4204 = vpop.f32.mrf.mxu0
      %v4205 = vadd.f32 0.0, %v4204
      %4206 = vmatmul.f32.gmra.mxu0 %v4044
      %v4207 = vpop.f32.mrf.mxu0
      %v4208 = vadd.f32 0.0, %v4207
      %4209 = vmatmul.f32.gmra.mxu0 %v4047
      %v4210 = vpop.f32.mrf.mxu0
      %v4211 = vadd.f32 0.0, %v4210
      %4212 = vmatmul.f32.gmra.mxu0 %v4050
      %v4213 = vpop.f32.mrf.mxu0
      %v4214 = vadd.f32 0.0, %v4213
      %4215 = vmatmul.f32.gmra.mxu0 %v4053
      %v4216 = vpop.f32.mrf.mxu0
      %v4217 = vadd.f32 0.0, %v4216
      %4218 = vmatmul.f32.gmra.mxu0 %v4056
      %v4219 = vpop.f32.mrf.mxu0
      %v4220 = vadd.f32 0.0, %v4219
      %4221 = vmatmul.f32.gmra.mxu0 %v4059
      %v4222 = vpop.f32.mrf.mxu0
      %v4223 = vadd.f32 0.0, %v4222
      %4224 = vmatmul.f32.gmra.mxu0 %v4062
      %v4225 = vpop.f32.mrf.mxu0
      %v4226 = vadd.f32 0.0, %v4225
      %4227 = vdwg.mxu0
      %v4229 = vsel %vm398, %v3821, 0
      %v4232 = vsel %vm398, %v3822, 0
      %v4235 = vsel %vm398, %v3823, 0
      %v4238 = vsel %vm398, %v3824, 0
      %v4241 = vsel %vm398, %v3825, 0
      %v4244 = vsel %vm398, %v3826, 0
      %v4247 = vsel %vm398, %v3827, 0
      %v4250 = vsel %vm398, %v3828, 0
      %v4253 = vsel %vm398, %v3829, 0
      %v4256 = vsel %vm398, %v3830, 0
      %v4259 = vsel %vm398, %v3831, 0
      %v4262 = vsel %vm398, %v3832, 0
      %v4265 = vsel %vm398, %v3833, 0
      %v4268 = vsel %vm398, %v3834, 0
      %v4271 = vsel %vm398, %v3835, 0
      %v4274 = vsel %vm398, %v3836, 0
      %v4277 = vsel %vm398, %v3837, 0
      %v4280 = vsel %vm398, %v3838, 0
      %v4283 = vsel %vm398, %v3839, 0
      %v4286 = vsel %vm398, %v3840, 0
      %v4289 = vsel %vm398, %v3841, 0
      %v4292 = vsel %vm398, %v3842, 0
      %v4295 = vsel %vm398, %v3843, 0
      %v4298 = vsel %vm398, %v3844, 0
      %v4301 = vsel %vm398, %v3845, 0
      %v4304 = vsel %vm398, %v3846, 0
      %v4307 = vsel %vm398, %v3847, 0
      %v4310 = vsel %vm398, %v3848, 0
      %v4313 = vsel %vm398, %v3849, 0
      %v4316 = vsel %vm398, %v3850, 0
      %v4319 = vsel %vm398, %v3851, 0
      %v4322 = vsel %vm398, %v3852, 0
      %v4325 = vsel %vm398, %v3853, 0
      %v4328 = vsel %vm398, %v3854, 0
      %v4331 = vsel %vm398, %v3855, 0
      %v4334 = vsel %vm398, %v3856, 0
      %v4337 = vsel %vm398, %v3857, 0
      %v4340 = vsel %vm398, %v3858, 0
      %v4343 = vsel %vm398, %v3859, 0
      %v4346 = vsel %vm398, %v3860, 0
      %v4349 = vsel %vm398, %v3861, 0
      %v4352 = vsel %vm398, %v3862, 0
      %v4355 = vsel %vm398, %v3863, 0
      %v4358 = vsel %vm398, %v3864, 0
      %v4361 = vsel %vm398, %v3865, 0
      %v4364 = vsel %vm398, %v3866, 0
      %v4367 = vsel %vm398, %v3867, 0
      %v4370 = vsel %vm398, %v3868, 0
      %v4373 = vsel %vm763, %v3869, 0
      %4375 = vmatpush.msra.mxu0 0.0
      %4376 = vmatpush.msra.mxu0 0.0
      %4377 = vmatpush.msra.mxu0 0.0
      %4378 = vmatpush.msra.mxu0 0.0
      %4379 = vmatpush.msra.mxu0 0.0
      %4380 = vmatpush.msra.mxu0 0.0
      %4381 = vmatpush.msra.mxu0 0.0
      %4382 = vmatpush.msra.mxu0 0.0
      %4383 = vmatpush.msra.mxu0 0.0
      %4384 = vmatpush.msra.mxu0 0.0
      %4385 = vmatpush.msra.mxu0 0.0
      %4386 = vmatpush.msra.mxu0 0.0
      %4387 = vmatpush.msra.mxu0 0.0
      %4388 = vmatpush.msra.mxu0 0.0
      %4389 = vmatpush.msra.mxu0 0.0
      %4390 = vmatpush.msra.mxu0 %v4373
      %4391 = vmatmul.f32.gmra.mxu0 %v4229
      %v4392 = vpop.f32.mrf.mxu0
      %v4393 = vadd.f32 %v4085, %v4392
      %4394 = vmatmul.f32.gmra.mxu0 %v4232
      %v4395 = vpop.f32.mrf.mxu0
      %v4396 = vadd.f32 %v4088, %v4395
      %4397 = vmatmul.f32.gmra.mxu0 %v4235
      %v4398 = vpop.f32.mrf.mxu0
      %v4399 = vadd.f32 %v4091, %v4398
      %4400 = vmatmul.f32.gmra.mxu0 %v4238
      %v4401 = vpop.f32.mrf.mxu0
      %v4402 = vadd.f32 %v4094, %v4401
      %4403 = vmatmul.f32.gmra.mxu0 %v4241
      %v4404 = vpop.f32.mrf.mxu0
      %v4405 = vadd.f32 %v4097, %v4404
      %4406 = vmatmul.f32.gmra.mxu0 %v4244
      %v4407 = vpop.f32.mrf.mxu0
      %v4408 = vadd.f32 %v4100, %v4407
      %4409 = vmatmul.f32.gmra.mxu0 %v4247
      %v4410 = vpop.f32.mrf.mxu0
      %v4411 = vadd.f32 %v4103, %v4410
      %4412 = vmatmul.f32.gmra.mxu0 %v4250
      %v4413 = vpop.f32.mrf.mxu0
      %v4414 = vadd.f32 %v4106, %v4413
      %4415 = vmatmul.f32.gmra.mxu0 %v4253
      %v4416 = vpop.f32.mrf.mxu0
      %v4417 = vadd.f32 %v4109, %v4416
      %4418 = vmatmul.f32.gmra.mxu0 %v4256
      %v4419 = vpop.f32.mrf.mxu0
      %v4420 = vadd.f32 %v4112, %v4419
      %4421 = vmatmul.f32.gmra.mxu0 %v4259
      %v4422 = vpop.f32.mrf.mxu0
      %v4423 = vadd.f32 %v4115, %v4422
      %4424 = vmatmul.f32.gmra.mxu0 %v4262
      %v4425 = vpop.f32.mrf.mxu0
      %v4426 = vadd.f32 %v4118, %v4425
      %4427 = vmatmul.f32.gmra.mxu0 %v4265
      %v4428 = vpop.f32.mrf.mxu0
      %v4429 = vadd.f32 %v4121, %v4428
      %4430 = vmatmul.f32.gmra.mxu0 %v4268
      %v4431 = vpop.f32.mrf.mxu0
      %v4432 = vadd.f32 %v4124, %v4431
      %4433 = vmatmul.f32.gmra.mxu0 %v4271
      %v4434 = vpop.f32.mrf.mxu0
      %v4435 = vadd.f32 %v4127, %v4434
      %4436 = vmatmul.f32.gmra.mxu0 %v4274
      %v4437 = vpop.f32.mrf.mxu0
      %v4438 = vadd.f32 %v4130, %v4437
      %4439 = vmatmul.f32.gmra.mxu0 %v4277
      %v4440 = vpop.f32.mrf.mxu0
      %v4441 = vadd.f32 %v4133, %v4440
      %4442 = vmatmul.f32.gmra.mxu0 %v4280
      %v4443 = vpop.f32.mrf.mxu0
      %v4444 = vadd.f32 %v4136, %v4443
      %4445 = vmatmul.f32.gmra.mxu0 %v4283
      %v4446 = vpop.f32.mrf.mxu0
      %v4447 = vadd.f32 %v4139, %v4446
      %4448 = vmatmul.f32.gmra.mxu0 %v4286
      %v4449 = vpop.f32.mrf.mxu0
      %v4450 = vadd.f32 %v4142, %v4449
      %4451 = vmatmul.f32.gmra.mxu0 %v4289
      %v4452 = vpop.f32.mrf.mxu0
      %v4453 = vadd.f32 %v4145, %v4452
      %4454 = vmatmul.f32.gmra.mxu0 %v4292
      %v4455 = vpop.f32.mrf.mxu0
      %v4456 = vadd.f32 %v4148, %v4455
      %4457 = vmatmul.f32.gmra.mxu0 %v4295
      %v4458 = vpop.f32.mrf.mxu0
      %v4459 = vadd.f32 %v4151, %v4458
      %4460 = vmatmul.f32.gmra.mxu0 %v4298
      %v4461 = vpop.f32.mrf.mxu0
      %v4462 = vadd.f32 %v4154, %v4461
      %4463 = vmatmul.f32.gmra.mxu0 %v4301
      %v4464 = vpop.f32.mrf.mxu0
      %v4465 = vadd.f32 %v4157, %v4464
      %4466 = vmatmul.f32.gmra.mxu0 %v4304
      %v4467 = vpop.f32.mrf.mxu0
      %v4468 = vadd.f32 %v4160, %v4467
      %4469 = vmatmul.f32.gmra.mxu0 %v4307
      %v4470 = vpop.f32.mrf.mxu0
      %v4471 = vadd.f32 %v4163, %v4470
      %4472 = vmatmul.f32.gmra.mxu0 %v4310
      %v4473 = vpop.f32.mrf.mxu0
      %v4474 = vadd.f32 %v4166, %v4473
      %4475 = vmatmul.f32.gmra.mxu0 %v4313
      %v4476 = vpop.f32.mrf.mxu0
      %v4477 = vadd.f32 %v4169, %v4476
      %4478 = vmatmul.f32.gmra.mxu0 %v4316
      %v4479 = vpop.f32.mrf.mxu0
      %v4480 = vadd.f32 %v4172, %v4479
      %4481 = vmatmul.f32.gmra.mxu0 %v4319
      %v4482 = vpop.f32.mrf.mxu0
      %v4483 = vadd.f32 %v4175, %v4482
      %4484 = vmatmul.f32.gmra.mxu0 %v4322
      %v4485 = vpop.f32.mrf.mxu0
      %v4486 = vadd.f32 %v4178, %v4485
      %4487 = vmatmul.f32.gmra.mxu0 %v4325
      %v4488 = vpop.f32.mrf.mxu0
      %v4489 = vadd.f32 %v4181, %v4488
      %4490 = vmatmul.f32.gmra.mxu0 %v4328
      %v4491 = vpop.f32.mrf.mxu0
      %v4492 = vadd.f32 %v4184, %v4491
      %4493 = vmatmul.f32.gmra.mxu0 %v4331
      %v4494 = vpop.f32.mrf.mxu0
      %v4495 = vadd.f32 %v4187, %v4494
      %4496 = vmatmul.f32.gmra.mxu0 %v4334
      %v4497 = vpop.f32.mrf.mxu0
      %v4498 = vadd.f32 %v4190, %v4497
      %4499 = vmatmul.f32.gmra.mxu0 %v4337
      %v4500 = vpop.f32.mrf.mxu0
      %v4501 = vadd.f32 %v4193, %v4500
      %4502 = vmatmul.f32.gmra.mxu0 %v4340
      %v4503 = vpop.f32.mrf.mxu0
      %v4504 = vadd.f32 %v4196, %v4503
      %4505 = vmatmul.f32.gmra.mxu0 %v4343
      %v4506 = vpop.f32.mrf.mxu0
      %v4507 = vadd.f32 %v4199, %v4506
      %4508 = vmatmul.f32.gmra.mxu0 %v4346
      %v4509 = vpop.f32.mrf.mxu0
      %v4510 = vadd.f32 %v4202, %v4509
      %4511 = vmatmul.f32.gmra.mxu0 %v4349
      %v4512 = vpop.f32.mrf.mxu0
      %v4513 = vadd.f32 %v4205, %v4512
      %4514 = vmatmul.f32.gmra.mxu0 %v4352
      %v4515 = vpop.f32.mrf.mxu0
      %v4516 = vadd.f32 %v4208, %v4515
      %4517 = vmatmul.f32.gmra.mxu0 %v4355
      %v4518 = vpop.f32.mrf.mxu0
      %v4519 = vadd.f32 %v4211, %v4518
      %4520 = vmatmul.f32.gmra.mxu0 %v4358
      %v4521 = vpop.f32.mrf.mxu0
      %v4522 = vadd.f32 %v4214, %v4521
      %4523 = vmatmul.f32.gmra.mxu0 %v4361
      %v4524 = vpop.f32.mrf.mxu0
      %v4525 = vadd.f32 %v4217, %v4524
      %4526 = vmatmul.f32.gmra.mxu0 %v4364
      %v4527 = vpop.f32.mrf.mxu0
      %v4528 = vadd.f32 %v4220, %v4527
      %4529 = vmatmul.f32.gmra.mxu0 %v4367
      %v4530 = vpop.f32.mrf.mxu0
      %v4531 = vadd.f32 %v4223, %v4530
      %4532 = vmatmul.f32.gmra.mxu0 %v4370
      %v4533 = vpop.f32.mrf.mxu0
      %v4534 = vadd.f32 %v4226, %v4533
      %4535 = vdwg.mxu0
      %v4536 = vld [vmem:[%s431] sm:$0xff]
      %v4537 = vld [vmem:[%s431 + $0x8] sm:$0xff]
      %v4538 = vld [vmem:[%s431 + $0x10] sm:$0xff]
      %v4539 = vld [vmem:[%s431 + $0x18] sm:$0xff]
      %v4540 = vld [vmem:[%s431 + $0x20] sm:$0xff]
      %v4541 = vld [vmem:[%s431 + $0x28] sm:$0xff]
      %v4542 = vld [vmem:[%s431 + $0x30] sm:$0xff]
      %v4543 = vld [vmem:[%s431 + $0x38] sm:$0xff]
      %v4544 = vld [vmem:[%s431 + $0x40] sm:$0xff]
      %v4545 = vld [vmem:[%s431 + $0x48] sm:$0xff]
      %v4546 = vld [vmem:[%s431 + $0x50] sm:$0xff]
      %v4547 = vld [vmem:[%s431 + $0x58] sm:$0xff]
      %v4548 = vld [vmem:[%s431 + $0x60] sm:$0xff]
      %v4549 = vld [vmem:[%s431 + $0x68] sm:$0xff]
      %v4550 = vld [vmem:[%s431 + $0x70] sm:$0xff]
      %v4551 = vld [vmem:[%s431 + $0x78] sm:$0xff]
      %v4552 = vld [vmem:[%s431 + $0x80] sm:$0xff]
      %v4553 = vld [vmem:[%s431 + $0x88] sm:$0xff]
      %v4554 = vld [vmem:[%s431 + $0x90] sm:$0xff]
      %v4555 = vld [vmem:[%s431 + $0x98] sm:$0xff]
      %v4556 = vld [vmem:[%s431 + $0xa0] sm:$0xff]
      %v4557 = vld [vmem:[%s431 + $0xa8] sm:$0xff]
      %v4558 = vld [vmem:[%s431 + $0xb0] sm:$0xff]
      %v4559 = vld [vmem:[%s431 + $0xb8] sm:$0xff]
      %v4560 = vld [vmem:[%s431 + $0xc0] sm:$0xff]
      %v4561 = vld [vmem:[%s431 + $0xc8] sm:$0xff]
      %v4562 = vld [vmem:[%s431 + $0xd0] sm:$0xff]
      %v4563 = vld [vmem:[%s431 + $0xd8] sm:$0xff]
      %v4564 = vld [vmem:[%s431 + $0xe0] sm:$0xff]
      %v4565 = vld [vmem:[%s431 + $0xe8] sm:$0xff]
      %v4566 = vld [vmem:[%s431 + $0xf0] sm:$0xff]
      %v4567 = vld [vmem:[%s431 + $0xf8] sm:$0xff]
      %v4568 = vld [vmem:[%s431 + $0x100] sm:$0xff]
      %v4569 = vld [vmem:[%s431 + $0x108] sm:$0xff]
      %v4570 = vld [vmem:[%s431 + $0x110] sm:$0xff]
      %v4571 = vld [vmem:[%s431 + $0x118] sm:$0xff]
      %v4572 = vld [vmem:[%s431 + $0x120] sm:$0xff]
      %v4573 = vld [vmem:[%s431 + $0x128] sm:$0xff]
      %v4574 = vld [vmem:[%s431 + $0x130] sm:$0xff]
      %v4575 = vld [vmem:[%s431 + $0x138] sm:$0xff]
      %v4576 = vld [vmem:[%s431 + $0x140] sm:$0xff]
      %v4577 = vld [vmem:[%s431 + $0x148] sm:$0xff]
      %v4578 = vld [vmem:[%s431 + $0x150] sm:$0xff]
      %v4579 = vld [vmem:[%s431 + $0x158] sm:$0xff]
      %v4580 = vld [vmem:[%s431 + $0x160] sm:$0xff]
      %v4581 = vld [vmem:[%s431 + $0x168] sm:$0xff]
      %v4582 = vld [vmem:[%s431 + $0x170] sm:$0xff]
      %v4583 = vld [vmem:[%s431 + $0x178] sm:$0xff]
      %s4584 = scalar_lea.vmem %s5, 24
      %v4585 = vld [vmem:[%s4584] sm:$0xf]
      %v4587 = vsel %vm398, %v4536, 0
      %v4590 = vsel %vm398, %v4537, 0
      %v4593 = vsel %vm398, %v4538, 0
      %v4596 = vsel %vm398, %v4539, 0
      %v4599 = vsel %vm398, %v4540, 0
      %v4602 = vsel %vm398, %v4541, 0
      %v4605 = vsel %vm398, %v4542, 0
      %v4608 = vsel %vm398, %v4543, 0
      %v4611 = vsel %vm398, %v4544, 0
      %v4614 = vsel %vm398, %v4545, 0
      %v4617 = vsel %vm398, %v4546, 0
      %v4620 = vsel %vm398, %v4547, 0
      %v4623 = vsel %vm398, %v4548, 0
      %v4626 = vsel %vm398, %v4549, 0
      %v4629 = vsel %vm398, %v4550, 0
      %v4632 = vsel %vm398, %v4551, 0
      %v4635 = vsel %vm398, %v4552, 0
      %v4638 = vsel %vm398, %v4553, 0
      %v4641 = vsel %vm398, %v4554, 0
      %v4644 = vsel %vm398, %v4555, 0
      %v4647 = vsel %vm398, %v4556, 0
      %v4650 = vsel %vm398, %v4557, 0
      %v4653 = vsel %vm398, %v4558, 0
      %v4656 = vsel %vm398, %v4559, 0
      %v4659 = vsel %vm398, %v4560, 0
      %v4662 = vsel %vm398, %v4561, 0
      %v4665 = vsel %vm398, %v4562, 0
      %v4668 = vsel %vm398, %v4563, 0
      %v4671 = vsel %vm398, %v4564, 0
      %v4674 = vsel %vm398, %v4565, 0
      %v4677 = vsel %vm398, %v4566, 0
      %v4680 = vsel %vm398, %v4567, 0
      %v4683 = vsel %vm398, %v4568, 0
      %v4686 = vsel %vm398, %v4569, 0
      %v4689 = vsel %vm398, %v4570, 0
      %v4692 = vsel %vm398, %v4571, 0
      %v4695 = vsel %vm398, %v4572, 0
      %v4698 = vsel %vm398, %v4573, 0
      %v4701 = vsel %vm398, %v4574, 0
      %v4704 = vsel %vm398, %v4575, 0
      %v4707 = vsel %vm398, %v4576, 0
      %v4710 = vsel %vm398, %v4577, 0
      %v4713 = vsel %vm398, %v4578, 0
      %v4716 = vsel %vm398, %v4579, 0
      %v4719 = vsel %vm398, %v4580, 0
      %v4722 = vsel %vm398, %v4581, 0
      %v4725 = vsel %vm398, %v4582, 0
      %v4728 = vsel %vm398, %v4583, 0
      %v4731 = vsel %vm763, %v4585, 0
      %4733 = vmatpush.msra.mxu0 0.0
      %4734 = vmatpush.msra.mxu0 0.0
      %4735 = vmatpush.msra.mxu0 0.0
      %4736 = vmatpush.msra.mxu0 0.0
      %4737 = vmatpush.msra.mxu0 0.0
      %4738 = vmatpush.msra.mxu0 0.0
      %4739 = vmatpush.msra.mxu0 0.0
      %4740 = vmatpush.msra.mxu0 0.0
      %4741 = vmatpush.msra.mxu0 0.0
      %4742 = vmatpush.msra.mxu0 0.0
      %4743 = vmatpush.msra.mxu0 0.0
      %4744 = vmatpush.msra.mxu0 0.0
      %4745 = vmatpush.msra.mxu0 0.0
      %4746 = vmatpush.msra.mxu0 0.0
      %4747 = vmatpush.msra.mxu0 0.0
      %4748 = vmatpush.msra.mxu0 %v4731
      %4749 = vmatmul.f32.gmra.mxu0 %v4587
      %v4750 = vpop.f32.mrf.mxu0
      %v4751 = vadd.f32 0.0, %v4750
      %4752 = vmatmul.f32.gmra.mxu0 %v4590
      %v4753 = vpop.f32.mrf.mxu0
      %v4754 = vadd.f32 0.0, %v4753
      %4755 = vmatmul.f32.gmra.mxu0 %v4593
      %v4756 = vpop.f32.mrf.mxu0
      %v4757 = vadd.f32 0.0, %v4756
      %4758 = vmatmul.f32.gmra.mxu0 %v4596
      %v4759 = vpop.f32.mrf.mxu0
      %v4760 = vadd.f32 0.0, %v4759
      %4761 = vmatmul.f32.gmra.mxu0 %v4599
      %v4762 = vpop.f32.mrf.mxu0
      %v4763 = vadd.f32 0.0, %v4762
      %4764 = vmatmul.f32.gmra.mxu0 %v4602
      %v4765 = vpop.f32.mrf.mxu0
      %v4766 = vadd.f32 0.0, %v4765
      %4767 = vmatmul.f32.gmra.mxu0 %v4605
      %v4768 = vpop.f32.mrf.mxu0
      %v4769 = vadd.f32 0.0, %v4768
      %4770 = vmatmul.f32.gmra.mxu0 %v4608
      %v4771 = vpop.f32.mrf.mxu0
      %v4772 = vadd.f32 0.0, %v4771
      %4773 = vmatmul.f32.gmra.mxu0 %v4611
      %v4774 = vpop.f32.mrf.mxu0
      %v4775 = vadd.f32 0.0, %v4774
      %4776 = vmatmul.f32.gmra.mxu0 %v4614
      %v4777 = vpop.f32.mrf.mxu0
      %v4778 = vadd.f32 0.0, %v4777
      %4779 = vmatmul.f32.gmra.mxu0 %v4617
      %v4780 = vpop.f32.mrf.mxu0
      %v4781 = vadd.f32 0.0, %v4780
      %4782 = vmatmul.f32.gmra.mxu0 %v4620
      %v4783 = vpop.f32.mrf.mxu0
      %v4784 = vadd.f32 0.0, %v4783
      %4785 = vmatmul.f32.gmra.mxu0 %v4623
      %v4786 = vpop.f32.mrf.mxu0
      %v4787 = vadd.f32 0.0, %v4786
      %4788 = vmatmul.f32.gmra.mxu0 %v4626
      %v4789 = vpop.f32.mrf.mxu0
      %v4790 = vadd.f32 0.0, %v4789
      %4791 = vmatmul.f32.gmra.mxu0 %v4629
      %v4792 = vpop.f32.mrf.mxu0
      %v4793 = vadd.f32 0.0, %v4792
      %4794 = vmatmul.f32.gmra.mxu0 %v4632
      %v4795 = vpop.f32.mrf.mxu0
      %v4796 = vadd.f32 0.0, %v4795
      %4797 = vmatmul.f32.gmra.mxu0 %v4635
      %v4798 = vpop.f32.mrf.mxu0
      %v4799 = vadd.f32 0.0, %v4798
      %4800 = vmatmul.f32.gmra.mxu0 %v4638
      %v4801 = vpop.f32.mrf.mxu0
      %v4802 = vadd.f32 0.0, %v4801
      %4803 = vmatmul.f32.gmra.mxu0 %v4641
      %v4804 = vpop.f32.mrf.mxu0
      %v4805 = vadd.f32 0.0, %v4804
      %4806 = vmatmul.f32.gmra.mxu0 %v4644
      %v4807 = vpop.f32.mrf.mxu0
      %v4808 = vadd.f32 0.0, %v4807
      %4809 = vmatmul.f32.gmra.mxu0 %v4647
      %v4810 = vpop.f32.mrf.mxu0
      %v4811 = vadd.f32 0.0, %v4810
      %4812 = vmatmul.f32.gmra.mxu0 %v4650
      %v4813 = vpop.f32.mrf.mxu0
      %v4814 = vadd.f32 0.0, %v4813
      %4815 = vmatmul.f32.gmra.mxu0 %v4653
      %v4816 = vpop.f32.mrf.mxu0
      %v4817 = vadd.f32 0.0, %v4816
      %4818 = vmatmul.f32.gmra.mxu0 %v4656
      %v4819 = vpop.f32.mrf.mxu0
      %v4820 = vadd.f32 0.0, %v4819
      %4821 = vmatmul.f32.gmra.mxu0 %v4659
      %v4822 = vpop.f32.mrf.mxu0
      %v4823 = vadd.f32 0.0, %v4822
      %4824 = vmatmul.f32.gmra.mxu0 %v4662
      %v4825 = vpop.f32.mrf.mxu0
      %v4826 = vadd.f32 0.0, %v4825
      %4827 = vmatmul.f32.gmra.mxu0 %v4665
      %v4828 = vpop.f32.mrf.mxu0
      %v4829 = vadd.f32 0.0, %v4828
      %4830 = vmatmul.f32.gmra.mxu0 %v4668
      %v4831 = vpop.f32.mrf.mxu0
      %v4832 = vadd.f32 0.0, %v4831
      %4833 = vmatmul.f32.gmra.mxu0 %v4671
      %v4834 = vpop.f32.mrf.mxu0
      %v4835 = vadd.f32 0.0, %v4834
      %4836 = vmatmul.f32.gmra.mxu0 %v4674
      %v4837 = vpop.f32.mrf.mxu0
      %v4838 = vadd.f32 0.0, %v4837
      %4839 = vmatmul.f32.gmra.mxu0 %v4677
      %v4840 = vpop.f32.mrf.mxu0
      %v4841 = vadd.f32 0.0, %v4840
      %4842 = vmatmul.f32.gmra.mxu0 %v4680
      %v4843 = vpop.f32.mrf.mxu0
      %v4844 = vadd.f32 0.0, %v4843
      %4845 = vmatmul.f32.gmra.mxu0 %v4683
      %v4846 = vpop.f32.mrf.mxu0
      %v4847 = vadd.f32 0.0, %v4846
      %4848 = vmatmul.f32.gmra.mxu0 %v4686
      %v4849 = vpop.f32.mrf.mxu0
      %v4850 = vadd.f32 0.0, %v4849
      %4851 = vmatmul.f32.gmra.mxu0 %v4689
      %v4852 = vpop.f32.mrf.mxu0
      %v4853 = vadd.f32 0.0, %v4852
      %4854 = vmatmul.f32.gmra.mxu0 %v4692
      %v4855 = vpop.f32.mrf.mxu0
      %v4856 = vadd.f32 0.0, %v4855
      %4857 = vmatmul.f32.gmra.mxu0 %v4695
      %v4858 = vpop.f32.mrf.mxu0
      %v4859 = vadd.f32 0.0, %v4858
      %4860 = vmatmul.f32.gmra.mxu0 %v4698
      %v4861 = vpop.f32.mrf.mxu0
      %v4862 = vadd.f32 0.0, %v4861
      %4863 = vmatmul.f32.gmra.mxu0 %v4701
      %v4864 = vpop.f32.mrf.mxu0
      %v4865 = vadd.f32 0.0, %v4864
      %4866 = vmatmul.f32.gmra.mxu0 %v4704
      %v4867 = vpop.f32.mrf.mxu0
      %v4868 = vadd.f32 0.0, %v4867
      %4869 = vmatmul.f32.gmra.mxu0 %v4707
      %v4870 = vpop.f32.mrf.mxu0
      %v4871 = vadd.f32 0.0, %v4870
      %4872 = vmatmul.f32.gmra.mxu0 %v4710
      %v4873 = vpop.f32.mrf.mxu0
      %v4874 = vadd.f32 0.0, %v4873
      %4875 = vmatmul.f32.gmra.mxu0 %v4713
      %v4876 = vpop.f32.mrf.mxu0
      %v4877 = vadd.f32 0.0, %v4876
      %4878 = vmatmul.f32.gmra.mxu0 %v4716
      %v4879 = vpop.f32.mrf.mxu0
      %v4880 = vadd.f32 0.0, %v4879
      %4881 = vmatmul.f32.gmra.mxu0 %v4719
      %v4882 = vpop.f32.mrf.mxu0
      %v4883 = vadd.f32 0.0, %v4882
      %4884 = vmatmul.f32.gmra.mxu0 %v4722
      %v4885 = vpop.f32.mrf.mxu0
      %v4886 = vadd.f32 0.0, %v4885
      %4887 = vmatmul.f32.gmra.mxu0 %v4725
      %v4888 = vpop.f32.mrf.mxu0
      %v4889 = vadd.f32 0.0, %v4888
      %4890 = vmatmul.f32.gmra.mxu0 %v4728
      %v4891 = vpop.f32.mrf.mxu0
      %v4892 = vadd.f32 0.0, %v4891
      %4893 = vdwg.mxu0
      %v4894 = vadd.f32 %v4393, %v4751
      %v4895 = vadd.f32 %v4396, %v4754
      %v4896 = vadd.f32 %v4399, %v4757
      %v4897 = vadd.f32 %v4402, %v4760
      %v4898 = vadd.f32 %v4405, %v4763
      %v4899 = vadd.f32 %v4408, %v4766
      %v4900 = vadd.f32 %v4411, %v4769
      %v4901 = vadd.f32 %v4414, %v4772
      %v4902 = vadd.f32 %v4417, %v4775
      %v4903 = vadd.f32 %v4420, %v4778
      %v4904 = vadd.f32 %v4423, %v4781
      %v4905 = vadd.f32 %v4426, %v4784
      %v4906 = vadd.f32 %v4429, %v4787
      %v4907 = vadd.f32 %v4432, %v4790
      %v4908 = vadd.f32 %v4435, %v4793
      %v4909 = vadd.f32 %v4438, %v4796
      %v4910 = vadd.f32 %v4441, %v4799
      %v4911 = vadd.f32 %v4444, %v4802
      %v4912 = vadd.f32 %v4447, %v4805
      %v4913 = vadd.f32 %v4450, %v4808
      %v4914 = vadd.f32 %v4453, %v4811
      %v4915 = vadd.f32 %v4456, %v4814
      %v4916 = vadd.f32 %v4459, %v4817
      %v4917 = vadd.f32 %v4462, %v4820
      %v4918 = vadd.f32 %v4465, %v4823
      %v4919 = vadd.f32 %v4468, %v4826
      %v4920 = vadd.f32 %v4471, %v4829
      %v4921 = vadd.f32 %v4474, %v4832
      %v4922 = vadd.f32 %v4477, %v4835
      %v4923 = vadd.f32 %v4480, %v4838
      %v4924 = vadd.f32 %v4483, %v4841
      %v4925 = vadd.f32 %v4486, %v4844
      %v4926 = vadd.f32 %v4489, %v4847
      %v4927 = vadd.f32 %v4492, %v4850
      %v4928 = vadd.f32 %v4495, %v4853
      %v4929 = vadd.f32 %v4498, %v4856
      %v4930 = vadd.f32 %v4501, %v4859
      %v4931 = vadd.f32 %v4504, %v4862
      %v4932 = vadd.f32 %v4507, %v4865
      %v4933 = vadd.f32 %v4510, %v4868
      %v4934 = vadd.f32 %v4513, %v4871
      %v4935 = vadd.f32 %v4516, %v4874
      %v4936 = vadd.f32 %v4519, %v4877
      %v4937 = vadd.f32 %v4522, %v4880
      %v4938 = vadd.f32 %v4525, %v4883
      %v4939 = vadd.f32 %v4528, %v4886
      %v4940 = vadd.f32 %v4531, %v4889
      %v4941 = vadd.f32 %v4534, %v4892
      %v4942 = vrot.slane %v4894, 7
      %v4943 = vrot.slane %v4895, 7
      %v4944 = vrot.slane %v4896, 7
      %v4945 = vrot.slane %v4897, 7
      %v4946 = vrot.slane %v4898, 7
      %v4947 = vrot.slane %v4899, 7
      %v4948 = vrot.slane %v4900, 7
      %v4949 = vrot.slane %v4901, 7
      %v4950 = vrot.slane %v4902, 7
      %v4951 = vrot.slane %v4903, 7
      %v4952 = vrot.slane %v4904, 7
      %v4953 = vrot.slane %v4905, 7
      %v4954 = vrot.slane %v4906, 7
      %v4955 = vrot.slane %v4907, 7
      %v4956 = vrot.slane %v4908, 7
      %v4957 = vrot.slane %v4909, 7
      %v4958 = vrot.slane %v4910, 7
      %v4959 = vrot.slane %v4911, 7
      %v4960 = vrot.slane %v4912, 7
      %v4961 = vrot.slane %v4913, 7
      %v4962 = vrot.slane %v4914, 7
      %v4963 = vrot.slane %v4915, 7
      %v4964 = vrot.slane %v4916, 7
      %v4965 = vrot.slane %v4917, 7
      %v4966 = vrot.slane %v4918, 7
      %v4967 = vrot.slane %v4919, 7
      %v4968 = vrot.slane %v4920, 7
      %v4969 = vrot.slane %v4921, 7
      %v4970 = vrot.slane %v4922, 7
      %v4971 = vrot.slane %v4923, 7
      %v4972 = vrot.slane %v4924, 7
      %v4973 = vrot.slane %v4925, 7
      %v4974 = vrot.slane %v4926, 7
      %v4975 = vrot.slane %v4927, 7
      %v4976 = vrot.slane %v4928, 7
      %v4977 = vrot.slane %v4929, 7
      %v4978 = vrot.slane %v4930, 7
      %v4979 = vrot.slane %v4931, 7
      %v4980 = vrot.slane %v4932, 7
      %v4981 = vrot.slane %v4933, 7
      %v4982 = vrot.slane %v4934, 7
      %v4983 = vrot.slane %v4935, 7
      %v4984 = vrot.slane %v4936, 7
      %v4985 = vrot.slane %v4937, 7
      %v4986 = vrot.slane %v4938, 7
      %v4987 = vrot.slane %v4939, 7
      %v4988 = vrot.slane %v4940, 7
      %v4989 = vrot.slane %v4941, 7
      %v4990 = vsel %vm1690, %v4988, %v4989
      %v4991 = vsel %vm1690, %v4987, %v4988
      %v4992 = vsel %vm1690, %v4986, %v4987
      %v4993 = vsel %vm1690, %v4985, %v4986
      %v4994 = vsel %vm1690, %v4984, %v4985
      %v4995 = vsel %vm1690, %v4983, %v4984
      %v4996 = vsel %vm1690, %v4982, %v4983
      %v4997 = vsel %vm1690, %v4981, %v4982
      %v4998 = vsel %vm1690, %v4980, %v4981
      %v4999 = vsel %vm1690, %v4979, %v4980
      %v5000 = vsel %vm1690, %v4978, %v4979
      %v5001 = vsel %vm1690, %v4977, %v4978
      %v5002 = vsel %vm1690, %v4976, %v4977
      %v5003 = vsel %vm1690, %v4975, %v4976
      %v5004 = vsel %vm1690, %v4974, %v4975
      %v5005 = vsel %vm1690, %v4973, %v4974
      %v5006 = vsel %vm1690, %v4972, %v4973
      %v5007 = vsel %vm1690, %v4971, %v4972
      %v5008 = vsel %vm1690, %v4970, %v4971
      %v5009 = vsel %vm1690, %v4969, %v4970
      %v5010 = vsel %vm1690, %v4968, %v4969
      %v5011 = vsel %vm1690, %v4967, %v4968
      %v5012 = vsel %vm1690, %v4966, %v4967
      %v5013 = vsel %vm1690, %v4965, %v4966
      %v5014 = vsel %vm1690, %v4964, %v4965
      %v5015 = vsel %vm1690, %v4963, %v4964
      %v5016 = vsel %vm1690, %v4962, %v4963
      %v5017 = vsel %vm1690, %v4961, %v4962
      %v5018 = vsel %vm1690, %v4960, %v4961
      %v5019 = vsel %vm1690, %v4959, %v4960
      %v5020 = vsel %vm1690, %v4958, %v4959
      %v5021 = vsel %vm1690, %v4957, %v4958
      %v5022 = vsel %vm1690, %v4956, %v4957
      %v5023 = vsel %vm1690, %v4955, %v4956
      %v5024 = vsel %vm1690, %v4954, %v4955
      %v5025 = vsel %vm1690, %v4953, %v4954
      %v5026 = vsel %vm1690, %v4952, %v4953
      %v5027 = vsel %vm1690, %v4951, %v4952
      %v5028 = vsel %vm1690, %v4950, %v4951
      %v5029 = vsel %vm1690, %v4949, %v4950
      %v5030 = vsel %vm1690, %v4948, %v4949
      %v5031 = vsel %vm1690, %v4947, %v4948
      %v5032 = vsel %vm1690, %v4946, %v4947
      %v5033 = vsel %vm1690, %v4945, %v4946
      %v5034 = vsel %vm1690, %v4944, %v4945
      %v5035 = vsel %vm1690, %v4943, %v4944
      %v5036 = vsel %vm1690, %v4942, %v4943
      %v5037 = vsel %vm1690, %v4989, %v4942
      %v5039 = vperm.slane %v3820, 0
      %v5041 = vadd.f32 %v5037, %v5039
      %v5042 = vadd.f32 %v5036, %v5039
      %v5043 = vadd.f32 %v5035, %v5039
      %v5044 = vadd.f32 %v5034, %v5039
      %v5045 = vadd.f32 %v5033, %v5039
      %v5046 = vadd.f32 %v5032, %v5039
      %v5047 = vadd.f32 %v5031, %v5039
      %v5048 = vadd.f32 %v5030, %v5039
      %v5049 = vadd.f32 %v5029, %v5039
      %v5050 = vadd.f32 %v5028, %v5039
      %v5051 = vadd.f32 %v5027, %v5039
      %v5052 = vadd.f32 %v5026, %v5039
      %v5053 = vadd.f32 %v5025, %v5039
      %v5054 = vadd.f32 %v5024, %v5039
      %v5055 = vadd.f32 %v5023, %v5039
      %v5056 = vadd.f32 %v5022, %v5039
      %v5057 = vadd.f32 %v5021, %v5039
      %v5058 = vadd.f32 %v5020, %v5039
      %v5059 = vadd.f32 %v5019, %v5039
      %v5060 = vadd.f32 %v5018, %v5039
      %v5061 = vadd.f32 %v5017, %v5039
      %v5062 = vadd.f32 %v5016, %v5039
      %v5063 = vadd.f32 %v5015, %v5039
      %v5064 = vadd.f32 %v5014, %v5039
      %v5065 = vadd.f32 %v5013, %v5039
      %v5066 = vadd.f32 %v5012, %v5039
      %v5067 = vadd.f32 %v5011, %v5039
      %v5068 = vadd.f32 %v5010, %v5039
      %v5069 = vadd.f32 %v5009, %v5039
      %v5070 = vadd.f32 %v5008, %v5039
      %v5071 = vadd.f32 %v5007, %v5039
      %v5072 = vadd.f32 %v5006, %v5039
      %v5073 = vadd.f32 %v5005, %v5039
      %v5074 = vadd.f32 %v5004, %v5039
      %v5075 = vadd.f32 %v5003, %v5039
      %v5076 = vadd.f32 %v5002, %v5039
      %v5077 = vadd.f32 %v5001, %v5039
      %v5078 = vadd.f32 %v5000, %v5039
      %v5079 = vadd.f32 %v4999, %v5039
      %v5080 = vadd.f32 %v4998, %v5039
      %v5081 = vadd.f32 %v4997, %v5039
      %v5082 = vadd.f32 %v4996, %v5039
      %v5083 = vadd.f32 %v4995, %v5039
      %v5084 = vadd.f32 %v4994, %v5039
      %v5085 = vadd.f32 %v4993, %v5039
      %v5086 = vadd.f32 %v4992, %v5039
      %v5087 = vadd.f32 %v4991, %v5039
      %v5088 = vadd.f32 %v4990, %v5039
      %s5089 = scalar_lea.vmem %s5, 4
      %v5090 = vld [vmem:[%s5089] sm:$0xf]
      %s5091 = scalar_lea.vmem %s5, 16
      %v5092 = vld [vmem:[%s5091] sm:$0xf]
      %v5094 = vsel %vm763, %v5092, 0
      %5096 = vmatpush.msra.mxu0 0.0
      %5097 = vmatpush.msra.mxu0 0.0
      %5098 = vmatpush.msra.mxu0 0.0
      %5099 = vmatpush.msra.mxu0 0.0
      %5100 = vmatpush.msra.mxu0 0.0
      %5101 = vmatpush.msra.mxu0 0.0
      %5102 = vmatpush.msra.mxu0 0.0
      %5103 = vmatpush.msra.mxu0 0.0
      %5104 = vmatpush.msra.mxu0 0.0
      %5105 = vmatpush.msra.mxu0 0.0
      %5106 = vmatpush.msra.mxu0 0.0
      %5107 = vmatpush.msra.mxu0 0.0
      %5108 = vmatpush.msra.mxu0 0.0
      %5109 = vmatpush.msra.mxu0 0.0
      %5110 = vmatpush.msra.mxu0 0.0
      %5111 = vmatpush.msra.mxu0 %v5094
      %5112 = vmatmul.f32.gmra.mxu0 %v3921
      %v5113 = vpop.f32.mrf.mxu0
      %v5114 = vadd.f32 0.0, %v5113
      %5115 = vmatmul.f32.gmra.mxu0 %v3924
      %v5116 = vpop.f32.mrf.mxu0
      %v5117 = vadd.f32 0.0, %v5116
      %5118 = vmatmul.f32.gmra.mxu0 %v3927
      %v5119 = vpop.f32.mrf.mxu0
      %v5120 = vadd.f32 0.0, %v5119
      %5121 = vmatmul.f32.gmra.mxu0 %v3930
      %v5122 = vpop.f32.mrf.mxu0
      %v5123 = vadd.f32 0.0, %v5122
      %5124 = vmatmul.f32.gmra.mxu0 %v3933
      %v5125 = vpop.f32.mrf.mxu0
      %v5126 = vadd.f32 0.0, %v5125
      %5127 = vmatmul.f32.gmra.mxu0 %v3936
      %v5128 = vpop.f32.mrf.mxu0
      %v5129 = vadd.f32 0.0, %v5128
      %5130 = vmatmul.f32.gmra.mxu0 %v3939
      %v5131 = vpop.f32.mrf.mxu0
      %v5132 = vadd.f32 0.0, %v5131
      %5133 = vmatmul.f32.gmra.mxu0 %v3942
      %v5134 = vpop.f32.mrf.mxu0
      %v5135 = vadd.f32 0.0, %v5134
      %5136 = vmatmul.f32.gmra.mxu0 %v3945
      %v5137 = vpop.f32.mrf.mxu0
      %v5138 = vadd.f32 0.0, %v5137
      %5139 = vmatmul.f32.gmra.mxu0 %v3948
      %v5140 = vpop.f32.mrf.mxu0
      %v5141 = vadd.f32 0.0, %v5140
      %5142 = vmatmul.f32.gmra.mxu0 %v3951
      %v5143 = vpop.f32.mrf.mxu0
      %v5144 = vadd.f32 0.0, %v5143
      %5145 = vmatmul.f32.gmra.mxu0 %v3954
      %v5146 = vpop.f32.mrf.mxu0
      %v5147 = vadd.f32 0.0, %v5146
      %5148 = vmatmul.f32.gmra.mxu0 %v3957
      %v5149 = vpop.f32.mrf.mxu0
      %v5150 = vadd.f32 0.0, %v5149
      %5151 = vmatmul.f32.gmra.mxu0 %v3960
      %v5152 = vpop.f32.mrf.mxu0
      %v5153 = vadd.f32 0.0, %v5152
      %5154 = vmatmul.f32.gmra.mxu0 %v3963
      %v5155 = vpop.f32.mrf.mxu0
      %v5156 = vadd.f32 0.0, %v5155
      %5157 = vmatmul.f32.gmra.mxu0 %v3966
      %v5158 = vpop.f32.mrf.mxu0
      %v5159 = vadd.f32 0.0, %v5158
      %5160 = vmatmul.f32.gmra.mxu0 %v3969
      %v5161 = vpop.f32.mrf.mxu0
      %v5162 = vadd.f32 0.0, %v5161
      %5163 = vmatmul.f32.gmra.mxu0 %v3972
      %v5164 = vpop.f32.mrf.mxu0
      %v5165 = vadd.f32 0.0, %v5164
      %5166 = vmatmul.f32.gmra.mxu0 %v3975
      %v5167 = vpop.f32.mrf.mxu0
      %v5168 = vadd.f32 0.0, %v5167
      %5169 = vmatmul.f32.gmra.mxu0 %v3978
      %v5170 = vpop.f32.mrf.mxu0
      %v5171 = vadd.f32 0.0, %v5170
      %5172 = vmatmul.f32.gmra.mxu0 %v3981
      %v5173 = vpop.f32.mrf.mxu0
      %v5174 = vadd.f32 0.0, %v5173
      %5175 = vmatmul.f32.gmra.mxu0 %v3984
      %v5176 = vpop.f32.mrf.mxu0
      %v5177 = vadd.f32 0.0, %v5176
      %5178 = vmatmul.f32.gmra.mxu0 %v3987
      %v5179 = vpop.f32.mrf.mxu0
      %v5180 = vadd.f32 0.0, %v5179
      %5181 = vmatmul.f32.gmra.mxu0 %v3990
      %v5182 = vpop.f32.mrf.mxu0
      %v5183 = vadd.f32 0.0, %v5182
      %5184 = vmatmul.f32.gmra.mxu0 %v3993
      %v5185 = vpop.f32.mrf.mxu0
      %v5186 = vadd.f32 0.0, %v5185
      %5187 = vmatmul.f32.gmra.mxu0 %v3996
      %v5188 = vpop.f32.mrf.mxu0
      %v5189 = vadd.f32 0.0, %v5188
      %5190 = vmatmul.f32.gmra.mxu0 %v3999
      %v5191 = vpop.f32.mrf.mxu0
      %v5192 = vadd.f32 0.0, %v5191
      %5193 = vmatmul.f32.gmra.mxu0 %v4002
      %v5194 = vpop.f32.mrf.mxu0
      %v5195 = vadd.f32 0.0, %v5194
      %5196 = vmatmul.f32.gmra.mxu0 %v4005
      %v5197 = vpop.f32.mrf.mxu0
      %v5198 = vadd.f32 0.0, %v5197
      %5199 = vmatmul.f32.gmra.mxu0 %v4008
      %v5200 = vpop.f32.mrf.mxu0
      %v5201 = vadd.f32 0.0, %v5200
      %5202 = vmatmul.f32.gmra.mxu0 %v4011
      %v5203 = vpop.f32.mrf.mxu0
      %v5204 = vadd.f32 0.0, %v5203
      %5205 = vmatmul.f32.gmra.mxu0 %v4014
      %v5206 = vpop.f32.mrf.mxu0
      %v5207 = vadd.f32 0.0, %v5206
      %5208 = vmatmul.f32.gmra.mxu0 %v4017
      %v5209 = vpop.f32.mrf.mxu0
      %v5210 = vadd.f32 0.0, %v5209
      %5211 = vmatmul.f32.gmra.mxu0 %v4020
      %v5212 = vpop.f32.mrf.mxu0
      %v5213 = vadd.f32 0.0, %v5212
      %5214 = vmatmul.f32.gmra.mxu0 %v4023
      %v5215 = vpop.f32.mrf.mxu0
      %v5216 = vadd.f32 0.0, %v5215
      %5217 = vmatmul.f32.gmra.mxu0 %v4026
      %v5218 = vpop.f32.mrf.mxu0
      %v5219 = vadd.f32 0.0, %v5218
      %5220 = vmatmul.f32.gmra.mxu0 %v4029
      %v5221 = vpop.f32.mrf.mxu0
      %v5222 = vadd.f32 0.0, %v5221
      %5223 = vmatmul.f32.gmra.mxu0 %v4032
      %v5224 = vpop.f32.mrf.mxu0
      %v5225 = vadd.f32 0.0, %v5224
      %5226 = vmatmul.f32.gmra.mxu0 %v4035
      %v5227 = vpop.f32.mrf.mxu0
      %v5228 = vadd.f32 0.0, %v5227
      %5229 = vmatmul.f32.gmra.mxu0 %v4038
      %v5230 = vpop.f32.mrf.mxu0
      %v5231 = vadd.f32 0.0, %v5230
      %5232 = vmatmul.f32.gmra.mxu0 %v4041
      %v5233 = vpop.f32.mrf.mxu0
      %v5234 = vadd.f32 0.0, %v5233
      %5235 = vmatmul.f32.gmra.mxu0 %v4044
      %v5236 = vpop.f32.mrf.mxu0
      %v5237 = vadd.f32 0.0, %v5236
      %5238 = vmatmul.f32.gmra.mxu0 %v4047
      %v5239 = vpop.f32.mrf.mxu0
      %v5240 = vadd.f32 0.0, %v5239
      %5241 = vmatmul.f32.gmra.mxu0 %v4050
      %v5242 = vpop.f32.mrf.mxu0
      %v5243 = vadd.f32 0.0, %v5242
      %5244 = vmatmul.f32.gmra.mxu0 %v4053
      %v5245 = vpop.f32.mrf.mxu0
      %v5246 = vadd.f32 0.0, %v5245
      %5247 = vmatmul.f32.gmra.mxu0 %v4056
      %v5248 = vpop.f32.mrf.mxu0
      %v5249 = vadd.f32 0.0, %v5248
      %5250 = vmatmul.f32.gmra.mxu0 %v4059
      %v5251 = vpop.f32.mrf.mxu0
      %v5252 = vadd.f32 0.0, %v5251
      %5253 = vmatmul.f32.gmra.mxu0 %v4062
      %v5254 = vpop.f32.mrf.mxu0
      %v5255 = vadd.f32 0.0, %v5254
      %5256 = vdwg.mxu0
      %v5258 = vsel %vm763, %v5090, 0
      %5260 = vmatpush.msra.mxu0 0.0
      %5261 = vmatpush.msra.mxu0 0.0
      %5262 = vmatpush.msra.mxu0 0.0
      %5263 = vmatpush.msra.mxu0 0.0
      %5264 = vmatpush.msra.mxu0 0.0
      %5265 = vmatpush.msra.mxu0 0.0
      %5266 = vmatpush.msra.mxu0 0.0
      %5267 = vmatpush.msra.mxu0 0.0
      %5268 = vmatpush.msra.mxu0 0.0
      %5269 = vmatpush.msra.mxu0 0.0
      %5270 = vmatpush.msra.mxu0 0.0
      %5271 = vmatpush.msra.mxu0 0.0
      %5272 = vmatpush.msra.mxu0 0.0
      %5273 = vmatpush.msra.mxu0 0.0
      %5274 = vmatpush.msra.mxu0 0.0
      %5275 = vmatpush.msra.mxu0 %v5258
      %5276 = vmatmul.f32.gmra.mxu0 %v4229
      %v5277 = vpop.f32.mrf.mxu0
      %v5278 = vadd.f32 %v5114, %v5277
      %5279 = vmatmul.f32.gmra.mxu0 %v4232
      %v5280 = vpop.f32.mrf.mxu0
      %v5281 = vadd.f32 %v5117, %v5280
      %5282 = vmatmul.f32.gmra.mxu0 %v4235
      %v5283 = vpop.f32.mrf.mxu0
      %v5284 = vadd.f32 %v5120, %v5283
      %5285 = vmatmul.f32.gmra.mxu0 %v4238
      %v5286 = vpop.f32.mrf.mxu0
      %v5287 = vadd.f32 %v5123, %v5286
      %5288 = vmatmul.f32.gmra.mxu0 %v4241
      %v5289 = vpop.f32.mrf.mxu0
      %v5290 = vadd.f32 %v5126, %v5289
      %5291 = vmatmul.f32.gmra.mxu0 %v4244
      %v5292 = vpop.f32.mrf.mxu0
      %v5293 = vadd.f32 %v5129, %v5292
      %5294 = vmatmul.f32.gmra.mxu0 %v4247
      %v5295 = vpop.f32.mrf.mxu0
      %v5296 = vadd.f32 %v5132, %v5295
      %5297 = vmatmul.f32.gmra.mxu0 %v4250
      %v5298 = vpop.f32.mrf.mxu0
      %v5299 = vadd.f32 %v5135, %v5298
      %5300 = vmatmul.f32.gmra.mxu0 %v4253
      %v5301 = vpop.f32.mrf.mxu0
      %v5302 = vadd.f32 %v5138, %v5301
      %5303 = vmatmul.f32.gmra.mxu0 %v4256
      %v5304 = vpop.f32.mrf.mxu0
      %v5305 = vadd.f32 %v5141, %v5304
      %5306 = vmatmul.f32.gmra.mxu0 %v4259
      %v5307 = vpop.f32.mrf.mxu0
      %v5308 = vadd.f32 %v5144, %v5307
      %5309 = vmatmul.f32.gmra.mxu0 %v4262
      %v5310 = vpop.f32.mrf.mxu0
      %v5311 = vadd.f32 %v5147, %v5310
      %5312 = vmatmul.f32.gmra.mxu0 %v4265
      %v5313 = vpop.f32.mrf.mxu0
      %v5314 = vadd.f32 %v5150, %v5313
      %5315 = vmatmul.f32.gmra.mxu0 %v4268
      %v5316 = vpop.f32.mrf.mxu0
      %v5317 = vadd.f32 %v5153, %v5316
      %5318 = vmatmul.f32.gmra.mxu0 %v4271
      %v5319 = vpop.f32.mrf.mxu0
      %v5320 = vadd.f32 %v5156, %v5319
      %5321 = vmatmul.f32.gmra.mxu0 %v4274
      %v5322 = vpop.f32.mrf.mxu0
      %v5323 = vadd.f32 %v5159, %v5322
      %5324 = vmatmul.f32.gmra.mxu0 %v4277
      %v5325 = vpop.f32.mrf.mxu0
      %v5326 = vadd.f32 %v5162, %v5325
      %5327 = vmatmul.f32.gmra.mxu0 %v4280
      %v5328 = vpop.f32.mrf.mxu0
      %v5329 = vadd.f32 %v5165, %v5328
      %5330 = vmatmul.f32.gmra.mxu0 %v4283
      %v5331 = vpop.f32.mrf.mxu0
      %v5332 = vadd.f32 %v5168, %v5331
      %5333 = vmatmul.f32.gmra.mxu0 %v4286
      %v5334 = vpop.f32.mrf.mxu0
      %v5335 = vadd.f32 %v5171, %v5334
      %5336 = vmatmul.f32.gmra.mxu0 %v4289
      %v5337 = vpop.f32.mrf.mxu0
      %v5338 = vadd.f32 %v5174, %v5337
      %5339 = vmatmul.f32.gmra.mxu0 %v4292
      %v5340 = vpop.f32.mrf.mxu0
      %v5341 = vadd.f32 %v5177, %v5340
      %5342 = vmatmul.f32.gmra.mxu0 %v4295
      %v5343 = vpop.f32.mrf.mxu0
      %v5344 = vadd.f32 %v5180, %v5343
      %5345 = vmatmul.f32.gmra.mxu0 %v4298
      %v5346 = vpop.f32.mrf.mxu0
      %v5347 = vadd.f32 %v5183, %v5346
      %5348 = vmatmul.f32.gmra.mxu0 %v4301
      %v5349 = vpop.f32.mrf.mxu0
      %v5350 = vadd.f32 %v5186, %v5349
      %5351 = vmatmul.f32.gmra.mxu0 %v4304
      %v5352 = vpop.f32.mrf.mxu0
      %v5353 = vadd.f32 %v5189, %v5352
      %5354 = vmatmul.f32.gmra.mxu0 %v4307
      %v5355 = vpop.f32.mrf.mxu0
      %v5356 = vadd.f32 %v5192, %v5355
      %5357 = vmatmul.f32.gmra.mxu0 %v4310
      %v5358 = vpop.f32.mrf.mxu0
      %v5359 = vadd.f32 %v5195, %v5358
      %5360 = vmatmul.f32.gmra.mxu0 %v4313
      %v5361 = vpop.f32.mrf.mxu0
      %v5362 = vadd.f32 %v5198, %v5361
      %5363 = vmatmul.f32.gmra.mxu0 %v4316
      %v5364 = vpop.f32.mrf.mxu0
      %v5365 = vadd.f32 %v5201, %v5364
      %5366 = vmatmul.f32.gmra.mxu0 %v4319
      %v5367 = vpop.f32.mrf.mxu0
      %v5368 = vadd.f32 %v5204, %v5367
      %5369 = vmatmul.f32.gmra.mxu0 %v4322
      %v5370 = vpop.f32.mrf.mxu0
      %v5371 = vadd.f32 %v5207, %v5370
      %5372 = vmatmul.f32.gmra.mxu0 %v4325
      %v5373 = vpop.f32.mrf.mxu0
      %v5374 = vadd.f32 %v5210, %v5373
      %5375 = vmatmul.f32.gmra.mxu0 %v4328
      %v5376 = vpop.f32.mrf.mxu0
      %v5377 = vadd.f32 %v5213, %v5376
      %5378 = vmatmul.f32.gmra.mxu0 %v4331
      %v5379 = vpop.f32.mrf.mxu0
      %v5380 = vadd.f32 %v5216, %v5379
      %5381 = vmatmul.f32.gmra.mxu0 %v4334
      %v5382 = vpop.f32.mrf.mxu0
      %v5383 = vadd.f32 %v5219, %v5382
      %5384 = vmatmul.f32.gmra.mxu0 %v4337
      %v5385 = vpop.f32.mrf.mxu0
      %v5386 = vadd.f32 %v5222, %v5385
      %5387 = vmatmul.f32.gmra.mxu0 %v4340
      %v5388 = vpop.f32.mrf.mxu0
      %v5389 = vadd.f32 %v5225, %v5388
      %5390 = vmatmul.f32.gmra.mxu0 %v4343
      %v5391 = vpop.f32.mrf.mxu0
      %v5392 = vadd.f32 %v5228, %v5391
      %5393 = vmatmul.f32.gmra.mxu0 %v4346
      %v5394 = vpop.f32.mrf.mxu0
      %v5395 = vadd.f32 %v5231, %v5394
      %5396 = vmatmul.f32.gmra.mxu0 %v4349
      %v5397 = vpop.f32.mrf.mxu0
      %v5398 = vadd.f32 %v5234, %v5397
      %5399 = vmatmul.f32.gmra.mxu0 %v4352
      %v5400 = vpop.f32.mrf.mxu0
      %v5401 = vadd.f32 %v5237, %v5400
      %5402 = vmatmul.f32.gmra.mxu0 %v4355
      %v5403 = vpop.f32.mrf.mxu0
      %v5404 = vadd.f32 %v5240, %v5403
      %5405 = vmatmul.f32.gmra.mxu0 %v4358
      %v5406 = vpop.f32.mrf.mxu0
      %v5407 = vadd.f32 %v5243, %v5406
      %5408 = vmatmul.f32.gmra.mxu0 %v4361
      %v5409 = vpop.f32.mrf.mxu0
      %v5410 = vadd.f32 %v5246, %v5409
      %5411 = vmatmul.f32.gmra.mxu0 %v4364
      %v5412 = vpop.f32.mrf.mxu0
      %v5413 = vadd.f32 %v5249, %v5412
      %5414 = vmatmul.f32.gmra.mxu0 %v4367
      %v5415 = vpop.f32.mrf.mxu0
      %v5416 = vadd.f32 %v5252, %v5415
      %5417 = vmatmul.f32.gmra.mxu0 %v4370
      %v5418 = vpop.f32.mrf.mxu0
      %v5419 = vadd.f32 %v5255, %v5418
      %5420 = vdwg.mxu0
      %s5421 = scalar_lea.vmem %s5, 28
      %v5422 = vld [vmem:[%s5421] sm:$0xf]
      %v5424 = vsel %vm763, %v5422, 0
      %5426 = vmatpush.msra.mxu0 0.0
      %5427 = vmatpush.msra.mxu0 0.0
      %5428 = vmatpush.msra.mxu0 0.0
      %5429 = vmatpush.msra.mxu0 0.0
      %5430 = vmatpush.msra.mxu0 0.0
      %5431 = vmatpush.msra.mxu0 0.0
      %5432 = vmatpush.msra.mxu0 0.0
      %5433 = vmatpush.msra.mxu0 0.0
      %5434 = vmatpush.msra.mxu0 0.0
      %5435 = vmatpush.msra.mxu0 0.0
      %5436 = vmatpush.msra.mxu0 0.0
      %5437 = vmatpush.msra.mxu0 0.0
      %5438 = vmatpush.msra.mxu0 0.0
      %5439 = vmatpush.msra.mxu0 0.0
      %5440 = vmatpush.msra.mxu0 0.0
      %5441 = vmatpush.msra.mxu0 %v5424
      %5442 = vmatmul.f32.gmra.mxu0 %v4587
      %v5443 = vpop.f32.mrf.mxu0
      %v5444 = vadd.f32 0.0, %v5443
      %5445 = vmatmul.f32.gmra.mxu0 %v4590
      %v5446 = vpop.f32.mrf.mxu0
      %v5447 = vadd.f32 0.0, %v5446
      %5448 = vmatmul.f32.gmra.mxu0 %v4593
      %v5449 = vpop.f32.mrf.mxu0
      %v5450 = vadd.f32 0.0, %v5449
      %5451 = vmatmul.f32.gmra.mxu0 %v4596
      %v5452 = vpop.f32.mrf.mxu0
      %v5453 = vadd.f32 0.0, %v5452
      %5454 = vmatmul.f32.gmra.mxu0 %v4599
      %v5455 = vpop.f32.mrf.mxu0
      %v5456 = vadd.f32 0.0, %v5455
      %5457 = vmatmul.f32.gmra.mxu0 %v4602
      %v5458 = vpop.f32.mrf.mxu0
      %v5459 = vadd.f32 0.0, %v5458
      %5460 = vmatmul.f32.gmra.mxu0 %v4605
      %v5461 = vpop.f32.mrf.mxu0
      %v5462 = vadd.f32 0.0, %v5461
      %5463 = vmatmul.f32.gmra.mxu0 %v4608
      %v5464 = vpop.f32.mrf.mxu0
      %v5465 = vadd.f32 0.0, %v5464
      %5466 = vmatmul.f32.gmra.mxu0 %v4611
      %v5467 = vpop.f32.mrf.mxu0
      %v5468 = vadd.f32 0.0, %v5467
      %5469 = vmatmul.f32.gmra.mxu0 %v4614
      %v5470 = vpop.f32.mrf.mxu0
      %v5471 = vadd.f32 0.0, %v5470
      %5472 = vmatmul.f32.gmra.mxu0 %v4617
      %v5473 = vpop.f32.mrf.mxu0
      %v5474 = vadd.f32 0.0, %v5473
      %5475 = vmatmul.f32.gmra.mxu0 %v4620
      %v5476 = vpop.f32.mrf.mxu0
      %v5477 = vadd.f32 0.0, %v5476
      %5478 = vmatmul.f32.gmra.mxu0 %v4623
      %v5479 = vpop.f32.mrf.mxu0
      %v5480 = vadd.f32 0.0, %v5479
      %5481 = vmatmul.f32.gmra.mxu0 %v4626
      %v5482 = vpop.f32.mrf.mxu0
      %v5483 = vadd.f32 0.0, %v5482
      %5484 = vmatmul.f32.gmra.mxu0 %v4629
      %v5485 = vpop.f32.mrf.mxu0
      %v5486 = vadd.f32 0.0, %v5485
      %5487 = vmatmul.f32.gmra.mxu0 %v4632
      %v5488 = vpop.f32.mrf.mxu0
      %v5489 = vadd.f32 0.0, %v5488
      %5490 = vmatmul.f32.gmra.mxu0 %v4635
      %v5491 = vpop.f32.mrf.mxu0
      %v5492 = vadd.f32 0.0, %v5491
      %5493 = vmatmul.f32.gmra.mxu0 %v4638
      %v5494 = vpop.f32.mrf.mxu0
      %v5495 = vadd.f32 0.0, %v5494
      %5496 = vmatmul.f32.gmra.mxu0 %v4641
      %v5497 = vpop.f32.mrf.mxu0
      %v5498 = vadd.f32 0.0, %v5497
      %5499 = vmatmul.f32.gmra.mxu0 %v4644
      %v5500 = vpop.f32.mrf.mxu0
      %v5501 = vadd.f32 0.0, %v5500
      %5502 = vmatmul.f32.gmra.mxu0 %v4647
      %v5503 = vpop.f32.mrf.mxu0
      %v5504 = vadd.f32 0.0, %v5503
      %5505 = vmatmul.f32.gmra.mxu0 %v4650
      %v5506 = vpop.f32.mrf.mxu0
      %v5507 = vadd.f32 0.0, %v5506
      %5508 = vmatmul.f32.gmra.mxu0 %v4653
      %v5509 = vpop.f32.mrf.mxu0
      %v5510 = vadd.f32 0.0, %v5509
      %5511 = vmatmul.f32.gmra.mxu0 %v4656
      %v5512 = vpop.f32.mrf.mxu0
      %v5513 = vadd.f32 0.0, %v5512
      %5514 = vmatmul.f32.gmra.mxu0 %v4659
      %v5515 = vpop.f32.mrf.mxu0
      %v5516 = vadd.f32 0.0, %v5515
      %5517 = vmatmul.f32.gmra.mxu0 %v4662
      %v5518 = vpop.f32.mrf.mxu0
      %v5519 = vadd.f32 0.0, %v5518
      %5520 = vmatmul.f32.gmra.mxu0 %v4665
      %v5521 = vpop.f32.mrf.mxu0
      %v5522 = vadd.f32 0.0, %v5521
      %5523 = vmatmul.f32.gmra.mxu0 %v4668
      %v5524 = vpop.f32.mrf.mxu0
      %v5525 = vadd.f32 0.0, %v5524
      %5526 = vmatmul.f32.gmra.mxu0 %v4671
      %v5527 = vpop.f32.mrf.mxu0
      %v5528 = vadd.f32 0.0, %v5527
      %5529 = vmatmul.f32.gmra.mxu0 %v4674
      %v5530 = vpop.f32.mrf.mxu0
      %v5531 = vadd.f32 0.0, %v5530
      %5532 = vmatmul.f32.gmra.mxu0 %v4677
      %v5533 = vpop.f32.mrf.mxu0
      %v5534 = vadd.f32 0.0, %v5533
      %5535 = vmatmul.f32.gmra.mxu0 %v4680
      %v5536 = vpop.f32.mrf.mxu0
      %v5537 = vadd.f32 0.0, %v5536
      %5538 = vmatmul.f32.gmra.mxu0 %v4683
      %v5539 = vpop.f32.mrf.mxu0
      %v5540 = vadd.f32 0.0, %v5539
      %5541 = vmatmul.f32.gmra.mxu0 %v4686
      %v5542 = vpop.f32.mrf.mxu0
      %v5543 = vadd.f32 0.0, %v5542
      %5544 = vmatmul.f32.gmra.mxu0 %v4689
      %v5545 = vpop.f32.mrf.mxu0
      %v5546 = vadd.f32 0.0, %v5545
      %5547 = vmatmul.f32.gmra.mxu0 %v4692
      %v5548 = vpop.f32.mrf.mxu0
      %v5549 = vadd.f32 0.0, %v5548
      %5550 = vmatmul.f32.gmra.mxu0 %v4695
      %v5551 = vpop.f32.mrf.mxu0
      %v5552 = vadd.f32 0.0, %v5551
      %5553 = vmatmul.f32.gmra.mxu0 %v4698
      %v5554 = vpop.f32.mrf.mxu0
      %v5555 = vadd.f32 0.0, %v5554
      %5556 = vmatmul.f32.gmra.mxu0 %v4701
      %v5557 = vpop.f32.mrf.mxu0
      %v5558 = vadd.f32 0.0, %v5557
      %5559 = vmatmul.f32.gmra.mxu0 %v4704
      %v5560 = vpop.f32.mrf.mxu0
      %v5561 = vadd.f32 0.0, %v5560
      %5562 = vmatmul.f32.gmra.mxu0 %v4707
      %v5563 = vpop.f32.mrf.mxu0
      %v5564 = vadd.f32 0.0, %v5563
      %5565 = vmatmul.f32.gmra.mxu0 %v4710
      %v5566 = vpop.f32.mrf.mxu0
      %v5567 = vadd.f32 0.0, %v5566
      %5568 = vmatmul.f32.gmra.mxu0 %v4713
      %v5569 = vpop.f32.mrf.mxu0
      %v5570 = vadd.f32 0.0, %v5569
      %5571 = vmatmul.f32.gmra.mxu0 %v4716
      %v5572 = vpop.f32.mrf.mxu0
      %v5573 = vadd.f32 0.0, %v5572
      %5574 = vmatmul.f32.gmra.mxu0 %v4719
      %v5575 = vpop.f32.mrf.mxu0
      %v5576 = vadd.f32 0.0, %v5575
      %5577 = vmatmul.f32.gmra.mxu0 %v4722
      %v5578 = vpop.f32.mrf.mxu0
      %v5579 = vadd.f32 0.0, %v5578
      %5580 = vmatmul.f32.gmra.mxu0 %v4725
      %v5581 = vpop.f32.mrf.mxu0
      %v5582 = vadd.f32 0.0, %v5581
      %5583 = vmatmul.f32.gmra.mxu0 %v4728
      %v5584 = vpop.f32.mrf.mxu0
      %v5585 = vadd.f32 0.0, %v5584
      %5586 = vdwg.mxu0
      %v5587 = vadd.f32 %v5278, %v5444
      %v5588 = vadd.f32 %v5281, %v5447
      %v5589 = vadd.f32 %v5284, %v5450
      %v5590 = vadd.f32 %v5287, %v5453
      %v5591 = vadd.f32 %v5290, %v5456
      %v5592 = vadd.f32 %v5293, %v5459
      %v5593 = vadd.f32 %v5296, %v5462
      %v5594 = vadd.f32 %v5299, %v5465
      %v5595 = vadd.f32 %v5302, %v5468
      %v5596 = vadd.f32 %v5305, %v5471
      %v5597 = vadd.f32 %v5308, %v5474
      %v5598 = vadd.f32 %v5311, %v5477
      %v5599 = vadd.f32 %v5314, %v5480
      %v5600 = vadd.f32 %v5317, %v5483
      %v5601 = vadd.f32 %v5320, %v5486
      %v5602 = vadd.f32 %v5323, %v5489
      %v5603 = vadd.f32 %v5326, %v5492
      %v5604 = vadd.f32 %v5329, %v5495
      %v5605 = vadd.f32 %v5332, %v5498
      %v5606 = vadd.f32 %v5335, %v5501
      %v5607 = vadd.f32 %v5338, %v5504
      %v5608 = vadd.f32 %v5341, %v5507
      %v5609 = vadd.f32 %v5344, %v5510
      %v5610 = vadd.f32 %v5347, %v5513
      %v5611 = vadd.f32 %v5350, %v5516
      %v5612 = vadd.f32 %v5353, %v5519
      %v5613 = vadd.f32 %v5356, %v5522
      %v5614 = vadd.f32 %v5359, %v5525
      %v5615 = vadd.f32 %v5362, %v5528
      %v5616 = vadd.f32 %v5365, %v5531
      %v5617 = vadd.f32 %v5368, %v5534
      %v5618 = vadd.f32 %v5371, %v5537
      %v5619 = vadd.f32 %v5374, %v5540
      %v5620 = vadd.f32 %v5377, %v5543
      %v5621 = vadd.f32 %v5380, %v5546
      %v5622 = vadd.f32 %v5383, %v5549
      %v5623 = vadd.f32 %v5386, %v5552
      %v5624 = vadd.f32 %v5389, %v5555
      %v5625 = vadd.f32 %v5392, %v5558
      %v5626 = vadd.f32 %v5395, %v5561
      %v5627 = vadd.f32 %v5398, %v5564
      %v5628 = vadd.f32 %v5401, %v5567
      %v5629 = vadd.f32 %v5404, %v5570
      %v5630 = vadd.f32 %v5407, %v5573
      %v5631 = vadd.f32 %v5410, %v5576
      %v5632 = vadd.f32 %v5413, %v5579
      %v5633 = vadd.f32 %v5416, %v5582
      %v5634 = vadd.f32 %v5419, %v5585
      %v5635 = vadd.f32 %v5041, %v5587
      %v5636 = vadd.f32 %v5042, %v5588
      %v5637 = vadd.f32 %v5043, %v5589
      %v5638 = vadd.f32 %v5044, %v5590
      %v5639 = vadd.f32 %v5045, %v5591
      %v5640 = vadd.f32 %v5046, %v5592
      %v5641 = vadd.f32 %v5047, %v5593
      %v5642 = vadd.f32 %v5048, %v5594
      %v5643 = vadd.f32 %v5049, %v5595
      %v5644 = vadd.f32 %v5050, %v5596
      %v5645 = vadd.f32 %v5051, %v5597
      %v5646 = vadd.f32 %v5052, %v5598
      %v5647 = vadd.f32 %v5053, %v5599
      %v5648 = vadd.f32 %v5054, %v5600
      %v5649 = vadd.f32 %v5055, %v5601
      %v5650 = vadd.f32 %v5056, %v5602
      %v5651 = vadd.f32 %v5057, %v5603
      %v5652 = vadd.f32 %v5058, %v5604
      %v5653 = vadd.f32 %v5059, %v5605
      %v5654 = vadd.f32 %v5060, %v5606
      %v5655 = vadd.f32 %v5061, %v5607
      %v5656 = vadd.f32 %v5062, %v5608
      %v5657 = vadd.f32 %v5063, %v5609
      %v5658 = vadd.f32 %v5064, %v5610
      %v5659 = vadd.f32 %v5065, %v5611
      %v5660 = vadd.f32 %v5066, %v5612
      %v5661 = vadd.f32 %v5067, %v5613
      %v5662 = vadd.f32 %v5068, %v5614
      %v5663 = vadd.f32 %v5069, %v5615
      %v5664 = vadd.f32 %v5070, %v5616
      %v5665 = vadd.f32 %v5071, %v5617
      %v5666 = vadd.f32 %v5072, %v5618
      %v5667 = vadd.f32 %v5073, %v5619
      %v5668 = vadd.f32 %v5074, %v5620
      %v5669 = vadd.f32 %v5075, %v5621
      %v5670 = vadd.f32 %v5076, %v5622
      %v5671 = vadd.f32 %v5077, %v5623
      %v5672 = vadd.f32 %v5078, %v5624
      %v5673 = vadd.f32 %v5079, %v5625
      %v5674 = vadd.f32 %v5080, %v5626
      %v5675 = vadd.f32 %v5081, %v5627
      %v5676 = vadd.f32 %v5082, %v5628
      %v5677 = vadd.f32 %v5083, %v5629
      %v5678 = vadd.f32 %v5084, %v5630
      %v5679 = vadd.f32 %v5085, %v5631
      %v5680 = vadd.f32 %v5086, %v5632
      %v5681 = vadd.f32 %v5087, %v5633
      %v5682 = vadd.f32 %v5088, %v5634
      %s5683 = scalar_lea.vmem %s5, 8
      %v5684 = vld [vmem:[%s5683] sm:$0xf]
      %s5685 = scalar_lea.vmem %s5, 20
      %v5686 = vld [vmem:[%s5685] sm:$0xf]
      %v5688 = vsel %vm763, %v5686, 0
      %5690 = vmatpush.msra.mxu0 0.0
      %5691 = vmatpush.msra.mxu0 0.0
      %5692 = vmatpush.msra.mxu0 0.0
      %5693 = vmatpush.msra.mxu0 0.0
      %5694 = vmatpush.msra.mxu0 0.0
      %5695 = vmatpush.msra.mxu0 0.0
      %5696 = vmatpush.msra.mxu0 0.0
      %5697 = vmatpush.msra.mxu0 0.0
      %5698 = vmatpush.msra.mxu0 0.0
      %5699 = vmatpush.msra.mxu0 0.0
      %5700 = vmatpush.msra.mxu0 0.0
      %5701 = vmatpush.msra.mxu0 0.0
      %5702 = vmatpush.msra.mxu0 0.0
      %5703 = vmatpush.msra.mxu0 0.0
      %5704 = vmatpush.msra.mxu0 0.0
      %5705 = vmatpush.msra.mxu0 %v5688
      %5706 = vmatmul.f32.gmra.mxu0 %v3921
      %v5707 = vpop.f32.mrf.mxu0
      %v5708 = vadd.f32 0.0, %v5707
      %5709 = vmatmul.f32.gmra.mxu0 %v3924
      %v5710 = vpop.f32.mrf.mxu0
      %v5711 = vadd.f32 0.0, %v5710
      %5712 = vmatmul.f32.gmra.mxu0 %v3927
      %v5713 = vpop.f32.mrf.mxu0
      %v5714 = vadd.f32 0.0, %v5713
      %5715 = vmatmul.f32.gmra.mxu0 %v3930
      %v5716 = vpop.f32.mrf.mxu0
      %v5717 = vadd.f32 0.0, %v5716
      %5718 = vmatmul.f32.gmra.mxu0 %v3933
      %v5719 = vpop.f32.mrf.mxu0
      %v5720 = vadd.f32 0.0, %v5719
      %5721 = vmatmul.f32.gmra.mxu0 %v3936
      %v5722 = vpop.f32.mrf.mxu0
      %v5723 = vadd.f32 0.0, %v5722
      %5724 = vmatmul.f32.gmra.mxu0 %v3939
      %v5725 = vpop.f32.mrf.mxu0
      %v5726 = vadd.f32 0.0, %v5725
      %5727 = vmatmul.f32.gmra.mxu0 %v3942
      %v5728 = vpop.f32.mrf.mxu0
      %v5729 = vadd.f32 0.0, %v5728
      %5730 = vmatmul.f32.gmra.mxu0 %v3945
      %v5731 = vpop.f32.mrf.mxu0
      %v5732 = vadd.f32 0.0, %v5731
      %5733 = vmatmul.f32.gmra.mxu0 %v3948
      %v5734 = vpop.f32.mrf.mxu0
      %v5735 = vadd.f32 0.0, %v5734
      %5736 = vmatmul.f32.gmra.mxu0 %v3951
      %v5737 = vpop.f32.mrf.mxu0
      %v5738 = vadd.f32 0.0, %v5737
      %5739 = vmatmul.f32.gmra.mxu0 %v3954
      %v5740 = vpop.f32.mrf.mxu0
      %v5741 = vadd.f32 0.0, %v5740
      %5742 = vmatmul.f32.gmra.mxu0 %v3957
      %v5743 = vpop.f32.mrf.mxu0
      %v5744 = vadd.f32 0.0, %v5743
      %5745 = vmatmul.f32.gmra.mxu0 %v3960
      %v5746 = vpop.f32.mrf.mxu0
      %v5747 = vadd.f32 0.0, %v5746
      %5748 = vmatmul.f32.gmra.mxu0 %v3963
      %v5749 = vpop.f32.mrf.mxu0
      %v5750 = vadd.f32 0.0, %v5749
      %5751 = vmatmul.f32.gmra.mxu0 %v3966
      %v5752 = vpop.f32.mrf.mxu0
      %v5753 = vadd.f32 0.0, %v5752
      %5754 = vmatmul.f32.gmra.mxu0 %v3969
      %v5755 = vpop.f32.mrf.mxu0
      %v5756 = vadd.f32 0.0, %v5755
      %5757 = vmatmul.f32.gmra.mxu0 %v3972
      %v5758 = vpop.f32.mrf.mxu0
      %v5759 = vadd.f32 0.0, %v5758
      %5760 = vmatmul.f32.gmra.mxu0 %v3975
      %v5761 = vpop.f32.mrf.mxu0
      %v5762 = vadd.f32 0.0, %v5761
      %5763 = vmatmul.f32.gmra.mxu0 %v3978
      %v5764 = vpop.f32.mrf.mxu0
      %v5765 = vadd.f32 0.0, %v5764
      %5766 = vmatmul.f32.gmra.mxu0 %v3981
      %v5767 = vpop.f32.mrf.mxu0
      %v5768 = vadd.f32 0.0, %v5767
      %5769 = vmatmul.f32.gmra.mxu0 %v3984
      %v5770 = vpop.f32.mrf.mxu0
      %v5771 = vadd.f32 0.0, %v5770
      %5772 = vmatmul.f32.gmra.mxu0 %v3987
      %v5773 = vpop.f32.mrf.mxu0
      %v5774 = vadd.f32 0.0, %v5773
      %5775 = vmatmul.f32.gmra.mxu0 %v3990
      %v5776 = vpop.f32.mrf.mxu0
      %v5777 = vadd.f32 0.0, %v5776
      %5778 = vmatmul.f32.gmra.mxu0 %v3993
      %v5779 = vpop.f32.mrf.mxu0
      %v5780 = vadd.f32 0.0, %v5779
      %5781 = vmatmul.f32.gmra.mxu0 %v3996
      %v5782 = vpop.f32.mrf.mxu0
      %v5783 = vadd.f32 0.0, %v5782
      %5784 = vmatmul.f32.gmra.mxu0 %v3999
      %v5785 = vpop.f32.mrf.mxu0
      %v5786 = vadd.f32 0.0, %v5785
      %5787 = vmatmul.f32.gmra.mxu0 %v4002
      %v5788 = vpop.f32.mrf.mxu0
      %v5789 = vadd.f32 0.0, %v5788
      %5790 = vmatmul.f32.gmra.mxu0 %v4005
      %v5791 = vpop.f32.mrf.mxu0
      %v5792 = vadd.f32 0.0, %v5791
      %5793 = vmatmul.f32.gmra.mxu0 %v4008
      %v5794 = vpop.f32.mrf.mxu0
      %v5795 = vadd.f32 0.0, %v5794
      %5796 = vmatmul.f32.gmra.mxu0 %v4011
      %v5797 = vpop.f32.mrf.mxu0
      %v5798 = vadd.f32 0.0, %v5797
      %5799 = vmatmul.f32.gmra.mxu0 %v4014
      %v5800 = vpop.f32.mrf.mxu0
      %v5801 = vadd.f32 0.0, %v5800
      %5802 = vmatmul.f32.gmra.mxu0 %v4017
      %v5803 = vpop.f32.mrf.mxu0
      %v5804 = vadd.f32 0.0, %v5803
      %5805 = vmatmul.f32.gmra.mxu0 %v4020
      %v5806 = vpop.f32.mrf.mxu0
      %v5807 = vadd.f32 0.0, %v5806
      %5808 = vmatmul.f32.gmra.mxu0 %v4023
      %v5809 = vpop.f32.mrf.mxu0
      %v5810 = vadd.f32 0.0, %v5809
      %5811 = vmatmul.f32.gmra.mxu0 %v4026
      %v5812 = vpop.f32.mrf.mxu0
      %v5813 = vadd.f32 0.0, %v5812
      %5814 = vmatmul.f32.gmra.mxu0 %v4029
      %v5815 = vpop.f32.mrf.mxu0
      %v5816 = vadd.f32 0.0, %v5815
      %5817 = vmatmul.f32.gmra.mxu0 %v4032
      %v5818 = vpop.f32.mrf.mxu0
      %v5819 = vadd.f32 0.0, %v5818
      %5820 = vmatmul.f32.gmra.mxu0 %v4035
      %v5821 = vpop.f32.mrf.mxu0
      %v5822 = vadd.f32 0.0, %v5821
      %5823 = vmatmul.f32.gmra.mxu0 %v4038
      %v5824 = vpop.f32.mrf.mxu0
      %v5825 = vadd.f32 0.0, %v5824
      %5826 = vmatmul.f32.gmra.mxu0 %v4041
      %v5827 = vpop.f32.mrf.mxu0
      %v5828 = vadd.f32 0.0, %v5827
      %5829 = vmatmul.f32.gmra.mxu0 %v4044
      %v5830 = vpop.f32.mrf.mxu0
      %v5831 = vadd.f32 0.0, %v5830
      %5832 = vmatmul.f32.gmra.mxu0 %v4047
      %v5833 = vpop.f32.mrf.mxu0
      %v5834 = vadd.f32 0.0, %v5833
      %5835 = vmatmul.f32.gmra.mxu0 %v4050
      %v5836 = vpop.f32.mrf.mxu0
      %v5837 = vadd.f32 0.0, %v5836
      %5838 = vmatmul.f32.gmra.mxu0 %v4053
      %v5839 = vpop.f32.mrf.mxu0
      %v5840 = vadd.f32 0.0, %v5839
      %5841 = vmatmul.f32.gmra.mxu0 %v4056
      %v5842 = vpop.f32.mrf.mxu0
      %v5843 = vadd.f32 0.0, %v5842
      %5844 = vmatmul.f32.gmra.mxu0 %v4059
      %v5845 = vpop.f32.mrf.mxu0
      %v5846 = vadd.f32 0.0, %v5845
      %5847 = vmatmul.f32.gmra.mxu0 %v4062
      %v5848 = vpop.f32.mrf.mxu0
      %v5849 = vadd.f32 0.0, %v5848
      %5850 = vdwg.mxu0
      %v5852 = vsel %vm763, %v5684, 0
      %5854 = vmatpush.msra.mxu0 0.0
      %5855 = vmatpush.msra.mxu0 0.0
      %5856 = vmatpush.msra.mxu0 0.0
      %5857 = vmatpush.msra.mxu0 0.0
      %5858 = vmatpush.msra.mxu0 0.0
      %5859 = vmatpush.msra.mxu0 0.0
      %5860 = vmatpush.msra.mxu0 0.0
      %5861 = vmatpush.msra.mxu0 0.0
      %5862 = vmatpush.msra.mxu0 0.0
      %5863 = vmatpush.msra.mxu0 0.0
      %5864 = vmatpush.msra.mxu0 0.0
      %5865 = vmatpush.msra.mxu0 0.0
      %5866 = vmatpush.msra.mxu0 0.0
      %5867 = vmatpush.msra.mxu0 0.0
      %5868 = vmatpush.msra.mxu0 0.0
      %5869 = vmatpush.msra.mxu0 %v5852
      %5870 = vmatmul.f32.gmra.mxu0 %v4229
      %v5871 = vpop.f32.mrf.mxu0
      %v5872 = vadd.f32 %v5708, %v5871
      %5873 = vmatmul.f32.gmra.mxu0 %v4232
      %v5874 = vpop.f32.mrf.mxu0
      %v5875 = vadd.f32 %v5711, %v5874
      %5876 = vmatmul.f32.gmra.mxu0 %v4235
      %v5877 = vpop.f32.mrf.mxu0
      %v5878 = vadd.f32 %v5714, %v5877
      %5879 = vmatmul.f32.gmra.mxu0 %v4238
      %v5880 = vpop.f32.mrf.mxu0
      %v5881 = vadd.f32 %v5717, %v5880
      %5882 = vmatmul.f32.gmra.mxu0 %v4241
      %v5883 = vpop.f32.mrf.mxu0
      %v5884 = vadd.f32 %v5720, %v5883
      %5885 = vmatmul.f32.gmra.mxu0 %v4244
      %v5886 = vpop.f32.mrf.mxu0
      %v5887 = vadd.f32 %v5723, %v5886
      %5888 = vmatmul.f32.gmra.mxu0 %v4247
      %v5889 = vpop.f32.mrf.mxu0
      %v5890 = vadd.f32 %v5726, %v5889
      %5891 = vmatmul.f32.gmra.mxu0 %v4250
      %v5892 = vpop.f32.mrf.mxu0
      %v5893 = vadd.f32 %v5729, %v5892
      %5894 = vmatmul.f32.gmra.mxu0 %v4253
      %v5895 = vpop.f32.mrf.mxu0
      %v5896 = vadd.f32 %v5732, %v5895
      %5897 = vmatmul.f32.gmra.mxu0 %v4256
      %v5898 = vpop.f32.mrf.mxu0
      %v5899 = vadd.f32 %v5735, %v5898
      %5900 = vmatmul.f32.gmra.mxu0 %v4259
      %v5901 = vpop.f32.mrf.mxu0
      %v5902 = vadd.f32 %v5738, %v5901
      %5903 = vmatmul.f32.gmra.mxu0 %v4262
      %v5904 = vpop.f32.mrf.mxu0
      %v5905 = vadd.f32 %v5741, %v5904
      %5906 = vmatmul.f32.gmra.mxu0 %v4265
      %v5907 = vpop.f32.mrf.mxu0
      %v5908 = vadd.f32 %v5744, %v5907
      %5909 = vmatmul.f32.gmra.mxu0 %v4268
      %v5910 = vpop.f32.mrf.mxu0
      %v5911 = vadd.f32 %v5747, %v5910
      %5912 = vmatmul.f32.gmra.mxu0 %v4271
      %v5913 = vpop.f32.mrf.mxu0
      %v5914 = vadd.f32 %v5750, %v5913
      %5915 = vmatmul.f32.gmra.mxu0 %v4274
      %v5916 = vpop.f32.mrf.mxu0
      %v5917 = vadd.f32 %v5753, %v5916
      %5918 = vmatmul.f32.gmra.mxu0 %v4277
      %v5919 = vpop.f32.mrf.mxu0
      %v5920 = vadd.f32 %v5756, %v5919
      %5921 = vmatmul.f32.gmra.mxu0 %v4280
      %v5922 = vpop.f32.mrf.mxu0
      %v5923 = vadd.f32 %v5759, %v5922
      %5924 = vmatmul.f32.gmra.mxu0 %v4283
      %v5925 = vpop.f32.mrf.mxu0
      %v5926 = vadd.f32 %v5762, %v5925
      %5927 = vmatmul.f32.gmra.mxu0 %v4286
      %v5928 = vpop.f32.mrf.mxu0
      %v5929 = vadd.f32 %v5765, %v5928
      %5930 = vmatmul.f32.gmra.mxu0 %v4289
      %v5931 = vpop.f32.mrf.mxu0
      %v5932 = vadd.f32 %v5768, %v5931
      %5933 = vmatmul.f32.gmra.mxu0 %v4292
      %v5934 = vpop.f32.mrf.mxu0
      %v5935 = vadd.f32 %v5771, %v5934
      %5936 = vmatmul.f32.gmra.mxu0 %v4295
      %v5937 = vpop.f32.mrf.mxu0
      %v5938 = vadd.f32 %v5774, %v5937
      %5939 = vmatmul.f32.gmra.mxu0 %v4298
      %v5940 = vpop.f32.mrf.mxu0
      %v5941 = vadd.f32 %v5777, %v5940
      %5942 = vmatmul.f32.gmra.mxu0 %v4301
      %v5943 = vpop.f32.mrf.mxu0
      %v5944 = vadd.f32 %v5780, %v5943
      %5945 = vmatmul.f32.gmra.mxu0 %v4304
      %v5946 = vpop.f32.mrf.mxu0
      %v5947 = vadd.f32 %v5783, %v5946
      %5948 = vmatmul.f32.gmra.mxu0 %v4307
      %v5949 = vpop.f32.mrf.mxu0
      %v5950 = vadd.f32 %v5786, %v5949
      %5951 = vmatmul.f32.gmra.mxu0 %v4310
      %v5952 = vpop.f32.mrf.mxu0
      %v5953 = vadd.f32 %v5789, %v5952
      %5954 = vmatmul.f32.gmra.mxu0 %v4313
      %v5955 = vpop.f32.mrf.mxu0
      %v5956 = vadd.f32 %v5792, %v5955
      %5957 = vmatmul.f32.gmra.mxu0 %v4316
      %v5958 = vpop.f32.mrf.mxu0
      %v5959 = vadd.f32 %v5795, %v5958
      %5960 = vmatmul.f32.gmra.mxu0 %v4319
      %v5961 = vpop.f32.mrf.mxu0
      %v5962 = vadd.f32 %v5798, %v5961
      %5963 = vmatmul.f32.gmra.mxu0 %v4322
      %v5964 = vpop.f32.mrf.mxu0
      %v5965 = vadd.f32 %v5801, %v5964
      %5966 = vmatmul.f32.gmra.mxu0 %v4325
      %v5967 = vpop.f32.mrf.mxu0
      %v5968 = vadd.f32 %v5804, %v5967
      %5969 = vmatmul.f32.gmra.mxu0 %v4328
      %v5970 = vpop.f32.mrf.mxu0
      %v5971 = vadd.f32 %v5807, %v5970
      %5972 = vmatmul.f32.gmra.mxu0 %v4331
      %v5973 = vpop.f32.mrf.mxu0
      %v5974 = vadd.f32 %v5810, %v5973
      %5975 = vmatmul.f32.gmra.mxu0 %v4334
      %v5976 = vpop.f32.mrf.mxu0
      %v5977 = vadd.f32 %v5813, %v5976
      %5978 = vmatmul.f32.gmra.mxu0 %v4337
      %v5979 = vpop.f32.mrf.mxu0
      %v5980 = vadd.f32 %v5816, %v5979
      %5981 = vmatmul.f32.gmra.mxu0 %v4340
      %v5982 = vpop.f32.mrf.mxu0
      %v5983 = vadd.f32 %v5819, %v5982
      %5984 = vmatmul.f32.gmra.mxu0 %v4343
      %v5985 = vpop.f32.mrf.mxu0
      %v5986 = vadd.f32 %v5822, %v5985
      %5987 = vmatmul.f32.gmra.mxu0 %v4346
      %v5988 = vpop.f32.mrf.mxu0
      %v5989 = vadd.f32 %v5825, %v5988
      %5990 = vmatmul.f32.gmra.mxu0 %v4349
      %v5991 = vpop.f32.mrf.mxu0
      %v5992 = vadd.f32 %v5828, %v5991
      %5993 = vmatmul.f32.gmra.mxu0 %v4352
      %v5994 = vpop.f32.mrf.mxu0
      %v5995 = vadd.f32 %v5831, %v5994
      %5996 = vmatmul.f32.gmra.mxu0 %v4355
      %v5997 = vpop.f32.mrf.mxu0
      %v5998 = vadd.f32 %v5834, %v5997
      %5999 = vmatmul.f32.gmra.mxu0 %v4358
      %v6000 = vpop.f32.mrf.mxu0
      %v6001 = vadd.f32 %v5837, %v6000
      %6002 = vmatmul.f32.gmra.mxu0 %v4361
      %v6003 = vpop.f32.mrf.mxu0
      %v6004 = vadd.f32 %v5840, %v6003
      %6005 = vmatmul.f32.gmra.mxu0 %v4364
      %v6006 = vpop.f32.mrf.mxu0
      %v6007 = vadd.f32 %v5843, %v6006
      %6008 = vmatmul.f32.gmra.mxu0 %v4367
      %v6009 = vpop.f32.mrf.mxu0
      %v6010 = vadd.f32 %v5846, %v6009
      %6011 = vmatmul.f32.gmra.mxu0 %v4370
      %v6012 = vpop.f32.mrf.mxu0
      %v6013 = vadd.f32 %v5849, %v6012
      %6014 = vdwg.mxu0
      %s6015 = scalar_lea.vmem %s5, 32
      %v6016 = vld [vmem:[%s6015] sm:$0xf]
      %v6018 = vsel %vm763, %v6016, 0
      %6020 = vmatpush.msra.mxu0 0.0
      %6021 = vmatpush.msra.mxu0 0.0
      %6022 = vmatpush.msra.mxu0 0.0
      %6023 = vmatpush.msra.mxu0 0.0
      %6024 = vmatpush.msra.mxu0 0.0
      %6025 = vmatpush.msra.mxu0 0.0
      %6026 = vmatpush.msra.mxu0 0.0
      %6027 = vmatpush.msra.mxu0 0.0
      %6028 = vmatpush.msra.mxu0 0.0
      %6029 = vmatpush.msra.mxu0 0.0
      %6030 = vmatpush.msra.mxu0 0.0
      %6031 = vmatpush.msra.mxu0 0.0
      %6032 = vmatpush.msra.mxu0 0.0
      %6033 = vmatpush.msra.mxu0 0.0
      %6034 = vmatpush.msra.mxu0 0.0
      %6035 = vmatpush.msra.mxu0 %v6018
      %6036 = vmatmul.f32.gmra.mxu0 %v4587
      %v6037 = vpop.f32.mrf.mxu0
      %v6038 = vadd.f32 0.0, %v6037
      %6039 = vmatmul.f32.gmra.mxu0 %v4590
      %v6040 = vpop.f32.mrf.mxu0
      %v6041 = vadd.f32 0.0, %v6040
      %6042 = vmatmul.f32.gmra.mxu0 %v4593
      %v6043 = vpop.f32.mrf.mxu0
      %v6044 = vadd.f32 0.0, %v6043
      %6045 = vmatmul.f32.gmra.mxu0 %v4596
      %v6046 = vpop.f32.mrf.mxu0
      %v6047 = vadd.f32 0.0, %v6046
      %6048 = vmatmul.f32.gmra.mxu0 %v4599
      %v6049 = vpop.f32.mrf.mxu0
      %v6050 = vadd.f32 0.0, %v6049
      %6051 = vmatmul.f32.gmra.mxu0 %v4602
      %v6052 = vpop.f32.mrf.mxu0
      %v6053 = vadd.f32 0.0, %v6052
      %6054 = vmatmul.f32.gmra.mxu0 %v4605
      %v6055 = vpop.f32.mrf.mxu0
      %v6056 = vadd.f32 0.0, %v6055
      %6057 = vmatmul.f32.gmra.mxu0 %v4608
      %v6058 = vpop.f32.mrf.mxu0
      %v6059 = vadd.f32 0.0, %v6058
      %6060 = vmatmul.f32.gmra.mxu0 %v4611
      %v6061 = vpop.f32.mrf.mxu0
      %v6062 = vadd.f32 0.0, %v6061
      %6063 = vmatmul.f32.gmra.mxu0 %v4614
      %v6064 = vpop.f32.mrf.mxu0
      %v6065 = vadd.f32 0.0, %v6064
      %6066 = vmatmul.f32.gmra.mxu0 %v4617
      %v6067 = vpop.f32.mrf.mxu0
      %v6068 = vadd.f32 0.0, %v6067
      %6069 = vmatmul.f32.gmra.mxu0 %v4620
      %v6070 = vpop.f32.mrf.mxu0
      %v6071 = vadd.f32 0.0, %v6070
      %6072 = vmatmul.f32.gmra.mxu0 %v4623
      %v6073 = vpop.f32.mrf.mxu0
      %v6074 = vadd.f32 0.0, %v6073
      %6075 = vmatmul.f32.gmra.mxu0 %v4626
      %v6076 = vpop.f32.mrf.mxu0
      %v6077 = vadd.f32 0.0, %v6076
      %6078 = vmatmul.f32.gmra.mxu0 %v4629
      %v6079 = vpop.f32.mrf.mxu0
      %v6080 = vadd.f32 0.0, %v6079
      %6081 = vmatmul.f32.gmra.mxu0 %v4632
      %v6082 = vpop.f32.mrf.mxu0
      %v6083 = vadd.f32 0.0, %v6082
      %6084 = vmatmul.f32.gmra.mxu0 %v4635
      %v6085 = vpop.f32.mrf.mxu0
      %v6086 = vadd.f32 0.0, %v6085
      %6087 = vmatmul.f32.gmra.mxu0 %v4638
      %v6088 = vpop.f32.mrf.mxu0
      %v6089 = vadd.f32 0.0, %v6088
      %6090 = vmatmul.f32.gmra.mxu0 %v4641
      %v6091 = vpop.f32.mrf.mxu0
      %v6092 = vadd.f32 0.0, %v6091
      %6093 = vmatmul.f32.gmra.mxu0 %v4644
      %v6094 = vpop.f32.mrf.mxu0
      %v6095 = vadd.f32 0.0, %v6094
      %6096 = vmatmul.f32.gmra.mxu0 %v4647
      %v6097 = vpop.f32.mrf.mxu0
      %v6098 = vadd.f32 0.0, %v6097
      %6099 = vmatmul.f32.gmra.mxu0 %v4650
      %v6100 = vpop.f32.mrf.mxu0
      %v6101 = vadd.f32 0.0, %v6100
      %6102 = vmatmul.f32.gmra.mxu0 %v4653
      %v6103 = vpop.f32.mrf.mxu0
      %v6104 = vadd.f32 0.0, %v6103
      %6105 = vmatmul.f32.gmra.mxu0 %v4656
      %v6106 = vpop.f32.mrf.mxu0
      %v6107 = vadd.f32 0.0, %v6106
      %6108 = vmatmul.f32.gmra.mxu0 %v4659
      %v6109 = vpop.f32.mrf.mxu0
      %v6110 = vadd.f32 0.0, %v6109
      %6111 = vmatmul.f32.gmra.mxu0 %v4662
      %v6112 = vpop.f32.mrf.mxu0
      %v6113 = vadd.f32 0.0, %v6112
      %6114 = vmatmul.f32.gmra.mxu0 %v4665
      %v6115 = vpop.f32.mrf.mxu0
      %v6116 = vadd.f32 0.0, %v6115
      %6117 = vmatmul.f32.gmra.mxu0 %v4668
      %v6118 = vpop.f32.mrf.mxu0
      %v6119 = vadd.f32 0.0, %v6118
      %6120 = vmatmul.f32.gmra.mxu0 %v4671
      %v6121 = vpop.f32.mrf.mxu0
      %v6122 = vadd.f32 0.0, %v6121
      %6123 = vmatmul.f32.gmra.mxu0 %v4674
      %v6124 = vpop.f32.mrf.mxu0
      %v6125 = vadd.f32 0.0, %v6124
      %6126 = vmatmul.f32.gmra.mxu0 %v4677
      %v6127 = vpop.f32.mrf.mxu0
      %v6128 = vadd.f32 0.0, %v6127
      %6129 = vmatmul.f32.gmra.mxu0 %v4680
      %v6130 = vpop.f32.mrf.mxu0
      %v6131 = vadd.f32 0.0, %v6130
      %6132 = vmatmul.f32.gmra.mxu0 %v4683
      %v6133 = vpop.f32.mrf.mxu0
      %v6134 = vadd.f32 0.0, %v6133
      %6135 = vmatmul.f32.gmra.mxu0 %v4686
      %v6136 = vpop.f32.mrf.mxu0
      %v6137 = vadd.f32 0.0, %v6136
      %6138 = vmatmul.f32.gmra.mxu0 %v4689
      %v6139 = vpop.f32.mrf.mxu0
      %v6140 = vadd.f32 0.0, %v6139
      %6141 = vmatmul.f32.gmra.mxu0 %v4692
      %v6142 = vpop.f32.mrf.mxu0
      %v6143 = vadd.f32 0.0, %v6142
      %6144 = vmatmul.f32.gmra.mxu0 %v4695
      %v6145 = vpop.f32.mrf.mxu0
      %v6146 = vadd.f32 0.0, %v6145
      %6147 = vmatmul.f32.gmra.mxu0 %v4698
      %v6148 = vpop.f32.mrf.mxu0
      %v6149 = vadd.f32 0.0, %v6148
      %6150 = vmatmul.f32.gmra.mxu0 %v4701
      %v6151 = vpop.f32.mrf.mxu0
      %v6152 = vadd.f32 0.0, %v6151
      %6153 = vmatmul.f32.gmra.mxu0 %v4704
      %v6154 = vpop.f32.mrf.mxu0
      %v6155 = vadd.f32 0.0, %v6154
      %6156 = vmatmul.f32.gmra.mxu0 %v4707
      %v6157 = vpop.f32.mrf.mxu0
      %v6158 = vadd.f32 0.0, %v6157
      %6159 = vmatmul.f32.gmra.mxu0 %v4710
      %v6160 = vpop.f32.mrf.mxu0
      %v6161 = vadd.f32 0.0, %v6160
      %6162 = vmatmul.f32.gmra.mxu0 %v4713
      %v6163 = vpop.f32.mrf.mxu0
      %v6164 = vadd.f32 0.0, %v6163
      %6165 = vmatmul.f32.gmra.mxu0 %v4716
      %v6166 = vpop.f32.mrf.mxu0
      %v6167 = vadd.f32 0.0, %v6166
      %6168 = vmatmul.f32.gmra.mxu0 %v4719
      %v6169 = vpop.f32.mrf.mxu0
      %v6170 = vadd.f32 0.0, %v6169
      %6171 = vmatmul.f32.gmra.mxu0 %v4722
      %v6172 = vpop.f32.mrf.mxu0
      %v6173 = vadd.f32 0.0, %v6172
      %6174 = vmatmul.f32.gmra.mxu0 %v4725
      %v6175 = vpop.f32.mrf.mxu0
      %v6176 = vadd.f32 0.0, %v6175
      %6177 = vmatmul.f32.gmra.mxu0 %v4728
      %v6178 = vpop.f32.mrf.mxu0
      %v6179 = vadd.f32 0.0, %v6178
      %6180 = vdwg.mxu0
      %v6181 = vadd.f32 %v5872, %v6038
      %v6182 = vadd.f32 %v5875, %v6041
      %v6183 = vadd.f32 %v5878, %v6044
      %v6184 = vadd.f32 %v5881, %v6047
      %v6185 = vadd.f32 %v5884, %v6050
      %v6186 = vadd.f32 %v5887, %v6053
      %v6187 = vadd.f32 %v5890, %v6056
      %v6188 = vadd.f32 %v5893, %v6059
      %v6189 = vadd.f32 %v5896, %v6062
      %v6190 = vadd.f32 %v5899, %v6065
      %v6191 = vadd.f32 %v5902, %v6068
      %v6192 = vadd.f32 %v5905, %v6071
      %v6193 = vadd.f32 %v5908, %v6074
      %v6194 = vadd.f32 %v5911, %v6077
      %v6195 = vadd.f32 %v5914, %v6080
      %v6196 = vadd.f32 %v5917, %v6083
      %v6197 = vadd.f32 %v5920, %v6086
      %v6198 = vadd.f32 %v5923, %v6089
      %v6199 = vadd.f32 %v5926, %v6092
      %v6200 = vadd.f32 %v5929, %v6095
      %v6201 = vadd.f32 %v5932, %v6098
      %v6202 = vadd.f32 %v5935, %v6101
      %v6203 = vadd.f32 %v5938, %v6104
      %v6204 = vadd.f32 %v5941, %v6107
      %v6205 = vadd.f32 %v5944, %v6110
      %v6206 = vadd.f32 %v5947, %v6113
      %v6207 = vadd.f32 %v5950, %v6116
      %v6208 = vadd.f32 %v5953, %v6119
      %v6209 = vadd.f32 %v5956, %v6122
      %v6210 = vadd.f32 %v5959, %v6125
      %v6211 = vadd.f32 %v5962, %v6128
      %v6212 = vadd.f32 %v5965, %v6131
      %v6213 = vadd.f32 %v5968, %v6134
      %v6214 = vadd.f32 %v5971, %v6137
      %v6215 = vadd.f32 %v5974, %v6140
      %v6216 = vadd.f32 %v5977, %v6143
      %v6217 = vadd.f32 %v5980, %v6146
      %v6218 = vadd.f32 %v5983, %v6149
      %v6219 = vadd.f32 %v5986, %v6152
      %v6220 = vadd.f32 %v5989, %v6155
      %v6221 = vadd.f32 %v5992, %v6158
      %v6222 = vadd.f32 %v5995, %v6161
      %v6223 = vadd.f32 %v5998, %v6164
      %v6224 = vadd.f32 %v6001, %v6167
      %v6225 = vadd.f32 %v6004, %v6170
      %v6226 = vadd.f32 %v6007, %v6173
      %v6227 = vadd.f32 %v6010, %v6176
      %v6228 = vadd.f32 %v6013, %v6179
      %v6229 = vrot.slane %v6181, 1
      %v6230 = vrot.slane %v6182, 1
      %v6231 = vrot.slane %v6183, 1
      %v6232 = vrot.slane %v6184, 1
      %v6233 = vrot.slane %v6185, 1
      %v6234 = vrot.slane %v6186, 1
      %v6235 = vrot.slane %v6187, 1
      %v6236 = vrot.slane %v6188, 1
      %v6237 = vrot.slane %v6189, 1
      %v6238 = vrot.slane %v6190, 1
      %v6239 = vrot.slane %v6191, 1
      %v6240 = vrot.slane %v6192, 1
      %v6241 = vrot.slane %v6193, 1
      %v6242 = vrot.slane %v6194, 1
      %v6243 = vrot.slane %v6195, 1
      %v6244 = vrot.slane %v6196, 1
      %v6245 = vrot.slane %v6197, 1
      %v6246 = vrot.slane %v6198, 1
      %v6247 = vrot.slane %v6199, 1
      %v6248 = vrot.slane %v6200, 1
      %v6249 = vrot.slane %v6201, 1
      %v6250 = vrot.slane %v6202, 1
      %v6251 = vrot.slane %v6203, 1
      %v6252 = vrot.slane %v6204, 1
      %v6253 = vrot.slane %v6205, 1
      %v6254 = vrot.slane %v6206, 1
      %v6255 = vrot.slane %v6207, 1
      %v6256 = vrot.slane %v6208, 1
      %v6257 = vrot.slane %v6209, 1
      %v6258 = vrot.slane %v6210, 1
      %v6259 = vrot.slane %v6211, 1
      %v6260 = vrot.slane %v6212, 1
      %v6261 = vrot.slane %v6213, 1
      %v6262 = vrot.slane %v6214, 1
      %v6263 = vrot.slane %v6215, 1
      %v6264 = vrot.slane %v6216, 1
      %v6265 = vrot.slane %v6217, 1
      %v6266 = vrot.slane %v6218, 1
      %v6267 = vrot.slane %v6219, 1
      %v6268 = vrot.slane %v6220, 1
      %v6269 = vrot.slane %v6221, 1
      %v6270 = vrot.slane %v6222, 1
      %v6271 = vrot.slane %v6223, 1
      %v6272 = vrot.slane %v6224, 1
      %v6273 = vrot.slane %v6225, 1
      %v6274 = vrot.slane %v6226, 1
      %v6275 = vrot.slane %v6227, 1
      %v6276 = vrot.slane %v6228, 1
      %v6277 = vsel %vm2978, %v6275, %v6276
      %v6278 = vsel %vm2978, %v6274, %v6275
      %v6279 = vsel %vm2978, %v6273, %v6274
      %v6280 = vsel %vm2978, %v6272, %v6273
      %v6281 = vsel %vm2978, %v6271, %v6272
      %v6282 = vsel %vm2978, %v6270, %v6271
      %v6283 = vsel %vm2978, %v6269, %v6270
      %v6284 = vsel %vm2978, %v6268, %v6269
      %v6285 = vsel %vm2978, %v6267, %v6268
      %v6286 = vsel %vm2978, %v6266, %v6267
      %v6287 = vsel %vm2978, %v6265, %v6266
      %v6288 = vsel %vm2978, %v6264, %v6265
      %v6289 = vsel %vm2978, %v6263, %v6264
      %v6290 = vsel %vm2978, %v6262, %v6263
      %v6291 = vsel %vm2978, %v6261, %v6262
      %v6292 = vsel %vm2978, %v6260, %v6261
      %v6293 = vsel %vm2978, %v6259, %v6260
      %v6294 = vsel %vm2978, %v6258, %v6259
      %v6295 = vsel %vm2978, %v6257, %v6258
      %v6296 = vsel %vm2978, %v6256, %v6257
      %v6297 = vsel %vm2978, %v6255, %v6256
      %v6298 = vsel %vm2978, %v6254, %v6255
      %v6299 = vsel %vm2978, %v6253, %v6254
      %v6300 = vsel %vm2978, %v6252, %v6253
      %v6301 = vsel %vm2978, %v6251, %v6252
      %v6302 = vsel %vm2978, %v6250, %v6251
      %v6303 = vsel %vm2978, %v6249, %v6250
      %v6304 = vsel %vm2978, %v6248, %v6249
      %v6305 = vsel %vm2978, %v6247, %v6248
      %v6306 = vsel %vm2978, %v6246, %v6247
      %v6307 = vsel %vm2978, %v6245, %v6246
      %v6308 = vsel %vm2978, %v6244, %v6245
      %v6309 = vsel %vm2978, %v6243, %v6244
      %v6310 = vsel %vm2978, %v6242, %v6243
      %v6311 = vsel %vm2978, %v6241, %v6242
      %v6312 = vsel %vm2978, %v6240, %v6241
      %v6313 = vsel %vm2978, %v6239, %v6240
      %v6314 = vsel %vm2978, %v6238, %v6239
      %v6315 = vsel %vm2978, %v6237, %v6238
      %v6316 = vsel %vm2978, %v6236, %v6237
      %v6317 = vsel %vm2978, %v6235, %v6236
      %v6318 = vsel %vm2978, %v6234, %v6235
      %v6319 = vsel %vm2978, %v6233, %v6234
      %v6320 = vsel %vm2978, %v6232, %v6233
      %v6321 = vsel %vm2978, %v6231, %v6232
      %v6322 = vsel %vm2978, %v6230, %v6231
      %v6323 = vsel %vm2978, %v6229, %v6230
      %v6324 = vsel %vm2978, %v6276, %v6229
      %v6325 = vadd.f32 %v5635, %v6323
      %v6326 = vadd.f32 %v5636, %v6322
      %v6327 = vadd.f32 %v5637, %v6321
      %v6328 = vadd.f32 %v5638, %v6320
      %v6329 = vadd.f32 %v5639, %v6319
      %v6330 = vadd.f32 %v5640, %v6318
      %v6331 = vadd.f32 %v5641, %v6317
      %v6332 = vadd.f32 %v5642, %v6316
      %v6333 = vadd.f32 %v5643, %v6315
      %v6334 = vadd.f32 %v5644, %v6314
      %v6335 = vadd.f32 %v5645, %v6313
      %v6336 = vadd.f32 %v5646, %v6312
      %v6337 = vadd.f32 %v5647, %v6311
      %v6338 = vadd.f32 %v5648, %v6310
      %v6339 = vadd.f32 %v5649, %v6309
      %v6340 = vadd.f32 %v5650, %v6308
      %v6341 = vadd.f32 %v5651, %v6307
      %v6342 = vadd.f32 %v5652, %v6306
      %v6343 = vadd.f32 %v5653, %v6305
      %v6344 = vadd.f32 %v5654, %v6304
      %v6345 = vadd.f32 %v5655, %v6303
      %v6346 = vadd.f32 %v5656, %v6302
      %v6347 = vadd.f32 %v5657, %v6301
      %v6348 = vadd.f32 %v5658, %v6300
      %v6349 = vadd.f32 %v5659, %v6299
      %v6350 = vadd.f32 %v5660, %v6298
      %v6351 = vadd.f32 %v5661, %v6297
      %v6352 = vadd.f32 %v5662, %v6296
      %v6353 = vadd.f32 %v5663, %v6295
      %v6354 = vadd.f32 %v5664, %v6294
      %v6355 = vadd.f32 %v5665, %v6293
      %v6356 = vadd.f32 %v5666, %v6292
      %v6357 = vadd.f32 %v5667, %v6291
      %v6358 = vadd.f32 %v5668, %v6290
      %v6359 = vadd.f32 %v5669, %v6289
      %v6360 = vadd.f32 %v5670, %v6288
      %v6361 = vadd.f32 %v5671, %v6287
      %v6362 = vadd.f32 %v5672, %v6286
      %v6363 = vadd.f32 %v5673, %v6285
      %v6364 = vadd.f32 %v5674, %v6284
      %v6365 = vadd.f32 %v5675, %v6283
      %v6366 = vadd.f32 %v5676, %v6282
      %v6367 = vadd.f32 %v5677, %v6281
      %v6368 = vadd.f32 %v5678, %v6280
      %v6369 = vadd.f32 %v5679, %v6279
      %v6370 = vadd.f32 %v5680, %v6278
      %v6371 = vadd.f32 %v5681, %v6277
      %v6372 = vadd.f32 %v5682, %v6324
      %v6373 = vld [vmem:[%s7] sm:$0x1]
      %v6374 = vld [vmem:[%s8] sm:$0x1]
      %v6375 = vsel %vm3080, %v6325, 0.0
      %v6376 = vsel %vm3081, %v6326, 0.0
      %v6377 = vsel %vm3082, %v6327, 0.0
      %v6378 = vsel %vm3080, %v6328, 0.0
      %v6379 = vsel %vm3081, %v6329, 0.0
      %v6380 = vsel %vm3082, %v6330, 0.0
      %v6381 = vsel %vm3080, %v6331, 0.0
      %v6382 = vsel %vm3081, %v6332, 0.0
      %v6383 = vsel %vm3082, %v6333, 0.0
      %v6384 = vsel %vm3080, %v6334, 0.0
      %v6385 = vsel %vm3081, %v6335, 0.0
      %v6386 = vsel %vm3082, %v6336, 0.0
      %v6387 = vsel %vm3080, %v6337, 0.0
      %v6388 = vsel %vm3081, %v6338, 0.0
      %v6389 = vsel %vm3082, %v6339, 0.0
      %v6390 = vsel %vm3080, %v6340, 0.0
      %v6391 = vsel %vm3081, %v6341, 0.0
      %v6392 = vsel %vm3082, %v6342, 0.0
      %v6393 = vsel %vm3080, %v6343, 0.0
      %v6394 = vsel %vm3081, %v6344, 0.0
      %v6395 = vsel %vm3082, %v6345, 0.0
      %v6396 = vsel %vm3080, %v6346, 0.0
      %v6397 = vsel %vm3081, %v6347, 0.0
      %v6398 = vsel %vm3082, %v6348, 0.0
      %v6399 = vsel %vm3080, %v6349, 0.0
      %v6400 = vsel %vm3081, %v6350, 0.0
      %v6401 = vsel %vm3082, %v6351, 0.0
      %v6402 = vsel %vm3080, %v6352, 0.0
      %v6403 = vsel %vm3081, %v6353, 0.0
      %v6404 = vsel %vm3082, %v6354, 0.0
      %v6405 = vsel %vm3080, %v6355, 0.0
      %v6406 = vsel %vm3081, %v6356, 0.0
      %v6407 = vsel %vm3082, %v6357, 0.0
      %v6408 = vsel %vm3080, %v6358, 0.0
      %v6409 = vsel %vm3081, %v6359, 0.0
      %v6410 = vsel %vm3082, %v6360, 0.0
      %v6411 = vsel %vm3080, %v6361, 0.0
      %v6412 = vsel %vm3081, %v6362, 0.0
      %v6413 = vsel %vm3082, %v6363, 0.0
      %v6414 = vsel %vm3080, %v6364, 0.0
      %v6415 = vsel %vm3081, %v6365, 0.0
      %v6416 = vsel %vm3082, %v6366, 0.0
      %v6417 = vsel %vm3080, %v6367, 0.0
      %v6418 = vsel %vm3081, %v6368, 0.0
      %v6419 = vsel %vm3082, %v6369, 0.0
      %v6420 = vsel %vm3080, %v6370, 0.0
      %v6421 = vsel %vm3081, %v6371, 0.0
      %v6422 = vsel %vm3082, %v6372, 0.0
      %v6423 = vsel %vm398, %v6375, 0.0
      %v6424 = vsel %vm398, %v6376, 0.0
      %v6425 = vadd.f32 %v6423, %v6424
      %v6426 = vsel %vm398, %v6377, 0.0
      %v6427 = vadd.f32 %v6425, %v6426
      %v6428 = vsel %vm398, %v6378, 0.0
      %v6429 = vadd.f32 %v6427, %v6428
      %v6430 = vsel %vm398, %v6379, 0.0
      %v6431 = vadd.f32 %v6429, %v6430
      %v6432 = vsel %vm398, %v6380, 0.0
      %v6433 = vadd.f32 %v6431, %v6432
      %v6434 = vsel %vm398, %v6381, 0.0
      %v6435 = vadd.f32 %v6433, %v6434
      %v6436 = vsel %vm398, %v6382, 0.0
      %v6437 = vadd.f32 %v6435, %v6436
      %v6438 = vsel %vm398, %v6383, 0.0
      %v6439 = vadd.f32 %v6437, %v6438
      %v6440 = vsel %vm398, %v6384, 0.0
      %v6441 = vadd.f32 %v6439, %v6440
      %v6442 = vsel %vm398, %v6385, 0.0
      %v6443 = vadd.f32 %v6441, %v6442
      %v6444 = vsel %vm398, %v6386, 0.0
      %v6445 = vadd.f32 %v6443, %v6444
      %v6446 = vsel %vm398, %v6387, 0.0
      %v6447 = vadd.f32 %v6445, %v6446
      %v6448 = vsel %vm398, %v6388, 0.0
      %v6449 = vadd.f32 %v6447, %v6448
      %v6450 = vsel %vm398, %v6389, 0.0
      %v6451 = vadd.f32 %v6449, %v6450
      %v6452 = vsel %vm398, %v6390, 0.0
      %v6453 = vadd.f32 %v6451, %v6452
      %v6454 = vsel %vm398, %v6391, 0.0
      %v6455 = vadd.f32 %v6453, %v6454
      %v6456 = vsel %vm398, %v6392, 0.0
      %v6457 = vadd.f32 %v6455, %v6456
      %v6458 = vsel %vm398, %v6393, 0.0
      %v6459 = vadd.f32 %v6457, %v6458
      %v6460 = vsel %vm398, %v6394, 0.0
      %v6461 = vadd.f32 %v6459, %v6460
      %v6462 = vsel %vm398, %v6395, 0.0
      %v6463 = vadd.f32 %v6461, %v6462
      %v6464 = vsel %vm398, %v6396, 0.0
      %v6465 = vadd.f32 %v6463, %v6464
      %v6466 = vsel %vm398, %v6397, 0.0
      %v6467 = vadd.f32 %v6465, %v6466
      %v6468 = vsel %vm398, %v6398, 0.0
      %v6469 = vadd.f32 %v6467, %v6468
      %v6470 = vsel %vm398, %v6399, 0.0
      %v6471 = vadd.f32 %v6469, %v6470
      %v6472 = vsel %vm398, %v6400, 0.0
      %v6473 = vadd.f32 %v6471, %v6472
      %v6474 = vsel %vm398, %v6401, 0.0
      %v6475 = vadd.f32 %v6473, %v6474
      %v6476 = vsel %vm398, %v6402, 0.0
      %v6477 = vadd.f32 %v6475, %v6476
      %v6478 = vsel %vm398, %v6403, 0.0
      %v6479 = vadd.f32 %v6477, %v6478
      %v6480 = vsel %vm398, %v6404, 0.0
      %v6481 = vadd.f32 %v6479, %v6480
      %v6482 = vsel %vm398, %v6405, 0.0
      %v6483 = vadd.f32 %v6481, %v6482
      %v6484 = vsel %vm398, %v6406, 0.0
      %v6485 = vadd.f32 %v6483, %v6484
      %v6486 = vsel %vm398, %v6407, 0.0
      %v6487 = vadd.f32 %v6485, %v6486
      %v6488 = vsel %vm398, %v6408, 0.0
      %v6489 = vadd.f32 %v6487, %v6488
      %v6490 = vsel %vm398, %v6409, 0.0
      %v6491 = vadd.f32 %v6489, %v6490
      %v6492 = vsel %vm398, %v6410, 0.0
      %v6493 = vadd.f32 %v6491, %v6492
      %v6494 = vsel %vm398, %v6411, 0.0
      %v6495 = vadd.f32 %v6493, %v6494
      %v6496 = vsel %vm398, %v6412, 0.0
      %v6497 = vadd.f32 %v6495, %v6496
      %v6498 = vsel %vm398, %v6413, 0.0
      %v6499 = vadd.f32 %v6497, %v6498
      %v6500 = vsel %vm398, %v6414, 0.0
      %v6501 = vadd.f32 %v6499, %v6500
      %v6502 = vsel %vm398, %v6415, 0.0
      %v6503 = vadd.f32 %v6501, %v6502
      %v6504 = vsel %vm398, %v6416, 0.0
      %v6505 = vadd.f32 %v6503, %v6504
      %v6506 = vsel %vm398, %v6417, 0.0
      %v6507 = vadd.f32 %v6505, %v6506
      %v6508 = vsel %vm398, %v6418, 0.0
      %v6509 = vadd.f32 %v6507, %v6508
      %v6510 = vsel %vm398, %v6419, 0.0
      %v6511 = vadd.f32 %v6509, %v6510
      %v6512 = vsel %vm398, %v6420, 0.0
      %v6513 = vadd.f32 %v6511, %v6512
      %v6514 = vsel %vm398, %v6421, 0.0
      %v6515 = vadd.f32 %v6513, %v6514
      %v6516 = vsel %vm398, %v6422, 0.0
      %v6517 = vadd.f32 %v6515, %v6516
      %v6518 = vrot.slane %v6517, 4
      %v6519 = vadd.f32 %v6517, %v6518
      %v6520 = vrot.slane %v6519, 2
      %v6521 = vadd.f32 %v6519, %v6520
      %v6522 = vrot.slane %v6521, 1
      %v6523 = vadd.f32 %v6521, %v6522
      %v6524 = vmul.f32 %v6523, 0.00390625
      %v6525 = vsub.f32 %v6325, %v6524
      %v6526 = vsub.f32 %v6326, %v6524
      %v6527 = vsub.f32 %v6327, %v6524
      %v6528 = vsub.f32 %v6328, %v6524
      %v6529 = vsub.f32 %v6329, %v6524
      %v6530 = vsub.f32 %v6330, %v6524
      %v6531 = vsub.f32 %v6331, %v6524
      %v6532 = vsub.f32 %v6332, %v6524
      %v6533 = vsub.f32 %v6333, %v6524
      %v6534 = vsub.f32 %v6334, %v6524
      %v6535 = vsub.f32 %v6335, %v6524
      %v6536 = vsub.f32 %v6336, %v6524
      %v6537 = vsub.f32 %v6337, %v6524
      %v6538 = vsub.f32 %v6338, %v6524
      %v6539 = vsub.f32 %v6339, %v6524
      %v6540 = vsub.f32 %v6340, %v6524
      %v6541 = vsub.f32 %v6341, %v6524
      %v6542 = vsub.f32 %v6342, %v6524
      %v6543 = vsub.f32 %v6343, %v6524
      %v6544 = vsub.f32 %v6344, %v6524
      %v6545 = vsub.f32 %v6345, %v6524
      %v6546 = vsub.f32 %v6346, %v6524
      %v6547 = vsub.f32 %v6347, %v6524
      %v6548 = vsub.f32 %v6348, %v6524
      %v6549 = vsub.f32 %v6349, %v6524
      %v6550 = vsub.f32 %v6350, %v6524
      %v6551 = vsub.f32 %v6351, %v6524
      %v6552 = vsub.f32 %v6352, %v6524
      %v6553 = vsub.f32 %v6353, %v6524
      %v6554 = vsub.f32 %v6354, %v6524
      %v6555 = vsub.f32 %v6355, %v6524
      %v6556 = vsub.f32 %v6356, %v6524
      %v6557 = vsub.f32 %v6357, %v6524
      %v6558 = vsub.f32 %v6358, %v6524
      %v6559 = vsub.f32 %v6359, %v6524
      %v6560 = vsub.f32 %v6360, %v6524
      %v6561 = vsub.f32 %v6361, %v6524
      %v6562 = vsub.f32 %v6362, %v6524
      %v6563 = vsub.f32 %v6363, %v6524
      %v6564 = vsub.f32 %v6364, %v6524
      %v6565 = vsub.f32 %v6365, %v6524
      %v6566 = vsub.f32 %v6366, %v6524
      %v6567 = vsub.f32 %v6367, %v6524
      %v6568 = vsub.f32 %v6368, %v6524
      %v6569 = vsub.f32 %v6369, %v6524
      %v6570 = vsub.f32 %v6370, %v6524
      %v6571 = vsub.f32 %v6371, %v6524
      %v6572 = vsub.f32 %v6372, %v6524
      %v6573 = vmul.f32 %v6525, %v6525
      %v6574 = vmul.f32 %v6526, %v6526
      %v6575 = vmul.f32 %v6527, %v6527
      %v6576 = vmul.f32 %v6528, %v6528
      %v6577 = vmul.f32 %v6529, %v6529
      %v6578 = vmul.f32 %v6530, %v6530
      %v6579 = vmul.f32 %v6531, %v6531
      %v6580 = vmul.f32 %v6532, %v6532
      %v6581 = vmul.f32 %v6533, %v6533
      %v6582 = vmul.f32 %v6534, %v6534
      %v6583 = vmul.f32 %v6535, %v6535
      %v6584 = vmul.f32 %v6536, %v6536
      %v6585 = vmul.f32 %v6537, %v6537
      %v6586 = vmul.f32 %v6538, %v6538
      %v6587 = vmul.f32 %v6539, %v6539
      %v6588 = vmul.f32 %v6540, %v6540
      %v6589 = vmul.f32 %v6541, %v6541
      %v6590 = vmul.f32 %v6542, %v6542
      %v6591 = vmul.f32 %v6543, %v6543
      %v6592 = vmul.f32 %v6544, %v6544
      %v6593 = vmul.f32 %v6545, %v6545
      %v6594 = vmul.f32 %v6546, %v6546
      %v6595 = vmul.f32 %v6547, %v6547
      %v6596 = vmul.f32 %v6548, %v6548
      %v6597 = vmul.f32 %v6549, %v6549
      %v6598 = vmul.f32 %v6550, %v6550
      %v6599 = vmul.f32 %v6551, %v6551
      %v6600 = vmul.f32 %v6552, %v6552
      %v6601 = vmul.f32 %v6553, %v6553
      %v6602 = vmul.f32 %v6554, %v6554
      %v6603 = vmul.f32 %v6555, %v6555
      %v6604 = vmul.f32 %v6556, %v6556
      %v6605 = vmul.f32 %v6557, %v6557
      %v6606 = vmul.f32 %v6558, %v6558
      %v6607 = vmul.f32 %v6559, %v6559
      %v6608 = vmul.f32 %v6560, %v6560
      %v6609 = vmul.f32 %v6561, %v6561
      %v6610 = vmul.f32 %v6562, %v6562
      %v6611 = vmul.f32 %v6563, %v6563
      %v6612 = vmul.f32 %v6564, %v6564
      %v6613 = vmul.f32 %v6565, %v6565
      %v6614 = vmul.f32 %v6566, %v6566
      %v6615 = vmul.f32 %v6567, %v6567
      %v6616 = vmul.f32 %v6568, %v6568
      %v6617 = vmul.f32 %v6569, %v6569
      %v6618 = vmul.f32 %v6570, %v6570
      %v6619 = vmul.f32 %v6571, %v6571
      %v6620 = vmul.f32 %v6572, %v6572
      %v6621 = vsel %vm3080, %v6573, 0.0
      %v6622 = vsel %vm3081, %v6574, 0.0
      %v6623 = vsel %vm3082, %v6575, 0.0
      %v6624 = vsel %vm3080, %v6576, 0.0
      %v6625 = vsel %vm3081, %v6577, 0.0
      %v6626 = vsel %vm3082, %v6578, 0.0
      %v6627 = vsel %vm3080, %v6579, 0.0
      %v6628 = vsel %vm3081, %v6580, 0.0
      %v6629 = vsel %vm3082, %v6581, 0.0
      %v6630 = vsel %vm3080, %v6582, 0.0
      %v6631 = vsel %vm3081, %v6583, 0.0
      %v6632 = vsel %vm3082, %v6584, 0.0
      %v6633 = vsel %vm3080, %v6585, 0.0
      %v6634 = vsel %vm3081, %v6586, 0.0
      %v6635 = vsel %vm3082, %v6587, 0.0
      %v6636 = vsel %vm3080, %v6588, 0.0
      %v6637 = vsel %vm3081, %v6589, 0.0
      %v6638 = vsel %vm3082, %v6590, 0.0
      %v6639 = vsel %vm3080, %v6591, 0.0
      %v6640 = vsel %vm3081, %v6592, 0.0
      %v6641 = vsel %vm3082, %v6593, 0.0
      %v6642 = vsel %vm3080, %v6594, 0.0
      %v6643 = vsel %vm3081, %v6595, 0.0
      %v6644 = vsel %vm3082, %v6596, 0.0
      %v6645 = vsel %vm3080, %v6597, 0.0
      %v6646 = vsel %vm3081, %v6598, 0.0
      %v6647 = vsel %vm3082, %v6599, 0.0
      %v6648 = vsel %vm3080, %v6600, 0.0
      %v6649 = vsel %vm3081, %v6601, 0.0
      %v6650 = vsel %vm3082, %v6602, 0.0
      %v6651 = vsel %vm3080, %v6603, 0.0
      %v6652 = vsel %vm3081, %v6604, 0.0
      %v6653 = vsel %vm3082, %v6605, 0.0
      %v6654 = vsel %vm3080, %v6606, 0.0
      %v6655 = vsel %vm3081, %v6607, 0.0
      %v6656 = vsel %vm3082, %v6608, 0.0
      %v6657 = vsel %vm3080, %v6609, 0.0
      %v6658 = vsel %vm3081, %v6610, 0.0
      %v6659 = vsel %vm3082, %v6611, 0.0
      %v6660 = vsel %vm3080, %v6612, 0.0
      %v6661 = vsel %vm3081, %v6613, 0.0
      %v6662 = vsel %vm3082, %v6614, 0.0
      %v6663 = vsel %vm3080, %v6615, 0.0
      %v6664 = vsel %vm3081, %v6616, 0.0
      %v6665 = vsel %vm3082, %v6617, 0.0
      %v6666 = vsel %vm3080, %v6618, 0.0
      %v6667 = vsel %vm3081, %v6619, 0.0
      %v6668 = vsel %vm3082, %v6620, 0.0
      %v6669 = vsel %vm398, %v6621, 0.0
      %v6670 = vsel %vm398, %v6622, 0.0
      %v6671 = vadd.f32 %v6669, %v6670
      %v6672 = vsel %vm398, %v6623, 0.0
      %v6673 = vadd.f32 %v6671, %v6672
      %v6674 = vsel %vm398, %v6624, 0.0
      %v6675 = vadd.f32 %v6673, %v6674
      %v6676 = vsel %vm398, %v6625, 0.0
      %v6677 = vadd.f32 %v6675, %v6676
      %v6678 = vsel %vm398, %v6626, 0.0
      %v6679 = vadd.f32 %v6677, %v6678
      %v6680 = vsel %vm398, %v6627, 0.0
      %v6681 = vadd.f32 %v6679, %v6680
      %v6682 = vsel %vm398, %v6628, 0.0
      %v6683 = vadd.f32 %v6681, %v6682
      %v6684 = vsel %vm398, %v6629, 0.0
      %v6685 = vadd.f32 %v6683, %v6684
      %v6686 = vsel %vm398, %v6630, 0.0
      %v6687 = vadd.f32 %v6685, %v6686
      %v6688 = vsel %vm398, %v6631, 0.0
      %v6689 = vadd.f32 %v6687, %v6688
      %v6690 = vsel %vm398, %v6632, 0.0
      %v6691 = vadd.f32 %v6689, %v6690
      %v6692 = vsel %vm398, %v6633, 0.0
      %v6693 = vadd.f32 %v6691, %v6692
      %v6694 = vsel %vm398, %v6634, 0.0
      %v6695 = vadd.f32 %v6693, %v6694
      %v6696 = vsel %vm398, %v6635, 0.0
      %v6697 = vadd.f32 %v6695, %v6696
      %v6698 = vsel %vm398, %v6636, 0.0
      %v6699 = vadd.f32 %v6697, %v6698
      %v6700 = vsel %vm398, %v6637, 0.0
      %v6701 = vadd.f32 %v6699, %v6700
      %v6702 = vsel %vm398, %v6638, 0.0
      %v6703 = vadd.f32 %v6701, %v6702
      %v6704 = vsel %vm398, %v6639, 0.0
      %v6705 = vadd.f32 %v6703, %v6704
      %v6706 = vsel %vm398, %v6640, 0.0
      %v6707 = vadd.f32 %v6705, %v6706
      %v6708 = vsel %vm398, %v6641, 0.0
      %v6709 = vadd.f32 %v6707, %v6708
      %v6710 = vsel %vm398, %v6642, 0.0
      %v6711 = vadd.f32 %v6709, %v6710
      %v6712 = vsel %vm398, %v6643, 0.0
      %v6713 = vadd.f32 %v6711, %v6712
      %v6714 = vsel %vm398, %v6644, 0.0
      %v6715 = vadd.f32 %v6713, %v6714
      %v6716 = vsel %vm398, %v6645, 0.0
      %v6717 = vadd.f32 %v6715, %v6716
      %v6718 = vsel %vm398, %v6646, 0.0
      %v6719 = vadd.f32 %v6717, %v6718
      %v6720 = vsel %vm398, %v6647, 0.0
      %v6721 = vadd.f32 %v6719, %v6720
      %v6722 = vsel %vm398, %v6648, 0.0
      %v6723 = vadd.f32 %v6721, %v6722
      %v6724 = vsel %vm398, %v6649, 0.0
      %v6725 = vadd.f32 %v6723, %v6724
      %v6726 = vsel %vm398, %v6650, 0.0
      %v6727 = vadd.f32 %v6725, %v6726
      %v6728 = vsel %vm398, %v6651, 0.0
      %v6729 = vadd.f32 %v6727, %v6728
      %v6730 = vsel %vm398, %v6652, 0.0
      %v6731 = vadd.f32 %v6729, %v6730
      %v6732 = vsel %vm398, %v6653, 0.0
      %v6733 = vadd.f32 %v6731, %v6732
      %v6734 = vsel %vm398, %v6654, 0.0
      %v6735 = vadd.f32 %v6733, %v6734
      %v6736 = vsel %vm398, %v6655, 0.0
      %v6737 = vadd.f32 %v6735, %v6736
      %v6738 = vsel %vm398, %v6656, 0.0
      %v6739 = vadd.f32 %v6737, %v6738
      %v6740 = vsel %vm398, %v6657, 0.0
      %v6741 = vadd.f32 %v6739, %v6740
      %v6742 = vsel %vm398, %v6658, 0.0
      %v6743 = vadd.f32 %v6741, %v6742
      %v6744 = vsel %vm398, %v6659, 0.0
      %v6745 = vadd.f32 %v6743, %v6744
      %v6746 = vsel %vm398, %v6660, 0.0
      %v6747 = vadd.f32 %v6745, %v6746
      %v6748 = vsel %vm398, %v6661, 0.0
      %v6749 = vadd.f32 %v6747, %v6748
      %v6750 = vsel %vm398, %v6662, 0.0
      %v6751 = vadd.f32 %v6749, %v6750
      %v6752 = vsel %vm398, %v6663, 0.0
      %v6753 = vadd.f32 %v6751, %v6752
      %v6754 = vsel %vm398, %v6664, 0.0
      %v6755 = vadd.f32 %v6753, %v6754
      %v6756 = vsel %vm398, %v6665, 0.0
      %v6757 = vadd.f32 %v6755, %v6756
      %v6758 = vsel %vm398, %v6666, 0.0
      %v6759 = vadd.f32 %v6757, %v6758
      %v6760 = vsel %vm398, %v6667, 0.0
      %v6761 = vadd.f32 %v6759, %v6760
      %v6762 = vsel %vm398, %v6668, 0.0
      %v6763 = vadd.f32 %v6761, %v6762
      %v6764 = vrot.slane %v6763, 4
      %v6765 = vadd.f32 %v6763, %v6764
      %v6766 = vrot.slane %v6765, 2
      %v6767 = vadd.f32 %v6765, %v6766
      %v6768 = vrot.slane %v6767, 1
      %v6769 = vadd.f32 %v6767, %v6768
      %v6770 = vmul.f32 %v6769, 0.00390625
      %v6771 = vadd.f32 %v6770, 1e-05
      %v6772 = vrsqrt.pop %v6771
      %v6773 = vmul.f32 %v6772, %v6771
      %v6774 = vmul.f32 %v6773, %v6772
      %v6775 = vmul.f32 0.5, %v6774
      %v6776 = vsub.f32 1.5, %v6775
      %v6777 = vmul.f32 %v6772, %v6776
      %vm6778 = vweird.f32 %v6771
      %vm6779 = vweird.f32 %v6772
      %vm6780 = vmor %vm6778, %vm6779
      %v6781 = vsel %vm6780, %v6772, %v6777
      %v6782 = vmul.f32 %v6525, %v6781
      %v6783 = vmul.f32 %v6526, %v6781
      %v6784 = vmul.f32 %v6527, %v6781
      %v6785 = vmul.f32 %v6528, %v6781
      %v6786 = vmul.f32 %v6529, %v6781
      %v6787 = vmul.f32 %v6530, %v6781
      %v6788 = vmul.f32 %v6531, %v6781
      %v6789 = vmul.f32 %v6532, %v6781
      %v6790 = vmul.f32 %v6533, %v6781
      %v6791 = vmul.f32 %v6534, %v6781
      %v6792 = vmul.f32 %v6535, %v6781
      %v6793 = vmul.f32 %v6536, %v6781
      %v6794 = vmul.f32 %v6537, %v6781
      %v6795 = vmul.f32 %v6538, %v6781
      %v6796 = vmul.f32 %v6539, %v6781
      %v6797 = vmul.f32 %v6540, %v6781
      %v6798 = vmul.f32 %v6541, %v6781
      %v6799 = vmul.f32 %v6542, %v6781
      %v6800 = vmul.f32 %v6543, %v6781
      %v6801 = vmul.f32 %v6544, %v6781
      %v6802 = vmul.f32 %v6545, %v6781
      %v6803 = vmul.f32 %v6546, %v6781
      %v6804 = vmul.f32 %v6547, %v6781
      %v6805 = vmul.f32 %v6548, %v6781
      %v6806 = vmul.f32 %v6549, %v6781
      %v6807 = vmul.f32 %v6550, %v6781
      %v6808 = vmul.f32 %v6551, %v6781
      %v6809 = vmul.f32 %v6552, %v6781
      %v6810 = vmul.f32 %v6553, %v6781
      %v6811 = vmul.f32 %v6554, %v6781
      %v6812 = vmul.f32 %v6555, %v6781
      %v6813 = vmul.f32 %v6556, %v6781
      %v6814 = vmul.f32 %v6557, %v6781
      %v6815 = vmul.f32 %v6558, %v6781
      %v6816 = vmul.f32 %v6559, %v6781
      %v6817 = vmul.f32 %v6560, %v6781
      %v6818 = vmul.f32 %v6561, %v6781
      %v6819 = vmul.f32 %v6562, %v6781
      %v6820 = vmul.f32 %v6563, %v6781
      %v6821 = vmul.f32 %v6564, %v6781
      %v6822 = vmul.f32 %v6565, %v6781
      %v6823 = vmul.f32 %v6566, %v6781
      %v6824 = vmul.f32 %v6567, %v6781
      %v6825 = vmul.f32 %v6568, %v6781
      %v6826 = vmul.f32 %v6569, %v6781
      %v6827 = vmul.f32 %v6570, %v6781
      %v6828 = vmul.f32 %v6571, %v6781
      %v6829 = vmul.f32 %v6572, %v6781
      %v6831 = vperm.slane %v6373, 0
      %v6833 = vmul.f32 %v6782, %v6831
      %v6834 = vmul.f32 %v6783, %v6831
      %v6835 = vmul.f32 %v6784, %v6831
      %v6836 = vmul.f32 %v6785, %v6831
      %v6837 = vmul.f32 %v6786, %v6831
      %v6838 = vmul.f32 %v6787, %v6831
      %v6839 = vmul.f32 %v6788, %v6831
      %v6840 = vmul.f32 %v6789, %v6831
      %v6841 = vmul.f32 %v6790, %v6831
      %v6842 = vmul.f32 %v6791, %v6831
      %v6843 = vmul.f32 %v6792, %v6831
      %v6844 = vmul.f32 %v6793, %v6831
      %v6845 = vmul.f32 %v6794, %v6831
      %v6846 = vmul.f32 %v6795, %v6831
      %v6847 = vmul.f32 %v6796, %v6831
      %v6848 = vmul.f32 %v6797, %v6831
      %v6849 = vmul.f32 %v6798, %v6831
      %v6850 = vmul.f32 %v6799, %v6831
      %v6851 = vmul.f32 %v6800, %v6831
      %v6852 = vmul.f32 %v6801, %v6831
      %v6853 = vmul.f32 %v6802, %v6831
      %v6854 = vmul.f32 %v6803, %v6831
      %v6855 = vmul.f32 %v6804, %v6831
      %v6856 = vmul.f32 %v6805, %v6831
      %v6857 = vmul.f32 %v6806, %v6831
      %v6858 = vmul.f32 %v6807, %v6831
      %v6859 = vmul.f32 %v6808, %v6831
      %v6860 = vmul.f32 %v6809, %v6831
      %v6861 = vmul.f32 %v6810, %v6831
      %v6862 = vmul.f32 %v6811, %v6831
      %v6863 = vmul.f32 %v6812, %v6831
      %v6864 = vmul.f32 %v6813, %v6831
      %v6865 = vmul.f32 %v6814, %v6831
      %v6866 = vmul.f32 %v6815, %v6831
      %v6867 = vmul.f32 %v6816, %v6831
      %v6868 = vmul.f32 %v6817, %v6831
      %v6869 = vmul.f32 %v6818, %v6831
      %v6870 = vmul.f32 %v6819, %v6831
      %v6871 = vmul.f32 %v6820, %v6831
      %v6872 = vmul.f32 %v6821, %v6831
      %v6873 = vmul.f32 %v6822, %v6831
      %v6874 = vmul.f32 %v6823, %v6831
      %v6875 = vmul.f32 %v6824, %v6831
      %v6876 = vmul.f32 %v6825, %v6831
      %v6877 = vmul.f32 %v6826, %v6831
      %v6878 = vmul.f32 %v6827, %v6831
      %v6879 = vmul.f32 %v6828, %v6831
      %v6880 = vmul.f32 %v6829, %v6831
      %v6882 = vperm.slane %v6374, 0
      %v6884 = vadd.f32 %v6833, %v6882
      %v6885 = vadd.f32 %v6834, %v6882
      %v6886 = vadd.f32 %v6835, %v6882
      %v6887 = vadd.f32 %v6836, %v6882
      %v6888 = vadd.f32 %v6837, %v6882
      %v6889 = vadd.f32 %v6838, %v6882
      %v6890 = vadd.f32 %v6839, %v6882
      %v6891 = vadd.f32 %v6840, %v6882
      %v6892 = vadd.f32 %v6841, %v6882
      %v6893 = vadd.f32 %v6842, %v6882
      %v6894 = vadd.f32 %v6843, %v6882
      %v6895 = vadd.f32 %v6844, %v6882
      %v6896 = vadd.f32 %v6845, %v6882
      %v6897 = vadd.f32 %v6846, %v6882
      %v6898 = vadd.f32 %v6847, %v6882
      %v6899 = vadd.f32 %v6848, %v6882
      %v6900 = vadd.f32 %v6849, %v6882
      %v6901 = vadd.f32 %v6850, %v6882
      %v6902 = vadd.f32 %v6851, %v6882
      %v6903 = vadd.f32 %v6852, %v6882
      %v6904 = vadd.f32 %v6853, %v6882
      %v6905 = vadd.f32 %v6854, %v6882
      %v6906 = vadd.f32 %v6855, %v6882
      %v6907 = vadd.f32 %v6856, %v6882
      %v6908 = vadd.f32 %v6857, %v6882
      %v6909 = vadd.f32 %v6858, %v6882
      %v6910 = vadd.f32 %v6859, %v6882
      %v6911 = vadd.f32 %v6860, %v6882
      %v6912 = vadd.f32 %v6861, %v6882
      %v6913 = vadd.f32 %v6862, %v6882
      %v6914 = vadd.f32 %v6863, %v6882
      %v6915 = vadd.f32 %v6864, %v6882
      %v6916 = vadd.f32 %v6865, %v6882
      %v6917 = vadd.f32 %v6866, %v6882
      %v6918 = vadd.f32 %v6867, %v6882
      %v6919 = vadd.f32 %v6868, %v6882
      %v6920 = vadd.f32 %v6869, %v6882
      %v6921 = vadd.f32 %v6870, %v6882
      %v6922 = vadd.f32 %v6871, %v6882
      %v6923 = vadd.f32 %v6872, %v6882
      %v6924 = vadd.f32 %v6873, %v6882
      %v6925 = vadd.f32 %v6874, %v6882
      %v6926 = vadd.f32 %v6875, %v6882
      %v6927 = vadd.f32 %v6876, %v6882
      %v6928 = vadd.f32 %v6877, %v6882
      %v6929 = vadd.f32 %v6878, %v6882
      %v6930 = vadd.f32 %v6879, %v6882
      %v6931 = vadd.f32 %v6880, %v6882
      %v6932 = vld [vmem:[%s327] sm:$0xff]
      %v6933 = vld [vmem:[%s327 + $0x8] sm:$0xff]
      %v6934 = vld [vmem:[%s327 + $0x10] sm:$0xff]
      %v6935 = vld [vmem:[%s327 + $0x18] sm:$0xff]
      %v6936 = vld [vmem:[%s327 + $0x20] sm:$0xff]
      %v6937 = vld [vmem:[%s327 + $0x28] sm:$0xff]
      %v6938 = vld [vmem:[%s327 + $0x30] sm:$0xff]
      %v6939 = vld [vmem:[%s327 + $0x38] sm:$0xff]
      %v6940 = vld [vmem:[%s327 + $0x40] sm:$0xff]
      %v6941 = vld [vmem:[%s327 + $0x48] sm:$0xff]
      %v6942 = vld [vmem:[%s327 + $0x50] sm:$0xff]
      %v6943 = vld [vmem:[%s327 + $0x58] sm:$0xff]
      %v6944 = vld [vmem:[%s327 + $0x60] sm:$0xff]
      %v6945 = vld [vmem:[%s327 + $0x68] sm:$0xff]
      %v6946 = vld [vmem:[%s327 + $0x70] sm:$0xff]
      %v6947 = vld [vmem:[%s327 + $0x78] sm:$0xff]
      %v6948 = vld [vmem:[%s327 + $0x80] sm:$0xff]
      %v6949 = vld [vmem:[%s327 + $0x88] sm:$0xff]
      %v6950 = vld [vmem:[%s327 + $0x90] sm:$0xff]
      %v6951 = vld [vmem:[%s327 + $0x98] sm:$0xff]
      %v6952 = vld [vmem:[%s327 + $0xa0] sm:$0xff]
      %v6953 = vld [vmem:[%s327 + $0xa8] sm:$0xff]
      %v6954 = vld [vmem:[%s327 + $0xb0] sm:$0xff]
      %v6955 = vld [vmem:[%s327 + $0xb8] sm:$0xff]
      %v6956 = vld [vmem:[%s327 + $0xc0] sm:$0xff]
      %v6957 = vld [vmem:[%s327 + $0xc8] sm:$0xff]
      %v6958 = vld [vmem:[%s327 + $0xd0] sm:$0xff]
      %v6959 = vld [vmem:[%s327 + $0xd8] sm:$0xff]
      %v6960 = vld [vmem:[%s327 + $0xe0] sm:$0xff]
      %v6961 = vld [vmem:[%s327 + $0xe8] sm:$0xff]
      %v6962 = vld [vmem:[%s327 + $0xf0] sm:$0xff]
      %v6963 = vld [vmem:[%s327 + $0xf8] sm:$0xff]
      %v6964 = vmul.f32 %v6932, 2.0
      %v6965 = vmul.f32 %v6933, 2.0
      %v6966 = vmul.f32 %v6934, 2.0
      %v6967 = vmul.f32 %v6935, 2.0
      %v6968 = vmul.f32 %v6936, 2.0
      %v6969 = vmul.f32 %v6937, 2.0
      %v6970 = vmul.f32 %v6938, 2.0
      %v6971 = vmul.f32 %v6939, 2.0
      %v6972 = vmul.f32 %v6940, 2.0
      %v6973 = vmul.f32 %v6941, 2.0
      %v6974 = vmul.f32 %v6942, 2.0
      %v6975 = vmul.f32 %v6943, 2.0
      %v6976 = vmul.f32 %v6944, 2.0
      %v6977 = vmul.f32 %v6945, 2.0
      %v6978 = vmul.f32 %v6946, 2.0
      %v6979 = vmul.f32 %v6947, 2.0
      %v6980 = vmul.f32 %v6948, 2.0
      %v6981 = vmul.f32 %v6949, 2.0
      %v6982 = vmul.f32 %v6950, 2.0
      %v6983 = vmul.f32 %v6951, 2.0
      %v6984 = vmul.f32 %v6952, 2.0
      %v6985 = vmul.f32 %v6953, 2.0
      %v6986 = vmul.f32 %v6954, 2.0
      %v6987 = vmul.f32 %v6955, 2.0
      %v6988 = vmul.f32 %v6956, 2.0
      %v6989 = vmul.f32 %v6957, 2.0
      %v6990 = vmul.f32 %v6958, 2.0
      %v6991 = vmul.f32 %v6959, 2.0
      %v6992 = vmul.f32 %v6960, 2.0
      %v6993 = vmul.f32 %v6961, 2.0
      %v6994 = vmul.f32 %v6962, 2.0
      %v6995 = vmul.f32 %v6963, 2.0
      %vm7028 = vcmask 1040384
      %v7029 = vrot.slane %v6964, 7
      %v7030 = vrot.slane %v6965, 7
      %v7031 = vsel %vm7028, %v7029, %v7030
      %v7032 = vrot.slane %v6966, 7
      %v7033 = vrot.slane %v6967, 7
      %v7034 = vsel %vm7028, %v7032, %v7033
      %v7035 = vrot.slane %v6968, 7
      %v7036 = vrot.slane %v6969, 7
      %v7037 = vsel %vm7028, %v7035, %v7036
      %v7038 = vrot.slane %v6970, 7
      %v7039 = vrot.slane %v6971, 7
      %v7040 = vsel %vm7028, %v7038, %v7039
      %v7041 = vrot.slane %v6972, 7
      %v7042 = vrot.slane %v6973, 7
      %v7043 = vsel %vm7028, %v7041, %v7042
      %v7044 = vrot.slane %v6974, 7
      %v7045 = vrot.slane %v6975, 7
      %v7046 = vsel %vm7028, %v7044, %v7045
      %v7047 = vrot.slane %v6976, 7
      %v7048 = vrot.slane %v6977, 7
      %v7049 = vsel %vm7028, %v7047, %v7048
      %v7050 = vrot.slane %v6978, 7
      %v7051 = vrot.slane %v6979, 7
      %v7052 = vsel %vm7028, %v7050, %v7051
      %v7053 = vrot.slane %v6980, 7
      %v7054 = vrot.slane %v6981, 7
      %v7055 = vsel %vm7028, %v7053, %v7054
      %v7056 = vrot.slane %v6982, 7
      %v7057 = vrot.slane %v6983, 7
      %v7058 = vsel %vm7028, %v7056, %v7057
      %v7059 = vrot.slane %v6984, 7
      %v7060 = vrot.slane %v6985, 7
      %v7061 = vsel %vm7028, %v7059, %v7060
      %v7062 = vrot.slane %v6986, 7
      %v7063 = vrot.slane %v6987, 7
      %v7064 = vsel %vm7028, %v7062, %v7063
      %v7065 = vrot.slane %v6988, 7
      %v7066 = vrot.slane %v6989, 7
      %v7067 = vsel %vm7028, %v7065, %v7066
      %v7068 = vrot.slane %v6990, 7
      %v7069 = vrot.slane %v6991, 7
      %v7070 = vsel %vm7028, %v7068, %v7069
      %v7071 = vrot.slane %v6992, 7
      %v7072 = vrot.slane %v6993, 7
      %v7073 = vsel %vm7028, %v7071, %v7072
      %v7074 = vrot.slane %v6994, 7
      %v7075 = vrot.slane %v6995, 7
      %v7076 = vsel %vm7028, %v7074, %v7075
      %v7125 = vadd.f32 %v6884, %v7029
      %v7126 = vadd.f32 %v6885, %v7031
      %v7127 = vadd.f32 %v6886, %v7030
      %v7128 = vadd.f32 %v6887, %v7032
      %v7129 = vadd.f32 %v6888, %v7034
      %v7130 = vadd.f32 %v6889, %v7033
      %v7131 = vadd.f32 %v6890, %v7035
      %v7132 = vadd.f32 %v6891, %v7037
      %v7133 = vadd.f32 %v6892, %v7036
      %v7134 = vadd.f32 %v6893, %v7038
      %v7135 = vadd.f32 %v6894, %v7040
      %v7136 = vadd.f32 %v6895, %v7039
      %v7137 = vadd.f32 %v6896, %v7041
      %v7138 = vadd.f32 %v6897, %v7043
      %v7139 = vadd.f32 %v6898, %v7042
      %v7140 = vadd.f32 %v6899, %v7044
      %v7141 = vadd.f32 %v6900, %v7046
      %v7142 = vadd.f32 %v6901, %v7045
      %v7143 = vadd.f32 %v6902, %v7047
      %v7144 = vadd.f32 %v6903, %v7049
      %v7145 = vadd.f32 %v6904, %v7048
      %v7146 = vadd.f32 %v6905, %v7050
      %v7147 = vadd.f32 %v6906, %v7052
      %v7148 = vadd.f32 %v6907, %v7051
      %v7149 = vadd.f32 %v6908, %v7053
      %v7150 = vadd.f32 %v6909, %v7055
      %v7151 = vadd.f32 %v6910, %v7054
      %v7152 = vadd.f32 %v6911, %v7056
      %v7153 = vadd.f32 %v6912, %v7058
      %v7154 = vadd.f32 %v6913, %v7057
      %v7155 = vadd.f32 %v6914, %v7059
      %v7156 = vadd.f32 %v6915, %v7061
      %v7157 = vadd.f32 %v6916, %v7060
      %v7158 = vadd.f32 %v6917, %v7062
      %v7159 = vadd.f32 %v6918, %v7064
      %v7160 = vadd.f32 %v6919, %v7063
      %v7161 = vadd.f32 %v6920, %v7065
      %v7162 = vadd.f32 %v6921, %v7067
      %v7163 = vadd.f32 %v6922, %v7066
      %v7164 = vadd.f32 %v6923, %v7068
      %v7165 = vadd.f32 %v6924, %v7070
      %v7166 = vadd.f32 %v6925, %v7069
      %v7167 = vadd.f32 %v6926, %v7071
      %v7168 = vadd.f32 %v6927, %v7073
      %v7169 = vadd.f32 %v6928, %v7072
      %v7170 = vadd.f32 %v6929, %v7074
      %v7171 = vadd.f32 %v6930, %v7076
      %v7172 = vadd.f32 %v6931, %v7075
      %vm7173 = vcmask 31745
      %7174 = vst.msk [vmem:[%s332 - $0x1] sm:$0xfe] %vm7173, %v7125
      %7175 = vst.msk [vmem:[%s332 + $0x7] sm:$0xff] %vm398, %v7126
      %7176 = vst.msk [vmem:[%s332 + $0xf] sm:$0x1] %vm464, %v7127
      %7177 = vst.msk [vmem:[%s332 + $0xf] sm:$0xfe] %vm7173, %v7128
      %7178 = vst.msk [vmem:[%s332 + $0x17] sm:$0xff] %vm398, %v7129
      %7179 = vst.msk [vmem:[%s332 + $0x1f] sm:$0x1] %vm464, %v7130
      %7180 = vst.msk [vmem:[%s332 + $0x1f] sm:$0xfe] %vm7173, %v7131
      %7181 = vst.msk [vmem:[%s332 + $0x27] sm:$0xff] %vm398, %v7132
      %7182 = vst.msk [vmem:[%s332 + $0x2f] sm:$0x1] %vm464, %v7133
      %7183 = vst.msk [vmem:[%s332 + $0x2f] sm:$0xfe] %vm7173, %v7134
      %7184 = vst.msk [vmem:[%s332 + $0x37] sm:$0xff] %vm398, %v7135
      %7185 = vst.msk [vmem:[%s332 + $0x3f] sm:$0x1] %vm464, %v7136
      %7186 = vst.msk [vmem:[%s332 + $0x3f] sm:$0xfe] %vm7173, %v7137
      %7187 = vst.msk [vmem:[%s332 + $0x47] sm:$0xff] %vm398, %v7138
      %7188 = vst.msk [vmem:[%s332 + $0x4f] sm:$0x1] %vm464, %v7139
      %7189 = vst.msk [vmem:[%s332 + $0x4f] sm:$0xfe] %vm7173, %v7140
      %7190 = vst.msk [vmem:[%s332 + $0x57] sm:$0xff] %vm398, %v7141
      %7191 = vst.msk [vmem:[%s332 + $0x5f] sm:$0x1] %vm464, %v7142
      %7192 = vst.msk [vmem:[%s332 + $0x5f] sm:$0xfe] %vm7173, %v7143
      %7193 = vst.msk [vmem:[%s332 + $0x67] sm:$0xff] %vm398, %v7144
      %7194 = vst.msk [vmem:[%s332 + $0x6f] sm:$0x1] %vm464, %v7145
      %7195 = vst.msk [vmem:[%s332 + $0x6f] sm:$0xfe] %vm7173, %v7146
      %7196 = vst.msk [vmem:[%s332 + $0x77] sm:$0xff] %vm398, %v7147
      %7197 = vst.msk [vmem:[%s332 + $0x7f] sm:$0x1] %vm464, %v7148
      %7198 = vst.msk [vmem:[%s332 + $0x7f] sm:$0xfe] %vm7173, %v7149
      %7199 = vst.msk [vmem:[%s332 + $0x87] sm:$0xff] %vm398, %v7150
      %7200 = vst.msk [vmem:[%s332 + $0x8f] sm:$0x1] %vm464, %v7151
      %7201 = vst.msk [vmem:[%s332 + $0x8f] sm:$0xfe] %vm7173, %v7152
      %7202 = vst.msk [vmem:[%s332 + $0x97] sm:$0xff] %vm398, %v7153
      %7203 = vst.msk [vmem:[%s332 + $0x9f] sm:$0x1] %vm464, %v7154
      %7204 = vst.msk [vmem:[%s332 + $0x9f] sm:$0xfe] %vm7173, %v7155
      %7205 = vst.msk [vmem:[%s332 + $0xa7] sm:$0xff] %vm398, %v7156
      %7206 = vst.msk [vmem:[%s332 + $0xaf] sm:$0x1] %vm464, %v7157
      %7207 = vst.msk [vmem:[%s332 + $0xaf] sm:$0xfe] %vm7173, %v7158
      %7208 = vst.msk [vmem:[%s332 + $0xb7] sm:$0xff] %vm398, %v7159
      %7209 = vst.msk [vmem:[%s332 + $0xbf] sm:$0x1] %vm464, %v7160
      %7210 = vst.msk [vmem:[%s332 + $0xbf] sm:$0xfe] %vm7173, %v7161
      %7211 = vst.msk [vmem:[%s332 + $0xc7] sm:$0xff] %vm398, %v7162
      %7212 = vst.msk [vmem:[%s332 + $0xcf] sm:$0x1] %vm464, %v7163
      %7213 = vst.msk [vmem:[%s332 + $0xcf] sm:$0xfe] %vm7173, %v7164
      %7214 = vst.msk [vmem:[%s332 + $0xd7] sm:$0xff] %vm398, %v7165
      %7215 = vst.msk [vmem:[%s332 + $0xdf] sm:$0x1] %vm464, %v7166
      %7216 = vst.msk [vmem:[%s332 + $0xdf] sm:$0xfe] %vm7173, %v7167
      %7217 = vst.msk [vmem:[%s332 + $0xe7] sm:$0xff] %vm398, %v7168
      %7218 = vst.msk [vmem:[%s332 + $0xef] sm:$0x1] %vm464, %v7169
      %7219 = vst.msk [vmem:[%s332 + $0xef] sm:$0xfe] %vm7173, %v7170
      %7220 = vst.msk [vmem:[%s332 + $0xf7] sm:$0xff] %vm398, %v7171
      %7221 = vst.msk [vmem:[%s332 + $0xff] sm:$0x1] %vm464, %v7172
      %p7222 = scmp.lt.s32.totalorder %s20, 1
      %s7223 = scalar_select %p7222, %s20, 1
      %s7224 = smul.addr %s7223, 32
      %s7225 = smul.addr %s7224, 8
      %s7226 = scalar_lea.vmem %s9, %s7225
      // Predicated region
      $region57: #{tpu_custom_call.1} parent=55 // pred_check
        %p7227 = pneg %p232
      $region58: #{tpu_custom_call.1} parent=55 // pred_check_branch
        %7229 = sbr.rel (%p7227) target = $region60
      $region59: #{tpu_custom_call.1} parent=55 // pred_region
        _
      $region60: #{tpu_custom_call.1} parent=55 // pred_fallthru
        _
    $region56: #{tpu_custom_call.1} parent=5 // pred_fallthru
      _
    %p7230 = scmp.le.s32.totalorder 2, %s15
    // Predicated region
    $region61: #{tpu_custom_call.1} parent=5 // pred_check
      %p7231 = pneg %p7230
    $region62: #{tpu_custom_call.1} parent=5 // pred_check_branch
      %7233 = sbr.rel (%p7231) target = $region64
    $region63: #{tpu_custom_call.1} parent=5 // pred_region
      %s7234 = ssub.s32 %s15, 2
      // Predicated region
      $region65: #{tpu_custom_call.1} parent=63 // pred_check
        %p7235 = pneg %p238
      $region66: #{tpu_custom_call.1} parent=63 // pred_check_branch
        %7237 = sbr.rel (%p7235) target = $region68
      $region67: #{tpu_custom_call.1} parent=63 // pred_region
        %p7238 = scmp.lt.s32.totalorder %s21, 1
        %s7239 = scalar_select %p7238, %s21, 1
        %s7240 = smul.addr %s7239, 32
        %s7241 = smul.addr %s7240, 8
        %s7242 = scalar_lea.vmem %s9, %s7241
      $region68: #{tpu_custom_call.1} parent=63 // pred_fallthru
        _
    $region64: #{tpu_custom_call.1} parent=5 // pred_fallthru
      _
  $region6: #{tpu_custom_call.1} parent=0 // loop_footer
    %s19 = sadd.s32 1, %s15
  $region7: #{tpu_custom_call.1} parent=0 // loop_footer_branch
    %14 = sbr.rel target = $region3
  $region8: #{tpu_custom_call.1} parent=0 // loop_exit
    _

</llo_original>
